<compile_context>
chip_gen: v7x
topology: tpu7x:2x2x1
jax: 0.10.0
libtpu: 0.0.40
codegen_flags: <defaults>
</compile_context>

<pallas_src>
import functools

import jax
import jax.numpy as jnp
from jax.experimental import pallas as pl
from jax.experimental.pallas import tpu as pltpu

LANE = 128


def _round_up(x, m):
    return (x + m - 1) // m * m


def _pick_tile_m(M, max_tm=512):
    """Largest tile of M (<= max_tm) that divides M, preferring 128/16/8 alignment."""
    if M <= max_tm:
        return M
    for align in (128, 16, 8):
        start = max_tm - (max_tm % align)
        for tm in range(start, 0, -align):
            if M % tm == 0:
                return tm
    return M  # fallback: single full-M block


# ----------------------------------------------------------------------------
# Pallas kernel 1:  out = relu?( x @ w + b )
#   grid over M only; weight / bias blocks are constant across the grid
#   (resident in VMEM); f32 accumulation, bf16 operands.
# ----------------------------------------------------------------------------
def _matmul_bias_kernel(x_ref, w_ref, b_ref, o_ref, *, apply_relu):
    acc = jnp.dot(x_ref[...], w_ref[...], preferred_element_type=jnp.float32)
    out = acc + b_ref[...]
    if apply_relu:
        out = jnp.maximum(out, 0.0)
    o_ref[...] = out.astype(o_ref.dtype)


def pallas_matmul_bias(x, w, b2d, *, relu=False, out_dtype=jnp.float32, max_tm=512):
    """x: (M, K) bf16, w: (K, N) bf16 (N % 128 == 0), b2d: (1, N) f32."""
    M, K = x.shape
    Kw, N = w.shape
    assert K == Kw and N % LANE == 0 and b2d.shape == (1, N)
    tm = _pick_tile_m(M, max_tm)
    kernel = functools.partial(_matmul_bias_kernel, apply_relu=relu)
    return pl.pallas_call(
        kernel,
        out_shape=jax.ShapeDtypeStruct((M, N), out_dtype),
        grid_spec=pltpu.PrefetchScalarGridSpec(
            num_scalar_prefetch=0,
            grid=(M // tm,),
            in_specs=[
                pl.BlockSpec((tm, K), lambda i: (i, 0)),
                pl.BlockSpec((K, N), lambda i: (0, 0)),
                pl.BlockSpec((1, N), lambda i: (0, 0)),
            ],
            out_specs=pl.BlockSpec((tm, N), lambda i: (i, 0)),
        ),
        compiler_params=pltpu.CompilerParams(
            dimension_semantics=("parallel",),
            vmem_limit_bytes=48 * 1024 * 1024,
        ),
    )(x, w, b2d)


# ----------------------------------------------------------------------------
# Pallas kernel 2:  logits = relu(x @ w1 + b1) @ w2 + b2   (fc + final_fc fused)
#   hidden activation stays in VMEM/vregs; output lane-padded to 128.
# ----------------------------------------------------------------------------
def _fused_fc_kernel(x_ref, w1_ref, b1_ref, w2_ref, b2_ref, o_ref):
    h = jnp.dot(x_ref[...], w1_ref[...], preferred_element_type=jnp.float32)
    h = jnp.maximum(h + b1_ref[...], 0.0)
    out = jnp.dot(h.astype(jnp.bfloat16), w2_ref[...],
                  preferred_element_type=jnp.float32)
    o_ref[...] = (out + b2_ref[...]).astype(o_ref.dtype)


def pallas_fused_fc(x, w1, b1_2d, w2, b2_2d, *, max_tm=256):
    M, K1 = x.shape
    K1w, H = w1.shape
    Hw, N = w2.shape
    assert K1 == K1w and H == Hw and N % LANE == 0
    tm = _pick_tile_m(M, max_tm)
    return pl.pallas_call(
        _fused_fc_kernel,
        out_shape=jax.ShapeDtypeStruct((M, N), jnp.float32),
        grid_spec=pltpu.PrefetchScalarGridSpec(
            num_scalar_prefetch=0,
            grid=(M // tm,),
            in_specs=[
                pl.BlockSpec((tm, K1), lambda i: (i, 0)),
                pl.BlockSpec((K1, H), lambda i: (0, 0)),
                pl.BlockSpec((1, H), lambda i: (0, 0)),
                pl.BlockSpec((H, N), lambda i: (0, 0)),
                pl.BlockSpec((1, N), lambda i: (0, 0)),
            ],
            out_specs=pl.BlockSpec((tm, N), lambda i: (i, 0)),
        ),
        compiler_params=pltpu.CompilerParams(
            dimension_semantics=("parallel",),
            vmem_limit_bytes=48 * 1024 * 1024,
        ),
    )(x, w1, b1_2d, w2, b2_2d)


# ----------------------------------------------------------------------------
# Glue: im2col / maxpool (NHWC, plain-JAX layout plumbing, emitted in bf16)
# ----------------------------------------------------------------------------
def _im2col_3x3_pad1_nhwc(x):
    """x: (B, H, W, C) -> (B*H*W, 9*C); column order (kh, kw, cin)."""
    B, H, W, C = x.shape
    xp = jnp.pad(x, ((0, 0), (1, 1), (1, 1), (0, 0)))
    patches = [xp[:, i:i + H, j:j + W, :] for i in range(3) for j in range(3)]
    p = jnp.stack(patches, axis=3)               # (B, H, W, 9, C)
    return p.reshape(B * H * W, 9 * C)


def conv3x3_relu_nhwc(x, w_mat, b2d, cout):
    """x: (B,H,W,Cin) bf16; w_mat: (9*Cin, 128) bf16 (cols >= cout are zero);
    b2d: (1,128) f32.  Returns ReLU(conv2d(pad=1)) as (B,H,W,cout) bf16."""
    B, H, W, _ = x.shape
    cols = _im2col_3x3_pad1_nhwc(x)              # (B*H*W, 9*Cin) bf16
    out = pallas_matmul_bias(cols, w_mat, b2d, relu=True, out_dtype=jnp.bfloat16)
    return out[:, :cout].reshape(B, H, W, cout)


def maxpool2x2_nhwc(x):
    B, H, W, C = x.shape
    return x.reshape(B, H // 2, 2, W // 2, 2, C).max(axis=(2, 4))


# ----------------------------------------------------------------------------
# Parameters: init like the PyTorch module, then pack into kernel-ready layout
# (pre-transposed, lane-padded, bf16) -- no per-forward transposes.
# ----------------------------------------------------------------------------
def init_params(key):
    ks = jax.random.split(key, 4)

    def kaiming_conv(k, cout, cin):
        # kaiming_normal_(mode='fan_out', nonlinearity='relu')
        fan_out = cout * 3 * 3
        std = (2.0 / fan_out) ** 0.5
        return jax.random.normal(k, (cout, cin, 3, 3), jnp.float32) * std

    def pack_conv(w, b):
        cout, cin = w.shape[0], w.shape[1]
        # rows ordered (kh, kw, cin) to match im2col column order
        wm = w.transpose(2, 3, 1, 0).reshape(9 * cin, cout)
        wm = jnp.pad(wm, ((0, 0), (0, LANE - cout))).astype(jnp.bfloat16)
        bp = jnp.pad(b, (0, LANE - cout)).reshape(1, LANE).astype(jnp.float32)
        return wm, bp

    conv1_w = kaiming_conv(ks[0], 32, 1)
    conv2_w = kaiming_conv(ks[1], 64, 32)
    # nn.Linear: normal(0, 0.01), bias 0 (torch stores (out, in))
    fc_w = jax.random.normal(ks[2], (1024, 3136), jnp.float32) * 0.01
    final_fc_w = jax.random.normal(ks[3], (10, 1024), jnp.float32) * 0.01

    c1_wm, c1_b = pack_conv(conv1_w, jnp.zeros((32,), jnp.float32))
    c2_wm, c2_b = pack_conv(conv2_w, jnp.zeros((64,), jnp.float32))

    return {
        "conv1_w": c1_wm, "conv1_b": c1_b,
        "conv2_w": c2_wm, "conv2_b": c2_b,
        "fc_w": fc_w.T.astype(jnp.bfloat16),                       # (3136, 1024)
        "fc_b": jnp.zeros((1, 1024), jnp.float32),
        "final_fc_w": jnp.pad(final_fc_w.T,
                              ((0, 0), (0, LANE - 10))).astype(jnp.bfloat16),
        "final_fc_b": jnp.zeros((1, LANE), jnp.float32),
    }


# ----------------------------------------------------------------------------
# Forward pass: MNISTClassifier.forward
# ----------------------------------------------------------------------------
@jax.jit
def mnist_classifier_forward(params, x):
    B = x.shape[0]
    # NCHW input -> NHWC internally (conv math is layout independent)
    h = x.transpose(0, 2, 3, 1).astype(jnp.bfloat16)                # (B,28,28,1)
    h = conv3x3_relu_nhwc(h, params["conv1_w"], params["conv1_b"], 32)
    h = maxpool2x2_nhwc(h)                                          # (B,14,14,32)
    h = conv3x3_relu_nhwc(h, params["conv2_w"], params["conv2_b"], 64)
    h = maxpool2x2_nhwc(h)                                          # (B,7,7,64)

    # Match PyTorch NCHW .view(B, -1) flatten order exactly
    flat = h.transpose(0, 3, 1, 2).reshape(B, 64 * 7 * 7)           # (B,3136) bf16

    mpad = _round_up(max(B, 8), 8)
    flat = jnp.pad(flat, ((0, mpad - B), (0, 0)))
    logits = pallas_fused_fc(flat, params["fc_w"], params["fc_b"],
                             params["final_fc_w"], params["final_fc_b"])
    return logits[:B, :10]


if __name__ == "__main__":
    key = jax.random.PRNGKey(0)
    pkey, xkey = jax.random.split(key)
    params = init_params(pkey)

    # MNIST-shaped input: batch=2, 1 channel, 28x28 (so flatten = 3136)
    x = jax.random.normal(xkey, (2, 1, 28, 28), jnp.float32)

    logits = mnist_classifier_forward(params, x)
    jax.block_until_ready(logits)
    assert logits.shape == (2, 10) and logits.dtype == jnp.float32
    print("KERNEL_OK")
</pallas_src>

<mosaic_0001>
module attributes {stable_mosaic.version = 11 : i64} {
  func.func @_matmul_bias_kernel(%arg0: i32, %arg1: memref<224x9xbf16, #tpu.memory_space<vmem>>, %arg2: memref<9x128xbf16, #tpu.memory_space<vmem>>, %arg3: memref<1x128xf32, #tpu.memory_space<vmem>>, %arg4: memref<224x128xbf16, #tpu.memory_space<vmem>>) attributes {dimension_semantics = [#tpu.dimension_semantics<parallel>], iteration_bounds = array<i64: 7>, scalar_prefetch = 0 : i64, scratch_operands = 0 : i64, tpu.core_type = #tpu.core_type<tc>, window_params = [{transform_indices = @transform_0, window_bounds = array<i64: 224, 9>}, {pipeline_mode = #tpu.pipeline_mode<synchronous>, transform_indices = @transform_1, window_bounds = array<i64: 9, 128>}, {pipeline_mode = #tpu.pipeline_mode<synchronous>, transform_indices = @transform_2, window_bounds = array<i64: 1, 128>}, {transform_indices = @transform_3, window_bounds = array<i64: 224, 128>}]} {
    %c0 = arith.constant 0 : index
    %c0_0 = arith.constant 0 : index
    %0 = vector.load %arg1[%c0, %c0_0] : memref<224x9xbf16, #tpu.memory_space<vmem>>, vector<224x9xbf16>
    %c0_1 = arith.constant 0 : index
    %c0_2 = arith.constant 0 : index
    %1 = vector.load %arg2[%c0_1, %c0_2] : memref<9x128xbf16, #tpu.memory_space<vmem>>, vector<9x128xbf16>
    %cst = arith.constant dense<0.000000e+00> : vector<224x128xf32>
    %2 = tpu.matmul %0, %1, %cst {dimension_numbers = #tpu.dot_dimension_numbers<[1], [0], [0], [1], [0, 0, 1, 1], [], []>} : vector<224x9xbf16>, vector<9x128xbf16>, vector<224x128xf32> -> vector<224x128xf32>
    %c0_3 = arith.constant 0 : index
    %c0_4 = arith.constant 0 : index
    %3 = vector.load %arg3[%c0_3, %c0_4] : memref<1x128xf32, #tpu.memory_space<vmem>>, vector<1x128xf32>
    %4 = vector.broadcast %3 : vector<1x128xf32> to vector<224x128xf32>
    %5 = arith.addf %2, %4 : vector<224x128xf32>
    %cst_5 = arith.constant 0.000000e+00 : f32
    %6 = vector.broadcast %cst_5 : f32 to vector<224x128xf32>
    %7 = arith.maximumf %5, %6 : vector<224x128xf32>
    %8 = arith.truncf %7 : vector<224x128xf32> to vector<224x128xbf16>
    %c0_6 = arith.constant 0 : index
    %c0_7 = arith.constant 0 : index
    %9 = vector.load %arg4[%c0_6, %c0_7] : memref<224x128xbf16, #tpu.memory_space<vmem>>, vector<224x128xbf16>
    tpu.vector_store %arg4[%c0_6, %c0_7], %8 {strides = array<i32>} : memref<224x128xbf16, #tpu.memory_space<vmem>>, vector<224x128xbf16>,
    return
  }
  func.func @transform_0(%arg0: i32) -> (i32, i32) {
    %c0_i32 = arith.constant 0 : i32
    %c0_i32_0 = arith.constant 0 : i32
    return %arg0, %c0_i32 : i32, i32
  }
  func.func @transform_1(%arg0: i32) -> (i32, i32) {
    %c0_i32 = arith.constant 0 : i32
    %c0_i32_0 = arith.constant 0 : i32
    %c0_i32_1 = arith.constant 0 : i32
    return %c0_i32, %c0_i32_0 : i32, i32
  }
  func.func @transform_2(%arg0: i32) -> (i32, i32) {
    %c0_i32 = arith.constant 0 : i32
    %c0_i32_0 = arith.constant 0 : i32
    %c0_i32_1 = arith.constant 0 : i32
    return %c0_i32, %c0_i32_0 : i32, i32
  }
  func.func @transform_3(%arg0: i32) -> (i32, i32) {
    %c0_i32 = arith.constant 0 : i32
    %c0_i32_0 = arith.constant 0 : i32
    return %arg0, %c0_i32 : i32, i32
  }
}

module attributes {stable_mosaic.version = 11 : i64} {
  func.func @_matmul_bias_kernel(%arg0: i32, %arg1: memref<392x288xbf16, #tpu.memory_space<vmem>>, %arg2: memref<288x128xbf16, #tpu.memory_space<vmem>>, %arg3: memref<1x128xf32, #tpu.memory_space<vmem>>, %arg4: memref<392x128xbf16, #tpu.memory_space<vmem>>) attributes {dimension_semantics = [#tpu.dimension_semantics<parallel>], iteration_bounds = array<i64: 1>, scalar_prefetch = 0 : i64, scratch_operands = 0 : i64, tpu.core_type = #tpu.core_type<tc>, window_params = [{transform_indices = @transform_0, window_bounds = array<i64: 392, 288>}, {pipeline_mode = #tpu.pipeline_mode<synchronous>, transform_indices = @transform_1, window_bounds = array<i64: 288, 128>}, {pipeline_mode = #tpu.pipeline_mode<synchronous>, transform_indices = @transform_2, window_bounds = array<i64: 1, 128>}, {transform_indices = @transform_3, window_bounds = array<i64: 392, 128>}]} {
    %c0 = arith.constant 0 : index
    %c0_0 = arith.constant 0 : index
    %0 = vector.load %arg1[%c0, %c0_0] : memref<392x288xbf16, #tpu.memory_space<vmem>>, vector<392x288xbf16>
    %c0_1 = arith.constant 0 : index
    %c0_2 = arith.constant 0 : index
    %1 = vector.load %arg2[%c0_1, %c0_2] : memref<288x128xbf16, #tpu.memory_space<vmem>>, vector<288x128xbf16>
    %cst = arith.constant dense<0.000000e+00> : vector<392x128xf32>
    %2 = tpu.matmul %0, %1, %cst {dimension_numbers = #tpu.dot_dimension_numbers<[1], [0], [0], [1], [0, 0, 1, 1], [], []>} : vector<392x288xbf16>, vector<288x128xbf16>, vector<392x128xf32> -> vector<392x128xf32>
    %c0_3 = arith.constant 0 : index
    %c0_4 = arith.constant 0 : index
    %3 = vector.load %arg3[%c0_3, %c0_4] : memref<1x128xf32, #tpu.memory_space<vmem>>, vector<1x128xf32>
    %4 = vector.broadcast %3 : vector<1x128xf32> to vector<392x128xf32>
    %5 = arith.addf %2, %4 : vector<392x128xf32>
    %cst_5 = arith.constant 0.000000e+00 : f32
    %6 = vector.broadcast %cst_5 : f32 to vector<392x128xf32>
    %7 = arith.maximumf %5, %6 : vector<392x128xf32>
    %8 = arith.truncf %7 : vector<392x128xf32> to vector<392x128xbf16>
    %c0_6 = arith.constant 0 : index
    %c0_7 = arith.constant 0 : index
    %9 = vector.load %arg4[%c0_6, %c0_7] : memref<392x128xbf16, #tpu.memory_space<vmem>>, vector<392x128xbf16>
    tpu.vector_store %arg4[%c0_6, %c0_7], %8 {strides = array<i32>} : memref<392x128xbf16, #tpu.memory_space<vmem>>, vector<392x128xbf16>,
    return
  }
  func.func @transform_0(%arg0: i32) -> (i32, i32) {
    %c0_i32 = arith.constant 0 : i32
    %c0_i32_0 = arith.constant 0 : i32
    return %arg0, %c0_i32 : i32, i32
  }
  func.func @transform_1(%arg0: i32) -> (i32, i32) {
    %c0_i32 = arith.constant 0 : i32
    %c0_i32_0 = arith.constant 0 : i32
    %c0_i32_1 = arith.constant 0 : i32
    return %c0_i32, %c0_i32_0 : i32, i32
  }
  func.func @transform_2(%arg0: i32) -> (i32, i32) {
    %c0_i32 = arith.constant 0 : i32
    %c0_i32_0 = arith.constant 0 : i32
    %c0_i32_1 = arith.constant 0 : i32
    return %c0_i32, %c0_i32_0 : i32, i32
  }
  func.func @transform_3(%arg0: i32) -> (i32, i32) {
    %c0_i32 = arith.constant 0 : i32
    %c0_i32_0 = arith.constant 0 : i32
    return %arg0, %c0_i32 : i32, i32
  }
}

module attributes {stable_mosaic.version = 11 : i64} {
  func.func @_fused_fc_kernel(%arg0: i32, %arg1: memref<8x3136xbf16, #tpu.memory_space<vmem>>, %arg2: memref<3136x1024xbf16, #tpu.memory_space<vmem>>, %arg3: memref<1x1024xf32, #tpu.memory_space<vmem>>, %arg4: memref<1024x128xbf16, #tpu.memory_space<vmem>>, %arg5: memref<1x128xf32, #tpu.memory_space<vmem>>, %arg6: memref<8x128xf32, #tpu.memory_space<vmem>>) attributes {dimension_semantics = [#tpu.dimension_semantics<parallel>], iteration_bounds = array<i64: 1>, scalar_prefetch = 0 : i64, scratch_operands = 0 : i64, tpu.core_type = #tpu.core_type<tc>, window_params = [{transform_indices = @transform_0, window_bounds = array<i64: 8, 3136>}, {pipeline_mode = #tpu.pipeline_mode<synchronous>, transform_indices = @transform_1, window_bounds = array<i64: 3136, 1024>}, {pipeline_mode = #tpu.pipeline_mode<synchronous>, transform_indices = @transform_2, window_bounds = array<i64: 1, 1024>}, {pipeline_mode = #tpu.pipeline_mode<synchronous>, transform_indices = @transform_3, window_bounds = array<i64: 1024, 128>}, {pipeline_mode = #tpu.pipeline_mode<synchronous>, transform_indices = @transform_4, window_bounds = array<i64: 1, 128>}, {transform_indices = @transform_5, window_bounds = array<i64: 8, 128>}]} {
    %c0 = arith.constant 0 : index
    %c0_0 = arith.constant 0 : index
    %0 = vector.load %arg1[%c0, %c0_0] : memref<8x3136xbf16, #tpu.memory_space<vmem>>, vector<8x3136xbf16>
    %c0_1 = arith.constant 0 : index
    %c0_2 = arith.constant 0 : index
    %1 = vector.load %arg2[%c0_1, %c0_2] : memref<3136x1024xbf16, #tpu.memory_space<vmem>>, vector<3136x1024xbf16>
    %cst = arith.constant dense<0.000000e+00> : vector<8x1024xf32>
    %2 = tpu.matmul %0, %1, %cst {dimension_numbers = #tpu.dot_dimension_numbers<[1], [0], [0], [1], [0, 0, 1, 1], [], []>} : vector<8x3136xbf16>, vector<3136x1024xbf16>, vector<8x1024xf32> -> vector<8x1024xf32>
    %c0_3 = arith.constant 0 : index
    %c0_4 = arith.constant 0 : index
    %3 = vector.load %arg3[%c0_3, %c0_4] : memref<1x1024xf32, #tpu.memory_space<vmem>>, vector<1x1024xf32>
    %4 = vector.broadcast %3 : vector<1x1024xf32> to vector<8x1024xf32>
    %5 = arith.addf %2, %4 : vector<8x1024xf32>
    %cst_5 = arith.constant 0.000000e+00 : f32
    %6 = vector.broadcast %cst_5 : f32 to vector<8x1024xf32>
    %7 = arith.maximumf %5, %6 : vector<8x1024xf32>
    %8 = arith.truncf %7 : vector<8x1024xf32> to vector<8x1024xbf16>
    %c0_6 = arith.constant 0 : index
    %c0_7 = arith.constant 0 : index
    %9 = vector.load %arg4[%c0_6, %c0_7] : memref<1024x128xbf16, #tpu.memory_space<vmem>>, vector<1024x128xbf16>
    %cst_8 = arith.constant dense<0.000000e+00> : vector<8x128xf32>
    %10 = tpu.matmul %8, %9, %cst_8 {dimension_numbers = #tpu.dot_dimension_numbers<[1], [0], [0], [1], [0, 0, 1, 1], [], []>} : vector<8x1024xbf16>, vector<1024x128xbf16>, vector<8x128xf32> -> vector<8x128xf32>
    %c0_9 = arith.constant 0 : index
    %c0_10 = arith.constant 0 : index
    %11 = vector.load %arg5[%c0_9, %c0_10] : memref<1x128xf32, #tpu.memory_space<vmem>>, vector<1x128xf32>
    %12 = vector.broadcast %11 : vector<1x128xf32> to vector<8x128xf32>
    %13 = arith.addf %10, %12 : vector<8x128xf32>
    %c0_11 = arith.constant 0 : index
    %c0_12 = arith.constant 0 : index
    %14 = vector.load %arg6[%c0_11, %c0_12] : memref<8x128xf32, #tpu.memory_space<vmem>>, vector<8x128xf32>
    tpu.vector_store %arg6[%c0_11, %c0_12], %13 {strides = array<i32>} : memref<8x128xf32, #tpu.memory_space<vmem>>, vector<8x128xf32>,
    return
  }
  func.func @transform_0(%arg0: i32) -> (i32, i32) {
    %c0_i32 = arith.constant 0 : i32
    %c0_i32_0 = arith.constant 0 : i32
    return %arg0, %c0_i32 : i32, i32
  }
  func.func @transform_1(%arg0: i32) -> (i32, i32) {
    %c0_i32 = arith.constant 0 : i32
    %c0_i32_0 = arith.constant 0 : i32
    %c0_i32_1 = arith.constant 0 : i32
    return %c0_i32, %c0_i32_0 : i32, i32
  }
  func.func @transform_2(%arg0: i32) -> (i32, i32) {
    %c0_i32 = arith.constant 0 : i32
    %c0_i32_0 = arith.constant 0 : i32
    %c0_i32_1 = arith.constant 0 : i32
    return %c0_i32, %c0_i32_0 : i32, i32
  }
  func.func @transform_3(%arg0: i32) -> (i32, i32) {
    %c0_i32 = arith.constant 0 : i32
    %c0_i32_0 = arith.constant 0 : i32
    %c0_i32_1 = arith.constant 0 : i32
    return %c0_i32, %c0_i32_0 : i32, i32
  }
  func.func @transform_4(%arg0: i32) -> (i32, i32) {
    %c0_i32 = arith.constant 0 : i32
    %c0_i32_0 = arith.constant 0 : i32
    %c0_i32_1 = arith.constant 0 : i32
    return %c0_i32, %c0_i32_0 : i32, i32
  }
  func.func @transform_5(%arg0: i32) -> (i32, i32) {
    %c0_i32 = arith.constant 0 : i32
    %c0_i32_0 = arith.constant 0 : i32
    return %arg0, %c0_i32 : i32, i32
  }
}

</mosaic_0001>

<llo_original>
// kernel: mnist_classifier_forward.3
$region0: #{mnist_classifier_forward.3}
  #allocation0 [shape = 'u32[]', space=smem, size = 0x4, offset = 0x4, fixed_abs, tag = 'smem constant byte address 0x4 - core index']
  #allocation1 [shape = 'u32[144,128]{1,0:T(1,128)}', space=vmem, size = 0x12000, scoped, tag = 'internal scratch']
  %s0 = inlined_call_operand.vmem [shape: bf16[1568,9], index: 0, kind: input, shape index: {}]
  %s1 = inlined_call_operand.hbm [shape: bf16[9,128], index: 1, kind: input, shape index: {}]
  %s2 = inlined_call_operand.hbm [shape: f32[1,128], index: 2, kind: input, shape index: {}]
  %s3 = inlined_call_operand.vmem [shape: bf16[1568,128], index: 3, kind: output, shape index: {}]
  %s4 = sld [smem:[#allocation0]]
  $region53: #{mnist_classifier_forward.3} parent=0
    _
  %s6 = ssub.s32 1, %s4
  %s7 = scalar_select 0, %s6, %s4
  $region1: #{mnist_classifier_forward.3} parent=0
    #allocation2 [shape = 'u8[4096]{0}', space=vmem, size = 0x1000, scoped, tag = 'input window, operand 1, single buffered']
    #allocation3 [shape = 's32[2]{0}', space=sflag, size = 0x8, scoped, tag = 'scoped memory for mnist_classifier_forward.3']
    #allocation4 [shape = 'u8[512]{0}', space=vmem, size = 0x400, scoped, tag = 'input window, operand 2, single buffered']
    #allocation5 [shape = 's32[1]{0}', space=sflag, size = 0x4, scoped, tag = 'scoped memory for mnist_classifier_forward.3']
    %8 = vsyncpa [#allocation3], 0
    %9 = vsyncpa [#allocation5], 0
    loop: start=0, step=1, limit=9
    $region2: #{mnist_classifier_forward.3} parent=1 // loop_pre_header
      _
    $region3: #{mnist_classifier_forward.3} parent=1 // loop_header
      %s11 = sphi 0, %s15
      %p12 = scmp.ge.s32.totalorder %s11, 9
      %s21 = sphi 0, %s23
      %s24 = sphi 0, %s21
      %s25 = sphi 0, %s24
      %s41 = sphi 0, %s25
      %s45 = sphi 0, %s45
      %s47 = sphi 0, %s45
      %s48 = sphi 0, %s47
      %s62 = sphi 0, %s48
      %s66 = sphi 0, %s66
      %s68 = sphi 0, %s66
      %s69 = sphi 0, %s68
      %s83 = sphi 0, %s69
      %s89 = sphi 0, %s91
      %s92 = sphi 0, %s89
      %s93 = sphi 0, %s92
      %s109 = sphi 0, %s93
    $region4: #{mnist_classifier_forward.3} parent=1 // loop_header_branch
      %14 = sbr.rel (%p12) target = $region8
    $region5: #{mnist_classifier_forward.3} parent=1 // loop_body
      %s16 = ssub.s32 %s11, 1
      %s17 = ssub.s32 %s11, 2
      %s18 = sadd.s32 %s11, 1
      %s19 = ssub.s32 %s11, %s18
      %p20 = scmp.eq.s32.totalorder %s19, 0
      %s22 = sadd.s32 %s21, 1
      %s23 = scalar_select %p20, %s21, %s22
      %p26 = pneg %p20
      %p27 = scmp.eq.s32.totalorder %s11, 6
      %p28 = por %p26, %p27
      %p29 = scmp.ne.s32.totalorder %s21, %s24
      %p30 = scmp.eq.s32.totalorder %s11, 0
      %p31 = por %p29, %p30
      %p32 = scmp.ne.s32.totalorder %s21, %s24
      %p33 = scmp.eq.s32.totalorder %s16, 6
      %p34 = por %p32, %p33
      %p35 = scmp.ne.s32.totalorder %s24, %s25
      %p36 = scmp.eq.s32.totalorder %s16, 0
      %p37 = por %p35, %p36
      %p38 = scmp.ne.s32.totalorder %s24, %s25
      %p39 = scmp.eq.s32.totalorder %s17, 6
      %p40 = por %p38, %p39
      %p42 = scmp.ne.s32.totalorder %s25, %s41
      %p43 = scmp.eq.s32.totalorder %s17, 0
      %p44 = por %p42, %p43
      %s46 = sadd.s32 %s45, 1
      %p49 = scmp.eq.s32.totalorder %s11, 6
      %p50 = scmp.ne.s32.totalorder %s45, %s47
      %p51 = scmp.eq.s32.totalorder %s11, 0
      %p52 = por %p50, %p51
      %p53 = scmp.ne.s32.totalorder %s45, %s47
      %p54 = scmp.eq.s32.totalorder %s16, 6
      %p55 = por %p53, %p54
      %p56 = scmp.ne.s32.totalorder %s47, %s48
      %p57 = scmp.eq.s32.totalorder %s16, 0
      %p58 = por %p56, %p57
      %p59 = scmp.ne.s32.totalorder %s47, %s48
      %p60 = scmp.eq.s32.totalorder %s17, 6
      %p61 = por %p59, %p60
      %p63 = scmp.ne.s32.totalorder %s48, %s62
      %p64 = scmp.eq.s32.totalorder %s17, 0
      %p65 = por %p63, %p64
      %s67 = sadd.s32 %s66, 1
      %p70 = scmp.eq.s32.totalorder %s11, 6
      %p71 = scmp.ne.s32.totalorder %s66, %s68
      %p72 = scmp.eq.s32.totalorder %s11, 0
      %p73 = por %p71, %p72
      %p74 = scmp.ne.s32.totalorder %s66, %s68
      %p75 = scmp.eq.s32.totalorder %s16, 6
      %p76 = por %p74, %p75
      %p77 = scmp.ne.s32.totalorder %s68, %s69
      %p78 = scmp.eq.s32.totalorder %s16, 0
      %p79 = por %p77, %p78
      %p80 = scmp.ne.s32.totalorder %s68, %s69
      %p81 = scmp.eq.s32.totalorder %s17, 6
      %p82 = por %p80, %p81
      %p84 = scmp.ne.s32.totalorder %s69, %s83
      %p85 = scmp.eq.s32.totalorder %s17, 0
      %p86 = por %p84, %p85
      %s87 = ssub.s32 %s11, %s18
      %p88 = scmp.eq.s32.totalorder %s87, 0
      %s90 = sadd.s32 %s89, 1
      %s91 = scalar_select %p88, %s89, %s90
      %p94 = pneg %p88
      %p95 = scmp.eq.s32.totalorder %s11, 6
      %p96 = por %p94, %p95
      %p97 = scmp.ne.s32.totalorder %s89, %s92
      %p98 = scmp.eq.s32.totalorder %s11, 0
      %p99 = por %p97, %p98
      %p100 = scmp.ne.s32.totalorder %s89, %s92
      %p101 = scmp.eq.s32.totalorder %s16, 6
      %p102 = por %p100, %p101
      %p103 = scmp.ne.s32.totalorder %s92, %s93
      %p104 = scmp.eq.s32.totalorder %s16, 0
      %p105 = por %p103, %p104
      %p106 = scmp.ne.s32.totalorder %s92, %s93
      %p107 = scmp.eq.s32.totalorder %s17, 6
      %p108 = por %p106, %p107
      %p110 = scmp.ne.s32.totalorder %s93, %s109
      %p111 = scmp.eq.s32.totalorder %s17, 0
      %p112 = por %p110, %p111
      %p113 = scmp.le.s32.totalorder 1, %s11
      %p114 = scmp.lt.s32.totalorder %s11, 8
      %p115 = pnand %p113, %p114
      %p116 = pneg %p115
      // Predicated region
      $region9: #{mnist_classifier_forward.3} parent=5 // pred_check
        _
      $region10: #{mnist_classifier_forward.3} parent=5 // pred_check_branch
        %118 = sbr.rel (%p115) target = $region12
      $region11: #{mnist_classifier_forward.3} parent=5 // pred_region
        %s119 = ssub.s32 %s11, 1
        // Predicated region
        $region13: #{mnist_classifier_forward.3} parent=11 // pred_check
          %p120 = pneg %p58
        $region14: #{mnist_classifier_forward.3} parent=11 // pred_check_branch
          %122 = sbr.rel (%p120) target = $region16
        $region15: #{mnist_classifier_forward.3} parent=11 // pred_region
          %s124 = ssub.s32 128, 128
          %125 = vsyncadd [#allocation3], %s124
          %s126 = sshll.u32 [#allocation2], 4
          %s127 = int_to_ptr.vmem [resolvable:$true] %s126
          %132 = dma.hbm_to_vmem [thread:$0]  %s1, 128, %s127, [#allocation3], 64, 64, 4
        $region16: #{mnist_classifier_forward.3} parent=11 // pred_fallthru
          _
        // Predicated region
        $region17: #{mnist_classifier_forward.3} parent=11 // pred_check
          %p133 = pneg %p79
        $region18: #{mnist_classifier_forward.3} parent=11 // pred_check_branch
          %135 = sbr.rel (%p133) target = $region20
        $region19: #{mnist_classifier_forward.3} parent=11 // pred_region
          %s137 = ssub.s32 16, 16
          %138 = vsyncadd [#allocation5], %s137
          %s140 = sshll.u32 [#allocation4], 4
          %s141 = int_to_ptr.vmem [resolvable:$true] %s140
          %143 = dma.hbm_to_vmem [thread:$0]  %s2, 16, %s141, [#allocation5]
        $region20: #{mnist_classifier_forward.3} parent=11 // pred_fallthru
          _
      $region12: #{mnist_classifier_forward.3} parent=5 // pred_fallthru
        _
      %p144 = scmp.lt.s32.totalorder %s11, 7
      // Predicated region
      $region21: #{mnist_classifier_forward.3} parent=5 // pred_check
        %p145 = pneg %p144
      $region22: #{mnist_classifier_forward.3} parent=5 // pred_check_branch
        %147 = sbr.rel (%p145) target = $region24
      $region23: #{mnist_classifier_forward.3} parent=5 // pred_region
        // Predicated region
        $region25: #{mnist_classifier_forward.3} parent=23 // pred_check
          %p148 = pneg %p31
        $region26: #{mnist_classifier_forward.3} parent=23 // pred_check_branch
          %150 = sbr.rel (%p148) target = $region28
        $region27: #{mnist_classifier_forward.3} parent=23 // pred_region
          %s151 = smul.u32 28, %s11
          %p152 = scmp.lt.s32.totalorder %s151, 195
          %s153 = scalar_select %p152, %s151, 195
          %s154 = smul.addr %s153, 4
          %s155 = scalar_lea.vmem %s0, %s154
          %s156 = smul.u32 28, %s11
        $region28: #{mnist_classifier_forward.3} parent=23 // pred_fallthru
          _
      $region24: #{mnist_classifier_forward.3} parent=5 // pred_fallthru
        _
      %p157 = scmp.le.s32.totalorder 1, %s11
      %p158 = scmp.lt.s32.totalorder %s11, 8
      %p159 = pnand %p157, %p158
      %p160 = pneg %p159
      // Predicated region
      $region29: #{mnist_classifier_forward.3} parent=5 // pred_check
        _
      $region30: #{mnist_classifier_forward.3} parent=5 // pred_check_branch
        %162 = sbr.rel (%p159) target = $region32
      $region31: #{mnist_classifier_forward.3} parent=5 // pred_region
        %s163 = ssub.s32 %s11, 1
        // Predicated region
        $region33: #{mnist_classifier_forward.3} parent=31 // pred_check
          %p164 = pneg %p58
        $region34: #{mnist_classifier_forward.3} parent=31 // pred_check_branch
          %166 = sbr.rel (%p164) target = $region36
        $region35: #{mnist_classifier_forward.3} parent=31 // pred_region
          %167 = dma.done [#allocation3], 128
        $region36: #{mnist_classifier_forward.3} parent=31 // pred_fallthru
          _
        // Predicated region
        $region37: #{mnist_classifier_forward.3} parent=31 // pred_check
          %p168 = pneg %p79
        $region38: #{mnist_classifier_forward.3} parent=31 // pred_check_branch
          %170 = sbr.rel (%p168) target = $region40
        $region39: #{mnist_classifier_forward.3} parent=31 // pred_region
          %171 = dma.done [#allocation5], 16
        $region40: #{mnist_classifier_forward.3} parent=31 // pred_fallthru
          _
        %s172 = smul.u32 28, %s16
        %p173 = scmp.lt.s32.totalorder %s172, 195
        %s174 = scalar_select %p173, %s172, 195
        %s175 = smul.addr %s174, 4
        %s176 = scalar_lea.vmem %s0, %s175
        %p177 = pneg %p37
        %p178 = pneg %p34
        %p179 = pneg %p58
        %p180 = pneg %p55
        %p181 = pneg %p79
        %p182 = pneg %p76
        %p183 = pneg %p105
        %p184 = pneg %p102
        %s185 = smul.u32 28, %s16
        %p186 = scmp.lt.s32.totalorder %s185, 195
        %s187 = scalar_select %p186, %s185, 195
        %s188 = smul.addr %s187, 4
        %s189 = scalar_lea.vmem %s3, %s188
        %s190 = smul.u32 28, %s16
        %p191 = scmp.lt.s32.totalorder %s190, 195
        %s192 = scalar_select %p191, %s190, 195
        %s193 = smul.addr %s192, 4
        %s194 = scalar_lea.vmem %s0, %s193
        %s195 = smul.u32 28, %s16
        %s196 = smul.u32 28, %s16
        %p197 = scmp.lt.s32.totalorder %s196, 195
        %s198 = scalar_select %p197, %s196, 195
        %s199 = smul.addr %s198, 4
        %s200 = scalar_lea.vmem %s3, %s199
        %s201 = smul.u32 28, %s16
        %v203 = vld [vmem:[%s194] sm:$0xf]
        %v204 = vld [vmem:[%s194 + $0x4] sm:$0xf]
        %v205 = vld [vmem:[%s194 + $0x8] sm:$0xf]
        %v206 = vld [vmem:[%s194 + $0xc] sm:$0xf]
        %v207 = vld [vmem:[%s194 + $0x10] sm:$0xf]
        %v208 = vld [vmem:[%s194 + $0x14] sm:$0xf]
        %v209 = vld [vmem:[%s194 + $0x18] sm:$0xf]
        %v210 = vld [vmem:[%s194 + $0x1c] sm:$0xf]
        %v211 = vld [vmem:[%s194 + $0x20] sm:$0xf]
        %v212 = vld [vmem:[%s194 + $0x24] sm:$0xf]
        %v213 = vld [vmem:[%s194 + $0x28] sm:$0xf]
        %v214 = vld [vmem:[%s194 + $0x2c] sm:$0xf]
        %v215 = vld [vmem:[%s194 + $0x30] sm:$0xf]
        %v216 = vld [vmem:[%s194 + $0x34] sm:$0xf]
        %v217 = vld [vmem:[%s194 + $0x38] sm:$0xf]
        %v218 = vld [vmem:[%s194 + $0x3c] sm:$0xf]
        %v219 = vld [vmem:[%s194 + $0x40] sm:$0xf]
        %v220 = vld [vmem:[%s194 + $0x44] sm:$0xf]
        %v221 = vld [vmem:[%s194 + $0x48] sm:$0xf]
        %v222 = vld [vmem:[%s194 + $0x4c] sm:$0xf]
        %v223 = vld [vmem:[%s194 + $0x50] sm:$0xf]
        %v224 = vld [vmem:[%s194 + $0x54] sm:$0xf]
        %v225 = vld [vmem:[%s194 + $0x58] sm:$0xf]
        %v226 = vld [vmem:[%s194 + $0x5c] sm:$0xf]
        %v227 = vld [vmem:[%s194 + $0x60] sm:$0xf]
        %v228 = vld [vmem:[%s194 + $0x64] sm:$0xf]
        %v229 = vld [vmem:[%s194 + $0x68] sm:$0xf]
        %v230 = vld [vmem:[%s194 + $0x6c] sm:$0xf]
        %v231 = vld [vmem:[#allocation2] sm:$0xf]
        %v232 = vld [vmem:[#allocation2 + $0x4] sm:$0x1]
        %v233 = vld [vmem:[#allocation4] sm:$0x1]
        %v235 = vlaneseq
        %v236 = vshrl.u32 %v235, 7
        %v237 = vsub.s32 0, %v236
        %v238 = vrot.slane %v233, %v237
        %v268 = vunpack.c.l.b16 %v203
        %v269 = vunpack.c.l.b16 %v204
        %v270 = vunpack.c.l.b16 %v205
        %v271 = vunpack.c.l.b16 %v206
        %v272 = vunpack.c.l.b16 %v207
        %v273 = vunpack.c.l.b16 %v208
        %v274 = vunpack.c.l.b16 %v209
        %v275 = vunpack.c.l.b16 %v210
        %v276 = vunpack.c.l.b16 %v211
        %v277 = vunpack.c.l.b16 %v212
        %v278 = vunpack.c.l.b16 %v213
        %v279 = vunpack.c.l.b16 %v214
        %v280 = vunpack.c.l.b16 %v215
        %v281 = vunpack.c.l.b16 %v216
        %v282 = vunpack.c.l.b16 %v217
        %v283 = vunpack.c.l.b16 %v218
        %v284 = vunpack.c.l.b16 %v219
        %v285 = vunpack.c.l.b16 %v220
        %v286 = vunpack.c.l.b16 %v221
        %v287 = vunpack.c.l.b16 %v222
        %v288 = vunpack.c.l.b16 %v223
        %v289 = vunpack.c.l.b16 %v224
        %v290 = vunpack.c.l.b16 %v225
        %v291 = vunpack.c.l.b16 %v226
        %v292 = vunpack.c.l.b16 %v227
        %v293 = vunpack.c.l.b16 %v228
        %v294 = vunpack.c.l.b16 %v229
        %v295 = vunpack.c.l.b16 %v230
        %v296 = vpack.c.b16 %v269, %v268
        %v297 = vpack.c.b16 %v271, %v270
        %v298 = vpack.c.b16 %v273, %v272
        %v299 = vpack.c.b16 %v275, %v274
        %v300 = vpack.c.b16 %v277, %v276
        %v301 = vpack.c.b16 %v279, %v278
        %v302 = vpack.c.b16 %v281, %v280
        %v303 = vpack.c.b16 %v283, %v282
        %v304 = vpack.c.b16 %v285, %v284
        %v305 = vpack.c.b16 %v287, %v286
        %v306 = vpack.c.b16 %v289, %v288
        %v307 = vpack.c.b16 %v291, %v290
        %v308 = vpack.c.b16 %v293, %v292
        %v309 = vpack.c.b16 %v295, %v294
        %v312 = vunpack.c.l.b16 %v231
        %v313 = vunpack.c.l.b16 %v232
        %v314 = vpack.c.b16 %v313, %v312
        %vm315 = vcmask 72704
        %v317 = vsel %vm315, %v296, 0
        %v320 = vsel %vm315, %v297, 0
        %v323 = vsel %vm315, %v298, 0
        %v326 = vsel %vm315, %v299, 0
        %v329 = vsel %vm315, %v300, 0
        %v332 = vsel %vm315, %v301, 0
        %v335 = vsel %vm315, %v302, 0
        %v338 = vsel %vm315, %v303, 0
        %v341 = vsel %vm315, %v304, 0
        %v344 = vsel %vm315, %v305, 0
        %v347 = vsel %vm315, %v306, 0
        %v350 = vsel %vm315, %v307, 0
        %v353 = vsel %vm315, %v308, 0
        %v356 = vsel %vm315, %v309, 0
        %vm358 = vcmask 1043456
        %vm359 = vcmask 1044480
        %v360 = vsel %vm358, 4294967295, 65535
        %v361 = vsel %vm359, %v360, 0
        %v363 = vand.u32 %v314, %v361
        %365 = vmatprep.subr.bf16.mxu0 0
        %366 = vmatpush1.bf16.msra.mxu0 %v363
        %367 = vmatprep.subr.bf16.mxu0 0
        %368 = vmatpush1.bf16.msra.mxu0 0
        %369 = vmatprep.subr.bf16.mxu0 0
        %370 = vmatpush1.bf16.msra.mxu0 0
        %371 = vmatprep.subr.bf16.mxu0 0
        %372 = vmatpush1.bf16.msra.mxu0 0
        %373 = vmatprep.subr.bf16.mxu0 0
        %374 = vmatpush1.bf16.msra.mxu0 0
        %375 = vmatprep.subr.bf16.mxu0 0
        %376 = vmatpush1.bf16.msra.mxu0 0
        %377 = vmatprep.subr.bf16.mxu0 0
        %378 = vmatpush1.bf16.msra.mxu0 0
        %379 = vmatprep.subr.bf16.mxu0 0
        %380 = vmatpush1.bf16.msra.mxu0 0
        %381 = vmatprep.subr.bf16.mxu0 0
        %382 = vmatpush1.bf16.msra.mxu0 0
        %383 = vmatprep.subr.bf16.mxu0 0
        %384 = vmatpush1.bf16.msra.mxu0 0
        %385 = vmatprep.subr.bf16.mxu0 0
        %386 = vmatpush1.bf16.msra.mxu0 0
        %387 = vmatprep.subr.bf16.mxu0 0
        %388 = vmatpush1.bf16.msra.mxu0 0
        %389 = vmatprep.subr.bf16.mxu0 0
        %390 = vmatpush1.bf16.msra.mxu0 0
        %391 = vmatprep.subr.bf16.mxu0 0
        %392 = vmatpush1.bf16.msra.mxu0 0
        %393 = vmatprep.subr.bf16.mxu0 0
        %394 = vmatpush1.bf16.msra.mxu0 0
        %395 = vmatprep.subr.bf16.mxu0 0
        %396 = vmatpush1.bf16.msra.mxu0 0
        %397 = vmatprep.mubr.bf16.mxu0 0
        %398 = vmatmul.mubr.bf16.gmra.mrb[0].mxu0 %v317
        %v399 = vpop.f32.mrb[0].mxu0
        %v400 = vadd.f32 %v238, %v399
        %v401 = vpop.f32.mrb[0].mxu0
        %v402 = vpop.f32.mrb[0].mxu0
        %v403 = vadd.f32 %v238, %v402
        %v404 = vpop.f32.mrb[0].mxu0
        %405 = vmatprep.mubr.bf16.mxu0 0
        %406 = vmatmul.mubr.bf16.gmra.mrb[0].mxu0 %v320
        %v407 = vpop.f32.mrb[0].mxu0
        %v408 = vadd.f32 %v238, %v407
        %v409 = vpop.f32.mrb[0].mxu0
        %v410 = vpop.f32.mrb[0].mxu0
        %v411 = vadd.f32 %v238, %v410
        %v412 = vpop.f32.mrb[0].mxu0
        %413 = vmatprep.mubr.bf16.mxu0 0
        %414 = vmatmul.mubr.bf16.gmra.mrb[0].mxu0 %v323
        %v415 = vpop.f32.mrb[0].mxu0
        %v416 = vadd.f32 %v238, %v415
        %v417 = vpop.f32.mrb[0].mxu0
        %v418 = vpop.f32.mrb[0].mxu0
        %v419 = vadd.f32 %v238, %v418
        %v420 = vpop.f32.mrb[0].mxu0
        %421 = vmatprep.mubr.bf16.mxu0 0
        %422 = vmatmul.mubr.bf16.gmra.mrb[0].mxu0 %v326
        %v423 = vpop.f32.mrb[0].mxu0
        %v424 = vadd.f32 %v238, %v423
        %v425 = vpop.f32.mrb[0].mxu0
        %v426 = vpop.f32.mrb[0].mxu0
        %v427 = vadd.f32 %v238, %v426
        %v428 = vpop.f32.mrb[0].mxu0
        %429 = vmatprep.mubr.bf16.mxu0 0
        %430 = vmatmul.mubr.bf16.gmra.mrb[0].mxu0 %v329
        %v431 = vpop.f32.mrb[0].mxu0
        %v432 = vadd.f32 %v238, %v431
        %v433 = vpop.f32.mrb[0].mxu0
        %v434 = vpop.f32.mrb[0].mxu0
        %v435 = vadd.f32 %v238, %v434
        %v436 = vpop.f32.mrb[0].mxu0
        %437 = vmatprep.mubr.bf16.mxu0 0
        %438 = vmatmul.mubr.bf16.gmra.mrb[0].mxu0 %v332
        %v439 = vpop.f32.mrb[0].mxu0
        %v440 = vadd.f32 %v238, %v439
        %v441 = vpop.f32.mrb[0].mxu0
        %v442 = vpop.f32.mrb[0].mxu0
        %v443 = vadd.f32 %v238, %v442
        %v444 = vpop.f32.mrb[0].mxu0
        %445 = vmatprep.mubr.bf16.mxu0 0
        %446 = vmatmul.mubr.bf16.gmra.mrb[0].mxu0 %v335
        %v447 = vpop.f32.mrb[0].mxu0
        %v448 = vadd.f32 %v238, %v447
        %v449 = vpop.f32.mrb[0].mxu0
        %v450 = vpop.f32.mrb[0].mxu0
        %v451 = vadd.f32 %v238, %v450
        %v452 = vpop.f32.mrb[0].mxu0
        %453 = vmatprep.mubr.bf16.mxu0 0
        %454 = vmatmul.mubr.bf16.gmra.mrb[0].mxu0 %v338
        %v455 = vpop.f32.mrb[0].mxu0
        %v456 = vadd.f32 %v238, %v455
        %v457 = vpop.f32.mrb[0].mxu0
        %v458 = vpop.f32.mrb[0].mxu0
        %v459 = vadd.f32 %v238, %v458
        %v460 = vpop.f32.mrb[0].mxu0
        %461 = vmatprep.mubr.bf16.mxu0 0
        %462 = vmatmul.mubr.bf16.gmra.mrb[0].mxu0 %v341
        %v463 = vpop.f32.mrb[0].mxu0
        %v464 = vadd.f32 %v238, %v463
        %v465 = vpop.f32.mrb[0].mxu0
        %v466 = vpop.f32.mrb[0].mxu0
        %v467 = vadd.f32 %v238, %v466
        %v468 = vpop.f32.mrb[0].mxu0
        %469 = vmatprep.mubr.bf16.mxu0 0
        %470 = vmatmul.mubr.bf16.gmra.mrb[0].mxu0 %v344
        %v471 = vpop.f32.mrb[0].mxu0
        %v472 = vadd.f32 %v238, %v471
        %v473 = vpop.f32.mrb[0].mxu0
        %v474 = vpop.f32.mrb[0].mxu0
        %v475 = vadd.f32 %v238, %v474
        %v476 = vpop.f32.mrb[0].mxu0
        %477 = vmatprep.mubr.bf16.mxu0 0
        %478 = vmatmul.mubr.bf16.gmra.mrb[0].mxu0 %v347
        %v479 = vpop.f32.mrb[0].mxu0
        %v480 = vadd.f32 %v238, %v479
        %v481 = vpop.f32.mrb[0].mxu0
        %v482 = vpop.f32.mrb[0].mxu0
        %v483 = vadd.f32 %v238, %v482
        %v484 = vpop.f32.mrb[0].mxu0
        %485 = vmatprep.mubr.bf16.mxu0 0
        %486 = vmatmul.mubr.bf16.gmra.mrb[0].mxu0 %v350
        %v487 = vpop.f32.mrb[0].mxu0
        %v488 = vadd.f32 %v238, %v487
        %v489 = vpop.f32.mrb[0].mxu0
        %v490 = vpop.f32.mrb[0].mxu0
        %v491 = vadd.f32 %v238, %v490
        %v492 = vpop.f32.mrb[0].mxu0
        %493 = vmatprep.mubr.bf16.mxu0 0
        %494 = vmatmul.mubr.bf16.gmra.mrb[0].mxu0 %v353
        %v495 = vpop.f32.mrb[0].mxu0
        %v496 = vadd.f32 %v238, %v495
        %v497 = vpop.f32.mrb[0].mxu0
        %v498 = vpop.f32.mrb[0].mxu0
        %v499 = vadd.f32 %v238, %v498
        %v500 = vpop.f32.mrb[0].mxu0
        %501 = vmatprep.mubr.bf16.mxu0 0
        %502 = vmatmul.mubr.bf16.gmra.mrb[0].mxu0 %v356
        %v503 = vpop.f32.mrb[0].mxu0
        %v504 = vadd.f32 %v238, %v503
        %v505 = vpop.f32.mrb[0].mxu0
        %v506 = vpop.f32.mrb[0].mxu0
        %v507 = vadd.f32 %v238, %v506
        %v508 = vpop.f32.mrb[0].mxu0
        %509 = vdwg.mxu0
        %v510 = vmax.f32 %v400, 0.0
        %v511 = vmax.f32 %v403, 0.0
        %v512 = vmax.f32 %v408, 0.0
        %v513 = vmax.f32 %v411, 0.0
        %v514 = vmax.f32 %v416, 0.0
        %v515 = vmax.f32 %v419, 0.0
        %v516 = vmax.f32 %v424, 0.0
        %v517 = vmax.f32 %v427, 0.0
        %v518 = vmax.f32 %v432, 0.0
        %v519 = vmax.f32 %v435, 0.0
        %v520 = vmax.f32 %v440, 0.0
        %v521 = vmax.f32 %v443, 0.0
        %v522 = vmax.f32 %v448, 0.0
        %v523 = vmax.f32 %v451, 0.0
        %v524 = vmax.f32 %v456, 0.0
        %v525 = vmax.f32 %v459, 0.0
        %v526 = vmax.f32 %v464, 0.0
        %v527 = vmax.f32 %v467, 0.0
        %v528 = vmax.f32 %v472, 0.0
        %v529 = vmax.f32 %v475, 0.0
        %v530 = vmax.f32 %v480, 0.0
        %v531 = vmax.f32 %v483, 0.0
        %v532 = vmax.f32 %v488, 0.0
        %v533 = vmax.f32 %v491, 0.0
        %v534 = vmax.f32 %v496, 0.0
        %v535 = vmax.f32 %v499, 0.0
        %v536 = vmax.f32 %v504, 0.0
        %v537 = vmax.f32 %v507, 0.0
        %v538 = vpack.c.bf16 %v511, %v510
        %v539 = vpack.c.bf16 %v513, %v512
        %v540 = vpack.c.bf16 %v515, %v514
        %v541 = vpack.c.bf16 %v517, %v516
        %v542 = vpack.c.bf16 %v519, %v518
        %v543 = vpack.c.bf16 %v521, %v520
        %v544 = vpack.c.bf16 %v523, %v522
        %v545 = vpack.c.bf16 %v525, %v524
        %v546 = vpack.c.bf16 %v527, %v526
        %v547 = vpack.c.bf16 %v529, %v528
        %v548 = vpack.c.bf16 %v531, %v530
        %v549 = vpack.c.bf16 %v533, %v532
        %v550 = vpack.c.bf16 %v535, %v534
        %v551 = vpack.c.bf16 %v537, %v536
        %v566 = vunpack.c.l.b16 %v538
        %v567 = vunpack.c.h.b16 %v538
        %v568 = vunpack.c.l.b16 %v539
        %v569 = vunpack.c.h.b16 %v539
        %v570 = vunpack.c.l.b16 %v540
        %v571 = vunpack.c.h.b16 %v540
        %v572 = vunpack.c.l.b16 %v541
        %v573 = vunpack.c.h.b16 %v541
        %v574 = vunpack.c.l.b16 %v542
        %v575 = vunpack.c.h.b16 %v542
        %v576 = vunpack.c.l.b16 %v543
        %v577 = vunpack.c.h.b16 %v543
        %v578 = vunpack.c.l.b16 %v544
        %v579 = vunpack.c.h.b16 %v544
        %v580 = vunpack.c.l.b16 %v545
        %v581 = vunpack.c.h.b16 %v545
        %v582 = vunpack.c.l.b16 %v546
        %v583 = vunpack.c.h.b16 %v546
        %v584 = vunpack.c.l.b16 %v547
        %v585 = vunpack.c.h.b16 %v547
        %v586 = vunpack.c.l.b16 %v548
        %v587 = vunpack.c.h.b16 %v548
        %v588 = vunpack.c.l.b16 %v549
        %v589 = vunpack.c.h.b16 %v549
        %v590 = vunpack.c.l.b16 %v550
        %v591 = vunpack.c.h.b16 %v550
        %v592 = vunpack.c.l.b16 %v551
        %v593 = vunpack.c.h.b16 %v551
        %v594 = vpack.c.b16 %v566, %v566
        %v595 = vpack.c.b16 %v567, %v567
        %v596 = vpack.c.b16 %v568, %v568
        %v597 = vpack.c.b16 %v569, %v569
        %v598 = vpack.c.b16 %v570, %v570
        %v599 = vpack.c.b16 %v571, %v571
        %v600 = vpack.c.b16 %v572, %v572
        %v601 = vpack.c.b16 %v573, %v573
        %v602 = vpack.c.b16 %v574, %v574
        %v603 = vpack.c.b16 %v575, %v575
        %v604 = vpack.c.b16 %v576, %v576
        %v605 = vpack.c.b16 %v577, %v577
        %v606 = vpack.c.b16 %v578, %v578
        %v607 = vpack.c.b16 %v579, %v579
        %v608 = vpack.c.b16 %v580, %v580
        %v609 = vpack.c.b16 %v581, %v581
        %v610 = vpack.c.b16 %v582, %v582
        %v611 = vpack.c.b16 %v583, %v583
        %v612 = vpack.c.b16 %v584, %v584
        %v613 = vpack.c.b16 %v585, %v585
        %v614 = vpack.c.b16 %v586, %v586
        %v615 = vpack.c.b16 %v587, %v587
        %v616 = vpack.c.b16 %v588, %v588
        %v617 = vpack.c.b16 %v589, %v589
        %v618 = vpack.c.b16 %v590, %v590
        %v619 = vpack.c.b16 %v591, %v591
        %v620 = vpack.c.b16 %v592, %v592
        %v621 = vpack.c.b16 %v593, %v593
        %650 = vst [vmem:[%s200] sm:$0xf] %v594
        %651 = vst [vmem:[%s200 + $0x4] sm:$0xf] %v595
        %652 = vst [vmem:[%s200 + $0x8] sm:$0xf] %v596
        %653 = vst [vmem:[%s200 + $0xc] sm:$0xf] %v597
        %654 = vst [vmem:[%s200 + $0x10] sm:$0xf] %v598
        %655 = vst [vmem:[%s200 + $0x14] sm:$0xf] %v599
        %656 = vst [vmem:[%s200 + $0x18] sm:$0xf] %v600
        %657 = vst [vmem:[%s200 + $0x1c] sm:$0xf] %v601
        %658 = vst [vmem:[%s200 + $0x20] sm:$0xf] %v602
        %659 = vst [vmem:[%s200 + $0x24] sm:$0xf] %v603
        %660 = vst [vmem:[%s200 + $0x28] sm:$0xf] %v604
        %661 = vst [vmem:[%s200 + $0x2c] sm:$0xf] %v605
        %662 = vst [vmem:[%s200 + $0x30] sm:$0xf] %v606
        %663 = vst [vmem:[%s200 + $0x34] sm:$0xf] %v607
        %664 = vst [vmem:[%s200 + $0x38] sm:$0xf] %v608
        %665 = vst [vmem:[%s200 + $0x3c] sm:$0xf] %v609
        %666 = vst [vmem:[%s200 + $0x40] sm:$0xf] %v610
        %667 = vst [vmem:[%s200 + $0x44] sm:$0xf] %v611
        %668 = vst [vmem:[%s200 + $0x48] sm:$0xf] %v612
        %669 = vst [vmem:[%s200 + $0x4c] sm:$0xf] %v613
        %670 = vst [vmem:[%s200 + $0x50] sm:$0xf] %v614
        %671 = vst [vmem:[%s200 + $0x54] sm:$0xf] %v615
        %672 = vst [vmem:[%s200 + $0x58] sm:$0xf] %v616
        %673 = vst [vmem:[%s200 + $0x5c] sm:$0xf] %v617
        %674 = vst [vmem:[%s200 + $0x60] sm:$0xf] %v618
        %675 = vst [vmem:[%s200 + $0x64] sm:$0xf] %v619
        %676 = vst [vmem:[%s200 + $0x68] sm:$0xf] %v620
        %677 = vst [vmem:[%s200 + $0x6c] sm:$0xf] %v621
        %s678 = smul.u32 28, %s16
        %p679 = scmp.lt.s32.totalorder %s678, 195
        %s680 = scalar_select %p679, %s678, 195
        %s681 = smul.addr %s680, 4
        %s682 = scalar_lea.vmem %s3, %s681
        // Predicated region
        $region41: #{mnist_classifier_forward.3} parent=31 // pred_check
          %p683 = pneg %p102
        $region42: #{mnist_classifier_forward.3} parent=31 // pred_check_branch
          %685 = sbr.rel (%p683) target = $region44
        $region43: #{mnist_classifier_forward.3} parent=31 // pred_region
          %s686 = smul.u32 28, %s16
        $region44: #{mnist_classifier_forward.3} parent=31 // pred_fallthru
          _
      $region32: #{mnist_classifier_forward.3} parent=5 // pred_fallthru
        _
      %p687 = scmp.le.s32.totalorder 2, %s11
      // Predicated region
      $region45: #{mnist_classifier_forward.3} parent=5 // pred_check
        %p688 = pneg %p687
      $region46: #{mnist_classifier_forward.3} parent=5 // pred_check_branch
        %690 = sbr.rel (%p688) target = $region48
      $region47: #{mnist_classifier_forward.3} parent=5 // pred_region
        %s691 = ssub.s32 %s11, 2
        // Predicated region
        $region49: #{mnist_classifier_forward.3} parent=47 // pred_check
          %p692 = pneg %p108
        $region50: #{mnist_classifier_forward.3} parent=47 // pred_check_branch
          %694 = sbr.rel (%p692) target = $region52
        $region51: #{mnist_classifier_forward.3} parent=47 // pred_region
          %s695 = smul.u32 28, %s17
          %p696 = scmp.lt.s32.totalorder %s695, 195
          %s697 = scalar_select %p696, %s695, 195
          %s698 = smul.addr %s697, 4
          %s699 = scalar_lea.vmem %s3, %s698
        $region52: #{mnist_classifier_forward.3} parent=47 // pred_fallthru
          _
      $region48: #{mnist_classifier_forward.3} parent=5 // pred_fallthru
        _
    $region6: #{mnist_classifier_forward.3} parent=1 // loop_footer
      %s15 = sadd.s32 1, %s11
    $region7: #{mnist_classifier_forward.3} parent=1 // loop_footer_branch
      %10 = sbr.rel target = $region3
    $region8: #{mnist_classifier_forward.3} parent=1 // loop_exit
      _
    %700 = vsyncpa [#allocation3], 1
    %s701 = scalar_lea.sflag [#allocation3], 1
    %702 = vsyncpa %s701, 1
    %703 = vsyncpa [#allocation5], 1

// kernel: mnist_classifier_forward.4
$region0: #{mnist_classifier_forward.4}
  #allocation0 [shape = 'u32[]', space=smem, size = 0x4, offset = 0x4, fixed_abs, tag = 'smem constant byte address 0x4 - core index']
  #allocation1 [shape = 'u32[144,128]{1,0:T(1,128)}', space=vmem, size = 0x12000, scoped, tag = 'internal scratch']
  %s0 = inlined_call_operand.vmem [shape: bf16[392,288], index: 0, kind: input, shape index: {}]
  %s1 = inlined_call_operand.vmem [shape: bf16[288,128], index: 1, kind: input, shape index: {}]
  %s2 = inlined_call_operand.vmem [shape: f32[1,128], index: 2, kind: input, shape index: {}]
  %s3 = inlined_call_operand.vmem [shape: bf16[392,128], index: 3, kind: output, shape index: {}]
  %s4 = sld [smem:[#allocation0]]
  $region22: #{mnist_classifier_forward.4} parent=0
    _
  %s6 = ssub.s32 1, %s4
  %s7 = scalar_select 0, %s6, %s4
  // Predicated region
  $region2: #{mnist_classifier_forward.4} parent=0 // pred_check
    _
  $region3: #{mnist_classifier_forward.4} parent=0 // pred_check_branch
    %9 = sbr.rel (0) target = $region5
  $region4: #{mnist_classifier_forward.4} parent=0 // pred_region
    _
  $region5: #{mnist_classifier_forward.4} parent=0 // pred_fallthru
    _
  // Predicated region
  $region6: #{mnist_classifier_forward.4} parent=0 // pred_check
    _
  $region7: #{mnist_classifier_forward.4} parent=0 // pred_check_branch
    %11 = sbr.rel (0) target = $region9
  $region8: #{mnist_classifier_forward.4} parent=0 // pred_region
    _
  $region9: #{mnist_classifier_forward.4} parent=0 // pred_fallthru
    _
  // Predicated region
  $region10: #{mnist_classifier_forward.4} parent=0 // pred_check
    _
  $region11: #{mnist_classifier_forward.4} parent=0 // pred_check_branch
    %13 = sbr.rel (0) target = $region13
  $region12: #{mnist_classifier_forward.4} parent=0 // pred_region
    _
  $region13: #{mnist_classifier_forward.4} parent=0 // pred_fallthru
    _
  %v15 = vld [vmem:[%s0] sm:$0xff]
  %v16 = vld [vmem:[%s0 + $0x8] sm:$0xf]
  %v17 = vld [vmem:[%s0 + $0xc] sm:$0xff]
  %v18 = vld [vmem:[%s0 + $0x14] sm:$0xf]
  %v19 = vld [vmem:[%s0 + $0x18] sm:$0xff]
  %v20 = vld [vmem:[%s0 + $0x20] sm:$0xf]
  %v21 = vld [vmem:[%s0 + $0x24] sm:$0xff]
  %v22 = vld [vmem:[%s0 + $0x2c] sm:$0xf]
  %v23 = vld [vmem:[%s0 + $0x30] sm:$0xff]
  %v24 = vld [vmem:[%s0 + $0x38] sm:$0xf]
  %v25 = vld [vmem:[%s0 + $0x3c] sm:$0xff]
  %v26 = vld [vmem:[%s0 + $0x44] sm:$0xf]
  %v27 = vld [vmem:[%s0 + $0x48] sm:$0xff]
  %v28 = vld [vmem:[%s0 + $0x50] sm:$0xf]
  %v29 = vld [vmem:[%s0 + $0x54] sm:$0xff]
  %v30 = vld [vmem:[%s0 + $0x5c] sm:$0xf]
  %v31 = vld [vmem:[%s0 + $0x60] sm:$0xff]
  %v32 = vld [vmem:[%s0 + $0x68] sm:$0xf]
  %v33 = vld [vmem:[%s0 + $0x6c] sm:$0xff]
  %v34 = vld [vmem:[%s0 + $0x74] sm:$0xf]
  %v35 = vld [vmem:[%s0 + $0x78] sm:$0xff]
  %v36 = vld [vmem:[%s0 + $0x80] sm:$0xf]
  %v37 = vld [vmem:[%s0 + $0x84] sm:$0xff]
  %v38 = vld [vmem:[%s0 + $0x8c] sm:$0xf]
  %v39 = vld [vmem:[%s0 + $0x90] sm:$0xff]
  %v40 = vld [vmem:[%s0 + $0x98] sm:$0xf]
  %v41 = vld [vmem:[%s0 + $0x9c] sm:$0xff]
  %v42 = vld [vmem:[%s0 + $0xa4] sm:$0xf]
  %v43 = vld [vmem:[%s0 + $0xa8] sm:$0xff]
  %v44 = vld [vmem:[%s0 + $0xb0] sm:$0xf]
  %v45 = vld [vmem:[%s0 + $0xb4] sm:$0xff]
  %v46 = vld [vmem:[%s0 + $0xbc] sm:$0xf]
  %v47 = vld [vmem:[%s0 + $0xc0] sm:$0xff]
  %v48 = vld [vmem:[%s0 + $0xc8] sm:$0xf]
  %v49 = vld [vmem:[%s0 + $0xcc] sm:$0xff]
  %v50 = vld [vmem:[%s0 + $0xd4] sm:$0xf]
  %v51 = vld [vmem:[%s0 + $0xd8] sm:$0xff]
  %v52 = vld [vmem:[%s0 + $0xe0] sm:$0xf]
  %v53 = vld [vmem:[%s0 + $0xe4] sm:$0xff]
  %v54 = vld [vmem:[%s0 + $0xec] sm:$0xf]
  %v55 = vld [vmem:[%s0 + $0xf0] sm:$0xff]
  %v56 = vld [vmem:[%s0 + $0xf8] sm:$0xf]
  %v57 = vld [vmem:[%s0 + $0xfc] sm:$0xff]
  %v58 = vld [vmem:[%s0 + $0x104] sm:$0xf]
  %v59 = vld [vmem:[%s0 + $0x108] sm:$0xff]
  %v60 = vld [vmem:[%s0 + $0x110] sm:$0xf]
  %v61 = vld [vmem:[%s0 + $0x114] sm:$0xff]
  %v62 = vld [vmem:[%s0 + $0x11c] sm:$0xf]
  %v63 = vld [vmem:[%s0 + $0x120] sm:$0xff]
  %v64 = vld [vmem:[%s0 + $0x128] sm:$0xf]
  %v65 = vld [vmem:[%s0 + $0x12c] sm:$0xff]
  %v66 = vld [vmem:[%s0 + $0x134] sm:$0xf]
  %v67 = vld [vmem:[%s0 + $0x138] sm:$0xff]
  %v68 = vld [vmem:[%s0 + $0x140] sm:$0xf]
  %v69 = vld [vmem:[%s0 + $0x144] sm:$0xff]
  %v70 = vld [vmem:[%s0 + $0x14c] sm:$0xf]
  %v71 = vld [vmem:[%s0 + $0x150] sm:$0xff]
  %v72 = vld [vmem:[%s0 + $0x158] sm:$0xf]
  %v73 = vld [vmem:[%s0 + $0x15c] sm:$0xff]
  %v74 = vld [vmem:[%s0 + $0x164] sm:$0xf]
  %v75 = vld [vmem:[%s0 + $0x168] sm:$0xff]
  %v76 = vld [vmem:[%s0 + $0x170] sm:$0xf]
  %v77 = vld [vmem:[%s0 + $0x174] sm:$0xff]
  %v78 = vld [vmem:[%s0 + $0x17c] sm:$0xf]
  %v79 = vld [vmem:[%s0 + $0x180] sm:$0xff]
  %v80 = vld [vmem:[%s0 + $0x188] sm:$0xf]
  %v81 = vld [vmem:[%s0 + $0x18c] sm:$0xff]
  %v82 = vld [vmem:[%s0 + $0x194] sm:$0xf]
  %v83 = vld [vmem:[%s0 + $0x198] sm:$0xff]
  %v84 = vld [vmem:[%s0 + $0x1a0] sm:$0xf]
  %v85 = vld [vmem:[%s0 + $0x1a4] sm:$0xff]
  %v86 = vld [vmem:[%s0 + $0x1ac] sm:$0xf]
  %v87 = vld [vmem:[%s0 + $0x1b0] sm:$0xff]
  %v88 = vld [vmem:[%s0 + $0x1b8] sm:$0xf]
  %v89 = vld [vmem:[%s0 + $0x1bc] sm:$0xff]
  %v90 = vld [vmem:[%s0 + $0x1c4] sm:$0xf]
  %v91 = vld [vmem:[%s0 + $0x1c8] sm:$0xff]
  %v92 = vld [vmem:[%s0 + $0x1d0] sm:$0xf]
  %v93 = vld [vmem:[%s0 + $0x1d4] sm:$0xff]
  %v94 = vld [vmem:[%s0 + $0x1dc] sm:$0xf]
  %v95 = vld [vmem:[%s0 + $0x1e0] sm:$0xff]
  %v96 = vld [vmem:[%s0 + $0x1e8] sm:$0xf]
  %v97 = vld [vmem:[%s0 + $0x1ec] sm:$0xff]
  %v98 = vld [vmem:[%s0 + $0x1f4] sm:$0xf]
  %v99 = vld [vmem:[%s0 + $0x1f8] sm:$0xff]
  %v100 = vld [vmem:[%s0 + $0x200] sm:$0xf]
  %v101 = vld [vmem:[%s0 + $0x204] sm:$0xff]
  %v102 = vld [vmem:[%s0 + $0x20c] sm:$0xf]
  %v103 = vld [vmem:[%s0 + $0x210] sm:$0xff]
  %v104 = vld [vmem:[%s0 + $0x218] sm:$0xf]
  %v105 = vld [vmem:[%s0 + $0x21c] sm:$0xff]
  %v106 = vld [vmem:[%s0 + $0x224] sm:$0xf]
  %v107 = vld [vmem:[%s0 + $0x228] sm:$0xff]
  %v108 = vld [vmem:[%s0 + $0x230] sm:$0xf]
  %v109 = vld [vmem:[%s0 + $0x234] sm:$0xff]
  %v110 = vld [vmem:[%s0 + $0x23c] sm:$0xf]
  %v111 = vld [vmem:[%s0 + $0x240] sm:$0xff]
  %v112 = vld [vmem:[%s0 + $0x248] sm:$0xf]
  %v113 = vld [vmem:[%s1] sm:$0xf]
  %v114 = vld [vmem:[%s1 + $0x4] sm:$0xf]
  %v115 = vld [vmem:[%s1 + $0x8] sm:$0xf]
  %v116 = vld [vmem:[%s1 + $0xc] sm:$0xf]
  %v117 = vld [vmem:[%s1 + $0x10] sm:$0xf]
  %v118 = vld [vmem:[%s1 + $0x14] sm:$0xf]
  %v119 = vld [vmem:[%s1 + $0x18] sm:$0xf]
  %v120 = vld [vmem:[%s1 + $0x1c] sm:$0xf]
  %v121 = vld [vmem:[%s1 + $0x20] sm:$0xf]
  %v122 = vld [vmem:[%s1 + $0x24] sm:$0xf]
  %v123 = vld [vmem:[%s1 + $0x28] sm:$0xf]
  %v124 = vld [vmem:[%s1 + $0x2c] sm:$0xf]
  %v125 = vld [vmem:[%s1 + $0x30] sm:$0xf]
  %v126 = vld [vmem:[%s1 + $0x34] sm:$0xf]
  %v127 = vld [vmem:[%s1 + $0x38] sm:$0xf]
  %v128 = vld [vmem:[%s1 + $0x3c] sm:$0xf]
  %v129 = vld [vmem:[%s1 + $0x40] sm:$0xf]
  %v130 = vld [vmem:[%s1 + $0x44] sm:$0xf]
  %v131 = vld [vmem:[%s1 + $0x48] sm:$0xf]
  %v132 = vld [vmem:[%s1 + $0x4c] sm:$0xf]
  %v133 = vld [vmem:[%s1 + $0x50] sm:$0xf]
  %v134 = vld [vmem:[%s1 + $0x54] sm:$0xf]
  %v135 = vld [vmem:[%s1 + $0x58] sm:$0xf]
  %v136 = vld [vmem:[%s1 + $0x5c] sm:$0xf]
  %v137 = vld [vmem:[%s1 + $0x60] sm:$0xf]
  %v138 = vld [vmem:[%s1 + $0x64] sm:$0xf]
  %v139 = vld [vmem:[%s1 + $0x68] sm:$0xf]
  %v140 = vld [vmem:[%s1 + $0x6c] sm:$0xf]
  %v141 = vld [vmem:[%s1 + $0x70] sm:$0xf]
  %v142 = vld [vmem:[%s1 + $0x74] sm:$0xf]
  %v143 = vld [vmem:[%s1 + $0x78] sm:$0xf]
  %v144 = vld [vmem:[%s1 + $0x7c] sm:$0xf]
  %v145 = vld [vmem:[%s1 + $0x80] sm:$0xf]
  %v146 = vld [vmem:[%s1 + $0x84] sm:$0xf]
  %v147 = vld [vmem:[%s1 + $0x88] sm:$0xf]
  %v148 = vld [vmem:[%s1 + $0x8c] sm:$0xf]
  %v149 = vld [vmem:[%s2] sm:$0x1]
  %v151 = vlaneseq
  %v152 = vshrl.u32 %v151, 7
  %v153 = vsub.s32 0, %v152
  %v154 = vrot.slane %v149, %v153
  %v254 = vunpack.c.l.b16 %v15
  %v255 = vunpack.c.h.b16 %v15
  %v256 = vunpack.c.l.b16 %v16
  %v257 = vunpack.c.l.b16 %v17
  %v258 = vunpack.c.h.b16 %v17
  %v259 = vunpack.c.l.b16 %v18
  %v260 = vunpack.c.l.b16 %v19
  %v261 = vunpack.c.h.b16 %v19
  %v262 = vunpack.c.l.b16 %v20
  %v263 = vunpack.c.l.b16 %v21
  %v264 = vunpack.c.h.b16 %v21
  %v265 = vunpack.c.l.b16 %v22
  %v266 = vunpack.c.l.b16 %v23
  %v267 = vunpack.c.h.b16 %v23
  %v268 = vunpack.c.l.b16 %v24
  %v269 = vunpack.c.l.b16 %v25
  %v270 = vunpack.c.h.b16 %v25
  %v271 = vunpack.c.l.b16 %v26
  %v272 = vunpack.c.l.b16 %v27
  %v273 = vunpack.c.h.b16 %v27
  %v274 = vunpack.c.l.b16 %v28
  %v275 = vunpack.c.l.b16 %v29
  %v276 = vunpack.c.h.b16 %v29
  %v277 = vunpack.c.l.b16 %v30
  %v278 = vunpack.c.l.b16 %v31
  %v279 = vunpack.c.h.b16 %v31
  %v280 = vunpack.c.l.b16 %v32
  %v281 = vunpack.c.l.b16 %v33
  %v282 = vunpack.c.h.b16 %v33
  %v283 = vunpack.c.l.b16 %v34
  %v284 = vunpack.c.l.b16 %v35
  %v285 = vunpack.c.h.b16 %v35
  %v286 = vunpack.c.l.b16 %v36
  %v287 = vunpack.c.l.b16 %v37
  %v288 = vunpack.c.h.b16 %v37
  %v289 = vunpack.c.l.b16 %v38
  %v290 = vunpack.c.l.b16 %v39
  %v291 = vunpack.c.h.b16 %v39
  %v292 = vunpack.c.l.b16 %v40
  %v293 = vunpack.c.l.b16 %v41
  %v294 = vunpack.c.h.b16 %v41
  %v295 = vunpack.c.l.b16 %v42
  %v296 = vunpack.c.l.b16 %v43
  %v297 = vunpack.c.h.b16 %v43
  %v298 = vunpack.c.l.b16 %v44
  %v299 = vunpack.c.l.b16 %v45
  %v300 = vunpack.c.h.b16 %v45
  %v301 = vunpack.c.l.b16 %v46
  %v302 = vunpack.c.l.b16 %v47
  %v303 = vunpack.c.h.b16 %v47
  %v304 = vunpack.c.l.b16 %v48
  %v305 = vunpack.c.l.b16 %v49
  %v306 = vunpack.c.h.b16 %v49
  %v307 = vunpack.c.l.b16 %v50
  %v308 = vunpack.c.l.b16 %v51
  %v309 = vunpack.c.h.b16 %v51
  %v310 = vunpack.c.l.b16 %v52
  %v311 = vunpack.c.l.b16 %v53
  %v312 = vunpack.c.h.b16 %v53
  %v313 = vunpack.c.l.b16 %v54
  %v314 = vunpack.c.l.b16 %v55
  %v315 = vunpack.c.h.b16 %v55
  %v316 = vunpack.c.l.b16 %v56
  %v317 = vunpack.c.l.b16 %v57
  %v318 = vunpack.c.h.b16 %v57
  %v319 = vunpack.c.l.b16 %v58
  %v320 = vunpack.c.l.b16 %v59
  %v321 = vunpack.c.h.b16 %v59
  %v322 = vunpack.c.l.b16 %v60
  %v323 = vunpack.c.l.b16 %v61
  %v324 = vunpack.c.h.b16 %v61
  %v325 = vunpack.c.l.b16 %v62
  %v326 = vunpack.c.l.b16 %v63
  %v327 = vunpack.c.h.b16 %v63
  %v328 = vunpack.c.l.b16 %v64
  %v329 = vunpack.c.l.b16 %v65
  %v330 = vunpack.c.h.b16 %v65
  %v331 = vunpack.c.l.b16 %v66
  %v332 = vunpack.c.l.b16 %v67
  %v333 = vunpack.c.h.b16 %v67
  %v334 = vunpack.c.l.b16 %v68
  %v335 = vunpack.c.l.b16 %v69
  %v336 = vunpack.c.h.b16 %v69
  %v337 = vunpack.c.l.b16 %v70
  %v338 = vunpack.c.l.b16 %v71
  %v339 = vunpack.c.h.b16 %v71
  %v340 = vunpack.c.l.b16 %v72
  %v341 = vunpack.c.l.b16 %v73
  %v342 = vunpack.c.h.b16 %v73
  %v343 = vunpack.c.l.b16 %v74
  %v344 = vunpack.c.l.b16 %v75
  %v345 = vunpack.c.h.b16 %v75
  %v346 = vunpack.c.l.b16 %v76
  %v347 = vunpack.c.l.b16 %v77
  %v348 = vunpack.c.h.b16 %v77
  %v349 = vunpack.c.l.b16 %v78
  %v350 = vunpack.c.l.b16 %v79
  %v351 = vunpack.c.h.b16 %v79
  %v352 = vunpack.c.l.b16 %v80
  %v353 = vunpack.c.l.b16 %v81
  %v354 = vunpack.c.h.b16 %v81
  %v355 = vunpack.c.l.b16 %v82
  %v356 = vunpack.c.l.b16 %v83
  %v357 = vunpack.c.h.b16 %v83
  %v358 = vunpack.c.l.b16 %v84
  %v359 = vunpack.c.l.b16 %v85
  %v360 = vunpack.c.h.b16 %v85
  %v361 = vunpack.c.l.b16 %v86
  %v362 = vunpack.c.l.b16 %v87
  %v363 = vunpack.c.h.b16 %v87
  %v364 = vunpack.c.l.b16 %v88
  %v365 = vunpack.c.l.b16 %v89
  %v366 = vunpack.c.h.b16 %v89
  %v367 = vunpack.c.l.b16 %v90
  %v368 = vunpack.c.l.b16 %v91
  %v369 = vunpack.c.h.b16 %v91
  %v370 = vunpack.c.l.b16 %v92
  %v371 = vunpack.c.l.b16 %v93
  %v372 = vunpack.c.h.b16 %v93
  %v373 = vunpack.c.l.b16 %v94
  %v374 = vunpack.c.l.b16 %v95
  %v375 = vunpack.c.h.b16 %v95
  %v376 = vunpack.c.l.b16 %v96
  %v377 = vunpack.c.l.b16 %v97
  %v378 = vunpack.c.h.b16 %v97
  %v379 = vunpack.c.l.b16 %v98
  %v380 = vunpack.c.l.b16 %v99
  %v381 = vunpack.c.h.b16 %v99
  %v382 = vunpack.c.l.b16 %v100
  %v383 = vunpack.c.l.b16 %v101
  %v384 = vunpack.c.h.b16 %v101
  %v385 = vunpack.c.l.b16 %v102
  %v386 = vunpack.c.l.b16 %v103
  %v387 = vunpack.c.h.b16 %v103
  %v388 = vunpack.c.l.b16 %v104
  %v389 = vunpack.c.l.b16 %v105
  %v390 = vunpack.c.h.b16 %v105
  %v391 = vunpack.c.l.b16 %v106
  %v392 = vunpack.c.l.b16 %v107
  %v393 = vunpack.c.h.b16 %v107
  %v394 = vunpack.c.l.b16 %v108
  %v395 = vunpack.c.l.b16 %v109
  %v396 = vunpack.c.h.b16 %v109
  %v397 = vunpack.c.l.b16 %v110
  %v398 = vunpack.c.l.b16 %v111
  %v399 = vunpack.c.h.b16 %v111
  %v400 = vunpack.c.l.b16 %v112
  %v401 = vpack.c.b16 %v257, %v254
  %v402 = vpack.c.b16 %v258, %v255
  %v403 = vpack.c.b16 %v259, %v256
  %v404 = vpack.c.b16 %v263, %v260
  %v405 = vpack.c.b16 %v264, %v261
  %v406 = vpack.c.b16 %v265, %v262
  %v407 = vpack.c.b16 %v269, %v266
  %v408 = vpack.c.b16 %v270, %v267
  %v409 = vpack.c.b16 %v271, %v268
  %v410 = vpack.c.b16 %v275, %v272
  %v411 = vpack.c.b16 %v276, %v273
  %v412 = vpack.c.b16 %v277, %v274
  %v413 = vpack.c.b16 %v281, %v278
  %v414 = vpack.c.b16 %v282, %v279
  %v415 = vpack.c.b16 %v283, %v280
  %v416 = vpack.c.b16 %v287, %v284
  %v417 = vpack.c.b16 %v288, %v285
  %v418 = vpack.c.b16 %v289, %v286
  %v419 = vpack.c.b16 %v293, %v290
  %v420 = vpack.c.b16 %v294, %v291
  %v421 = vpack.c.b16 %v295, %v292
  %v422 = vpack.c.b16 %v299, %v296
  %v423 = vpack.c.b16 %v300, %v297
  %v424 = vpack.c.b16 %v301, %v298
  %v425 = vpack.c.b16 %v305, %v302
  %v426 = vpack.c.b16 %v306, %v303
  %v427 = vpack.c.b16 %v307, %v304
  %v428 = vpack.c.b16 %v311, %v308
  %v429 = vpack.c.b16 %v312, %v309
  %v430 = vpack.c.b16 %v313, %v310
  %v431 = vpack.c.b16 %v317, %v314
  %v432 = vpack.c.b16 %v318, %v315
  %v433 = vpack.c.b16 %v319, %v316
  %v434 = vpack.c.b16 %v323, %v320
  %v435 = vpack.c.b16 %v324, %v321
  %v436 = vpack.c.b16 %v325, %v322
  %v437 = vpack.c.b16 %v329, %v326
  %v438 = vpack.c.b16 %v330, %v327
  %v439 = vpack.c.b16 %v331, %v328
  %v440 = vpack.c.b16 %v335, %v332
  %v441 = vpack.c.b16 %v336, %v333
  %v442 = vpack.c.b16 %v337, %v334
  %v443 = vpack.c.b16 %v341, %v338
  %v444 = vpack.c.b16 %v342, %v339
  %v445 = vpack.c.b16 %v343, %v340
  %v446 = vpack.c.b16 %v347, %v344
  %v447 = vpack.c.b16 %v348, %v345
  %v448 = vpack.c.b16 %v349, %v346
  %v449 = vpack.c.b16 %v353, %v350
  %v450 = vpack.c.b16 %v354, %v351
  %v451 = vpack.c.b16 %v355, %v352
  %v452 = vpack.c.b16 %v359, %v356
  %v453 = vpack.c.b16 %v360, %v357
  %v454 = vpack.c.b16 %v361, %v358
  %v455 = vpack.c.b16 %v365, %v362
  %v456 = vpack.c.b16 %v366, %v363
  %v457 = vpack.c.b16 %v367, %v364
  %v458 = vpack.c.b16 %v371, %v368
  %v459 = vpack.c.b16 %v372, %v369
  %v460 = vpack.c.b16 %v373, %v370
  %v461 = vpack.c.b16 %v377, %v374
  %v462 = vpack.c.b16 %v378, %v375
  %v463 = vpack.c.b16 %v379, %v376
  %v464 = vpack.c.b16 %v383, %v380
  %v465 = vpack.c.b16 %v384, %v381
  %v466 = vpack.c.b16 %v385, %v382
  %v467 = vpack.c.b16 %v389, %v386
  %v468 = vpack.c.b16 %v390, %v387
  %v469 = vpack.c.b16 %v391, %v388
  %v470 = vpack.c.b16 %v395, %v392
  %v471 = vpack.c.b16 %v396, %v393
  %v472 = vpack.c.b16 %v397, %v394
  %v473 = vpack.c.b16 %v398, %v398
  %v474 = vpack.c.b16 %v399, %v399
  %v475 = vpack.c.b16 %v400, %v400
  %v562 = vunpack.c.l.b16 %v113
  %v563 = vunpack.c.l.b16 %v114
  %v564 = vunpack.c.l.b16 %v115
  %v565 = vunpack.c.l.b16 %v116
  %v566 = vunpack.c.l.b16 %v117
  %v567 = vunpack.c.l.b16 %v118
  %v568 = vunpack.c.l.b16 %v119
  %v569 = vunpack.c.l.b16 %v120
  %v570 = vunpack.c.l.b16 %v121
  %v571 = vunpack.c.l.b16 %v122
  %v572 = vunpack.c.l.b16 %v123
  %v573 = vunpack.c.l.b16 %v124
  %v574 = vunpack.c.l.b16 %v125
  %v575 = vunpack.c.l.b16 %v126
  %v576 = vunpack.c.l.b16 %v127
  %v577 = vunpack.c.l.b16 %v128
  %v578 = vunpack.c.l.b16 %v129
  %v579 = vunpack.c.l.b16 %v130
  %v580 = vunpack.c.l.b16 %v131
  %v581 = vunpack.c.l.b16 %v132
  %v582 = vunpack.c.l.b16 %v133
  %v583 = vunpack.c.l.b16 %v134
  %v584 = vunpack.c.l.b16 %v135
  %v585 = vunpack.c.l.b16 %v136
  %v586 = vunpack.c.l.b16 %v137
  %v587 = vunpack.c.l.b16 %v138
  %v588 = vunpack.c.l.b16 %v139
  %v589 = vunpack.c.l.b16 %v140
  %v590 = vunpack.c.l.b16 %v141
  %v591 = vunpack.c.l.b16 %v142
  %v592 = vunpack.c.l.b16 %v143
  %v593 = vunpack.c.l.b16 %v144
  %v594 = vunpack.c.l.b16 %v145
  %v595 = vunpack.c.l.b16 %v146
  %v596 = vunpack.c.l.b16 %v147
  %v597 = vunpack.c.l.b16 %v148
  %v598 = vpack.c.b16 %v563, %v562
  %v599 = vpack.c.b16 %v565, %v564
  %v600 = vpack.c.b16 %v567, %v566
  %v601 = vpack.c.b16 %v569, %v568
  %v602 = vpack.c.b16 %v571, %v570
  %v603 = vpack.c.b16 %v573, %v572
  %v604 = vpack.c.b16 %v575, %v574
  %v605 = vpack.c.b16 %v577, %v576
  %v606 = vpack.c.b16 %v579, %v578
  %v607 = vpack.c.b16 %v581, %v580
  %v608 = vpack.c.b16 %v583, %v582
  %v609 = vpack.c.b16 %v585, %v584
  %v610 = vpack.c.b16 %v587, %v586
  %v611 = vpack.c.b16 %v589, %v588
  %v612 = vpack.c.b16 %v591, %v590
  %v613 = vpack.c.b16 %v593, %v592
  %v614 = vpack.c.b16 %v595, %v594
  %v615 = vpack.c.b16 %v597, %v596
  %vm634 = vcmask 261120
  %v636 = vsel %vm634, %v403, 0
  %v639 = vsel %vm634, %v406, 0
  %v642 = vsel %vm634, %v409, 0
  %v645 = vsel %vm634, %v412, 0
  %v648 = vsel %vm634, %v415, 0
  %v651 = vsel %vm634, %v418, 0
  %v654 = vsel %vm634, %v421, 0
  %v657 = vsel %vm634, %v424, 0
  %v660 = vsel %vm634, %v427, 0
  %v663 = vsel %vm634, %v430, 0
  %v666 = vsel %vm634, %v433, 0
  %v669 = vsel %vm634, %v436, 0
  %v672 = vsel %vm634, %v439, 0
  %v675 = vsel %vm634, %v442, 0
  %v678 = vsel %vm634, %v445, 0
  %v681 = vsel %vm634, %v448, 0
  %v684 = vsel %vm634, %v451, 0
  %v687 = vsel %vm634, %v454, 0
  %v690 = vsel %vm634, %v457, 0
  %v693 = vsel %vm634, %v460, 0
  %v696 = vsel %vm634, %v463, 0
  %v699 = vsel %vm634, %v466, 0
  %v702 = vsel %vm634, %v469, 0
  %v705 = vsel %vm634, %v472, 0
  %v708 = vsel %vm634, %v475, 0
  %710 = vmatprep.subr.bf16.mxu0 0
  %711 = vmatpush1.bf16.msra.mxu0 %v598
  %712 = vmatprep.subr.bf16.mxu0 0
  %713 = vmatpush1.bf16.msra.mxu0 %v599
  %714 = vmatprep.subr.bf16.mxu0 0
  %715 = vmatpush1.bf16.msra.mxu0 %v600
  %716 = vmatprep.subr.bf16.mxu0 0
  %717 = vmatpush1.bf16.msra.mxu0 %v601
  %718 = vmatprep.subr.bf16.mxu0 0
  %719 = vmatpush1.bf16.msra.mxu0 %v602
  %720 = vmatprep.subr.bf16.mxu0 0
  %721 = vmatpush1.bf16.msra.mxu0 %v603
  %722 = vmatprep.subr.bf16.mxu0 0
  %723 = vmatpush1.bf16.msra.mxu0 %v604
  %724 = vmatprep.subr.bf16.mxu0 0
  %725 = vmatpush1.bf16.msra.mxu0 %v605
  %726 = vmatprep.subr.bf16.mxu0 0
  %727 = vmatpush1.bf16.msra.mxu0 %v606
  %728 = vmatprep.subr.bf16.mxu0 0
  %729 = vmatpush1.bf16.msra.mxu0 %v607
  %730 = vmatprep.subr.bf16.mxu0 0
  %731 = vmatpush1.bf16.msra.mxu0 %v608
  %732 = vmatprep.subr.bf16.mxu0 0
  %733 = vmatpush1.bf16.msra.mxu0 %v609
  %734 = vmatprep.subr.bf16.mxu0 0
  %735 = vmatpush1.bf16.msra.mxu0 %v610
  %736 = vmatprep.subr.bf16.mxu0 0
  %737 = vmatpush1.bf16.msra.mxu0 %v611
  %738 = vmatprep.subr.bf16.mxu0 0
  %739 = vmatpush1.bf16.msra.mxu0 %v612
  %740 = vmatprep.subr.bf16.mxu0 0
  %741 = vmatpush1.bf16.msra.mxu0 %v613
  %742 = vmatprep.mubr.bf16.mxu0 %v402
  %743 = vmatmul.mubr.bf16.gmra.mrb[0].mxu0 %v401
  %v744 = vpop.f32.mrb[0].mxu0
  %v745 = vadd.f32 %v154, %v744
  %v746 = vpop.f32.mrb[0].mxu0
  %v747 = vpop.f32.mrb[0].mxu0
  %v748 = vadd.f32 %v154, %v747
  %v749 = vpop.f32.mrb[0].mxu0
  %750 = vmatprep.mubr.bf16.mxu0 %v405
  %751 = vmatmul.mubr.bf16.gmra.mrb[0].mxu0 %v404
  %v752 = vpop.f32.mrb[0].mxu0
  %v753 = vadd.f32 %v154, %v752
  %v754 = vpop.f32.mrb[0].mxu0
  %v755 = vpop.f32.mrb[0].mxu0
  %v756 = vadd.f32 %v154, %v755
  %v757 = vpop.f32.mrb[0].mxu0
  %758 = vmatprep.mubr.bf16.mxu0 %v408
  %759 = vmatmul.mubr.bf16.gmra.mrb[0].mxu0 %v407
  %v760 = vpop.f32.mrb[0].mxu0
  %v761 = vadd.f32 %v154, %v760
  %v762 = vpop.f32.mrb[0].mxu0
  %v763 = vpop.f32.mrb[0].mxu0
  %v764 = vadd.f32 %v154, %v763
  %v765 = vpop.f32.mrb[0].mxu0
  %766 = vmatprep.mubr.bf16.mxu0 %v411
  %767 = vmatmul.mubr.bf16.gmra.mrb[0].mxu0 %v410
  %v768 = vpop.f32.mrb[0].mxu0
  %v769 = vadd.f32 %v154, %v768
  %v770 = vpop.f32.mrb[0].mxu0
  %v771 = vpop.f32.mrb[0].mxu0
  %v772 = vadd.f32 %v154, %v771
  %v773 = vpop.f32.mrb[0].mxu0
  %774 = vmatprep.mubr.bf16.mxu0 %v414
  %775 = vmatmul.mubr.bf16.gmra.mrb[0].mxu0 %v413
  %v776 = vpop.f32.mrb[0].mxu0
  %v777 = vadd.f32 %v154, %v776
  %v778 = vpop.f32.mrb[0].mxu0
  %v779 = vpop.f32.mrb[0].mxu0
  %v780 = vadd.f32 %v154, %v779
  %v781 = vpop.f32.mrb[0].mxu0
  %782 = vmatprep.mubr.bf16.mxu0 %v417
  %783 = vmatmul.mubr.bf16.gmra.mrb[0].mxu0 %v416
  %v784 = vpop.f32.mrb[0].mxu0
  %v785 = vadd.f32 %v154, %v784
  %v786 = vpop.f32.mrb[0].mxu0
  %v787 = vpop.f32.mrb[0].mxu0
  %v788 = vadd.f32 %v154, %v787
  %v789 = vpop.f32.mrb[0].mxu0
  %790 = vmatprep.mubr.bf16.mxu0 %v420
  %791 = vmatmul.mubr.bf16.gmra.mrb[0].mxu0 %v419
  %v792 = vpop.f32.mrb[0].mxu0
  %v793 = vadd.f32 %v154, %v792
  %v794 = vpop.f32.mrb[0].mxu0
  %v795 = vpop.f32.mrb[0].mxu0
  %v796 = vadd.f32 %v154, %v795
  %v797 = vpop.f32.mrb[0].mxu0
  %798 = vmatprep.mubr.bf16.mxu0 %v423
  %799 = vmatmul.mubr.bf16.gmra.mrb[0].mxu0 %v422
  %v800 = vpop.f32.mrb[0].mxu0
  %v801 = vadd.f32 %v154, %v800
  %v802 = vpop.f32.mrb[0].mxu0
  %v803 = vpop.f32.mrb[0].mxu0
  %v804 = vadd.f32 %v154, %v803
  %v805 = vpop.f32.mrb[0].mxu0
  %806 = vmatprep.mubr.bf16.mxu0 %v426
  %807 = vmatmul.mubr.bf16.gmra.mrb[0].mxu0 %v425
  %v808 = vpop.f32.mrb[0].mxu0
  %v809 = vadd.f32 %v154, %v808
  %v810 = vpop.f32.mrb[0].mxu0
  %v811 = vpop.f32.mrb[0].mxu0
  %v812 = vadd.f32 %v154, %v811
  %v813 = vpop.f32.mrb[0].mxu0
  %814 = vmatprep.mubr.bf16.mxu0 %v429
  %815 = vmatmul.mubr.bf16.gmra.mrb[0].mxu0 %v428
  %v816 = vpop.f32.mrb[0].mxu0
  %v817 = vadd.f32 %v154, %v816
  %v818 = vpop.f32.mrb[0].mxu0
  %v819 = vpop.f32.mrb[0].mxu0
  %v820 = vadd.f32 %v154, %v819
  %v821 = vpop.f32.mrb[0].mxu0
  %822 = vmatprep.mubr.bf16.mxu0 %v432
  %823 = vmatmul.mubr.bf16.gmra.mrb[0].mxu0 %v431
  %v824 = vpop.f32.mrb[0].mxu0
  %v825 = vadd.f32 %v154, %v824
  %v826 = vpop.f32.mrb[0].mxu0
  %v827 = vpop.f32.mrb[0].mxu0
  %v828 = vadd.f32 %v154, %v827
  %v829 = vpop.f32.mrb[0].mxu0
  %830 = vmatprep.mubr.bf16.mxu0 %v435
  %831 = vmatmul.mubr.bf16.gmra.mrb[0].mxu0 %v434
  %v832 = vpop.f32.mrb[0].mxu0
  %v833 = vadd.f32 %v154, %v832
  %v834 = vpop.f32.mrb[0].mxu0
  %v835 = vpop.f32.mrb[0].mxu0
  %v836 = vadd.f32 %v154, %v835
  %v837 = vpop.f32.mrb[0].mxu0
  %838 = vmatprep.mubr.bf16.mxu0 %v438
  %839 = vmatmul.mubr.bf16.gmra.mrb[0].mxu0 %v437
  %v840 = vpop.f32.mrb[0].mxu0
  %v841 = vadd.f32 %v154, %v840
  %v842 = vpop.f32.mrb[0].mxu0
  %v843 = vpop.f32.mrb[0].mxu0
  %v844 = vadd.f32 %v154, %v843
  %v845 = vpop.f32.mrb[0].mxu0
  %846 = vmatprep.mubr.bf16.mxu0 %v441
  %847 = vmatmul.mubr.bf16.gmra.mrb[0].mxu0 %v440
  %v848 = vpop.f32.mrb[0].mxu0
  %v849 = vadd.f32 %v154, %v848
  %v850 = vpop.f32.mrb[0].mxu0
  %v851 = vpop.f32.mrb[0].mxu0
  %v852 = vadd.f32 %v154, %v851
  %v853 = vpop.f32.mrb[0].mxu0
  %854 = vmatprep.mubr.bf16.mxu0 %v444
  %855 = vmatmul.mubr.bf16.gmra.mrb[0].mxu0 %v443
  %v856 = vpop.f32.mrb[0].mxu0
  %v857 = vadd.f32 %v154, %v856
  %v858 = vpop.f32.mrb[0].mxu0
  %v859 = vpop.f32.mrb[0].mxu0
  %v860 = vadd.f32 %v154, %v859
  %v861 = vpop.f32.mrb[0].mxu0
  %862 = vmatprep.mubr.bf16.mxu0 %v447
  %863 = vmatmul.mubr.bf16.gmra.mrb[0].mxu0 %v446
  %v864 = vpop.f32.mrb[0].mxu0
  %v865 = vadd.f32 %v154, %v864
  %v866 = vpop.f32.mrb[0].mxu0
  %v867 = vpop.f32.mrb[0].mxu0
  %v868 = vadd.f32 %v154, %v867
  %v869 = vpop.f32.mrb[0].mxu0
  %870 = vmatprep.mubr.bf16.mxu0 %v450
  %871 = vmatmul.mubr.bf16.gmra.mrb[0].mxu0 %v449
  %v872 = vpop.f32.mrb[0].mxu0
  %v873 = vadd.f32 %v154, %v872
  %v874 = vpop.f32.mrb[0].mxu0
  %v875 = vpop.f32.mrb[0].mxu0
  %v876 = vadd.f32 %v154, %v875
  %v877 = vpop.f32.mrb[0].mxu0
  %878 = vmatprep.mubr.bf16.mxu0 %v453
  %879 = vmatmul.mubr.bf16.gmra.mrb[0].mxu0 %v452
  %v880 = vpop.f32.mrb[0].mxu0
  %v881 = vadd.f32 %v154, %v880
  %v882 = vpop.f32.mrb[0].mxu0
  %v883 = vpop.f32.mrb[0].mxu0
  %v884 = vadd.f32 %v154, %v883
  %v885 = vpop.f32.mrb[0].mxu0
  %886 = vmatprep.mubr.bf16.mxu0 %v456
  %887 = vmatmul.mubr.bf16.gmra.mrb[0].mxu0 %v455
  %v888 = vpop.f32.mrb[0].mxu0
  %v889 = vadd.f32 %v154, %v888
  %v890 = vpop.f32.mrb[0].mxu0
  %v891 = vpop.f32.mrb[0].mxu0
  %v892 = vadd.f32 %v154, %v891
  %v893 = vpop.f32.mrb[0].mxu0
  %894 = vmatprep.mubr.bf16.mxu0 %v459
  %895 = vmatmul.mubr.bf16.gmra.mrb[0].mxu0 %v458
  %v896 = vpop.f32.mrb[0].mxu0
  %v897 = vadd.f32 %v154, %v896
  %v898 = vpop.f32.mrb[0].mxu0
  %v899 = vpop.f32.mrb[0].mxu0
  %v900 = vadd.f32 %v154, %v899
  %v901 = vpop.f32.mrb[0].mxu0
  %902 = vmatprep.mubr.bf16.mxu0 %v462
  %903 = vmatmul.mubr.bf16.gmra.mrb[0].mxu0 %v461
  %v904 = vpop.f32.mrb[0].mxu0
  %v905 = vadd.f32 %v154, %v904
  %v906 = vpop.f32.mrb[0].mxu0
  %v907 = vpop.f32.mrb[0].mxu0
  %v908 = vadd.f32 %v154, %v907
  %v909 = vpop.f32.mrb[0].mxu0
  %910 = vmatprep.mubr.bf16.mxu0 %v465
  %911 = vmatmul.mubr.bf16.gmra.mrb[0].mxu0 %v464
  %v912 = vpop.f32.mrb[0].mxu0
  %v913 = vadd.f32 %v154, %v912
  %v914 = vpop.f32.mrb[0].mxu0
  %v915 = vpop.f32.mrb[0].mxu0
  %v916 = vadd.f32 %v154, %v915
  %v917 = vpop.f32.mrb[0].mxu0
  %918 = vmatprep.mubr.bf16.mxu0 %v468
  %919 = vmatmul.mubr.bf16.gmra.mrb[0].mxu0 %v467
  %v920 = vpop.f32.mrb[0].mxu0
  %v921 = vadd.f32 %v154, %v920
  %v922 = vpop.f32.mrb[0].mxu0
  %v923 = vpop.f32.mrb[0].mxu0
  %v924 = vadd.f32 %v154, %v923
  %v925 = vpop.f32.mrb[0].mxu0
  %926 = vmatprep.mubr.bf16.mxu0 %v471
  %927 = vmatmul.mubr.bf16.gmra.mrb[0].mxu0 %v470
  %v928 = vpop.f32.mrb[0].mxu0
  %v929 = vadd.f32 %v154, %v928
  %v930 = vpop.f32.mrb[0].mxu0
  %v931 = vpop.f32.mrb[0].mxu0
  %v932 = vadd.f32 %v154, %v931
  %v933 = vpop.f32.mrb[0].mxu0
  %934 = vmatprep.mubr.bf16.mxu0 %v474
  %935 = vmatmul.mubr.bf16.gmra.mrb[0].mxu0 %v473
  %v936 = vpop.f32.mrb[0].mxu0
  %v937 = vadd.f32 %v154, %v936
  %v938 = vpop.f32.mrb[0].mxu0
  %v939 = vpop.f32.mrb[0].mxu0
  %v940 = vpop.f32.mrb[0].mxu0
  %941 = vdwg.mxu0
  %942 = vmatprep.subr.bf16.mxu0 0
  %943 = vmatpush1.bf16.msra.mxu0 %v614
  %944 = vmatprep.subr.bf16.mxu0 0
  %945 = vmatpush1.bf16.msra.mxu0 %v615
  %946 = vmatprep.subr.bf16.mxu0 0
  %947 = vmatpush1.bf16.msra.mxu0 0
  %948 = vmatprep.subr.bf16.mxu0 0
  %949 = vmatpush1.bf16.msra.mxu0 0
  %950 = vmatprep.subr.bf16.mxu0 0
  %951 = vmatpush1.bf16.msra.mxu0 0
  %952 = vmatprep.subr.bf16.mxu0 0
  %953 = vmatpush1.bf16.msra.mxu0 0
  %954 = vmatprep.subr.bf16.mxu0 0
  %955 = vmatpush1.bf16.msra.mxu0 0
  %956 = vmatprep.subr.bf16.mxu0 0
  %957 = vmatpush1.bf16.msra.mxu0 0
  %958 = vmatprep.subr.bf16.mxu0 0
  %959 = vmatpush1.bf16.msra.mxu0 0
  %960 = vmatprep.subr.bf16.mxu0 0
  %961 = vmatpush1.bf16.msra.mxu0 0
  %962 = vmatprep.subr.bf16.mxu0 0
  %963 = vmatpush1.bf16.msra.mxu0 0
  %964 = vmatprep.subr.bf16.mxu0 0
  %965 = vmatpush1.bf16.msra.mxu0 0
  %966 = vmatprep.subr.bf16.mxu0 0
  %967 = vmatpush1.bf16.msra.mxu0 0
  %968 = vmatprep.subr.bf16.mxu0 0
  %969 = vmatpush1.bf16.msra.mxu0 0
  %970 = vmatprep.subr.bf16.mxu0 0
  %971 = vmatpush1.bf16.msra.mxu0 0
  %972 = vmatprep.subr.bf16.mxu0 0
  %973 = vmatpush1.bf16.msra.mxu0 0
  %974 = vmatprep.mubr.bf16.mxu0 0
  %975 = vmatmul.mubr.bf16.gmra.mrb[0].mxu0 %v636
  %v976 = vpop.f32.mrb[0].mxu0
  %v977 = vadd.f32 %v745, %v976
  %v978 = vpop.f32.mrb[0].mxu0
  %v979 = vpop.f32.mrb[0].mxu0
  %v980 = vadd.f32 %v748, %v979
  %v981 = vpop.f32.mrb[0].mxu0
  %982 = vmatprep.mubr.bf16.mxu0 0
  %983 = vmatmul.mubr.bf16.gmra.mrb[0].mxu0 %v639
  %v984 = vpop.f32.mrb[0].mxu0
  %v985 = vadd.f32 %v753, %v984
  %v986 = vpop.f32.mrb[0].mxu0
  %v987 = vpop.f32.mrb[0].mxu0
  %v988 = vadd.f32 %v756, %v987
  %v989 = vpop.f32.mrb[0].mxu0
  %990 = vmatprep.mubr.bf16.mxu0 0
  %991 = vmatmul.mubr.bf16.gmra.mrb[0].mxu0 %v642
  %v992 = vpop.f32.mrb[0].mxu0
  %v993 = vadd.f32 %v761, %v992
  %v994 = vpop.f32.mrb[0].mxu0
  %v995 = vpop.f32.mrb[0].mxu0
  %v996 = vadd.f32 %v764, %v995
  %v997 = vpop.f32.mrb[0].mxu0
  %998 = vmatprep.mubr.bf16.mxu0 0
  %999 = vmatmul.mubr.bf16.gmra.mrb[0].mxu0 %v645
  %v1000 = vpop.f32.mrb[0].mxu0
  %v1001 = vadd.f32 %v769, %v1000
  %v1002 = vpop.f32.mrb[0].mxu0
  %v1003 = vpop.f32.mrb[0].mxu0
  %v1004 = vadd.f32 %v772, %v1003
  %v1005 = vpop.f32.mrb[0].mxu0
  %1006 = vmatprep.mubr.bf16.mxu0 0
  %1007 = vmatmul.mubr.bf16.gmra.mrb[0].mxu0 %v648
  %v1008 = vpop.f32.mrb[0].mxu0
  %v1009 = vadd.f32 %v777, %v1008
  %v1010 = vpop.f32.mrb[0].mxu0
  %v1011 = vpop.f32.mrb[0].mxu0
  %v1012 = vadd.f32 %v780, %v1011
  %v1013 = vpop.f32.mrb[0].mxu0
  %1014 = vmatprep.mubr.bf16.mxu0 0
  %1015 = vmatmul.mubr.bf16.gmra.mrb[0].mxu0 %v651
  %v1016 = vpop.f32.mrb[0].mxu0
  %v1017 = vadd.f32 %v785, %v1016
  %v1018 = vpop.f32.mrb[0].mxu0
  %v1019 = vpop.f32.mrb[0].mxu0
  %v1020 = vadd.f32 %v788, %v1019
  %v1021 = vpop.f32.mrb[0].mxu0
  %1022 = vmatprep.mubr.bf16.mxu0 0
  %1023 = vmatmul.mubr.bf16.gmra.mrb[0].mxu0 %v654
  %v1024 = vpop.f32.mrb[0].mxu0
  %v1025 = vadd.f32 %v793, %v1024
  %v1026 = vpop.f32.mrb[0].mxu0
  %v1027 = vpop.f32.mrb[0].mxu0
  %v1028 = vadd.f32 %v796, %v1027
  %v1029 = vpop.f32.mrb[0].mxu0
  %1030 = vmatprep.mubr.bf16.mxu0 0
  %1031 = vmatmul.mubr.bf16.gmra.mrb[0].mxu0 %v657
  %v1032 = vpop.f32.mrb[0].mxu0
  %v1033 = vadd.f32 %v801, %v1032
  %v1034 = vpop.f32.mrb[0].mxu0
  %v1035 = vpop.f32.mrb[0].mxu0
  %v1036 = vadd.f32 %v804, %v1035
  %v1037 = vpop.f32.mrb[0].mxu0
  %1038 = vmatprep.mubr.bf16.mxu0 0
  %1039 = vmatmul.mubr.bf16.gmra.mrb[0].mxu0 %v660
  %v1040 = vpop.f32.mrb[0].mxu0
  %v1041 = vadd.f32 %v809, %v1040
  %v1042 = vpop.f32.mrb[0].mxu0
  %v1043 = vpop.f32.mrb[0].mxu0
  %v1044 = vadd.f32 %v812, %v1043
  %v1045 = vpop.f32.mrb[0].mxu0
  %1046 = vmatprep.mubr.bf16.mxu0 0
  %1047 = vmatmul.mubr.bf16.gmra.mrb[0].mxu0 %v663
  %v1048 = vpop.f32.mrb[0].mxu0
  %v1049 = vadd.f32 %v817, %v1048
  %v1050 = vpop.f32.mrb[0].mxu0
  %v1051 = vpop.f32.mrb[0].mxu0
  %v1052 = vadd.f32 %v820, %v1051
  %v1053 = vpop.f32.mrb[0].mxu0
  %1054 = vmatprep.mubr.bf16.mxu0 0
  %1055 = vmatmul.mubr.bf16.gmra.mrb[0].mxu0 %v666
  %v1056 = vpop.f32.mrb[0].mxu0
  %v1057 = vadd.f32 %v825, %v1056
  %v1058 = vpop.f32.mrb[0].mxu0
  %v1059 = vpop.f32.mrb[0].mxu0
  %v1060 = vadd.f32 %v828, %v1059
  %v1061 = vpop.f32.mrb[0].mxu0
  %1062 = vmatprep.mubr.bf16.mxu0 0
  %1063 = vmatmul.mubr.bf16.gmra.mrb[0].mxu0 %v669
  %v1064 = vpop.f32.mrb[0].mxu0
  %v1065 = vadd.f32 %v833, %v1064
  %v1066 = vpop.f32.mrb[0].mxu0
  %v1067 = vpop.f32.mrb[0].mxu0
  %v1068 = vadd.f32 %v836, %v1067
  %v1069 = vpop.f32.mrb[0].mxu0
  %1070 = vmatprep.mubr.bf16.mxu0 0
  %1071 = vmatmul.mubr.bf16.gmra.mrb[0].mxu0 %v672
  %v1072 = vpop.f32.mrb[0].mxu0
  %v1073 = vadd.f32 %v841, %v1072
  %v1074 = vpop.f32.mrb[0].mxu0
  %v1075 = vpop.f32.mrb[0].mxu0
  %v1076 = vadd.f32 %v844, %v1075
  %v1077 = vpop.f32.mrb[0].mxu0
  %1078 = vmatprep.mubr.bf16.mxu0 0
  %1079 = vmatmul.mubr.bf16.gmra.mrb[0].mxu0 %v675
  %v1080 = vpop.f32.mrb[0].mxu0
  %v1081 = vadd.f32 %v849, %v1080
  %v1082 = vpop.f32.mrb[0].mxu0
  %v1083 = vpop.f32.mrb[0].mxu0
  %v1084 = vadd.f32 %v852, %v1083
  %v1085 = vpop.f32.mrb[0].mxu0
  %1086 = vmatprep.mubr.bf16.mxu0 0
  %1087 = vmatmul.mubr.bf16.gmra.mrb[0].mxu0 %v678
  %v1088 = vpop.f32.mrb[0].mxu0
  %v1089 = vadd.f32 %v857, %v1088
  %v1090 = vpop.f32.mrb[0].mxu0
  %v1091 = vpop.f32.mrb[0].mxu0
  %v1092 = vadd.f32 %v860, %v1091
  %v1093 = vpop.f32.mrb[0].mxu0
  %1094 = vmatprep.mubr.bf16.mxu0 0
  %1095 = vmatmul.mubr.bf16.gmra.mrb[0].mxu0 %v681
  %v1096 = vpop.f32.mrb[0].mxu0
  %v1097 = vadd.f32 %v865, %v1096
  %v1098 = vpop.f32.mrb[0].mxu0
  %v1099 = vpop.f32.mrb[0].mxu0
  %v1100 = vadd.f32 %v868, %v1099
  %v1101 = vpop.f32.mrb[0].mxu0
  %1102 = vmatprep.mubr.bf16.mxu0 0
  %1103 = vmatmul.mubr.bf16.gmra.mrb[0].mxu0 %v684
  %v1104 = vpop.f32.mrb[0].mxu0
  %v1105 = vadd.f32 %v873, %v1104
  %v1106 = vpop.f32.mrb[0].mxu0
  %v1107 = vpop.f32.mrb[0].mxu0
  %v1108 = vadd.f32 %v876, %v1107
  %v1109 = vpop.f32.mrb[0].mxu0
  %1110 = vmatprep.mubr.bf16.mxu0 0
  %1111 = vmatmul.mubr.bf16.gmra.mrb[0].mxu0 %v687
  %v1112 = vpop.f32.mrb[0].mxu0
  %v1113 = vadd.f32 %v881, %v1112
  %v1114 = vpop.f32.mrb[0].mxu0
  %v1115 = vpop.f32.mrb[0].mxu0
  %v1116 = vadd.f32 %v884, %v1115
  %v1117 = vpop.f32.mrb[0].mxu0
  %1118 = vmatprep.mubr.bf16.mxu0 0
  %1119 = vmatmul.mubr.bf16.gmra.mrb[0].mxu0 %v690
  %v1120 = vpop.f32.mrb[0].mxu0
  %v1121 = vadd.f32 %v889, %v1120
  %v1122 = vpop.f32.mrb[0].mxu0
  %v1123 = vpop.f32.mrb[0].mxu0
  %v1124 = vadd.f32 %v892, %v1123
  %v1125 = vpop.f32.mrb[0].mxu0
  %1126 = vmatprep.mubr.bf16.mxu0 0
  %1127 = vmatmul.mubr.bf16.gmra.mrb[0].mxu0 %v693
  %v1128 = vpop.f32.mrb[0].mxu0
  %v1129 = vadd.f32 %v897, %v1128
  %v1130 = vpop.f32.mrb[0].mxu0
  %v1131 = vpop.f32.mrb[0].mxu0
  %v1132 = vadd.f32 %v900, %v1131
  %v1133 = vpop.f32.mrb[0].mxu0
  %1134 = vmatprep.mubr.bf16.mxu0 0
  %1135 = vmatmul.mubr.bf16.gmra.mrb[0].mxu0 %v696
  %v1136 = vpop.f32.mrb[0].mxu0
  %v1137 = vadd.f32 %v905, %v1136
  %v1138 = vpop.f32.mrb[0].mxu0
  %v1139 = vpop.f32.mrb[0].mxu0
  %v1140 = vadd.f32 %v908, %v1139
  %v1141 = vpop.f32.mrb[0].mxu0
  %1142 = vmatprep.mubr.bf16.mxu0 0
  %1143 = vmatmul.mubr.bf16.gmra.mrb[0].mxu0 %v699
  %v1144 = vpop.f32.mrb[0].mxu0
  %v1145 = vadd.f32 %v913, %v1144
  %v1146 = vpop.f32.mrb[0].mxu0
  %v1147 = vpop.f32.mrb[0].mxu0
  %v1148 = vadd.f32 %v916, %v1147
  %v1149 = vpop.f32.mrb[0].mxu0
  %1150 = vmatprep.mubr.bf16.mxu0 0
  %1151 = vmatmul.mubr.bf16.gmra.mrb[0].mxu0 %v702
  %v1152 = vpop.f32.mrb[0].mxu0
  %v1153 = vadd.f32 %v921, %v1152
  %v1154 = vpop.f32.mrb[0].mxu0
  %v1155 = vpop.f32.mrb[0].mxu0
  %v1156 = vadd.f32 %v924, %v1155
  %v1157 = vpop.f32.mrb[0].mxu0
  %1158 = vmatprep.mubr.bf16.mxu0 0
  %1159 = vmatmul.mubr.bf16.gmra.mrb[0].mxu0 %v705
  %v1160 = vpop.f32.mrb[0].mxu0
  %v1161 = vadd.f32 %v929, %v1160
  %v1162 = vpop.f32.mrb[0].mxu0
  %v1163 = vpop.f32.mrb[0].mxu0
  %v1164 = vadd.f32 %v932, %v1163
  %v1165 = vpop.f32.mrb[0].mxu0
  %1166 = vmatprep.mubr.bf16.mxu0 0
  %1167 = vmatmul.mubr.bf16.gmra.mrb[0].mxu0 %v708
  %v1168 = vpop.f32.mrb[0].mxu0
  %v1169 = vadd.f32 %v937, %v1168
  %v1170 = vpop.f32.mrb[0].mxu0
  %v1171 = vpop.f32.mrb[0].mxu0
  %v1172 = vpop.f32.mrb[0].mxu0
  %1173 = vdwg.mxu0
  %v1174 = vmax.f32 %v977, 0.0
  %v1175 = vmax.f32 %v980, 0.0
  %v1176 = vmax.f32 %v985, 0.0
  %v1177 = vmax.f32 %v988, 0.0
  %v1178 = vmax.f32 %v993, 0.0
  %v1179 = vmax.f32 %v996, 0.0
  %v1180 = vmax.f32 %v1001, 0.0
  %v1181 = vmax.f32 %v1004, 0.0
  %v1182 = vmax.f32 %v1009, 0.0
  %v1183 = vmax.f32 %v1012, 0.0
  %v1184 = vmax.f32 %v1017, 0.0
  %v1185 = vmax.f32 %v1020, 0.0
  %v1186 = vmax.f32 %v1025, 0.0
  %v1187 = vmax.f32 %v1028, 0.0
  %v1188 = vmax.f32 %v1033, 0.0
  %v1189 = vmax.f32 %v1036, 0.0
  %v1190 = vmax.f32 %v1041, 0.0
  %v1191 = vmax.f32 %v1044, 0.0
  %v1192 = vmax.f32 %v1049, 0.0
  %v1193 = vmax.f32 %v1052, 0.0
  %v1194 = vmax.f32 %v1057, 0.0
  %v1195 = vmax.f32 %v1060, 0.0
  %v1196 = vmax.f32 %v1065, 0.0
  %v1197 = vmax.f32 %v1068, 0.0
  %v1198 = vmax.f32 %v1073, 0.0
  %v1199 = vmax.f32 %v1076, 0.0
  %v1200 = vmax.f32 %v1081, 0.0
  %v1201 = vmax.f32 %v1084, 0.0
  %v1202 = vmax.f32 %v1089, 0.0
  %v1203 = vmax.f32 %v1092, 0.0
  %v1204 = vmax.f32 %v1097, 0.0
  %v1205 = vmax.f32 %v1100, 0.0
  %v1206 = vmax.f32 %v1105, 0.0
  %v1207 = vmax.f32 %v1108, 0.0
  %v1208 = vmax.f32 %v1113, 0.0
  %v1209 = vmax.f32 %v1116, 0.0
  %v1210 = vmax.f32 %v1121, 0.0
  %v1211 = vmax.f32 %v1124, 0.0
  %v1212 = vmax.f32 %v1129, 0.0
  %v1213 = vmax.f32 %v1132, 0.0
  %v1214 = vmax.f32 %v1137, 0.0
  %v1215 = vmax.f32 %v1140, 0.0
  %v1216 = vmax.f32 %v1145, 0.0
  %v1217 = vmax.f32 %v1148, 0.0
  %v1218 = vmax.f32 %v1153, 0.0
  %v1219 = vmax.f32 %v1156, 0.0
  %v1220 = vmax.f32 %v1161, 0.0
  %v1221 = vmax.f32 %v1164, 0.0
  %v1222 = vmax.f32 %v1169, 0.0
  %v1223 = vpack.c.bf16 %v1175, %v1174
  %v1224 = vpack.c.bf16 %v1177, %v1176
  %v1225 = vpack.c.bf16 %v1179, %v1178
  %v1226 = vpack.c.bf16 %v1181, %v1180
  %v1227 = vpack.c.bf16 %v1183, %v1182
  %v1228 = vpack.c.bf16 %v1185, %v1184
  %v1229 = vpack.c.bf16 %v1187, %v1186
  %v1230 = vpack.c.bf16 %v1189, %v1188
  %v1231 = vpack.c.bf16 %v1191, %v1190
  %v1232 = vpack.c.bf16 %v1193, %v1192
  %v1233 = vpack.c.bf16 %v1195, %v1194
  %v1234 = vpack.c.bf16 %v1197, %v1196
  %v1235 = vpack.c.bf16 %v1199, %v1198
  %v1236 = vpack.c.bf16 %v1201, %v1200
  %v1237 = vpack.c.bf16 %v1203, %v1202
  %v1238 = vpack.c.bf16 %v1205, %v1204
  %v1239 = vpack.c.bf16 %v1207, %v1206
  %v1240 = vpack.c.bf16 %v1209, %v1208
  %v1241 = vpack.c.bf16 %v1211, %v1210
  %v1242 = vpack.c.bf16 %v1213, %v1212
  %v1243 = vpack.c.bf16 %v1215, %v1214
  %v1244 = vpack.c.bf16 %v1217, %v1216
  %v1245 = vpack.c.bf16 %v1219, %v1218
  %v1246 = vpack.c.bf16 %v1221, %v1220
  %v1247 = vpack.c.bf16 %v1222, %v1222
  %v1273 = vunpack.c.l.b16 %v1223
  %v1274 = vunpack.c.h.b16 %v1223
  %v1275 = vunpack.c.l.b16 %v1224
  %v1276 = vunpack.c.h.b16 %v1224
  %v1277 = vunpack.c.l.b16 %v1225
  %v1278 = vunpack.c.h.b16 %v1225
  %v1279 = vunpack.c.l.b16 %v1226
  %v1280 = vunpack.c.h.b16 %v1226
  %v1281 = vunpack.c.l.b16 %v1227
  %v1282 = vunpack.c.h.b16 %v1227
  %v1283 = vunpack.c.l.b16 %v1228
  %v1284 = vunpack.c.h.b16 %v1228
  %v1285 = vunpack.c.l.b16 %v1229
  %v1286 = vunpack.c.h.b16 %v1229
  %v1287 = vunpack.c.l.b16 %v1230
  %v1288 = vunpack.c.h.b16 %v1230
  %v1289 = vunpack.c.l.b16 %v1231
  %v1290 = vunpack.c.h.b16 %v1231
  %v1291 = vunpack.c.l.b16 %v1232
  %v1292 = vunpack.c.h.b16 %v1232
  %v1293 = vunpack.c.l.b16 %v1233
  %v1294 = vunpack.c.h.b16 %v1233
  %v1295 = vunpack.c.l.b16 %v1234
  %v1296 = vunpack.c.h.b16 %v1234
  %v1297 = vunpack.c.l.b16 %v1235
  %v1298 = vunpack.c.h.b16 %v1235
  %v1299 = vunpack.c.l.b16 %v1236
  %v1300 = vunpack.c.h.b16 %v1236
  %v1301 = vunpack.c.l.b16 %v1237
  %v1302 = vunpack.c.h.b16 %v1237
  %v1303 = vunpack.c.l.b16 %v1238
  %v1304 = vunpack.c.h.b16 %v1238
  %v1305 = vunpack.c.l.b16 %v1239
  %v1306 = vunpack.c.h.b16 %v1239
  %v1307 = vunpack.c.l.b16 %v1240
  %v1308 = vunpack.c.h.b16 %v1240
  %v1309 = vunpack.c.l.b16 %v1241
  %v1310 = vunpack.c.h.b16 %v1241
  %v1311 = vunpack.c.l.b16 %v1242
  %v1312 = vunpack.c.h.b16 %v1242
  %v1313 = vunpack.c.l.b16 %v1243
  %v1314 = vunpack.c.h.b16 %v1243
  %v1315 = vunpack.c.l.b16 %v1244
  %v1316 = vunpack.c.h.b16 %v1244
  %v1317 = vunpack.c.l.b16 %v1245
  %v1318 = vunpack.c.h.b16 %v1245
  %v1319 = vunpack.c.l.b16 %v1246
  %v1320 = vunpack.c.h.b16 %v1246
  %v1321 = vunpack.c.l.b16 %v1247
  %v1322 = vpack.c.b16 %v1273, %v1273
  %v1323 = vpack.c.b16 %v1274, %v1274
  %v1324 = vpack.c.b16 %v1275, %v1275
  %v1325 = vpack.c.b16 %v1276, %v1276
  %v1326 = vpack.c.b16 %v1277, %v1277
  %v1327 = vpack.c.b16 %v1278, %v1278
  %v1328 = vpack.c.b16 %v1279, %v1279
  %v1329 = vpack.c.b16 %v1280, %v1280
  %v1330 = vpack.c.b16 %v1281, %v1281
  %v1331 = vpack.c.b16 %v1282, %v1282
  %v1332 = vpack.c.b16 %v1283, %v1283
  %v1333 = vpack.c.b16 %v1284, %v1284
  %v1334 = vpack.c.b16 %v1285, %v1285
  %v1335 = vpack.c.b16 %v1286, %v1286
  %v1336 = vpack.c.b16 %v1287, %v1287
  %v1337 = vpack.c.b16 %v1288, %v1288
  %v1338 = vpack.c.b16 %v1289, %v1289
  %v1339 = vpack.c.b16 %v1290, %v1290
  %v1340 = vpack.c.b16 %v1291, %v1291
  %v1341 = vpack.c.b16 %v1292, %v1292
  %v1342 = vpack.c.b16 %v1293, %v1293
  %v1343 = vpack.c.b16 %v1294, %v1294
  %v1344 = vpack.c.b16 %v1295, %v1295
  %v1345 = vpack.c.b16 %v1296, %v1296
  %v1346 = vpack.c.b16 %v1297, %v1297
  %v1347 = vpack.c.b16 %v1298, %v1298
  %v1348 = vpack.c.b16 %v1299, %v1299
  %v1349 = vpack.c.b16 %v1300, %v1300
  %v1350 = vpack.c.b16 %v1301, %v1301
  %v1351 = vpack.c.b16 %v1302, %v1302
  %v1352 = vpack.c.b16 %v1303, %v1303
  %v1353 = vpack.c.b16 %v1304, %v1304
  %v1354 = vpack.c.b16 %v1305, %v1305
  %v1355 = vpack.c.b16 %v1306, %v1306
  %v1356 = vpack.c.b16 %v1307, %v1307
  %v1357 = vpack.c.b16 %v1308, %v1308
  %v1358 = vpack.c.b16 %v1309, %v1309
  %v1359 = vpack.c.b16 %v1310, %v1310
  %v1360 = vpack.c.b16 %v1311, %v1311
  %v1361 = vpack.c.b16 %v1312, %v1312
  %v1362 = vpack.c.b16 %v1313, %v1313
  %v1363 = vpack.c.b16 %v1314, %v1314
  %v1364 = vpack.c.b16 %v1315, %v1315
  %v1365 = vpack.c.b16 %v1316, %v1316
  %v1366 = vpack.c.b16 %v1317, %v1317
  %v1367 = vpack.c.b16 %v1318, %v1318
  %v1368 = vpack.c.b16 %v1319, %v1319
  %v1369 = vpack.c.b16 %v1320, %v1320
  %v1370 = vpack.c.b16 %v1321, %v1321
  %1420 = vst [vmem:[%s3] sm:$0xf] %v1322
  %1421 = vst [vmem:[%s3 + $0x4] sm:$0xf] %v1323
  %1422 = vst [vmem:[%s3 + $0x8] sm:$0xf] %v1324
  %1423 = vst [vmem:[%s3 + $0xc] sm:$0xf] %v1325
  %1424 = vst [vmem:[%s3 + $0x10] sm:$0xf] %v1326
  %1425 = vst [vmem:[%s3 + $0x14] sm:$0xf] %v1327
  %1426 = vst [vmem:[%s3 + $0x18] sm:$0xf] %v1328
  %1427 = vst [vmem:[%s3 + $0x1c] sm:$0xf] %v1329
  %1428 = vst [vmem:[%s3 + $0x20] sm:$0xf] %v1330
  %1429 = vst [vmem:[%s3 + $0x24] sm:$0xf] %v1331
  %1430 = vst [vmem:[%s3 + $0x28] sm:$0xf] %v1332
  %1431 = vst [vmem:[%s3 + $0x2c] sm:$0xf] %v1333
  %1432 = vst [vmem:[%s3 + $0x30] sm:$0xf] %v1334
  %1433 = vst [vmem:[%s3 + $0x34] sm:$0xf] %v1335
  %1434 = vst [vmem:[%s3 + $0x38] sm:$0xf] %v1336
  %1435 = vst [vmem:[%s3 + $0x3c] sm:$0xf] %v1337
  %1436 = vst [vmem:[%s3 + $0x40] sm:$0xf] %v1338
  %1437 = vst [vmem:[%s3 + $0x44] sm:$0xf] %v1339
  %1438 = vst [vmem:[%s3 + $0x48] sm:$0xf] %v1340
  %1439 = vst [vmem:[%s3 + $0x4c] sm:$0xf] %v1341
  %1440 = vst [vmem:[%s3 + $0x50] sm:$0xf] %v1342
  %1441 = vst [vmem:[%s3 + $0x54] sm:$0xf] %v1343
  %1442 = vst [vmem:[%s3 + $0x58] sm:$0xf] %v1344
  %1443 = vst [vmem:[%s3 + $0x5c] sm:$0xf] %v1345
  %1444 = vst [vmem:[%s3 + $0x60] sm:$0xf] %v1346
  %1445 = vst [vmem:[%s3 + $0x64] sm:$0xf] %v1347
  %1446 = vst [vmem:[%s3 + $0x68] sm:$0xf] %v1348
  %1447 = vst [vmem:[%s3 + $0x6c] sm:$0xf] %v1349
  %1448 = vst [vmem:[%s3 + $0x70] sm:$0xf] %v1350
  %1449 = vst [vmem:[%s3 + $0x74] sm:$0xf] %v1351
  %1450 = vst [vmem:[%s3 + $0x78] sm:$0xf] %v1352
  %1451 = vst [vmem:[%s3 + $0x7c] sm:$0xf] %v1353
  %1452 = vst [vmem:[%s3 + $0x80] sm:$0xf] %v1354
  %1453 = vst [vmem:[%s3 + $0x84] sm:$0xf] %v1355
  %1454 = vst [vmem:[%s3 + $0x88] sm:$0xf] %v1356
  %1455 = vst [vmem:[%s3 + $0x8c] sm:$0xf] %v1357
  %1456 = vst [vmem:[%s3 + $0x90] sm:$0xf] %v1358
  %1457 = vst [vmem:[%s3 + $0x94] sm:$0xf] %v1359
  %1458 = vst [vmem:[%s3 + $0x98] sm:$0xf] %v1360
  %1459 = vst [vmem:[%s3 + $0x9c] sm:$0xf] %v1361
  %1460 = vst [vmem:[%s3 + $0xa0] sm:$0xf] %v1362
  %1461 = vst [vmem:[%s3 + $0xa4] sm:$0xf] %v1363
  %1462 = vst [vmem:[%s3 + $0xa8] sm:$0xf] %v1364
  %1463 = vst [vmem:[%s3 + $0xac] sm:$0xf] %v1365
  %1464 = vst [vmem:[%s3 + $0xb0] sm:$0xf] %v1366
  %1465 = vst [vmem:[%s3 + $0xb4] sm:$0xf] %v1367
  %1466 = vst [vmem:[%s3 + $0xb8] sm:$0xf] %v1368
  %1467 = vst [vmem:[%s3 + $0xbc] sm:$0xf] %v1369
  %1468 = vst [vmem:[%s3 + $0xc0] sm:$0xf] %v1370
  // Predicated region
  $region14: #{mnist_classifier_forward.4} parent=0 // pred_check
    _
  $region15: #{mnist_classifier_forward.4} parent=0 // pred_check_branch
    %1470 = sbr.rel (0) target = $region17
  $region16: #{mnist_classifier_forward.4} parent=0 // pred_region
    _
  $region17: #{mnist_classifier_forward.4} parent=0 // pred_fallthru
    _
  // Predicated region
  $region18: #{mnist_classifier_forward.4} parent=0 // pred_check
    _
  $region19: #{mnist_classifier_forward.4} parent=0 // pred_check_branch
    %1472 = sbr.rel (0) target = $region21
  $region20: #{mnist_classifier_forward.4} parent=0 // pred_region
    _
  $region21: #{mnist_classifier_forward.4} parent=0 // pred_fallthru
    _

// kernel: mnist_classifier_forward.5
$region0: #{mnist_classifier_forward.5}
  #allocation0 [shape = 'u32[]', space=smem, size = 0x4, offset = 0x4, fixed_abs, tag = 'smem constant byte address 0x4 - core index']
  #allocation1 [shape = 'u32[144,128]{1,0:T(1,128)}', space=vmem, size = 0x12000, scoped, tag = 'internal scratch']
  %s0 = inlined_call_operand.vmem [shape: bf16[8,3136], index: 0, kind: input, shape index: {}]
  %s1 = inlined_call_operand.vmem [shape: bf16[3136,1024], index: 1, kind: input, shape index: {}]
  %s2 = inlined_call_operand.vmem [shape: f32[1,1024], index: 2, kind: input, shape index: {}]
  %s3 = inlined_call_operand.vmem [shape: bf16[1024,128], index: 3, kind: input, shape index: {}]
  %s4 = inlined_call_operand.vmem [shape: f32[1,128], index: 4, kind: input, shape index: {}]
  %s5 = inlined_call_operand.vmem [shape: f32[8,128], index: 5, kind: output, shape index: {}]
  %s6 = sld [smem:[#allocation0]]
  $region30: #{mnist_classifier_forward.5} parent=0
    _
  %s8 = ssub.s32 1, %s6
  %s9 = scalar_select 0, %s8, %s6
  // Predicated region
  $region2: #{mnist_classifier_forward.5} parent=0 // pred_check
    _
  $region3: #{mnist_classifier_forward.5} parent=0 // pred_check_branch
    %11 = sbr.rel (0) target = $region5
  $region4: #{mnist_classifier_forward.5} parent=0 // pred_region
    _
  $region5: #{mnist_classifier_forward.5} parent=0 // pred_fallthru
    _
  // Predicated region
  $region6: #{mnist_classifier_forward.5} parent=0 // pred_check
    _
  $region7: #{mnist_classifier_forward.5} parent=0 // pred_check_branch
    %13 = sbr.rel (0) target = $region9
  $region8: #{mnist_classifier_forward.5} parent=0 // pred_region
    _
  $region9: #{mnist_classifier_forward.5} parent=0 // pred_fallthru
    _
  // Predicated region
  $region10: #{mnist_classifier_forward.5} parent=0 // pred_check
    _
  $region11: #{mnist_classifier_forward.5} parent=0 // pred_check_branch
    %15 = sbr.rel (0) target = $region13
  $region12: #{mnist_classifier_forward.5} parent=0 // pred_region
    _
  $region13: #{mnist_classifier_forward.5} parent=0 // pred_fallthru
    _
  // Predicated region
  $region14: #{mnist_classifier_forward.5} parent=0 // pred_check
    _
  $region15: #{mnist_classifier_forward.5} parent=0 // pred_check_branch
    %17 = sbr.rel (0) target = $region17
  $region16: #{mnist_classifier_forward.5} parent=0 // pred_region
    _
  $region17: #{mnist_classifier_forward.5} parent=0 // pred_fallthru
    _
  // Predicated region
  $region18: #{mnist_classifier_forward.5} parent=0 // pred_check
    _
  $region19: #{mnist_classifier_forward.5} parent=0 // pred_check_branch
    %19 = sbr.rel (0) target = $region21
  $region20: #{mnist_classifier_forward.5} parent=0 // pred_region
    _
  $region21: #{mnist_classifier_forward.5} parent=0 // pred_fallthru
    _
  %v21 = vld [vmem:[%s0] sm:$0xff]
  %v22 = vld [vmem:[%s0 + $0x8] sm:$0xff]
  %v23 = vld [vmem:[%s0 + $0x10] sm:$0xff]
  %v24 = vld [vmem:[%s0 + $0x18] sm:$0xff]
  %v25 = vld [vmem:[%s0 + $0x20] sm:$0xff]
  %v26 = vld [vmem:[%s0 + $0x28] sm:$0xff]
  %v27 = vld [vmem:[%s0 + $0x30] sm:$0xff]
  %v28 = vld [vmem:[%s0 + $0x38] sm:$0xff]
  %v29 = vld [vmem:[%s0 + $0x40] sm:$0xff]
  %v30 = vld [vmem:[%s0 + $0x48] sm:$0xff]
  %v31 = vld [vmem:[%s0 + $0x50] sm:$0xff]
  %v32 = vld [vmem:[%s0 + $0x58] sm:$0xff]
  %v33 = vld [vmem:[%s0 + $0x60] sm:$0xf]
  %v34 = vld [vmem:[%s1] sm:$0xff]
  %v35 = vld [vmem:[%s1 + $0x8] sm:$0xff]
  %v36 = vld [vmem:[%s1 + $0x10] sm:$0xff]
  %v37 = vld [vmem:[%s1 + $0x18] sm:$0xff]
  %v38 = vld [vmem:[%s1 + $0x20] sm:$0xff]
  %v39 = vld [vmem:[%s1 + $0x28] sm:$0xff]
  %v40 = vld [vmem:[%s1 + $0x30] sm:$0xff]
  %v41 = vld [vmem:[%s1 + $0x38] sm:$0xff]
  %v42 = vld [vmem:[%s1 + $0x40] sm:$0xff]
  %v43 = vld [vmem:[%s1 + $0x48] sm:$0xff]
  %v44 = vld [vmem:[%s1 + $0x50] sm:$0xff]
  %v45 = vld [vmem:[%s1 + $0x58] sm:$0xff]
  %v46 = vld [vmem:[%s1 + $0x60] sm:$0xff]
  %v47 = vld [vmem:[%s1 + $0x68] sm:$0xff]
  %v48 = vld [vmem:[%s1 + $0x70] sm:$0xff]
  %v49 = vld [vmem:[%s1 + $0x78] sm:$0xff]
  %v50 = vld [vmem:[%s1 + $0x80] sm:$0xff]
  %v51 = vld [vmem:[%s1 + $0x88] sm:$0xff]
  %v52 = vld [vmem:[%s1 + $0x90] sm:$0xff]
  %v53 = vld [vmem:[%s1 + $0x98] sm:$0xff]
  %v54 = vld [vmem:[%s1 + $0xa0] sm:$0xff]
  %v55 = vld [vmem:[%s1 + $0xa8] sm:$0xff]
  %v56 = vld [vmem:[%s1 + $0xb0] sm:$0xff]
  %v57 = vld [vmem:[%s1 + $0xb8] sm:$0xff]
  %v58 = vld [vmem:[%s1 + $0xc0] sm:$0xff]
  %v59 = vld [vmem:[%s1 + $0xc8] sm:$0xff]
  %v60 = vld [vmem:[%s1 + $0xd0] sm:$0xff]
  %v61 = vld [vmem:[%s1 + $0xd8] sm:$0xff]
  %v62 = vld [vmem:[%s1 + $0xe0] sm:$0xff]
  %v63 = vld [vmem:[%s1 + $0xe8] sm:$0xff]
  %v64 = vld [vmem:[%s1 + $0xf0] sm:$0xff]
  %v65 = vld [vmem:[%s1 + $0xf8] sm:$0xff]
  %v66 = vld [vmem:[%s1 + $0x100] sm:$0xff]
  %v67 = vld [vmem:[%s1 + $0x108] sm:$0xff]
  %v68 = vld [vmem:[%s1 + $0x110] sm:$0xff]
  %v69 = vld [vmem:[%s1 + $0x118] sm:$0xff]
  %v70 = vld [vmem:[%s1 + $0x120] sm:$0xff]
  %v71 = vld [vmem:[%s1 + $0x128] sm:$0xff]
  %v72 = vld [vmem:[%s1 + $0x130] sm:$0xff]
  %v73 = vld [vmem:[%s1 + $0x138] sm:$0xff]
  %v74 = vld [vmem:[%s1 + $0x140] sm:$0xff]
  %v75 = vld [vmem:[%s1 + $0x148] sm:$0xff]
  %v76 = vld [vmem:[%s1 + $0x150] sm:$0xff]
  %v77 = vld [vmem:[%s1 + $0x158] sm:$0xff]
  %v78 = vld [vmem:[%s1 + $0x160] sm:$0xff]
  %v79 = vld [vmem:[%s1 + $0x168] sm:$0xff]
  %v80 = vld [vmem:[%s1 + $0x170] sm:$0xff]
  %v81 = vld [vmem:[%s1 + $0x178] sm:$0xff]
  %v82 = vld [vmem:[%s1 + $0x180] sm:$0xff]
  %v83 = vld [vmem:[%s1 + $0x188] sm:$0xff]
  %v84 = vld [vmem:[%s1 + $0x190] sm:$0xff]
  %v85 = vld [vmem:[%s1 + $0x198] sm:$0xff]
  %v86 = vld [vmem:[%s1 + $0x1a0] sm:$0xff]
  %v87 = vld [vmem:[%s1 + $0x1a8] sm:$0xff]
  %v88 = vld [vmem:[%s1 + $0x1b0] sm:$0xff]
  %v89 = vld [vmem:[%s1 + $0x1b8] sm:$0xff]
  %v90 = vld [vmem:[%s1 + $0x1c0] sm:$0xff]
  %v91 = vld [vmem:[%s1 + $0x1c8] sm:$0xff]
  %v92 = vld [vmem:[%s1 + $0x1d0] sm:$0xff]
  %v93 = vld [vmem:[%s1 + $0x1d8] sm:$0xff]
  %v94 = vld [vmem:[%s1 + $0x1e0] sm:$0xff]
  %v95 = vld [vmem:[%s1 + $0x1e8] sm:$0xff]
  %v96 = vld [vmem:[%s1 + $0x1f0] sm:$0xff]
  %v97 = vld [vmem:[%s1 + $0x1f8] sm:$0xff]
  %v98 = vld [vmem:[%s1 + $0x200] sm:$0xff]
  %v99 = vld [vmem:[%s1 + $0x208] sm:$0xff]
  %v100 = vld [vmem:[%s1 + $0x210] sm:$0xff]
  %v101 = vld [vmem:[%s1 + $0x218] sm:$0xff]
  %v102 = vld [vmem:[%s1 + $0x220] sm:$0xff]
  %v103 = vld [vmem:[%s1 + $0x228] sm:$0xff]
  %v104 = vld [vmem:[%s1 + $0x230] sm:$0xff]
  %v105 = vld [vmem:[%s1 + $0x238] sm:$0xff]
  %v106 = vld [vmem:[%s1 + $0x240] sm:$0xff]
  %v107 = vld [vmem:[%s1 + $0x248] sm:$0xff]
  %v108 = vld [vmem:[%s1 + $0x250] sm:$0xff]
  %v109 = vld [vmem:[%s1 + $0x258] sm:$0xff]
  %v110 = vld [vmem:[%s1 + $0x260] sm:$0xff]
  %v111 = vld [vmem:[%s1 + $0x268] sm:$0xff]
  %v112 = vld [vmem:[%s1 + $0x270] sm:$0xff]
  %v113 = vld [vmem:[%s1 + $0x278] sm:$0xff]
  %v114 = vld [vmem:[%s1 + $0x280] sm:$0xff]
  %v115 = vld [vmem:[%s1 + $0x288] sm:$0xff]
  %v116 = vld [vmem:[%s1 + $0x290] sm:$0xff]
  %v117 = vld [vmem:[%s1 + $0x298] sm:$0xff]
  %v118 = vld [vmem:[%s1 + $0x2a0] sm:$0xff]
  %v119 = vld [vmem:[%s1 + $0x2a8] sm:$0xff]
  %v120 = vld [vmem:[%s1 + $0x2b0] sm:$0xff]
  %v121 = vld [vmem:[%s1 + $0x2b8] sm:$0xff]
  %v122 = vld [vmem:[%s1 + $0x2c0] sm:$0xff]
  %v123 = vld [vmem:[%s1 + $0x2c8] sm:$0xff]
  %v124 = vld [vmem:[%s1 + $0x2d0] sm:$0xff]
  %v125 = vld [vmem:[%s1 + $0x2d8] sm:$0xff]
  %v126 = vld [vmem:[%s1 + $0x2e0] sm:$0xff]
  %v127 = vld [vmem:[%s1 + $0x2e8] sm:$0xff]
  %v128 = vld [vmem:[%s1 + $0x2f0] sm:$0xff]
  %v129 = vld [vmem:[%s1 + $0x2f8] sm:$0xff]
  %v130 = vld [vmem:[%s1 + $0x300] sm:$0xff]
  %v131 = vld [vmem:[%s1 + $0x308] sm:$0xff]
  %v132 = vld [vmem:[%s1 + $0x310] sm:$0xff]
  %v133 = vld [vmem:[%s1 + $0x318] sm:$0xff]
  %v134 = vld [vmem:[%s1 + $0x320] sm:$0xff]
  %v135 = vld [vmem:[%s1 + $0x328] sm:$0xff]
  %v136 = vld [vmem:[%s1 + $0x330] sm:$0xff]
  %v137 = vld [vmem:[%s1 + $0x338] sm:$0xff]
  %v138 = vld [vmem:[%s1 + $0x340] sm:$0xff]
  %v139 = vld [vmem:[%s1 + $0x348] sm:$0xff]
  %v140 = vld [vmem:[%s1 + $0x350] sm:$0xff]
  %v141 = vld [vmem:[%s1 + $0x358] sm:$0xff]
  %v142 = vld [vmem:[%s1 + $0x360] sm:$0xff]
  %v143 = vld [vmem:[%s1 + $0x368] sm:$0xff]
  %v144 = vld [vmem:[%s1 + $0x370] sm:$0xff]
  %v145 = vld [vmem:[%s1 + $0x378] sm:$0xff]
  %v146 = vld [vmem:[%s1 + $0x380] sm:$0xff]
  %v147 = vld [vmem:[%s1 + $0x388] sm:$0xff]
  %v148 = vld [vmem:[%s1 + $0x390] sm:$0xff]
  %v149 = vld [vmem:[%s1 + $0x398] sm:$0xff]
  %v150 = vld [vmem:[%s1 + $0x3a0] sm:$0xff]
  %v151 = vld [vmem:[%s1 + $0x3a8] sm:$0xff]
  %v152 = vld [vmem:[%s1 + $0x3b0] sm:$0xff]
  %v153 = vld [vmem:[%s1 + $0x3b8] sm:$0xff]
  %v154 = vld [vmem:[%s1 + $0x3c0] sm:$0xff]
  %v155 = vld [vmem:[%s1 + $0x3c8] sm:$0xff]
  %v156 = vld [vmem:[%s1 + $0x3d0] sm:$0xff]
  %v157 = vld [vmem:[%s1 + $0x3d8] sm:$0xff]
  %v158 = vld [vmem:[%s1 + $0x3e0] sm:$0xff]
  %v159 = vld [vmem:[%s1 + $0x3e8] sm:$0xff]
  %v160 = vld [vmem:[%s1 + $0x3f0] sm:$0xff]
  %v161 = vld [vmem:[%s1 + $0x3f8] sm:$0xff]
  %v162 = vld [vmem:[%s1 + $0x400] sm:$0xff]
  %v163 = vld [vmem:[%s1 + $0x408] sm:$0xff]
  %v164 = vld [vmem:[%s1 + $0x410] sm:$0xff]
  %v165 = vld [vmem:[%s1 + $0x418] sm:$0xff]
  %v166 = vld [vmem:[%s1 + $0x420] sm:$0xff]
  %v167 = vld [vmem:[%s1 + $0x428] sm:$0xff]
  %v168 = vld [vmem:[%s1 + $0x430] sm:$0xff]
  %v169 = vld [vmem:[%s1 + $0x438] sm:$0xff]
  %v170 = vld [vmem:[%s1 + $0x440] sm:$0xff]
  %v171 = vld [vmem:[%s1 + $0x448] sm:$0xff]
  %v172 = vld [vmem:[%s1 + $0x450] sm:$0xff]
  %v173 = vld [vmem:[%s1 + $0x458] sm:$0xff]
  %v174 = vld [vmem:[%s1 + $0x460] sm:$0xff]
  %v175 = vld [vmem:[%s1 + $0x468] sm:$0xff]
  %v176 = vld [vmem:[%s1 + $0x470] sm:$0xff]
  %v177 = vld [vmem:[%s1 + $0x478] sm:$0xff]
  %v178 = vld [vmem:[%s1 + $0x480] sm:$0xff]
  %v179 = vld [vmem:[%s1 + $0x488] sm:$0xff]
  %v180 = vld [vmem:[%s1 + $0x490] sm:$0xff]
  %v181 = vld [vmem:[%s1 + $0x498] sm:$0xff]
  %v182 = vld [vmem:[%s1 + $0x4a0] sm:$0xff]
  %v183 = vld [vmem:[%s1 + $0x4a8] sm:$0xff]
  %v184 = vld [vmem:[%s1 + $0x4b0] sm:$0xff]
  %v185 = vld [vmem:[%s1 + $0x4b8] sm:$0xff]
  %v186 = vld [vmem:[%s1 + $0x4c0] sm:$0xff]
  %v187 = vld [vmem:[%s1 + $0x4c8] sm:$0xff]
  %v188 = vld [vmem:[%s1 + $0x4d0] sm:$0xff]
  %v189 = vld [vmem:[%s1 + $0x4d8] sm:$0xff]
  %v190 = vld [vmem:[%s1 + $0x4e0] sm:$0xff]
  %v191 = vld [vmem:[%s1 + $0x4e8] sm:$0xff]
  %v192 = vld [vmem:[%s1 + $0x4f0] sm:$0xff]
  %v193 = vld [vmem:[%s1 + $0x4f8] sm:$0xff]
  %v194 = vld [vmem:[%s1 + $0x500] sm:$0xff]
  %v195 = vld [vmem:[%s1 + $0x508] sm:$0xff]
  %v196 = vld [vmem:[%s1 + $0x510] sm:$0xff]
  %v197 = vld [vmem:[%s1 + $0x518] sm:$0xff]
  %v198 = vld [vmem:[%s1 + $0x520] sm:$0xff]
  %v199 = vld [vmem:[%s1 + $0x528] sm:$0xff]
  %v200 = vld [vmem:[%s1 + $0x530] sm:$0xff]
  %v201 = vld [vmem:[%s1 + $0x538] sm:$0xff]
  %v202 = vld [vmem:[%s1 + $0x540] sm:$0xff]
  %v203 = vld [vmem:[%s1 + $0x548] sm:$0xff]
  %v204 = vld [vmem:[%s1 + $0x550] sm:$0xff]
  %v205 = vld [vmem:[%s1 + $0x558] sm:$0xff]
  %v206 = vld [vmem:[%s1 + $0x560] sm:$0xff]
  %v207 = vld [vmem:[%s1 + $0x568] sm:$0xff]
  %v208 = vld [vmem:[%s1 + $0x570] sm:$0xff]
  %v209 = vld [vmem:[%s1 + $0x578] sm:$0xff]
  %v210 = vld [vmem:[%s1 + $0x580] sm:$0xff]
  %v211 = vld [vmem:[%s1 + $0x588] sm:$0xff]
  %v212 = vld [vmem:[%s1 + $0x590] sm:$0xff]
  %v213 = vld [vmem:[%s1 + $0x598] sm:$0xff]
  %v214 = vld [vmem:[%s1 + $0x5a0] sm:$0xff]
  %v215 = vld [vmem:[%s1 + $0x5a8] sm:$0xff]
  %v216 = vld [vmem:[%s1 + $0x5b0] sm:$0xff]
  %v217 = vld [vmem:[%s1 + $0x5b8] sm:$0xff]
  %v218 = vld [vmem:[%s1 + $0x5c0] sm:$0xff]
  %v219 = vld [vmem:[%s1 + $0x5c8] sm:$0xff]
  %v220 = vld [vmem:[%s1 + $0x5d0] sm:$0xff]
  %v221 = vld [vmem:[%s1 + $0x5d8] sm:$0xff]
  %v222 = vld [vmem:[%s1 + $0x5e0] sm:$0xff]
  %v223 = vld [vmem:[%s1 + $0x5e8] sm:$0xff]
  %v224 = vld [vmem:[%s1 + $0x5f0] sm:$0xff]
  %v225 = vld [vmem:[%s1 + $0x5f8] sm:$0xff]
  %v226 = vld [vmem:[%s1 + $0x600] sm:$0xff]
  %v227 = vld [vmem:[%s1 + $0x608] sm:$0xff]
  %v228 = vld [vmem:[%s1 + $0x610] sm:$0xff]
  %v229 = vld [vmem:[%s1 + $0x618] sm:$0xff]
  %v230 = vld [vmem:[%s1 + $0x620] sm:$0xff]
  %v231 = vld [vmem:[%s1 + $0x628] sm:$0xff]
  %v232 = vld [vmem:[%s1 + $0x630] sm:$0xff]
  %v233 = vld [vmem:[%s1 + $0x638] sm:$0xff]
  %v234 = vld [vmem:[%s1 + $0x640] sm:$0xff]
  %v235 = vld [vmem:[%s1 + $0x648] sm:$0xff]
  %v236 = vld [vmem:[%s1 + $0x650] sm:$0xff]
  %v237 = vld [vmem:[%s1 + $0x658] sm:$0xff]
  %v238 = vld [vmem:[%s1 + $0x660] sm:$0xff]
  %v239 = vld [vmem:[%s1 + $0x668] sm:$0xff]
  %v240 = vld [vmem:[%s1 + $0x670] sm:$0xff]
  %v241 = vld [vmem:[%s1 + $0x678] sm:$0xff]
  %v242 = vld [vmem:[%s1 + $0x680] sm:$0xff]
  %v243 = vld [vmem:[%s1 + $0x688] sm:$0xff]
  %v244 = vld [vmem:[%s1 + $0x690] sm:$0xff]
  %v245 = vld [vmem:[%s1 + $0x698] sm:$0xff]
  %v246 = vld [vmem:[%s1 + $0x6a0] sm:$0xff]
  %v247 = vld [vmem:[%s1 + $0x6a8] sm:$0xff]
  %v248 = vld [vmem:[%s1 + $0x6b0] sm:$0xff]
  %v249 = vld [vmem:[%s1 + $0x6b8] sm:$0xff]
  %v250 = vld [vmem:[%s1 + $0x6c0] sm:$0xff]
  %v251 = vld [vmem:[%s1 + $0x6c8] sm:$0xff]
  %v252 = vld [vmem:[%s1 + $0x6d0] sm:$0xff]
  %v253 = vld [vmem:[%s1 + $0x6d8] sm:$0xff]
  %v254 = vld [vmem:[%s1 + $0x6e0] sm:$0xff]
  %v255 = vld [vmem:[%s1 + $0x6e8] sm:$0xff]
  %v256 = vld [vmem:[%s1 + $0x6f0] sm:$0xff]
  %v257 = vld [vmem:[%s1 + $0x6f8] sm:$0xff]
  %v258 = vld [vmem:[%s1 + $0x700] sm:$0xff]
  %v259 = vld [vmem:[%s1 + $0x708] sm:$0xff]
  %v260 = vld [vmem:[%s1 + $0x710] sm:$0xff]
  %v261 = vld [vmem:[%s1 + $0x718] sm:$0xff]
  %v262 = vld [vmem:[%s1 + $0x720] sm:$0xff]
  %v263 = vld [vmem:[%s1 + $0x728] sm:$0xff]
  %v264 = vld [vmem:[%s1 + $0x730] sm:$0xff]
  %v265 = vld [vmem:[%s1 + $0x738] sm:$0xff]
  %v266 = vld [vmem:[%s1 + $0x740] sm:$0xff]
  %v267 = vld [vmem:[%s1 + $0x748] sm:$0xff]
  %v268 = vld [vmem:[%s1 + $0x750] sm:$0xff]
  %v269 = vld [vmem:[%s1 + $0x758] sm:$0xff]
  %v270 = vld [vmem:[%s1 + $0x760] sm:$0xff]
  %v271 = vld [vmem:[%s1 + $0x768] sm:$0xff]
  %v272 = vld [vmem:[%s1 + $0x770] sm:$0xff]
  %v273 = vld [vmem:[%s1 + $0x778] sm:$0xff]
  %v274 = vld [vmem:[%s1 + $0x780] sm:$0xff]
  %v275 = vld [vmem:[%s1 + $0x788] sm:$0xff]
  %v276 = vld [vmem:[%s1 + $0x790] sm:$0xff]
  %v277 = vld [vmem:[%s1 + $0x798] sm:$0xff]
  %v278 = vld [vmem:[%s1 + $0x7a0] sm:$0xff]
  %v279 = vld [vmem:[%s1 + $0x7a8] sm:$0xff]
  %v280 = vld [vmem:[%s1 + $0x7b0] sm:$0xff]
  %v281 = vld [vmem:[%s1 + $0x7b8] sm:$0xff]
  %v282 = vld [vmem:[%s1 + $0x7c0] sm:$0xff]
  %v283 = vld [vmem:[%s1 + $0x7c8] sm:$0xff]
  %v284 = vld [vmem:[%s1 + $0x7d0] sm:$0xff]
  %v285 = vld [vmem:[%s1 + $0x7d8] sm:$0xff]
  %v286 = vld [vmem:[%s1 + $0x7e0] sm:$0xff]
  %v287 = vld [vmem:[%s1 + $0x7e8] sm:$0xff]
  %v288 = vld [vmem:[%s1 + $0x7f0] sm:$0xff]
  %v289 = vld [vmem:[%s1 + $0x7f8] sm:$0xff]
  %v290 = vld [vmem:[%s1 + $0x800] sm:$0xff]
  %v291 = vld [vmem:[%s1 + $0x808] sm:$0xff]
  %v292 = vld [vmem:[%s1 + $0x810] sm:$0xff]
  %v293 = vld [vmem:[%s1 + $0x818] sm:$0xff]
  %v294 = vld [vmem:[%s1 + $0x820] sm:$0xff]
  %v295 = vld [vmem:[%s1 + $0x828] sm:$0xff]
  %v296 = vld [vmem:[%s1 + $0x830] sm:$0xff]
  %v297 = vld [vmem:[%s1 + $0x838] sm:$0xff]
  %v298 = vld [vmem:[%s1 + $0x840] sm:$0xff]
  %v299 = vld [vmem:[%s1 + $0x848] sm:$0xff]
  %v300 = vld [vmem:[%s1 + $0x850] sm:$0xff]
  %v301 = vld [vmem:[%s1 + $0x858] sm:$0xff]
  %v302 = vld [vmem:[%s1 + $0x860] sm:$0xff]
  %v303 = vld [vmem:[%s1 + $0x868] sm:$0xff]
  %v304 = vld [vmem:[%s1 + $0x870] sm:$0xff]
  %v305 = vld [vmem:[%s1 + $0x878] sm:$0xff]
  %v306 = vld [vmem:[%s1 + $0x880] sm:$0xff]
  %v307 = vld [vmem:[%s1 + $0x888] sm:$0xff]
  %v308 = vld [vmem:[%s1 + $0x890] sm:$0xff]
  %v309 = vld [vmem:[%s1 + $0x898] sm:$0xff]
  %v310 = vld [vmem:[%s1 + $0x8a0] sm:$0xff]
  %v311 = vld [vmem:[%s1 + $0x8a8] sm:$0xff]
  %v312 = vld [vmem:[%s1 + $0x8b0] sm:$0xff]
  %v313 = vld [vmem:[%s1 + $0x8b8] sm:$0xff]
  %v314 = vld [vmem:[%s1 + $0x8c0] sm:$0xff]
  %v315 = vld [vmem:[%s1 + $0x8c8] sm:$0xff]
  %v316 = vld [vmem:[%s1 + $0x8d0] sm:$0xff]
  %v317 = vld [vmem:[%s1 + $0x8d8] sm:$0xff]
  %v318 = vld [vmem:[%s1 + $0x8e0] sm:$0xff]
  %v319 = vld [vmem:[%s1 + $0x8e8] sm:$0xff]
  %v320 = vld [vmem:[%s1 + $0x8f0] sm:$0xff]
  %v321 = vld [vmem:[%s1 + $0x8f8] sm:$0xff]
  %v322 = vld [vmem:[%s1 + $0x900] sm:$0xff]
  %v323 = vld [vmem:[%s1 + $0x908] sm:$0xff]
  %v324 = vld [vmem:[%s1 + $0x910] sm:$0xff]
  %v325 = vld [vmem:[%s1 + $0x918] sm:$0xff]
  %v326 = vld [vmem:[%s1 + $0x920] sm:$0xff]
  %v327 = vld [vmem:[%s1 + $0x928] sm:$0xff]
  %v328 = vld [vmem:[%s1 + $0x930] sm:$0xff]
  %v329 = vld [vmem:[%s1 + $0x938] sm:$0xff]
  %v330 = vld [vmem:[%s1 + $0x940] sm:$0xff]
  %v331 = vld [vmem:[%s1 + $0x948] sm:$0xff]
  %v332 = vld [vmem:[%s1 + $0x950] sm:$0xff]
  %v333 = vld [vmem:[%s1 + $0x958] sm:$0xff]
  %v334 = vld [vmem:[%s1 + $0x960] sm:$0xff]
  %v335 = vld [vmem:[%s1 + $0x968] sm:$0xff]
  %v336 = vld [vmem:[%s1 + $0x970] sm:$0xff]
  %v337 = vld [vmem:[%s1 + $0x978] sm:$0xff]
  %v338 = vld [vmem:[%s1 + $0x980] sm:$0xff]
  %v339 = vld [vmem:[%s1 + $0x988] sm:$0xff]
  %v340 = vld [vmem:[%s1 + $0x990] sm:$0xff]
  %v341 = vld [vmem:[%s1 + $0x998] sm:$0xff]
  %v342 = vld [vmem:[%s1 + $0x9a0] sm:$0xff]
  %v343 = vld [vmem:[%s1 + $0x9a8] sm:$0xff]
  %v344 = vld [vmem:[%s1 + $0x9b0] sm:$0xff]
  %v345 = vld [vmem:[%s1 + $0x9b8] sm:$0xff]
  %v346 = vld [vmem:[%s1 + $0x9c0] sm:$0xff]
  %v347 = vld [vmem:[%s1 + $0x9c8] sm:$0xff]
  %v348 = vld [vmem:[%s1 + $0x9d0] sm:$0xff]
  %v349 = vld [vmem:[%s1 + $0x9d8] sm:$0xff]
  %v350 = vld [vmem:[%s1 + $0x9e0] sm:$0xff]
  %v351 = vld [vmem:[%s1 + $0x9e8] sm:$0xff]
  %v352 = vld [vmem:[%s1 + $0x9f0] sm:$0xff]
  %v353 = vld [vmem:[%s1 + $0x9f8] sm:$0xff]
  %v354 = vld [vmem:[%s1 + $0xa00] sm:$0xff]
  %v355 = vld [vmem:[%s1 + $0xa08] sm:$0xff]
  %v356 = vld [vmem:[%s1 + $0xa10] sm:$0xff]
  %v357 = vld [vmem:[%s1 + $0xa18] sm:$0xff]
  %v358 = vld [vmem:[%s1 + $0xa20] sm:$0xff]
  %v359 = vld [vmem:[%s1 + $0xa28] sm:$0xff]
  %v360 = vld [vmem:[%s1 + $0xa30] sm:$0xff]
  %v361 = vld [vmem:[%s1 + $0xa38] sm:$0xff]
  %v362 = vld [vmem:[%s1 + $0xa40] sm:$0xff]
  %v363 = vld [vmem:[%s1 + $0xa48] sm:$0xff]
  %v364 = vld [vmem:[%s1 + $0xa50] sm:$0xff]
  %v365 = vld [vmem:[%s1 + $0xa58] sm:$0xff]
  %v366 = vld [vmem:[%s1 + $0xa60] sm:$0xff]
  %v367 = vld [vmem:[%s1 + $0xa68] sm:$0xff]
  %v368 = vld [vmem:[%s1 + $0xa70] sm:$0xff]
  %v369 = vld [vmem:[%s1 + $0xa78] sm:$0xff]
  %v370 = vld [vmem:[%s1 + $0xa80] sm:$0xff]
  %v371 = vld [vmem:[%s1 + $0xa88] sm:$0xff]
  %v372 = vld [vmem:[%s1 + $0xa90] sm:$0xff]
  %v373 = vld [vmem:[%s1 + $0xa98] sm:$0xff]
  %v374 = vld [vmem:[%s1 + $0xaa0] sm:$0xff]
  %v375 = vld [vmem:[%s1 + $0xaa8] sm:$0xff]
  %v376 = vld [vmem:[%s1 + $0xab0] sm:$0xff]
  %v377 = vld [vmem:[%s1 + $0xab8] sm:$0xff]
  %v378 = vld [vmem:[%s1 + $0xac0] sm:$0xff]
  %v379 = vld [vmem:[%s1 + $0xac8] sm:$0xff]
  %v380 = vld [vmem:[%s1 + $0xad0] sm:$0xff]
  %v381 = vld [vmem:[%s1 + $0xad8] sm:$0xff]
  %v382 = vld [vmem:[%s1 + $0xae0] sm:$0xff]
  %v383 = vld [vmem:[%s1 + $0xae8] sm:$0xff]
  %v384 = vld [vmem:[%s1 + $0xaf0] sm:$0xff]
  %v385 = vld [vmem:[%s1 + $0xaf8] sm:$0xff]
  %v386 = vld [vmem:[%s1 + $0xb00] sm:$0xff]
  %v387 = vld [vmem:[%s1 + $0xb08] sm:$0xff]
  %v388 = vld [vmem:[%s1 + $0xb10] sm:$0xff]
  %v389 = vld [vmem:[%s1 + $0xb18] sm:$0xff]
  %v390 = vld [vmem:[%s1 + $0xb20] sm:$0xff]
  %v391 = vld [vmem:[%s1 + $0xb28] sm:$0xff]
  %v392 = vld [vmem:[%s1 + $0xb30] sm:$0xff]
  %v393 = vld [vmem:[%s1 + $0xb38] sm:$0xff]
  %v394 = vld [vmem:[%s1 + $0xb40] sm:$0xff]
  %v395 = vld [vmem:[%s1 + $0xb48] sm:$0xff]
  %v396 = vld [vmem:[%s1 + $0xb50] sm:$0xff]
  %v397 = vld [vmem:[%s1 + $0xb58] sm:$0xff]
  %v398 = vld [vmem:[%s1 + $0xb60] sm:$0xff]
  %v399 = vld [vmem:[%s1 + $0xb68] sm:$0xff]
  %v400 = vld [vmem:[%s1 + $0xb70] sm:$0xff]
  %v401 = vld [vmem:[%s1 + $0xb78] sm:$0xff]
  %v402 = vld [vmem:[%s1 + $0xb80] sm:$0xff]
  %v403 = vld [vmem:[%s1 + $0xb88] sm:$0xff]
  %v404 = vld [vmem:[%s1 + $0xb90] sm:$0xff]
  %v405 = vld [vmem:[%s1 + $0xb98] sm:$0xff]
  %v406 = vld [vmem:[%s1 + $0xba0] sm:$0xff]
  %v407 = vld [vmem:[%s1 + $0xba8] sm:$0xff]
  %v408 = vld [vmem:[%s1 + $0xbb0] sm:$0xff]
  %v409 = vld [vmem:[%s1 + $0xbb8] sm:$0xff]
  %v410 = vld [vmem:[%s1 + $0xbc0] sm:$0xff]
  %v411 = vld [vmem:[%s1 + $0xbc8] sm:$0xff]
  %v412 = vld [vmem:[%s1 + $0xbd0] sm:$0xff]
  %v413 = vld [vmem:[%s1 + $0xbd8] sm:$0xff]
  %v414 = vld [vmem:[%s1 + $0xbe0] sm:$0xff]
  %v415 = vld [vmem:[%s1 + $0xbe8] sm:$0xff]
  %v416 = vld [vmem:[%s1 + $0xbf0] sm:$0xff]
  %v417 = vld [vmem:[%s1 + $0xbf8] sm:$0xff]
  %v418 = vld [vmem:[%s1 + $0xc00] sm:$0xff]
  %v419 = vld [vmem:[%s1 + $0xc08] sm:$0xff]
  %v420 = vld [vmem:[%s1 + $0xc10] sm:$0xff]
  %v421 = vld [vmem:[%s1 + $0xc18] sm:$0xff]
  %v422 = vld [vmem:[%s1 + $0xc20] sm:$0xff]
  %v423 = vld [vmem:[%s1 + $0xc28] sm:$0xff]
  %v424 = vld [vmem:[%s1 + $0xc30] sm:$0xff]
  %v425 = vld [vmem:[%s1 + $0xc38] sm:$0xff]
  %v426 = vld [vmem:[%s1 + $0xc40] sm:$0xff]
  %v427 = vld [vmem:[%s1 + $0xc48] sm:$0xff]
  %v428 = vld [vmem:[%s1 + $0xc50] sm:$0xff]
  %v429 = vld [vmem:[%s1 + $0xc58] sm:$0xff]
  %v430 = vld [vmem:[%s1 + $0xc60] sm:$0xff]
  %v431 = vld [vmem:[%s1 + $0xc68] sm:$0xff]
  %v432 = vld [vmem:[%s1 + $0xc70] sm:$0xff]
  %v433 = vld [vmem:[%s1 + $0xc78] sm:$0xff]
  %v434 = vld [vmem:[%s1 + $0xc80] sm:$0xff]
  %v435 = vld [vmem:[%s1 + $0xc88] sm:$0xff]
  %v436 = vld [vmem:[%s1 + $0xc90] sm:$0xff]
  %v437 = vld [vmem:[%s1 + $0xc98] sm:$0xff]
  %v438 = vld [vmem:[%s1 + $0xca0] sm:$0xff]
  %v439 = vld [vmem:[%s1 + $0xca8] sm:$0xff]
  %v440 = vld [vmem:[%s1 + $0xcb0] sm:$0xff]
  %v441 = vld [vmem:[%s1 + $0xcb8] sm:$0xff]
  %v442 = vld [vmem:[%s1 + $0xcc0] sm:$0xff]
  %v443 = vld [vmem:[%s1 + $0xcc8] sm:$0xff]
  %v444 = vld [vmem:[%s1 + $0xcd0] sm:$0xff]
  %v445 = vld [vmem:[%s1 + $0xcd8] sm:$0xff]
  %v446 = vld [vmem:[%s1 + $0xce0] sm:$0xff]
  %v447 = vld [vmem:[%s1 + $0xce8] sm:$0xff]
  %v448 = vld [vmem:[%s1 + $0xcf0] sm:$0xff]
  %v449 = vld [vmem:[%s1 + $0xcf8] sm:$0xff]
  %v450 = vld [vmem:[%s1 + $0xd00] sm:$0xff]
  %v451 = vld [vmem:[%s1 + $0xd08] sm:$0xff]
  %v452 = vld [vmem:[%s1 + $0xd10] sm:$0xff]
  %v453 = vld [vmem:[%s1 + $0xd18] sm:$0xff]
  %v454 = vld [vmem:[%s1 + $0xd20] sm:$0xff]
  %v455 = vld [vmem:[%s1 + $0xd28] sm:$0xff]
  %v456 = vld [vmem:[%s1 + $0xd30] sm:$0xff]
  %v457 = vld [vmem:[%s1 + $0xd38] sm:$0xff]
  %v458 = vld [vmem:[%s1 + $0xd40] sm:$0xff]
  %v459 = vld [vmem:[%s1 + $0xd48] sm:$0xff]
  %v460 = vld [vmem:[%s1 + $0xd50] sm:$0xff]
  %v461 = vld [vmem:[%s1 + $0xd58] sm:$0xff]
  %v462 = vld [vmem:[%s1 + $0xd60] sm:$0xff]
  %v463 = vld [vmem:[%s1 + $0xd68] sm:$0xff]
  %v464 = vld [vmem:[%s1 + $0xd70] sm:$0xff]
  %v465 = vld [vmem:[%s1 + $0xd78] sm:$0xff]
  %v466 = vld [vmem:[%s1 + $0xd80] sm:$0xff]
  %v467 = vld [vmem:[%s1 + $0xd88] sm:$0xff]
  %v468 = vld [vmem:[%s1 + $0xd90] sm:$0xff]
  %v469 = vld [vmem:[%s1 + $0xd98] sm:$0xff]
  %v470 = vld [vmem:[%s1 + $0xda0] sm:$0xff]
  %v471 = vld [vmem:[%s1 + $0xda8] sm:$0xff]
  %v472 = vld [vmem:[%s1 + $0xdb0] sm:$0xff]
  %v473 = vld [vmem:[%s1 + $0xdb8] sm:$0xff]
  %v474 = vld [vmem:[%s1 + $0xdc0] sm:$0xff]
  %v475 = vld [vmem:[%s1 + $0xdc8] sm:$0xff]
  %v476 = vld [vmem:[%s1 + $0xdd0] sm:$0xff]
  %v477 = vld [vmem:[%s1 + $0xdd8] sm:$0xff]
  %v478 = vld [vmem:[%s1 + $0xde0] sm:$0xff]
  %v479 = vld [vmem:[%s1 + $0xde8] sm:$0xff]
  %v480 = vld [vmem:[%s1 + $0xdf0] sm:$0xff]
  %v481 = vld [vmem:[%s1 + $0xdf8] sm:$0xff]
  %v482 = vld [vmem:[%s1 + $0xe00] sm:$0xff]
  %v483 = vld [vmem:[%s1 + $0xe08] sm:$0xff]
  %v484 = vld [vmem:[%s1 + $0xe10] sm:$0xff]
  %v485 = vld [vmem:[%s1 + $0xe18] sm:$0xff]
  %v486 = vld [vmem:[%s1 + $0xe20] sm:$0xff]
  %v487 = vld [vmem:[%s1 + $0xe28] sm:$0xff]
  %v488 = vld [vmem:[%s1 + $0xe30] sm:$0xff]
  %v489 = vld [vmem:[%s1 + $0xe38] sm:$0xff]
  %v490 = vld [vmem:[%s1 + $0xe40] sm:$0xff]
  %v491 = vld [vmem:[%s1 + $0xe48] sm:$0xff]
  %v492 = vld [vmem:[%s1 + $0xe50] sm:$0xff]
  %v493 = vld [vmem:[%s1 + $0xe58] sm:$0xff]
  %v494 = vld [vmem:[%s1 + $0xe60] sm:$0xff]
  %v495 = vld [vmem:[%s1 + $0xe68] sm:$0xff]
  %v496 = vld [vmem:[%s1 + $0xe70] sm:$0xff]
  %v497 = vld [vmem:[%s1 + $0xe78] sm:$0xff]
  %v498 = vld [vmem:[%s1 + $0xe80] sm:$0xff]
  %v499 = vld [vmem:[%s1 + $0xe88] sm:$0xff]
  %v500 = vld [vmem:[%s1 + $0xe90] sm:$0xff]
  %v501 = vld [vmem:[%s1 + $0xe98] sm:$0xff]
  %v502 = vld [vmem:[%s1 + $0xea0] sm:$0xff]
  %v503 = vld [vmem:[%s1 + $0xea8] sm:$0xff]
  %v504 = vld [vmem:[%s1 + $0xeb0] sm:$0xff]
  %v505 = vld [vmem:[%s1 + $0xeb8] sm:$0xff]
  %v506 = vld [vmem:[%s1 + $0xec0] sm:$0xff]
  %v507 = vld [vmem:[%s1 + $0xec8] sm:$0xff]
  %v508 = vld [vmem:[%s1 + $0xed0] sm:$0xff]
  %v509 = vld [vmem:[%s1 + $0xed8] sm:$0xff]
  %v510 = vld [vmem:[%s1 + $0xee0] sm:$0xff]
  %v511 = vld [vmem:[%s1 + $0xee8] sm:$0xff]
  %v512 = vld [vmem:[%s1 + $0xef0] sm:$0xff]
  %v513 = vld [vmem:[%s1 + $0xef8] sm:$0xff]
  %v514 = vld [vmem:[%s1 + $0xf00] sm:$0xff]
  %v515 = vld [vmem:[%s1 + $0xf08] sm:$0xff]
  %v516 = vld [vmem:[%s1 + $0xf10] sm:$0xff]
  %v517 = vld [vmem:[%s1 + $0xf18] sm:$0xff]
  %v518 = vld [vmem:[%s1 + $0xf20] sm:$0xff]
  %v519 = vld [vmem:[%s1 + $0xf28] sm:$0xff]
  %v520 = vld [vmem:[%s1 + $0xf30] sm:$0xff]
  %v521 = vld [vmem:[%s1 + $0xf38] sm:$0xff]
  %v522 = vld [vmem:[%s1 + $0xf40] sm:$0xff]
  %v523 = vld [vmem:[%s1 + $0xf48] sm:$0xff]
  %v524 = vld [vmem:[%s1 + $0xf50] sm:$0xff]
  %v525 = vld [vmem:[%s1 + $0xf58] sm:$0xff]
  %v526 = vld [vmem:[%s1 + $0xf60] sm:$0xff]
  %v527 = vld [vmem:[%s1 + $0xf68] sm:$0xff]
  %v528 = vld [vmem:[%s1 + $0xf70] sm:$0xff]
  %v529 = vld [vmem:[%s1 + $0xf78] sm:$0xff]
  %v530 = vld [vmem:[%s1 + $0xf80] sm:$0xff]
  %v531 = vld [vmem:[%s1 + $0xf88] sm:$0xff]
  %v532 = vld [vmem:[%s1 + $0xf90] sm:$0xff]
  %v533 = vld [vmem:[%s1 + $0xf98] sm:$0xff]
  %v534 = vld [vmem:[%s1 + $0xfa0] sm:$0xff]
  %v535 = vld [vmem:[%s1 + $0xfa8] sm:$0xff]
  %v536 = vld [vmem:[%s1 + $0xfb0] sm:$0xff]
  %v537 = vld [vmem:[%s1 + $0xfb8] sm:$0xff]
  %v538 = vld [vmem:[%s1 + $0xfc0] sm:$0xff]
  %v539 = vld [vmem:[%s1 + $0xfc8] sm:$0xff]
  %v540 = vld [vmem:[%s1 + $0xfd0] sm:$0xff]
  %v541 = vld [vmem:[%s1 + $0xfd8] sm:$0xff]
  %v542 = vld [vmem:[%s1 + $0xfe0] sm:$0xff]
  %v543 = vld [vmem:[%s1 + $0xfe8] sm:$0xff]
  %v544 = vld [vmem:[%s1 + $0xff0] sm:$0xff]
  %v545 = vld [vmem:[%s1 + $0xff8] sm:$0xff]
  %v546 = vld [vmem:[%s1 + $0x1000] sm:$0xff]
  %v547 = vld [vmem:[%s1 + $0x1008] sm:$0xff]
  %v548 = vld [vmem:[%s1 + $0x1010] sm:$0xff]
  %v549 = vld [vmem:[%s1 + $0x1018] sm:$0xff]
  %v550 = vld [vmem:[%s1 + $0x1020] sm:$0xff]
  %v551 = vld [vmem:[%s1 + $0x1028] sm:$0xff]
  %v552 = vld [vmem:[%s1 + $0x1030] sm:$0xff]
  %v553 = vld [vmem:[%s1 + $0x1038] sm:$0xff]
  %v554 = vld [vmem:[%s1 + $0x1040] sm:$0xff]
  %v555 = vld [vmem:[%s1 + $0x1048] sm:$0xff]
  %v556 = vld [vmem:[%s1 + $0x1050] sm:$0xff]
  %v557 = vld [vmem:[%s1 + $0x1058] sm:$0xff]
  %v558 = vld [vmem:[%s1 + $0x1060] sm:$0xff]
  %v559 = vld [vmem:[%s1 + $0x1068] sm:$0xff]
  %v560 = vld [vmem:[%s1 + $0x1070] sm:$0xff]
  %v561 = vld [vmem:[%s1 + $0x1078] sm:$0xff]
  %v562 = vld [vmem:[%s1 + $0x1080] sm:$0xff]
  %v563 = vld [vmem:[%s1 + $0x1088] sm:$0xff]
  %v564 = vld [vmem:[%s1 + $0x1090] sm:$0xff]
  %v565 = vld [vmem:[%s1 + $0x1098] sm:$0xff]
  %v566 = vld [vmem:[%s1 + $0x10a0] sm:$0xff]
  %v567 = vld [vmem:[%s1 + $0x10a8] sm:$0xff]
  %v568 = vld [vmem:[%s1 + $0x10b0] sm:$0xff]
  %v569 = vld [vmem:[%s1 + $0x10b8] sm:$0xff]
  %v570 = vld [vmem:[%s1 + $0x10c0] sm:$0xff]
  %v571 = vld [vmem:[%s1 + $0x10c8] sm:$0xff]
  %v572 = vld [vmem:[%s1 + $0x10d0] sm:$0xff]
  %v573 = vld [vmem:[%s1 + $0x10d8] sm:$0xff]
  %v574 = vld [vmem:[%s1 + $0x10e0] sm:$0xff]
  %v575 = vld [vmem:[%s1 + $0x10e8] sm:$0xff]
  %v576 = vld [vmem:[%s1 + $0x10f0] sm:$0xff]
  %v577 = vld [vmem:[%s1 + $0x10f8] sm:$0xff]
  %v578 = vld [vmem:[%s1 + $0x1100] sm:$0xff]
  %v579 = vld [vmem:[%s1 + $0x1108] sm:$0xff]
  %v580 = vld [vmem:[%s1 + $0x1110] sm:$0xff]
  %v581 = vld [vmem:[%s1 + $0x1118] sm:$0xff]
  %v582 = vld [vmem:[%s1 + $0x1120] sm:$0xff]
  %v583 = vld [vmem:[%s1 + $0x1128] sm:$0xff]
  %v584 = vld [vmem:[%s1 + $0x1130] sm:$0xff]
  %v585 = vld [vmem:[%s1 + $0x1138] sm:$0xff]
  %v586 = vld [vmem:[%s1 + $0x1140] sm:$0xff]
  %v587 = vld [vmem:[%s1 + $0x1148] sm:$0xff]
  %v588 = vld [vmem:[%s1 + $0x1150] sm:$0xff]
  %v589 = vld [vmem:[%s1 + $0x1158] sm:$0xff]
  %v590 = vld [vmem:[%s1 + $0x1160] sm:$0xff]
  %v591 = vld [vmem:[%s1 + $0x1168] sm:$0xff]
  %v592 = vld [vmem:[%s1 + $0x1170] sm:$0xff]
  %v593 = vld [vmem:[%s1 + $0x1178] sm:$0xff]
  %v594 = vld [vmem:[%s1 + $0x1180] sm:$0xff]
  %v595 = vld [vmem:[%s1 + $0x1188] sm:$0xff]
  %v596 = vld [vmem:[%s1 + $0x1190] sm:$0xff]
  %v597 = vld [vmem:[%s1 + $0x1198] sm:$0xff]
  %v598 = vld [vmem:[%s1 + $0x11a0] sm:$0xff]
  %v599 = vld [vmem:[%s1 + $0x11a8] sm:$0xff]
  %v600 = vld [vmem:[%s1 + $0x11b0] sm:$0xff]
  %v601 = vld [vmem:[%s1 + $0x11b8] sm:$0xff]
  %v602 = vld [vmem:[%s1 + $0x11c0] sm:$0xff]
  %v603 = vld [vmem:[%s1 + $0x11c8] sm:$0xff]
  %v604 = vld [vmem:[%s1 + $0x11d0] sm:$0xff]
  %v605 = vld [vmem:[%s1 + $0x11d8] sm:$0xff]
  %v606 = vld [vmem:[%s1 + $0x11e0] sm:$0xff]
  %v607 = vld [vmem:[%s1 + $0x11e8] sm:$0xff]
  %v608 = vld [vmem:[%s1 + $0x11f0] sm:$0xff]
  %v609 = vld [vmem:[%s1 + $0x11f8] sm:$0xff]
  %v610 = vld [vmem:[%s1 + $0x1200] sm:$0xff]
  %v611 = vld [vmem:[%s1 + $0x1208] sm:$0xff]
  %v612 = vld [vmem:[%s1 + $0x1210] sm:$0xff]
  %v613 = vld [vmem:[%s1 + $0x1218] sm:$0xff]
  %v614 = vld [vmem:[%s1 + $0x1220] sm:$0xff]
  %v615 = vld [vmem:[%s1 + $0x1228] sm:$0xff]
  %v616 = vld [vmem:[%s1 + $0x1230] sm:$0xff]
  %v617 = vld [vmem:[%s1 + $0x1238] sm:$0xff]
  %v618 = vld [vmem:[%s1 + $0x1240] sm:$0xff]
  %v619 = vld [vmem:[%s1 + $0x1248] sm:$0xff]
  %v620 = vld [vmem:[%s1 + $0x1250] sm:$0xff]
  %v621 = vld [vmem:[%s1 + $0x1258] sm:$0xff]
  %v622 = vld [vmem:[%s1 + $0x1260] sm:$0xff]
  %v623 = vld [vmem:[%s1 + $0x1268] sm:$0xff]
  %v624 = vld [vmem:[%s1 + $0x1270] sm:$0xff]
  %v625 = vld [vmem:[%s1 + $0x1278] sm:$0xff]
  %v626 = vld [vmem:[%s1 + $0x1280] sm:$0xff]
  %v627 = vld [vmem:[%s1 + $0x1288] sm:$0xff]
  %v628 = vld [vmem:[%s1 + $0x1290] sm:$0xff]
  %v629 = vld [vmem:[%s1 + $0x1298] sm:$0xff]
  %v630 = vld [vmem:[%s1 + $0x12a0] sm:$0xff]
  %v631 = vld [vmem:[%s1 + $0x12a8] sm:$0xff]
  %v632 = vld [vmem:[%s1 + $0x12b0] sm:$0xff]
  %v633 = vld [vmem:[%s1 + $0x12b8] sm:$0xff]
  %v634 = vld [vmem:[%s1 + $0x12c0] sm:$0xff]
  %v635 = vld [vmem:[%s1 + $0x12c8] sm:$0xff]
  %v636 = vld [vmem:[%s1 + $0x12d0] sm:$0xff]
  %v637 = vld [vmem:[%s1 + $0x12d8] sm:$0xff]
  %v638 = vld [vmem:[%s1 + $0x12e0] sm:$0xff]
  %v639 = vld [vmem:[%s1 + $0x12e8] sm:$0xff]
  %v640 = vld [vmem:[%s1 + $0x12f0] sm:$0xff]
  %v641 = vld [vmem:[%s1 + $0x12f8] sm:$0xff]
  %v642 = vld [vmem:[%s1 + $0x1300] sm:$0xff]
  %v643 = vld [vmem:[%s1 + $0x1308] sm:$0xff]
  %v644 = vld [vmem:[%s1 + $0x1310] sm:$0xff]
  %v645 = vld [vmem:[%s1 + $0x1318] sm:$0xff]
  %v646 = vld [vmem:[%s1 + $0x1320] sm:$0xff]
  %v647 = vld [vmem:[%s1 + $0x1328] sm:$0xff]
  %v648 = vld [vmem:[%s1 + $0x1330] sm:$0xff]
  %v649 = vld [vmem:[%s1 + $0x1338] sm:$0xff]
  %v650 = vld [vmem:[%s1 + $0x1340] sm:$0xff]
  %v651 = vld [vmem:[%s1 + $0x1348] sm:$0xff]
  %v652 = vld [vmem:[%s1 + $0x1350] sm:$0xff]
  %v653 = vld [vmem:[%s1 + $0x1358] sm:$0xff]
  %v654 = vld [vmem:[%s1 + $0x1360] sm:$0xff]
  %v655 = vld [vmem:[%s1 + $0x1368] sm:$0xff]
  %v656 = vld [vmem:[%s1 + $0x1370] sm:$0xff]
  %v657 = vld [vmem:[%s1 + $0x1378] sm:$0xff]
  %v658 = vld [vmem:[%s1 + $0x1380] sm:$0xff]
  %v659 = vld [vmem:[%s1 + $0x1388] sm:$0xff]
  %v660 = vld [vmem:[%s1 + $0x1390] sm:$0xff]
  %v661 = vld [vmem:[%s1 + $0x1398] sm:$0xff]
  %v662 = vld [vmem:[%s1 + $0x13a0] sm:$0xff]
  %v663 = vld [vmem:[%s1 + $0x13a8] sm:$0xff]
  %v664 = vld [vmem:[%s1 + $0x13b0] sm:$0xff]
  %v665 = vld [vmem:[%s1 + $0x13b8] sm:$0xff]
  %v666 = vld [vmem:[%s1 + $0x13c0] sm:$0xff]
  %v667 = vld [vmem:[%s1 + $0x13c8] sm:$0xff]
  %v668 = vld [vmem:[%s1 + $0x13d0] sm:$0xff]
  %v669 = vld [vmem:[%s1 + $0x13d8] sm:$0xff]
  %v670 = vld [vmem:[%s1 + $0x13e0] sm:$0xff]
  %v671 = vld [vmem:[%s1 + $0x13e8] sm:$0xff]
  %v672 = vld [vmem:[%s1 + $0x13f0] sm:$0xff]
  %v673 = vld [vmem:[%s1 + $0x13f8] sm:$0xff]
  %v674 = vld [vmem:[%s1 + $0x1400] sm:$0xff]
  %v675 = vld [vmem:[%s1 + $0x1408] sm:$0xff]
  %v676 = vld [vmem:[%s1 + $0x1410] sm:$0xff]
  %v677 = vld [vmem:[%s1 + $0x1418] sm:$0xff]
  %v678 = vld [vmem:[%s1 + $0x1420] sm:$0xff]
  %v679 = vld [vmem:[%s1 + $0x1428] sm:$0xff]
  %v680 = vld [vmem:[%s1 + $0x1430] sm:$0xff]
  %v681 = vld [vmem:[%s1 + $0x1438] sm:$0xff]
  %v682 = vld [vmem:[%s1 + $0x1440] sm:$0xff]
  %v683 = vld [vmem:[%s1 + $0x1448] sm:$0xff]
  %v684 = vld [vmem:[%s1 + $0x1450] sm:$0xff]
  %v685 = vld [vmem:[%s1 + $0x1458] sm:$0xff]
  %v686 = vld [vmem:[%s1 + $0x1460] sm:$0xff]
  %v687 = vld [vmem:[%s1 + $0x1468] sm:$0xff]
  %v688 = vld [vmem:[%s1 + $0x1470] sm:$0xff]
  %v689 = vld [vmem:[%s1 + $0x1478] sm:$0xff]
  %v690 = vld [vmem:[%s1 + $0x1480] sm:$0xff]
  %v691 = vld [vmem:[%s1 + $0x1488] sm:$0xff]
  %v692 = vld [vmem:[%s1 + $0x1490] sm:$0xff]
  %v693 = vld [vmem:[%s1 + $0x1498] sm:$0xff]
  %v694 = vld [vmem:[%s1 + $0x14a0] sm:$0xff]
  %v695 = vld [vmem:[%s1 + $0x14a8] sm:$0xff]
  %v696 = vld [vmem:[%s1 + $0x14b0] sm:$0xff]
  %v697 = vld [vmem:[%s1 + $0x14b8] sm:$0xff]
  %v698 = vld [vmem:[%s1 + $0x14c0] sm:$0xff]
  %v699 = vld [vmem:[%s1 + $0x14c8] sm:$0xff]
  %v700 = vld [vmem:[%s1 + $0x14d0] sm:$0xff]
  %v701 = vld [vmem:[%s1 + $0x14d8] sm:$0xff]
  %v702 = vld [vmem:[%s1 + $0x14e0] sm:$0xff]
  %v703 = vld [vmem:[%s1 + $0x14e8] sm:$0xff]
  %v704 = vld [vmem:[%s1 + $0x14f0] sm:$0xff]
  %v705 = vld [vmem:[%s1 + $0x14f8] sm:$0xff]
  %v706 = vld [vmem:[%s1 + $0x1500] sm:$0xff]
  %v707 = vld [vmem:[%s1 + $0x1508] sm:$0xff]
  %v708 = vld [vmem:[%s1 + $0x1510] sm:$0xff]
  %v709 = vld [vmem:[%s1 + $0x1518] sm:$0xff]
  %v710 = vld [vmem:[%s1 + $0x1520] sm:$0xff]
  %v711 = vld [vmem:[%s1 + $0x1528] sm:$0xff]
  %v712 = vld [vmem:[%s1 + $0x1530] sm:$0xff]
  %v713 = vld [vmem:[%s1 + $0x1538] sm:$0xff]
  %v714 = vld [vmem:[%s1 + $0x1540] sm:$0xff]
  %v715 = vld [vmem:[%s1 + $0x1548] sm:$0xff]
  %v716 = vld [vmem:[%s1 + $0x1550] sm:$0xff]
  %v717 = vld [vmem:[%s1 + $0x1558] sm:$0xff]
  %v718 = vld [vmem:[%s1 + $0x1560] sm:$0xff]
  %v719 = vld [vmem:[%s1 + $0x1568] sm:$0xff]
  %v720 = vld [vmem:[%s1 + $0x1570] sm:$0xff]
  %v721 = vld [vmem:[%s1 + $0x1578] sm:$0xff]
  %v722 = vld [vmem:[%s1 + $0x1580] sm:$0xff]
  %v723 = vld [vmem:[%s1 + $0x1588] sm:$0xff]
  %v724 = vld [vmem:[%s1 + $0x1590] sm:$0xff]
  %v725 = vld [vmem:[%s1 + $0x1598] sm:$0xff]
  %v726 = vld [vmem:[%s1 + $0x15a0] sm:$0xff]
  %v727 = vld [vmem:[%s1 + $0x15a8] sm:$0xff]
  %v728 = vld [vmem:[%s1 + $0x15b0] sm:$0xff]
  %v729 = vld [vmem:[%s1 + $0x15b8] sm:$0xff]
  %v730 = vld [vmem:[%s1 + $0x15c0] sm:$0xff]
  %v731 = vld [vmem:[%s1 + $0x15c8] sm:$0xff]
  %v732 = vld [vmem:[%s1 + $0x15d0] sm:$0xff]
  %v733 = vld [vmem:[%s1 + $0x15d8] sm:$0xff]
  %v734 = vld [vmem:[%s1 + $0x15e0] sm:$0xff]
  %v735 = vld [vmem:[%s1 + $0x15e8] sm:$0xff]
  %v736 = vld [vmem:[%s1 + $0x15f0] sm:$0xff]
  %v737 = vld [vmem:[%s1 + $0x15f8] sm:$0xff]
  %v738 = vld [vmem:[%s1 + $0x1600] sm:$0xff]
  %v739 = vld [vmem:[%s1 + $0x1608] sm:$0xff]
  %v740 = vld [vmem:[%s1 + $0x1610] sm:$0xff]
  %v741 = vld [vmem:[%s1 + $0x1618] sm:$0xff]
  %v742 = vld [vmem:[%s1 + $0x1620] sm:$0xff]
  %v743 = vld [vmem:[%s1 + $0x1628] sm:$0xff]
  %v744 = vld [vmem:[%s1 + $0x1630] sm:$0xff]
  %v745 = vld [vmem:[%s1 + $0x1638] sm:$0xff]
  %v746 = vld [vmem:[%s1 + $0x1640] sm:$0xff]
  %v747 = vld [vmem:[%s1 + $0x1648] sm:$0xff]
  %v748 = vld [vmem:[%s1 + $0x1650] sm:$0xff]
  %v749 = vld [vmem:[%s1 + $0x1658] sm:$0xff]
  %v750 = vld [vmem:[%s1 + $0x1660] sm:$0xff]
  %v751 = vld [vmem:[%s1 + $0x1668] sm:$0xff]
  %v752 = vld [vmem:[%s1 + $0x1670] sm:$0xff]
  %v753 = vld [vmem:[%s1 + $0x1678] sm:$0xff]
  %v754 = vld [vmem:[%s1 + $0x1680] sm:$0xff]
  %v755 = vld [vmem:[%s1 + $0x1688] sm:$0xff]
  %v756 = vld [vmem:[%s1 + $0x1690] sm:$0xff]
  %v757 = vld [vmem:[%s1 + $0x1698] sm:$0xff]
  %v758 = vld [vmem:[%s1 + $0x16a0] sm:$0xff]
  %v759 = vld [vmem:[%s1 + $0x16a8] sm:$0xff]
  %v760 = vld [vmem:[%s1 + $0x16b0] sm:$0xff]
  %v761 = vld [vmem:[%s1 + $0x16b8] sm:$0xff]
  %v762 = vld [vmem:[%s1 + $0x16c0] sm:$0xff]
  %v763 = vld [vmem:[%s1 + $0x16c8] sm:$0xff]
  %v764 = vld [vmem:[%s1 + $0x16d0] sm:$0xff]
  %v765 = vld [vmem:[%s1 + $0x16d8] sm:$0xff]
  %v766 = vld [vmem:[%s1 + $0x16e0] sm:$0xff]
  %v767 = vld [vmem:[%s1 + $0x16e8] sm:$0xff]
  %v768 = vld [vmem:[%s1 + $0x16f0] sm:$0xff]
  %v769 = vld [vmem:[%s1 + $0x16f8] sm:$0xff]
  %v770 = vld [vmem:[%s1 + $0x1700] sm:$0xff]
  %v771 = vld [vmem:[%s1 + $0x1708] sm:$0xff]
  %v772 = vld [vmem:[%s1 + $0x1710] sm:$0xff]
  %v773 = vld [vmem:[%s1 + $0x1718] sm:$0xff]
  %v774 = vld [vmem:[%s1 + $0x1720] sm:$0xff]
  %v775 = vld [vmem:[%s1 + $0x1728] sm:$0xff]
  %v776 = vld [vmem:[%s1 + $0x1730] sm:$0xff]
  %v777 = vld [vmem:[%s1 + $0x1738] sm:$0xff]
  %v778 = vld [vmem:[%s1 + $0x1740] sm:$0xff]
  %v779 = vld [vmem:[%s1 + $0x1748] sm:$0xff]
  %v780 = vld [vmem:[%s1 + $0x1750] sm:$0xff]
  %v781 = vld [vmem:[%s1 + $0x1758] sm:$0xff]
  %v782 = vld [vmem:[%s1 + $0x1760] sm:$0xff]
  %v783 = vld [vmem:[%s1 + $0x1768] sm:$0xff]
  %v784 = vld [vmem:[%s1 + $0x1770] sm:$0xff]
  %v785 = vld [vmem:[%s1 + $0x1778] sm:$0xff]
  %v786 = vld [vmem:[%s1 + $0x1780] sm:$0xff]
  %v787 = vld [vmem:[%s1 + $0x1788] sm:$0xff]
  %v788 = vld [vmem:[%s1 + $0x1790] sm:$0xff]
  %v789 = vld [vmem:[%s1 + $0x1798] sm:$0xff]
  %v790 = vld [vmem:[%s1 + $0x17a0] sm:$0xff]
  %v791 = vld [vmem:[%s1 + $0x17a8] sm:$0xff]
  %v792 = vld [vmem:[%s1 + $0x17b0] sm:$0xff]
  %v793 = vld [vmem:[%s1 + $0x17b8] sm:$0xff]
  %v794 = vld [vmem:[%s1 + $0x17c0] sm:$0xff]
  %v795 = vld [vmem:[%s1 + $0x17c8] sm:$0xff]
  %v796 = vld [vmem:[%s1 + $0x17d0] sm:$0xff]
  %v797 = vld [vmem:[%s1 + $0x17d8] sm:$0xff]
  %v798 = vld [vmem:[%s1 + $0x17e0] sm:$0xff]
  %v799 = vld [vmem:[%s1 + $0x17e8] sm:$0xff]
  %v800 = vld [vmem:[%s1 + $0x17f0] sm:$0xff]
  %v801 = vld [vmem:[%s1 + $0x17f8] sm:$0xff]
  %v802 = vld [vmem:[%s1 + $0x1800] sm:$0xff]
  %v803 = vld [vmem:[%s1 + $0x1808] sm:$0xff]
  %v804 = vld [vmem:[%s1 + $0x1810] sm:$0xff]
  %v805 = vld [vmem:[%s1 + $0x1818] sm:$0xff]
  %v806 = vld [vmem:[%s1 + $0x1820] sm:$0xff]
  %v807 = vld [vmem:[%s1 + $0x1828] sm:$0xff]
  %v808 = vld [vmem:[%s1 + $0x1830] sm:$0xff]
  %v809 = vld [vmem:[%s1 + $0x1838] sm:$0xff]
  %v810 = vld [vmem:[%s1 + $0x1840] sm:$0xff]
  %v811 = vld [vmem:[%s1 + $0x1848] sm:$0xff]
  %v812 = vld [vmem:[%s1 + $0x1850] sm:$0xff]
  %v813 = vld [vmem:[%s1 + $0x1858] sm:$0xff]
  %v814 = vld [vmem:[%s1 + $0x1860] sm:$0xff]
  %v815 = vld [vmem:[%s1 + $0x1868] sm:$0xff]
  %v816 = vld [vmem:[%s1 + $0x1870] sm:$0xff]
  %v817 = vld [vmem:[%s1 + $0x1878] sm:$0xff]
  %v818 = vld [vmem:[%s1 + $0x1880] sm:$0xff]
  %v819 = vld [vmem:[%s1 + $0x1888] sm:$0xff]
  %v820 = vld [vmem:[%s1 + $0x1890] sm:$0xff]
  %v821 = vld [vmem:[%s1 + $0x1898] sm:$0xff]
  %v822 = vld [vmem:[%s1 + $0x18a0] sm:$0xff]
  %v823 = vld [vmem:[%s1 + $0x18a8] sm:$0xff]
  %v824 = vld [vmem:[%s1 + $0x18b0] sm:$0xff]
  %v825 = vld [vmem:[%s1 + $0x18b8] sm:$0xff]
  %v826 = vld [vmem:[%s1 + $0x18c0] sm:$0xff]
  %v827 = vld [vmem:[%s1 + $0x18c8] sm:$0xff]
  %v828 = vld [vmem:[%s1 + $0x18d0] sm:$0xff]
  %v829 = vld [vmem:[%s1 + $0x18d8] sm:$0xff]
  %v830 = vld [vmem:[%s1 + $0x18e0] sm:$0xff]
  %v831 = vld [vmem:[%s1 + $0x18e8] sm:$0xff]
  %v832 = vld [vmem:[%s1 + $0x18f0] sm:$0xff]
  %v833 = vld [vmem:[%s1 + $0x18f8] sm:$0xff]
  %v834 = vld [vmem:[%s1 + $0x1900] sm:$0xff]
  %v835 = vld [vmem:[%s1 + $0x1908] sm:$0xff]
  %v836 = vld [vmem:[%s1 + $0x1910] sm:$0xff]
  %v837 = vld [vmem:[%s1 + $0x1918] sm:$0xff]
  %v838 = vld [vmem:[%s1 + $0x1920] sm:$0xff]
  %v839 = vld [vmem:[%s1 + $0x1928] sm:$0xff]
  %v840 = vld [vmem:[%s1 + $0x1930] sm:$0xff]
  %v841 = vld [vmem:[%s1 + $0x1938] sm:$0xff]
  %v842 = vld [vmem:[%s1 + $0x1940] sm:$0xff]
  %v843 = vld [vmem:[%s1 + $0x1948] sm:$0xff]
  %v844 = vld [vmem:[%s1 + $0x1950] sm:$0xff]
  %v845 = vld [vmem:[%s1 + $0x1958] sm:$0xff]
  %v846 = vld [vmem:[%s1 + $0x1960] sm:$0xff]
  %v847 = vld [vmem:[%s1 + $0x1968] sm:$0xff]
  %v848 = vld [vmem:[%s1 + $0x1970] sm:$0xff]
  %v849 = vld [vmem:[%s1 + $0x1978] sm:$0xff]
  %v850 = vld [vmem:[%s1 + $0x1980] sm:$0xff]
  %v851 = vld [vmem:[%s1 + $0x1988] sm:$0xff]
  %v852 = vld [vmem:[%s1 + $0x1990] sm:$0xff]
  %v853 = vld [vmem:[%s1 + $0x1998] sm:$0xff]
  %v854 = vld [vmem:[%s1 + $0x19a0] sm:$0xff]
  %v855 = vld [vmem:[%s1 + $0x19a8] sm:$0xff]
  %v856 = vld [vmem:[%s1 + $0x19b0] sm:$0xff]
  %v857 = vld [vmem:[%s1 + $0x19b8] sm:$0xff]
  %v858 = vld [vmem:[%s1 + $0x19c0] sm:$0xff]
  %v859 = vld [vmem:[%s1 + $0x19c8] sm:$0xff]
  %v860 = vld [vmem:[%s1 + $0x19d0] sm:$0xff]
  %v861 = vld [vmem:[%s1 + $0x19d8] sm:$0xff]
  %v862 = vld [vmem:[%s1 + $0x19e0] sm:$0xff]
  %v863 = vld [vmem:[%s1 + $0x19e8] sm:$0xff]
  %v864 = vld [vmem:[%s1 + $0x19f0] sm:$0xff]
  %v865 = vld [vmem:[%s1 + $0x19f8] sm:$0xff]
  %v866 = vld [vmem:[%s1 + $0x1a00] sm:$0xff]
  %v867 = vld [vmem:[%s1 + $0x1a08] sm:$0xff]
  %v868 = vld [vmem:[%s1 + $0x1a10] sm:$0xff]
  %v869 = vld [vmem:[%s1 + $0x1a18] sm:$0xff]
  %v870 = vld [vmem:[%s1 + $0x1a20] sm:$0xff]
  %v871 = vld [vmem:[%s1 + $0x1a28] sm:$0xff]
  %v872 = vld [vmem:[%s1 + $0x1a30] sm:$0xff]
  %v873 = vld [vmem:[%s1 + $0x1a38] sm:$0xff]
  %v874 = vld [vmem:[%s1 + $0x1a40] sm:$0xff]
  %v875 = vld [vmem:[%s1 + $0x1a48] sm:$0xff]
  %v876 = vld [vmem:[%s1 + $0x1a50] sm:$0xff]
  %v877 = vld [vmem:[%s1 + $0x1a58] sm:$0xff]
  %v878 = vld [vmem:[%s1 + $0x1a60] sm:$0xff]
  %v879 = vld [vmem:[%s1 + $0x1a68] sm:$0xff]
  %v880 = vld [vmem:[%s1 + $0x1a70] sm:$0xff]
  %v881 = vld [vmem:[%s1 + $0x1a78] sm:$0xff]
  %v882 = vld [vmem:[%s1 + $0x1a80] sm:$0xff]
  %v883 = vld [vmem:[%s1 + $0x1a88] sm:$0xff]
  %v884 = vld [vmem:[%s1 + $0x1a90] sm:$0xff]
  %v885 = vld [vmem:[%s1 + $0x1a98] sm:$0xff]
  %v886 = vld [vmem:[%s1 + $0x1aa0] sm:$0xff]
  %v887 = vld [vmem:[%s1 + $0x1aa8] sm:$0xff]
  %v888 = vld [vmem:[%s1 + $0x1ab0] sm:$0xff]
  %v889 = vld [vmem:[%s1 + $0x1ab8] sm:$0xff]
  %v890 = vld [vmem:[%s1 + $0x1ac0] sm:$0xff]
  %v891 = vld [vmem:[%s1 + $0x1ac8] sm:$0xff]
  %v892 = vld [vmem:[%s1 + $0x1ad0] sm:$0xff]
  %v893 = vld [vmem:[%s1 + $0x1ad8] sm:$0xff]
  %v894 = vld [vmem:[%s1 + $0x1ae0] sm:$0xff]
  %v895 = vld [vmem:[%s1 + $0x1ae8] sm:$0xff]
  %v896 = vld [vmem:[%s1 + $0x1af0] sm:$0xff]
  %v897 = vld [vmem:[%s1 + $0x1af8] sm:$0xff]
  %v898 = vld [vmem:[%s1 + $0x1b00] sm:$0xff]
  %v899 = vld [vmem:[%s1 + $0x1b08] sm:$0xff]
  %v900 = vld [vmem:[%s1 + $0x1b10] sm:$0xff]
  %v901 = vld [vmem:[%s1 + $0x1b18] sm:$0xff]
  %v902 = vld [vmem:[%s1 + $0x1b20] sm:$0xff]
  %v903 = vld [vmem:[%s1 + $0x1b28] sm:$0xff]
  %v904 = vld [vmem:[%s1 + $0x1b30] sm:$0xff]
  %v905 = vld [vmem:[%s1 + $0x1b38] sm:$0xff]
  %v906 = vld [vmem:[%s1 + $0x1b40] sm:$0xff]
  %v907 = vld [vmem:[%s1 + $0x1b48] sm:$0xff]
  %v908 = vld [vmem:[%s1 + $0x1b50] sm:$0xff]
  %v909 = vld [vmem:[%s1 + $0x1b58] sm:$0xff]
  %v910 = vld [vmem:[%s1 + $0x1b60] sm:$0xff]
  %v911 = vld [vmem:[%s1 + $0x1b68] sm:$0xff]
  %v912 = vld [vmem:[%s1 + $0x1b70] sm:$0xff]
  %v913 = vld [vmem:[%s1 + $0x1b78] sm:$0xff]
  %v914 = vld [vmem:[%s1 + $0x1b80] sm:$0xff]
  %v915 = vld [vmem:[%s1 + $0x1b88] sm:$0xff]
  %v916 = vld [vmem:[%s1 + $0x1b90] sm:$0xff]
  %v917 = vld [vmem:[%s1 + $0x1b98] sm:$0xff]
  %v918 = vld [vmem:[%s1 + $0x1ba0] sm:$0xff]
  %v919 = vld [vmem:[%s1 + $0x1ba8] sm:$0xff]
  %v920 = vld [vmem:[%s1 + $0x1bb0] sm:$0xff]
  %v921 = vld [vmem:[%s1 + $0x1bb8] sm:$0xff]
  %v922 = vld [vmem:[%s1 + $0x1bc0] sm:$0xff]
  %v923 = vld [vmem:[%s1 + $0x1bc8] sm:$0xff]
  %v924 = vld [vmem:[%s1 + $0x1bd0] sm:$0xff]
  %v925 = vld [vmem:[%s1 + $0x1bd8] sm:$0xff]
  %v926 = vld [vmem:[%s1 + $0x1be0] sm:$0xff]
  %v927 = vld [vmem:[%s1 + $0x1be8] sm:$0xff]
  %v928 = vld [vmem:[%s1 + $0x1bf0] sm:$0xff]
  %v929 = vld [vmem:[%s1 + $0x1bf8] sm:$0xff]
  %v930 = vld [vmem:[%s1 + $0x1c00] sm:$0xff]
  %v931 = vld [vmem:[%s1 + $0x1c08] sm:$0xff]
  %v932 = vld [vmem:[%s1 + $0x1c10] sm:$0xff]
  %v933 = vld [vmem:[%s1 + $0x1c18] sm:$0xff]
  %v934 = vld [vmem:[%s1 + $0x1c20] sm:$0xff]
  %v935 = vld [vmem:[%s1 + $0x1c28] sm:$0xff]
  %v936 = vld [vmem:[%s1 + $0x1c30] sm:$0xff]
  %v937 = vld [vmem:[%s1 + $0x1c38] sm:$0xff]
  %v938 = vld [vmem:[%s1 + $0x1c40] sm:$0xff]
  %v939 = vld [vmem:[%s1 + $0x1c48] sm:$0xff]
  %v940 = vld [vmem:[%s1 + $0x1c50] sm:$0xff]
  %v941 = vld [vmem:[%s1 + $0x1c58] sm:$0xff]
  %v942 = vld [vmem:[%s1 + $0x1c60] sm:$0xff]
  %v943 = vld [vmem:[%s1 + $0x1c68] sm:$0xff]
  %v944 = vld [vmem:[%s1 + $0x1c70] sm:$0xff]
  %v945 = vld [vmem:[%s1 + $0x1c78] sm:$0xff]
  %v946 = vld [vmem:[%s1 + $0x1c80] sm:$0xff]
  %v947 = vld [vmem:[%s1 + $0x1c88] sm:$0xff]
  %v948 = vld [vmem:[%s1 + $0x1c90] sm:$0xff]
  %v949 = vld [vmem:[%s1 + $0x1c98] sm:$0xff]
  %v950 = vld [vmem:[%s1 + $0x1ca0] sm:$0xff]
  %v951 = vld [vmem:[%s1 + $0x1ca8] sm:$0xff]
  %v952 = vld [vmem:[%s1 + $0x1cb0] sm:$0xff]
  %v953 = vld [vmem:[%s1 + $0x1cb8] sm:$0xff]
  %v954 = vld [vmem:[%s1 + $0x1cc0] sm:$0xff]
  %v955 = vld [vmem:[%s1 + $0x1cc8] sm:$0xff]
  %v956 = vld [vmem:[%s1 + $0x1cd0] sm:$0xff]
  %v957 = vld [vmem:[%s1 + $0x1cd8] sm:$0xff]
  %v958 = vld [vmem:[%s1 + $0x1ce0] sm:$0xff]
  %v959 = vld [vmem:[%s1 + $0x1ce8] sm:$0xff]
  %v960 = vld [vmem:[%s1 + $0x1cf0] sm:$0xff]
  %v961 = vld [vmem:[%s1 + $0x1cf8] sm:$0xff]
  %v962 = vld [vmem:[%s1 + $0x1d00] sm:$0xff]
  %v963 = vld [vmem:[%s1 + $0x1d08] sm:$0xff]
  %v964 = vld [vmem:[%s1 + $0x1d10] sm:$0xff]
  %v965 = vld [vmem:[%s1 + $0x1d18] sm:$0xff]
  %v966 = vld [vmem:[%s1 + $0x1d20] sm:$0xff]
  %v967 = vld [vmem:[%s1 + $0x1d28] sm:$0xff]
  %v968 = vld [vmem:[%s1 + $0x1d30] sm:$0xff]
  %v969 = vld [vmem:[%s1 + $0x1d38] sm:$0xff]
  %v970 = vld [vmem:[%s1 + $0x1d40] sm:$0xff]
  %v971 = vld [vmem:[%s1 + $0x1d48] sm:$0xff]
  %v972 = vld [vmem:[%s1 + $0x1d50] sm:$0xff]
  %v973 = vld [vmem:[%s1 + $0x1d58] sm:$0xff]
  %v974 = vld [vmem:[%s1 + $0x1d60] sm:$0xff]
  %v975 = vld [vmem:[%s1 + $0x1d68] sm:$0xff]
  %v976 = vld [vmem:[%s1 + $0x1d70] sm:$0xff]
  %v977 = vld [vmem:[%s1 + $0x1d78] sm:$0xff]
  %v978 = vld [vmem:[%s1 + $0x1d80] sm:$0xff]
  %v979 = vld [vmem:[%s1 + $0x1d88] sm:$0xff]
  %v980 = vld [vmem:[%s1 + $0x1d90] sm:$0xff]
  %v981 = vld [vmem:[%s1 + $0x1d98] sm:$0xff]
  %v982 = vld [vmem:[%s1 + $0x1da0] sm:$0xff]
  %v983 = vld [vmem:[%s1 + $0x1da8] sm:$0xff]
  %v984 = vld [vmem:[%s1 + $0x1db0] sm:$0xff]
  %v985 = vld [vmem:[%s1 + $0x1db8] sm:$0xff]
  %v986 = vld [vmem:[%s1 + $0x1dc0] sm:$0xff]
  %v987 = vld [vmem:[%s1 + $0x1dc8] sm:$0xff]
  %v988 = vld [vmem:[%s1 + $0x1dd0] sm:$0xff]
  %v989 = vld [vmem:[%s1 + $0x1dd8] sm:$0xff]
  %v990 = vld [vmem:[%s1 + $0x1de0] sm:$0xff]
  %v991 = vld [vmem:[%s1 + $0x1de8] sm:$0xff]
  %v992 = vld [vmem:[%s1 + $0x1df0] sm:$0xff]
  %v993 = vld [vmem:[%s1 + $0x1df8] sm:$0xff]
  %v994 = vld [vmem:[%s1 + $0x1e00] sm:$0xff]
  %v995 = vld [vmem:[%s1 + $0x1e08] sm:$0xff]
  %v996 = vld [vmem:[%s1 + $0x1e10] sm:$0xff]
  %v997 = vld [vmem:[%s1 + $0x1e18] sm:$0xff]
  %v998 = vld [vmem:[%s1 + $0x1e20] sm:$0xff]
  %v999 = vld [vmem:[%s1 + $0x1e28] sm:$0xff]
  %v1000 = vld [vmem:[%s1 + $0x1e30] sm:$0xff]
  %v1001 = vld [vmem:[%s1 + $0x1e38] sm:$0xff]
  %v1002 = vld [vmem:[%s1 + $0x1e40] sm:$0xff]
  %v1003 = vld [vmem:[%s1 + $0x1e48] sm:$0xff]
  %v1004 = vld [vmem:[%s1 + $0x1e50] sm:$0xff]
  %v1005 = vld [vmem:[%s1 + $0x1e58] sm:$0xff]
  %v1006 = vld [vmem:[%s1 + $0x1e60] sm:$0xff]
  %v1007 = vld [vmem:[%s1 + $0x1e68] sm:$0xff]
  %v1008 = vld [vmem:[%s1 + $0x1e70] sm:$0xff]
  %v1009 = vld [vmem:[%s1 + $0x1e78] sm:$0xff]
  %v1010 = vld [vmem:[%s1 + $0x1e80] sm:$0xff]
  %v1011 = vld [vmem:[%s1 + $0x1e88] sm:$0xff]
  %v1012 = vld [vmem:[%s1 + $0x1e90] sm:$0xff]
  %v1013 = vld [vmem:[%s1 + $0x1e98] sm:$0xff]
  %v1014 = vld [vmem:[%s1 + $0x1ea0] sm:$0xff]
  %v1015 = vld [vmem:[%s1 + $0x1ea8] sm:$0xff]
  %v1016 = vld [vmem:[%s1 + $0x1eb0] sm:$0xff]
  %v1017 = vld [vmem:[%s1 + $0x1eb8] sm:$0xff]
  %v1018 = vld [vmem:[%s1 + $0x1ec0] sm:$0xff]
  %v1019 = vld [vmem:[%s1 + $0x1ec8] sm:$0xff]
  %v1020 = vld [vmem:[%s1 + $0x1ed0] sm:$0xff]
  %v1021 = vld [vmem:[%s1 + $0x1ed8] sm:$0xff]
  %v1022 = vld [vmem:[%s1 + $0x1ee0] sm:$0xff]
  %v1023 = vld [vmem:[%s1 + $0x1ee8] sm:$0xff]
  %v1024 = vld [vmem:[%s1 + $0x1ef0] sm:$0xff]
  %v1025 = vld [vmem:[%s1 + $0x1ef8] sm:$0xff]
  %v1026 = vld [vmem:[%s1 + $0x1f00] sm:$0xff]
  %v1027 = vld [vmem:[%s1 + $0x1f08] sm:$0xff]
  %v1028 = vld [vmem:[%s1 + $0x1f10] sm:$0xff]
  %v1029 = vld [vmem:[%s1 + $0x1f18] sm:$0xff]
  %v1030 = vld [vmem:[%s1 + $0x1f20] sm:$0xff]
  %v1031 = vld [vmem:[%s1 + $0x1f28] sm:$0xff]
  %v1032 = vld [vmem:[%s1 + $0x1f30] sm:$0xff]
  %v1033 = vld [vmem:[%s1 + $0x1f38] sm:$0xff]
  %v1034 = vld [vmem:[%s1 + $0x1f40] sm:$0xff]
  %v1035 = vld [vmem:[%s1 + $0x1f48] sm:$0xff]
  %v1036 = vld [vmem:[%s1 + $0x1f50] sm:$0xff]
  %v1037 = vld [vmem:[%s1 + $0x1f58] sm:$0xff]
  %v1038 = vld [vmem:[%s1 + $0x1f60] sm:$0xff]
  %v1039 = vld [vmem:[%s1 + $0x1f68] sm:$0xff]
  %v1040 = vld [vmem:[%s1 + $0x1f70] sm:$0xff]
  %v1041 = vld [vmem:[%s1 + $0x1f78] sm:$0xff]
  %v1042 = vld [vmem:[%s1 + $0x1f80] sm:$0xff]
  %v1043 = vld [vmem:[%s1 + $0x1f88] sm:$0xff]
  %v1044 = vld [vmem:[%s1 + $0x1f90] sm:$0xff]
  %v1045 = vld [vmem:[%s1 + $0x1f98] sm:$0xff]
  %v1046 = vld [vmem:[%s1 + $0x1fa0] sm:$0xff]
  %v1047 = vld [vmem:[%s1 + $0x1fa8] sm:$0xff]
  %v1048 = vld [vmem:[%s1 + $0x1fb0] sm:$0xff]
  %v1049 = vld [vmem:[%s1 + $0x1fb8] sm:$0xff]
  %v1050 = vld [vmem:[%s1 + $0x1fc0] sm:$0xff]
  %v1051 = vld [vmem:[%s1 + $0x1fc8] sm:$0xff]
  %v1052 = vld [vmem:[%s1 + $0x1fd0] sm:$0xff]
  %v1053 = vld [vmem:[%s1 + $0x1fd8] sm:$0xff]
  %v1054 = vld [vmem:[%s1 + $0x1fe0] sm:$0xff]
  %v1055 = vld [vmem:[%s1 + $0x1fe8] sm:$0xff]
  %v1056 = vld [vmem:[%s1 + $0x1ff0] sm:$0xff]
  %v1057 = vld [vmem:[%s1 + $0x1ff8] sm:$0xff]
  %v1058 = vld [vmem:[%s1 + $0x2000] sm:$0xff]
  %v1059 = vld [vmem:[%s1 + $0x2008] sm:$0xff]
  %v1060 = vld [vmem:[%s1 + $0x2010] sm:$0xff]
  %v1061 = vld [vmem:[%s1 + $0x2018] sm:$0xff]
  %v1062 = vld [vmem:[%s1 + $0x2020] sm:$0xff]
  %v1063 = vld [vmem:[%s1 + $0x2028] sm:$0xff]
  %v1064 = vld [vmem:[%s1 + $0x2030] sm:$0xff]
  %v1065 = vld [vmem:[%s1 + $0x2038] sm:$0xff]
  %v1066 = vld [vmem:[%s1 + $0x2040] sm:$0xff]
  %v1067 = vld [vmem:[%s1 + $0x2048] sm:$0xff]
  %v1068 = vld [vmem:[%s1 + $0x2050] sm:$0xff]
  %v1069 = vld [vmem:[%s1 + $0x2058] sm:$0xff]
  %v1070 = vld [vmem:[%s1 + $0x2060] sm:$0xff]
  %v1071 = vld [vmem:[%s1 + $0x2068] sm:$0xff]
  %v1072 = vld [vmem:[%s1 + $0x2070] sm:$0xff]
  %v1073 = vld [vmem:[%s1 + $0x2078] sm:$0xff]
  %v1074 = vld [vmem:[%s1 + $0x2080] sm:$0xff]
  %v1075 = vld [vmem:[%s1 + $0x2088] sm:$0xff]
  %v1076 = vld [vmem:[%s1 + $0x2090] sm:$0xff]
  %v1077 = vld [vmem:[%s1 + $0x2098] sm:$0xff]
  %v1078 = vld [vmem:[%s1 + $0x20a0] sm:$0xff]
  %v1079 = vld [vmem:[%s1 + $0x20a8] sm:$0xff]
  %v1080 = vld [vmem:[%s1 + $0x20b0] sm:$0xff]
  %v1081 = vld [vmem:[%s1 + $0x20b8] sm:$0xff]
  %v1082 = vld [vmem:[%s1 + $0x20c0] sm:$0xff]
  %v1083 = vld [vmem:[%s1 + $0x20c8] sm:$0xff]
  %v1084 = vld [vmem:[%s1 + $0x20d0] sm:$0xff]
  %v1085 = vld [vmem:[%s1 + $0x20d8] sm:$0xff]
  %v1086 = vld [vmem:[%s1 + $0x20e0] sm:$0xff]
  %v1087 = vld [vmem:[%s1 + $0x20e8] sm:$0xff]
  %v1088 = vld [vmem:[%s1 + $0x20f0] sm:$0xff]
  %v1089 = vld [vmem:[%s1 + $0x20f8] sm:$0xff]
  %v1090 = vld [vmem:[%s1 + $0x2100] sm:$0xff]
  %v1091 = vld [vmem:[%s1 + $0x2108] sm:$0xff]
  %v1092 = vld [vmem:[%s1 + $0x2110] sm:$0xff]
  %v1093 = vld [vmem:[%s1 + $0x2118] sm:$0xff]
  %v1094 = vld [vmem:[%s1 + $0x2120] sm:$0xff]
  %v1095 = vld [vmem:[%s1 + $0x2128] sm:$0xff]
  %v1096 = vld [vmem:[%s1 + $0x2130] sm:$0xff]
  %v1097 = vld [vmem:[%s1 + $0x2138] sm:$0xff]
  %v1098 = vld [vmem:[%s1 + $0x2140] sm:$0xff]
  %v1099 = vld [vmem:[%s1 + $0x2148] sm:$0xff]
  %v1100 = vld [vmem:[%s1 + $0x2150] sm:$0xff]
  %v1101 = vld [vmem:[%s1 + $0x2158] sm:$0xff]
  %v1102 = vld [vmem:[%s1 + $0x2160] sm:$0xff]
  %v1103 = vld [vmem:[%s1 + $0x2168] sm:$0xff]
  %v1104 = vld [vmem:[%s1 + $0x2170] sm:$0xff]
  %v1105 = vld [vmem:[%s1 + $0x2178] sm:$0xff]
  %v1106 = vld [vmem:[%s1 + $0x2180] sm:$0xff]
  %v1107 = vld [vmem:[%s1 + $0x2188] sm:$0xff]
  %v1108 = vld [vmem:[%s1 + $0x2190] sm:$0xff]
  %v1109 = vld [vmem:[%s1 + $0x2198] sm:$0xff]
  %v1110 = vld [vmem:[%s1 + $0x21a0] sm:$0xff]
  %v1111 = vld [vmem:[%s1 + $0x21a8] sm:$0xff]
  %v1112 = vld [vmem:[%s1 + $0x21b0] sm:$0xff]
  %v1113 = vld [vmem:[%s1 + $0x21b8] sm:$0xff]
  %v1114 = vld [vmem:[%s1 + $0x21c0] sm:$0xff]
  %v1115 = vld [vmem:[%s1 + $0x21c8] sm:$0xff]
  %v1116 = vld [vmem:[%s1 + $0x21d0] sm:$0xff]
  %v1117 = vld [vmem:[%s1 + $0x21d8] sm:$0xff]
  %v1118 = vld [vmem:[%s1 + $0x21e0] sm:$0xff]
  %v1119 = vld [vmem:[%s1 + $0x21e8] sm:$0xff]
  %v1120 = vld [vmem:[%s1 + $0x21f0] sm:$0xff]
  %v1121 = vld [vmem:[%s1 + $0x21f8] sm:$0xff]
  %v1122 = vld [vmem:[%s1 + $0x2200] sm:$0xff]
  %v1123 = vld [vmem:[%s1 + $0x2208] sm:$0xff]
  %v1124 = vld [vmem:[%s1 + $0x2210] sm:$0xff]
  %v1125 = vld [vmem:[%s1 + $0x2218] sm:$0xff]
  %v1126 = vld [vmem:[%s1 + $0x2220] sm:$0xff]
  %v1127 = vld [vmem:[%s1 + $0x2228] sm:$0xff]
  %v1128 = vld [vmem:[%s1 + $0x2230] sm:$0xff]
  %v1129 = vld [vmem:[%s1 + $0x2238] sm:$0xff]
  %v1130 = vld [vmem:[%s1 + $0x2240] sm:$0xff]
  %v1131 = vld [vmem:[%s1 + $0x2248] sm:$0xff]
  %v1132 = vld [vmem:[%s1 + $0x2250] sm:$0xff]
  %v1133 = vld [vmem:[%s1 + $0x2258] sm:$0xff]
  %v1134 = vld [vmem:[%s1 + $0x2260] sm:$0xff]
  %v1135 = vld [vmem:[%s1 + $0x2268] sm:$0xff]
  %v1136 = vld [vmem:[%s1 + $0x2270] sm:$0xff]
  %v1137 = vld [vmem:[%s1 + $0x2278] sm:$0xff]
  %v1138 = vld [vmem:[%s1 + $0x2280] sm:$0xff]
  %v1139 = vld [vmem:[%s1 + $0x2288] sm:$0xff]
  %v1140 = vld [vmem:[%s1 + $0x2290] sm:$0xff]
  %v1141 = vld [vmem:[%s1 + $0x2298] sm:$0xff]
  %v1142 = vld [vmem:[%s1 + $0x22a0] sm:$0xff]
  %v1143 = vld [vmem:[%s1 + $0x22a8] sm:$0xff]
  %v1144 = vld [vmem:[%s1 + $0x22b0] sm:$0xff]
  %v1145 = vld [vmem:[%s1 + $0x22b8] sm:$0xff]
  %v1146 = vld [vmem:[%s1 + $0x22c0] sm:$0xff]
  %v1147 = vld [vmem:[%s1 + $0x22c8] sm:$0xff]
  %v1148 = vld [vmem:[%s1 + $0x22d0] sm:$0xff]
  %v1149 = vld [vmem:[%s1 + $0x22d8] sm:$0xff]
  %v1150 = vld [vmem:[%s1 + $0x22e0] sm:$0xff]
  %v1151 = vld [vmem:[%s1 + $0x22e8] sm:$0xff]
  %v1152 = vld [vmem:[%s1 + $0x22f0] sm:$0xff]
  %v1153 = vld [vmem:[%s1 + $0x22f8] sm:$0xff]
  %v1154 = vld [vmem:[%s1 + $0x2300] sm:$0xff]
  %v1155 = vld [vmem:[%s1 + $0x2308] sm:$0xff]
  %v1156 = vld [vmem:[%s1 + $0x2310] sm:$0xff]
  %v1157 = vld [vmem:[%s1 + $0x2318] sm:$0xff]
  %v1158 = vld [vmem:[%s1 + $0x2320] sm:$0xff]
  %v1159 = vld [vmem:[%s1 + $0x2328] sm:$0xff]
  %v1160 = vld [vmem:[%s1 + $0x2330] sm:$0xff]
  %v1161 = vld [vmem:[%s1 + $0x2338] sm:$0xff]
  %v1162 = vld [vmem:[%s1 + $0x2340] sm:$0xff]
  %v1163 = vld [vmem:[%s1 + $0x2348] sm:$0xff]
  %v1164 = vld [vmem:[%s1 + $0x2350] sm:$0xff]
  %v1165 = vld [vmem:[%s1 + $0x2358] sm:$0xff]
  %v1166 = vld [vmem:[%s1 + $0x2360] sm:$0xff]
  %v1167 = vld [vmem:[%s1 + $0x2368] sm:$0xff]
  %v1168 = vld [vmem:[%s1 + $0x2370] sm:$0xff]
  %v1169 = vld [vmem:[%s1 + $0x2378] sm:$0xff]
  %v1170 = vld [vmem:[%s1 + $0x2380] sm:$0xff]
  %v1171 = vld [vmem:[%s1 + $0x2388] sm:$0xff]
  %v1172 = vld [vmem:[%s1 + $0x2390] sm:$0xff]
  %v1173 = vld [vmem:[%s1 + $0x2398] sm:$0xff]
  %v1174 = vld [vmem:[%s1 + $0x23a0] sm:$0xff]
  %v1175 = vld [vmem:[%s1 + $0x23a8] sm:$0xff]
  %v1176 = vld [vmem:[%s1 + $0x23b0] sm:$0xff]
  %v1177 = vld [vmem:[%s1 + $0x23b8] sm:$0xff]
  %v1178 = vld [vmem:[%s1 + $0x23c0] sm:$0xff]
  %v1179 = vld [vmem:[%s1 + $0x23c8] sm:$0xff]
  %v1180 = vld [vmem:[%s1 + $0x23d0] sm:$0xff]
  %v1181 = vld [vmem:[%s1 + $0x23d8] sm:$0xff]
  %v1182 = vld [vmem:[%s1 + $0x23e0] sm:$0xff]
  %v1183 = vld [vmem:[%s1 + $0x23e8] sm:$0xff]
  %v1184 = vld [vmem:[%s1 + $0x23f0] sm:$0xff]
  %v1185 = vld [vmem:[%s1 + $0x23f8] sm:$0xff]
  %v1186 = vld [vmem:[%s1 + $0x2400] sm:$0xff]
  %v1187 = vld [vmem:[%s1 + $0x2408] sm:$0xff]
  %v1188 = vld [vmem:[%s1 + $0x2410] sm:$0xff]
  %v1189 = vld [vmem:[%s1 + $0x2418] sm:$0xff]
  %v1190 = vld [vmem:[%s1 + $0x2420] sm:$0xff]
  %v1191 = vld [vmem:[%s1 + $0x2428] sm:$0xff]
  %v1192 = vld [vmem:[%s1 + $0x2430] sm:$0xff]
  %v1193 = vld [vmem:[%s1 + $0x2438] sm:$0xff]
  %v1194 = vld [vmem:[%s1 + $0x2440] sm:$0xff]
  %v1195 = vld [vmem:[%s1 + $0x2448] sm:$0xff]
  %v1196 = vld [vmem:[%s1 + $0x2450] sm:$0xff]
  %v1197 = vld [vmem:[%s1 + $0x2458] sm:$0xff]
  %v1198 = vld [vmem:[%s1 + $0x2460] sm:$0xff]
  %v1199 = vld [vmem:[%s1 + $0x2468] sm:$0xff]
  %v1200 = vld [vmem:[%s1 + $0x2470] sm:$0xff]
  %v1201 = vld [vmem:[%s1 + $0x2478] sm:$0xff]
  %v1202 = vld [vmem:[%s1 + $0x2480] sm:$0xff]
  %v1203 = vld [vmem:[%s1 + $0x2488] sm:$0xff]
  %v1204 = vld [vmem:[%s1 + $0x2490] sm:$0xff]
  %v1205 = vld [vmem:[%s1 + $0x2498] sm:$0xff]
  %v1206 = vld [vmem:[%s1 + $0x24a0] sm:$0xff]
  %v1207 = vld [vmem:[%s1 + $0x24a8] sm:$0xff]
  %v1208 = vld [vmem:[%s1 + $0x24b0] sm:$0xff]
  %v1209 = vld [vmem:[%s1 + $0x24b8] sm:$0xff]
  %v1210 = vld [vmem:[%s1 + $0x24c0] sm:$0xff]
  %v1211 = vld [vmem:[%s1 + $0x24c8] sm:$0xff]
  %v1212 = vld [vmem:[%s1 + $0x24d0] sm:$0xff]
  %v1213 = vld [vmem:[%s1 + $0x24d8] sm:$0xff]
  %v1214 = vld [vmem:[%s1 + $0x24e0] sm:$0xff]
  %v1215 = vld [vmem:[%s1 + $0x24e8] sm:$0xff]
  %v1216 = vld [vmem:[%s1 + $0x24f0] sm:$0xff]
  %v1217 = vld [vmem:[%s1 + $0x24f8] sm:$0xff]
  %v1218 = vld [vmem:[%s1 + $0x2500] sm:$0xff]
  %v1219 = vld [vmem:[%s1 + $0x2508] sm:$0xff]
  %v1220 = vld [vmem:[%s1 + $0x2510] sm:$0xff]
  %v1221 = vld [vmem:[%s1 + $0x2518] sm:$0xff]
  %v1222 = vld [vmem:[%s1 + $0x2520] sm:$0xff]
  %v1223 = vld [vmem:[%s1 + $0x2528] sm:$0xff]
  %v1224 = vld [vmem:[%s1 + $0x2530] sm:$0xff]
  %v1225 = vld [vmem:[%s1 + $0x2538] sm:$0xff]
  %v1226 = vld [vmem:[%s1 + $0x2540] sm:$0xff]
  %v1227 = vld [vmem:[%s1 + $0x2548] sm:$0xff]
  %v1228 = vld [vmem:[%s1 + $0x2550] sm:$0xff]
  %v1229 = vld [vmem:[%s1 + $0x2558] sm:$0xff]
  %v1230 = vld [vmem:[%s1 + $0x2560] sm:$0xff]
  %v1231 = vld [vmem:[%s1 + $0x2568] sm:$0xff]
  %v1232 = vld [vmem:[%s1 + $0x2570] sm:$0xff]
  %v1233 = vld [vmem:[%s1 + $0x2578] sm:$0xff]
  %v1234 = vld [vmem:[%s1 + $0x2580] sm:$0xff]
  %v1235 = vld [vmem:[%s1 + $0x2588] sm:$0xff]
  %v1236 = vld [vmem:[%s1 + $0x2590] sm:$0xff]
  %v1237 = vld [vmem:[%s1 + $0x2598] sm:$0xff]
  %v1238 = vld [vmem:[%s1 + $0x25a0] sm:$0xff]
  %v1239 = vld [vmem:[%s1 + $0x25a8] sm:$0xff]
  %v1240 = vld [vmem:[%s1 + $0x25b0] sm:$0xff]
  %v1241 = vld [vmem:[%s1 + $0x25b8] sm:$0xff]
  %v1242 = vld [vmem:[%s1 + $0x25c0] sm:$0xff]
  %v1243 = vld [vmem:[%s1 + $0x25c8] sm:$0xff]
  %v1244 = vld [vmem:[%s1 + $0x25d0] sm:$0xff]
  %v1245 = vld [vmem:[%s1 + $0x25d8] sm:$0xff]
  %v1246 = vld [vmem:[%s1 + $0x25e0] sm:$0xff]
  %v1247 = vld [vmem:[%s1 + $0x25e8] sm:$0xff]
  %v1248 = vld [vmem:[%s1 + $0x25f0] sm:$0xff]
  %v1249 = vld [vmem:[%s1 + $0x25f8] sm:$0xff]
  %v1250 = vld [vmem:[%s1 + $0x2600] sm:$0xff]
  %v1251 = vld [vmem:[%s1 + $0x2608] sm:$0xff]
  %v1252 = vld [vmem:[%s1 + $0x2610] sm:$0xff]
  %v1253 = vld [vmem:[%s1 + $0x2618] sm:$0xff]
  %v1254 = vld [vmem:[%s1 + $0x2620] sm:$0xff]
  %v1255 = vld [vmem:[%s1 + $0x2628] sm:$0xff]
  %v1256 = vld [vmem:[%s1 + $0x2630] sm:$0xff]
  %v1257 = vld [vmem:[%s1 + $0x2638] sm:$0xff]
  %v1258 = vld [vmem:[%s1 + $0x2640] sm:$0xff]
  %v1259 = vld [vmem:[%s1 + $0x2648] sm:$0xff]
  %v1260 = vld [vmem:[%s1 + $0x2650] sm:$0xff]
  %v1261 = vld [vmem:[%s1 + $0x2658] sm:$0xff]
  %v1262 = vld [vmem:[%s1 + $0x2660] sm:$0xff]
  %v1263 = vld [vmem:[%s1 + $0x2668] sm:$0xff]
  %v1264 = vld [vmem:[%s1 + $0x2670] sm:$0xff]
  %v1265 = vld [vmem:[%s1 + $0x2678] sm:$0xff]
  %v1266 = vld [vmem:[%s1 + $0x2680] sm:$0xff]
  %v1267 = vld [vmem:[%s1 + $0x2688] sm:$0xff]
  %v1268 = vld [vmem:[%s1 + $0x2690] sm:$0xff]
  %v1269 = vld [vmem:[%s1 + $0x2698] sm:$0xff]
  %v1270 = vld [vmem:[%s1 + $0x26a0] sm:$0xff]
  %v1271 = vld [vmem:[%s1 + $0x26a8] sm:$0xff]
  %v1272 = vld [vmem:[%s1 + $0x26b0] sm:$0xff]
  %v1273 = vld [vmem:[%s1 + $0x26b8] sm:$0xff]
  %v1274 = vld [vmem:[%s1 + $0x26c0] sm:$0xff]
  %v1275 = vld [vmem:[%s1 + $0x26c8] sm:$0xff]
  %v1276 = vld [vmem:[%s1 + $0x26d0] sm:$0xff]
  %v1277 = vld [vmem:[%s1 + $0x26d8] sm:$0xff]
  %v1278 = vld [vmem:[%s1 + $0x26e0] sm:$0xff]
  %v1279 = vld [vmem:[%s1 + $0x26e8] sm:$0xff]
  %v1280 = vld [vmem:[%s1 + $0x26f0] sm:$0xff]
  %v1281 = vld [vmem:[%s1 + $0x26f8] sm:$0xff]
  %v1282 = vld [vmem:[%s1 + $0x2700] sm:$0xff]
  %v1283 = vld [vmem:[%s1 + $0x2708] sm:$0xff]
  %v1284 = vld [vmem:[%s1 + $0x2710] sm:$0xff]
  %v1285 = vld [vmem:[%s1 + $0x2718] sm:$0xff]
  %v1286 = vld [vmem:[%s1 + $0x2720] sm:$0xff]
  %v1287 = vld [vmem:[%s1 + $0x2728] sm:$0xff]
  %v1288 = vld [vmem:[%s1 + $0x2730] sm:$0xff]
  %v1289 = vld [vmem:[%s1 + $0x2738] sm:$0xff]
  %v1290 = vld [vmem:[%s1 + $0x2740] sm:$0xff]
  %v1291 = vld [vmem:[%s1 + $0x2748] sm:$0xff]
  %v1292 = vld [vmem:[%s1 + $0x2750] sm:$0xff]
  %v1293 = vld [vmem:[%s1 + $0x2758] sm:$0xff]
  %v1294 = vld [vmem:[%s1 + $0x2760] sm:$0xff]
  %v1295 = vld [vmem:[%s1 + $0x2768] sm:$0xff]
  %v1296 = vld [vmem:[%s1 + $0x2770] sm:$0xff]
  %v1297 = vld [vmem:[%s1 + $0x2778] sm:$0xff]
  %v1298 = vld [vmem:[%s1 + $0x2780] sm:$0xff]
  %v1299 = vld [vmem:[%s1 + $0x2788] sm:$0xff]
  %v1300 = vld [vmem:[%s1 + $0x2790] sm:$0xff]
  %v1301 = vld [vmem:[%s1 + $0x2798] sm:$0xff]
  %v1302 = vld [vmem:[%s1 + $0x27a0] sm:$0xff]
  %v1303 = vld [vmem:[%s1 + $0x27a8] sm:$0xff]
  %v1304 = vld [vmem:[%s1 + $0x27b0] sm:$0xff]
  %v1305 = vld [vmem:[%s1 + $0x27b8] sm:$0xff]
  %v1306 = vld [vmem:[%s1 + $0x27c0] sm:$0xff]
  %v1307 = vld [vmem:[%s1 + $0x27c8] sm:$0xff]
  %v1308 = vld [vmem:[%s1 + $0x27d0] sm:$0xff]
  %v1309 = vld [vmem:[%s1 + $0x27d8] sm:$0xff]
  %v1310 = vld [vmem:[%s1 + $0x27e0] sm:$0xff]
  %v1311 = vld [vmem:[%s1 + $0x27e8] sm:$0xff]
  %v1312 = vld [vmem:[%s1 + $0x27f0] sm:$0xff]
  %v1313 = vld [vmem:[%s1 + $0x27f8] sm:$0xff]
  %v1314 = vld [vmem:[%s1 + $0x2800] sm:$0xff]
  %v1315 = vld [vmem:[%s1 + $0x2808] sm:$0xff]
  %v1316 = vld [vmem:[%s1 + $0x2810] sm:$0xff]
  %v1317 = vld [vmem:[%s1 + $0x2818] sm:$0xff]
  %v1318 = vld [vmem:[%s1 + $0x2820] sm:$0xff]
  %v1319 = vld [vmem:[%s1 + $0x2828] sm:$0xff]
  %v1320 = vld [vmem:[%s1 + $0x2830] sm:$0xff]
  %v1321 = vld [vmem:[%s1 + $0x2838] sm:$0xff]
  %v1322 = vld [vmem:[%s1 + $0x2840] sm:$0xff]
  %v1323 = vld [vmem:[%s1 + $0x2848] sm:$0xff]
  %v1324 = vld [vmem:[%s1 + $0x2850] sm:$0xff]
  %v1325 = vld [vmem:[%s1 + $0x2858] sm:$0xff]
  %v1326 = vld [vmem:[%s1 + $0x2860] sm:$0xff]
  %v1327 = vld [vmem:[%s1 + $0x2868] sm:$0xff]
  %v1328 = vld [vmem:[%s1 + $0x2870] sm:$0xff]
  %v1329 = vld [vmem:[%s1 + $0x2878] sm:$0xff]
  %v1330 = vld [vmem:[%s1 + $0x2880] sm:$0xff]
  %v1331 = vld [vmem:[%s1 + $0x2888] sm:$0xff]
  %v1332 = vld [vmem:[%s1 + $0x2890] sm:$0xff]
  %v1333 = vld [vmem:[%s1 + $0x2898] sm:$0xff]
  %v1334 = vld [vmem:[%s1 + $0x28a0] sm:$0xff]
  %v1335 = vld [vmem:[%s1 + $0x28a8] sm:$0xff]
  %v1336 = vld [vmem:[%s1 + $0x28b0] sm:$0xff]
  %v1337 = vld [vmem:[%s1 + $0x28b8] sm:$0xff]
  %v1338 = vld [vmem:[%s1 + $0x28c0] sm:$0xff]
  %v1339 = vld [vmem:[%s1 + $0x28c8] sm:$0xff]
  %v1340 = vld [vmem:[%s1 + $0x28d0] sm:$0xff]
  %v1341 = vld [vmem:[%s1 + $0x28d8] sm:$0xff]
  %v1342 = vld [vmem:[%s1 + $0x28e0] sm:$0xff]
  %v1343 = vld [vmem:[%s1 + $0x28e8] sm:$0xff]
  %v1344 = vld [vmem:[%s1 + $0x28f0] sm:$0xff]
  %v1345 = vld [vmem:[%s1 + $0x28f8] sm:$0xff]
  %v1346 = vld [vmem:[%s1 + $0x2900] sm:$0xff]
  %v1347 = vld [vmem:[%s1 + $0x2908] sm:$0xff]
  %v1348 = vld [vmem:[%s1 + $0x2910] sm:$0xff]
  %v1349 = vld [vmem:[%s1 + $0x2918] sm:$0xff]
  %v1350 = vld [vmem:[%s1 + $0x2920] sm:$0xff]
  %v1351 = vld [vmem:[%s1 + $0x2928] sm:$0xff]
  %v1352 = vld [vmem:[%s1 + $0x2930] sm:$0xff]
  %v1353 = vld [vmem:[%s1 + $0x2938] sm:$0xff]
  %v1354 = vld [vmem:[%s1 + $0x2940] sm:$0xff]
  %v1355 = vld [vmem:[%s1 + $0x2948] sm:$0xff]
  %v1356 = vld [vmem:[%s1 + $0x2950] sm:$0xff]
  %v1357 = vld [vmem:[%s1 + $0x2958] sm:$0xff]
  %v1358 = vld [vmem:[%s1 + $0x2960] sm:$0xff]
  %v1359 = vld [vmem:[%s1 + $0x2968] sm:$0xff]
  %v1360 = vld [vmem:[%s1 + $0x2970] sm:$0xff]
  %v1361 = vld [vmem:[%s1 + $0x2978] sm:$0xff]
  %v1362 = vld [vmem:[%s1 + $0x2980] sm:$0xff]
  %v1363 = vld [vmem:[%s1 + $0x2988] sm:$0xff]
  %v1364 = vld [vmem:[%s1 + $0x2990] sm:$0xff]
  %v1365 = vld [vmem:[%s1 + $0x2998] sm:$0xff]
  %v1366 = vld [vmem:[%s1 + $0x29a0] sm:$0xff]
  %v1367 = vld [vmem:[%s1 + $0x29a8] sm:$0xff]
  %v1368 = vld [vmem:[%s1 + $0x29b0] sm:$0xff]
  %v1369 = vld [vmem:[%s1 + $0x29b8] sm:$0xff]
  %v1370 = vld [vmem:[%s1 + $0x29c0] sm:$0xff]
  %v1371 = vld [vmem:[%s1 + $0x29c8] sm:$0xff]
  %v1372 = vld [vmem:[%s1 + $0x29d0] sm:$0xff]
  %v1373 = vld [vmem:[%s1 + $0x29d8] sm:$0xff]
  %v1374 = vld [vmem:[%s1 + $0x29e0] sm:$0xff]
  %v1375 = vld [vmem:[%s1 + $0x29e8] sm:$0xff]
  %v1376 = vld [vmem:[%s1 + $0x29f0] sm:$0xff]
  %v1377 = vld [vmem:[%s1 + $0x29f8] sm:$0xff]
  %v1378 = vld [vmem:[%s1 + $0x2a00] sm:$0xff]
  %v1379 = vld [vmem:[%s1 + $0x2a08] sm:$0xff]
  %v1380 = vld [vmem:[%s1 + $0x2a10] sm:$0xff]
  %v1381 = vld [vmem:[%s1 + $0x2a18] sm:$0xff]
  %v1382 = vld [vmem:[%s1 + $0x2a20] sm:$0xff]
  %v1383 = vld [vmem:[%s1 + $0x2a28] sm:$0xff]
  %v1384 = vld [vmem:[%s1 + $0x2a30] sm:$0xff]
  %v1385 = vld [vmem:[%s1 + $0x2a38] sm:$0xff]
  %v1386 = vld [vmem:[%s1 + $0x2a40] sm:$0xff]
  %v1387 = vld [vmem:[%s1 + $0x2a48] sm:$0xff]
  %v1388 = vld [vmem:[%s1 + $0x2a50] sm:$0xff]
  %v1389 = vld [vmem:[%s1 + $0x2a58] sm:$0xff]
  %v1390 = vld [vmem:[%s1 + $0x2a60] sm:$0xff]
  %v1391 = vld [vmem:[%s1 + $0x2a68] sm:$0xff]
  %v1392 = vld [vmem:[%s1 + $0x2a70] sm:$0xff]
  %v1393 = vld [vmem:[%s1 + $0x2a78] sm:$0xff]
  %v1394 = vld [vmem:[%s1 + $0x2a80] sm:$0xff]
  %v1395 = vld [vmem:[%s1 + $0x2a88] sm:$0xff]
  %v1396 = vld [vmem:[%s1 + $0x2a90] sm:$0xff]
  %v1397 = vld [vmem:[%s1 + $0x2a98] sm:$0xff]
  %v1398 = vld [vmem:[%s1 + $0x2aa0] sm:$0xff]
  %v1399 = vld [vmem:[%s1 + $0x2aa8] sm:$0xff]
  %v1400 = vld [vmem:[%s1 + $0x2ab0] sm:$0xff]
  %v1401 = vld [vmem:[%s1 + $0x2ab8] sm:$0xff]
  %v1402 = vld [vmem:[%s1 + $0x2ac0] sm:$0xff]
  %v1403 = vld [vmem:[%s1 + $0x2ac8] sm:$0xff]
  %v1404 = vld [vmem:[%s1 + $0x2ad0] sm:$0xff]
  %v1405 = vld [vmem:[%s1 + $0x2ad8] sm:$0xff]
  %v1406 = vld [vmem:[%s1 + $0x2ae0] sm:$0xff]
  %v1407 = vld [vmem:[%s1 + $0x2ae8] sm:$0xff]
  %v1408 = vld [vmem:[%s1 + $0x2af0] sm:$0xff]
  %v1409 = vld [vmem:[%s1 + $0x2af8] sm:$0xff]
  %v1410 = vld [vmem:[%s1 + $0x2b00] sm:$0xff]
  %v1411 = vld [vmem:[%s1 + $0x2b08] sm:$0xff]
  %v1412 = vld [vmem:[%s1 + $0x2b10] sm:$0xff]
  %v1413 = vld [vmem:[%s1 + $0x2b18] sm:$0xff]
  %v1414 = vld [vmem:[%s1 + $0x2b20] sm:$0xff]
  %v1415 = vld [vmem:[%s1 + $0x2b28] sm:$0xff]
  %v1416 = vld [vmem:[%s1 + $0x2b30] sm:$0xff]
  %v1417 = vld [vmem:[%s1 + $0x2b38] sm:$0xff]
  %v1418 = vld [vmem:[%s1 + $0x2b40] sm:$0xff]
  %v1419 = vld [vmem:[%s1 + $0x2b48] sm:$0xff]
  %v1420 = vld [vmem:[%s1 + $0x2b50] sm:$0xff]
  %v1421 = vld [vmem:[%s1 + $0x2b58] sm:$0xff]
  %v1422 = vld [vmem:[%s1 + $0x2b60] sm:$0xff]
  %v1423 = vld [vmem:[%s1 + $0x2b68] sm:$0xff]
  %v1424 = vld [vmem:[%s1 + $0x2b70] sm:$0xff]
  %v1425 = vld [vmem:[%s1 + $0x2b78] sm:$0xff]
  %v1426 = vld [vmem:[%s1 + $0x2b80] sm:$0xff]
  %v1427 = vld [vmem:[%s1 + $0x2b88] sm:$0xff]
  %v1428 = vld [vmem:[%s1 + $0x2b90] sm:$0xff]
  %v1429 = vld [vmem:[%s1 + $0x2b98] sm:$0xff]
  %v1430 = vld [vmem:[%s1 + $0x2ba0] sm:$0xff]
  %v1431 = vld [vmem:[%s1 + $0x2ba8] sm:$0xff]
  %v1432 = vld [vmem:[%s1 + $0x2bb0] sm:$0xff]
  %v1433 = vld [vmem:[%s1 + $0x2bb8] sm:$0xff]
  %v1434 = vld [vmem:[%s1 + $0x2bc0] sm:$0xff]
  %v1435 = vld [vmem:[%s1 + $0x2bc8] sm:$0xff]
  %v1436 = vld [vmem:[%s1 + $0x2bd0] sm:$0xff]
  %v1437 = vld [vmem:[%s1 + $0x2bd8] sm:$0xff]
  %v1438 = vld [vmem:[%s1 + $0x2be0] sm:$0xff]
  %v1439 = vld [vmem:[%s1 + $0x2be8] sm:$0xff]
  %v1440 = vld [vmem:[%s1 + $0x2bf0] sm:$0xff]
  %v1441 = vld [vmem:[%s1 + $0x2bf8] sm:$0xff]
  %v1442 = vld [vmem:[%s1 + $0x2c00] sm:$0xff]
  %v1443 = vld [vmem:[%s1 + $0x2c08] sm:$0xff]
  %v1444 = vld [vmem:[%s1 + $0x2c10] sm:$0xff]
  %v1445 = vld [vmem:[%s1 + $0x2c18] sm:$0xff]
  %v1446 = vld [vmem:[%s1 + $0x2c20] sm:$0xff]
  %v1447 = vld [vmem:[%s1 + $0x2c28] sm:$0xff]
  %v1448 = vld [vmem:[%s1 + $0x2c30] sm:$0xff]
  %v1449 = vld [vmem:[%s1 + $0x2c38] sm:$0xff]
  %v1450 = vld [vmem:[%s1 + $0x2c40] sm:$0xff]
  %v1451 = vld [vmem:[%s1 + $0x2c48] sm:$0xff]
  %v1452 = vld [vmem:[%s1 + $0x2c50] sm:$0xff]
  %v1453 = vld [vmem:[%s1 + $0x2c58] sm:$0xff]
  %v1454 = vld [vmem:[%s1 + $0x2c60] sm:$0xff]
  %v1455 = vld [vmem:[%s1 + $0x2c68] sm:$0xff]
  %v1456 = vld [vmem:[%s1 + $0x2c70] sm:$0xff]
  %v1457 = vld [vmem:[%s1 + $0x2c78] sm:$0xff]
  %v1458 = vld [vmem:[%s1 + $0x2c80] sm:$0xff]
  %v1459 = vld [vmem:[%s1 + $0x2c88] sm:$0xff]
  %v1460 = vld [vmem:[%s1 + $0x2c90] sm:$0xff]
  %v1461 = vld [vmem:[%s1 + $0x2c98] sm:$0xff]
  %v1462 = vld [vmem:[%s1 + $0x2ca0] sm:$0xff]
  %v1463 = vld [vmem:[%s1 + $0x2ca8] sm:$0xff]
  %v1464 = vld [vmem:[%s1 + $0x2cb0] sm:$0xff]
  %v1465 = vld [vmem:[%s1 + $0x2cb8] sm:$0xff]
  %v1466 = vld [vmem:[%s1 + $0x2cc0] sm:$0xff]
  %v1467 = vld [vmem:[%s1 + $0x2cc8] sm:$0xff]
  %v1468 = vld [vmem:[%s1 + $0x2cd0] sm:$0xff]
  %v1469 = vld [vmem:[%s1 + $0x2cd8] sm:$0xff]
  %v1470 = vld [vmem:[%s1 + $0x2ce0] sm:$0xff]
  %v1471 = vld [vmem:[%s1 + $0x2ce8] sm:$0xff]
  %v1472 = vld [vmem:[%s1 + $0x2cf0] sm:$0xff]
  %v1473 = vld [vmem:[%s1 + $0x2cf8] sm:$0xff]
  %v1474 = vld [vmem:[%s1 + $0x2d00] sm:$0xff]
  %v1475 = vld [vmem:[%s1 + $0x2d08] sm:$0xff]
  %v1476 = vld [vmem:[%s1 + $0x2d10] sm:$0xff]
  %v1477 = vld [vmem:[%s1 + $0x2d18] sm:$0xff]
  %v1478 = vld [vmem:[%s1 + $0x2d20] sm:$0xff]
  %v1479 = vld [vmem:[%s1 + $0x2d28] sm:$0xff]
  %v1480 = vld [vmem:[%s1 + $0x2d30] sm:$0xff]
  %v1481 = vld [vmem:[%s1 + $0x2d38] sm:$0xff]
  %v1482 = vld [vmem:[%s1 + $0x2d40] sm:$0xff]
  %v1483 = vld [vmem:[%s1 + $0x2d48] sm:$0xff]
  %v1484 = vld [vmem:[%s1 + $0x2d50] sm:$0xff]
  %v1485 = vld [vmem:[%s1 + $0x2d58] sm:$0xff]
  %v1486 = vld [vmem:[%s1 + $0x2d60] sm:$0xff]
  %v1487 = vld [vmem:[%s1 + $0x2d68] sm:$0xff]
  %v1488 = vld [vmem:[%s1 + $0x2d70] sm:$0xff]
  %v1489 = vld [vmem:[%s1 + $0x2d78] sm:$0xff]
  %v1490 = vld [vmem:[%s1 + $0x2d80] sm:$0xff]
  %v1491 = vld [vmem:[%s1 + $0x2d88] sm:$0xff]
  %v1492 = vld [vmem:[%s1 + $0x2d90] sm:$0xff]
  %v1493 = vld [vmem:[%s1 + $0x2d98] sm:$0xff]
  %v1494 = vld [vmem:[%s1 + $0x2da0] sm:$0xff]
  %v1495 = vld [vmem:[%s1 + $0x2da8] sm:$0xff]
  %v1496 = vld [vmem:[%s1 + $0x2db0] sm:$0xff]
  %v1497 = vld [vmem:[%s1 + $0x2db8] sm:$0xff]
  %v1498 = vld [vmem:[%s1 + $0x2dc0] sm:$0xff]
  %v1499 = vld [vmem:[%s1 + $0x2dc8] sm:$0xff]
  %v1500 = vld [vmem:[%s1 + $0x2dd0] sm:$0xff]
  %v1501 = vld [vmem:[%s1 + $0x2dd8] sm:$0xff]
  %v1502 = vld [vmem:[%s1 + $0x2de0] sm:$0xff]
  %v1503 = vld [vmem:[%s1 + $0x2de8] sm:$0xff]
  %v1504 = vld [vmem:[%s1 + $0x2df0] sm:$0xff]
  %v1505 = vld [vmem:[%s1 + $0x2df8] sm:$0xff]
  %v1506 = vld [vmem:[%s1 + $0x2e00] sm:$0xff]
  %v1507 = vld [vmem:[%s1 + $0x2e08] sm:$0xff]
  %v1508 = vld [vmem:[%s1 + $0x2e10] sm:$0xff]
  %v1509 = vld [vmem:[%s1 + $0x2e18] sm:$0xff]
  %v1510 = vld [vmem:[%s1 + $0x2e20] sm:$0xff]
  %v1511 = vld [vmem:[%s1 + $0x2e28] sm:$0xff]
  %v1512 = vld [vmem:[%s1 + $0x2e30] sm:$0xff]
  %v1513 = vld [vmem:[%s1 + $0x2e38] sm:$0xff]
  %v1514 = vld [vmem:[%s1 + $0x2e40] sm:$0xff]
  %v1515 = vld [vmem:[%s1 + $0x2e48] sm:$0xff]
  %v1516 = vld [vmem:[%s1 + $0x2e50] sm:$0xff]
  %v1517 = vld [vmem:[%s1 + $0x2e58] sm:$0xff]
  %v1518 = vld [vmem:[%s1 + $0x2e60] sm:$0xff]
  %v1519 = vld [vmem:[%s1 + $0x2e68] sm:$0xff]
  %v1520 = vld [vmem:[%s1 + $0x2e70] sm:$0xff]
  %v1521 = vld [vmem:[%s1 + $0x2e78] sm:$0xff]
  %v1522 = vld [vmem:[%s1 + $0x2e80] sm:$0xff]
  %v1523 = vld [vmem:[%s1 + $0x2e88] sm:$0xff]
  %v1524 = vld [vmem:[%s1 + $0x2e90] sm:$0xff]
  %v1525 = vld [vmem:[%s1 + $0x2e98] sm:$0xff]
  %v1526 = vld [vmem:[%s1 + $0x2ea0] sm:$0xff]
  %v1527 = vld [vmem:[%s1 + $0x2ea8] sm:$0xff]
  %v1528 = vld [vmem:[%s1 + $0x2eb0] sm:$0xff]
  %v1529 = vld [vmem:[%s1 + $0x2eb8] sm:$0xff]
  %v1530 = vld [vmem:[%s1 + $0x2ec0] sm:$0xff]
  %v1531 = vld [vmem:[%s1 + $0x2ec8] sm:$0xff]
  %v1532 = vld [vmem:[%s1 + $0x2ed0] sm:$0xff]
  %v1533 = vld [vmem:[%s1 + $0x2ed8] sm:$0xff]
  %v1534 = vld [vmem:[%s1 + $0x2ee0] sm:$0xff]
  %v1535 = vld [vmem:[%s1 + $0x2ee8] sm:$0xff]
  %v1536 = vld [vmem:[%s1 + $0x2ef0] sm:$0xff]
  %v1537 = vld [vmem:[%s1 + $0x2ef8] sm:$0xff]
  %v1538 = vld [vmem:[%s1 + $0x2f00] sm:$0xff]
  %v1539 = vld [vmem:[%s1 + $0x2f08] sm:$0xff]
  %v1540 = vld [vmem:[%s1 + $0x2f10] sm:$0xff]
  %v1541 = vld [vmem:[%s1 + $0x2f18] sm:$0xff]
  %v1542 = vld [vmem:[%s1 + $0x2f20] sm:$0xff]
  %v1543 = vld [vmem:[%s1 + $0x2f28] sm:$0xff]
  %v1544 = vld [vmem:[%s1 + $0x2f30] sm:$0xff]
  %v1545 = vld [vmem:[%s1 + $0x2f38] sm:$0xff]
  %v1546 = vld [vmem:[%s1 + $0x2f40] sm:$0xff]
  %v1547 = vld [vmem:[%s1 + $0x2f48] sm:$0xff]
  %v1548 = vld [vmem:[%s1 + $0x2f50] sm:$0xff]
  %v1549 = vld [vmem:[%s1 + $0x2f58] sm:$0xff]
  %v1550 = vld [vmem:[%s1 + $0x2f60] sm:$0xff]
  %v1551 = vld [vmem:[%s1 + $0x2f68] sm:$0xff]
  %v1552 = vld [vmem:[%s1 + $0x2f70] sm:$0xff]
  %v1553 = vld [vmem:[%s1 + $0x2f78] sm:$0xff]
  %v1554 = vld [vmem:[%s1 + $0x2f80] sm:$0xff]
  %v1555 = vld [vmem:[%s1 + $0x2f88] sm:$0xff]
  %v1556 = vld [vmem:[%s1 + $0x2f90] sm:$0xff]
  %v1557 = vld [vmem:[%s1 + $0x2f98] sm:$0xff]
  %v1558 = vld [vmem:[%s1 + $0x2fa0] sm:$0xff]
  %v1559 = vld [vmem:[%s1 + $0x2fa8] sm:$0xff]
  %v1560 = vld [vmem:[%s1 + $0x2fb0] sm:$0xff]
  %v1561 = vld [vmem:[%s1 + $0x2fb8] sm:$0xff]
  %v1562 = vld [vmem:[%s1 + $0x2fc0] sm:$0xff]
  %v1563 = vld [vmem:[%s1 + $0x2fc8] sm:$0xff]
  %v1564 = vld [vmem:[%s1 + $0x2fd0] sm:$0xff]
  %v1565 = vld [vmem:[%s1 + $0x2fd8] sm:$0xff]
  %v1566 = vld [vmem:[%s1 + $0x2fe0] sm:$0xff]
  %v1567 = vld [vmem:[%s1 + $0x2fe8] sm:$0xff]
  %v1568 = vld [vmem:[%s1 + $0x2ff0] sm:$0xff]
  %v1569 = vld [vmem:[%s1 + $0x2ff8] sm:$0xff]
  %v1570 = vld [vmem:[%s1 + $0x3000] sm:$0xff]
  %v1571 = vld [vmem:[%s1 + $0x3008] sm:$0xff]
  %v1572 = vld [vmem:[%s1 + $0x3010] sm:$0xff]
  %v1573 = vld [vmem:[%s1 + $0x3018] sm:$0xff]
  %v1574 = vld [vmem:[%s1 + $0x3020] sm:$0xff]
  %v1575 = vld [vmem:[%s1 + $0x3028] sm:$0xff]
  %v1576 = vld [vmem:[%s1 + $0x3030] sm:$0xff]
  %v1577 = vld [vmem:[%s1 + $0x3038] sm:$0xff]
  %v1578 = vld [vmem:[%s1 + $0x3040] sm:$0xff]
  %v1579 = vld [vmem:[%s1 + $0x3048] sm:$0xff]
  %v1580 = vld [vmem:[%s1 + $0x3050] sm:$0xff]
  %v1581 = vld [vmem:[%s1 + $0x3058] sm:$0xff]
  %v1582 = vld [vmem:[%s1 + $0x3060] sm:$0xff]
  %v1583 = vld [vmem:[%s1 + $0x3068] sm:$0xff]
  %v1584 = vld [vmem:[%s1 + $0x3070] sm:$0xff]
  %v1585 = vld [vmem:[%s1 + $0x3078] sm:$0xff]
  %v1586 = vld [vmem:[%s1 + $0x3080] sm:$0xff]
  %v1587 = vld [vmem:[%s1 + $0x3088] sm:$0xff]
  %v1588 = vld [vmem:[%s1 + $0x3090] sm:$0xff]
  %v1589 = vld [vmem:[%s1 + $0x3098] sm:$0xff]
  %v1590 = vld [vmem:[%s1 + $0x30a0] sm:$0xff]
  %v1591 = vld [vmem:[%s1 + $0x30a8] sm:$0xff]
  %v1592 = vld [vmem:[%s1 + $0x30b0] sm:$0xff]
  %v1593 = vld [vmem:[%s1 + $0x30b8] sm:$0xff]
  %v1594 = vld [vmem:[%s1 + $0x30c0] sm:$0xff]
  %v1595 = vld [vmem:[%s1 + $0x30c8] sm:$0xff]
  %v1596 = vld [vmem:[%s1 + $0x30d0] sm:$0xff]
  %v1597 = vld [vmem:[%s1 + $0x30d8] sm:$0xff]
  %v1598 = vld [vmem:[%s1 + $0x30e0] sm:$0xff]
  %v1599 = vld [vmem:[%s1 + $0x30e8] sm:$0xff]
  %v1600 = vld [vmem:[%s1 + $0x30f0] sm:$0xff]
  %v1601 = vld [vmem:[%s1 + $0x30f8] sm:$0xff]
  %v1602 = vld [vmem:[%s2] sm:$0xff]
  %v1604 = vlaneseq
  %v1605 = vshrl.u32 %v1604, 7
  %v1606 = vsub.s32 0, %v1605
  %v1607 = vrot.slane %v1602, %v1606
  %v1608 = vlaneseq
  %v1609 = vshrl.u32 %v1608, 7
  %v1610 = vsub.s32 1, %v1609
  %v1611 = vrot.slane %v1602, %v1610
  %v1612 = vlaneseq
  %v1613 = vshrl.u32 %v1612, 7
  %v1614 = vsub.s32 2, %v1613
  %v1615 = vrot.slane %v1602, %v1614
  %v1616 = vlaneseq
  %v1617 = vshrl.u32 %v1616, 7
  %v1618 = vsub.s32 3, %v1617
  %v1619 = vrot.slane %v1602, %v1618
  %v1620 = vlaneseq
  %v1621 = vshrl.u32 %v1620, 7
  %v1622 = vsub.s32 4, %v1621
  %v1623 = vrot.slane %v1602, %v1622
  %v1624 = vlaneseq
  %v1625 = vshrl.u32 %v1624, 7
  %v1626 = vsub.s32 5, %v1625
  %v1627 = vrot.slane %v1602, %v1626
  %v1628 = vlaneseq
  %v1629 = vshrl.u32 %v1628, 7
  %v1630 = vsub.s32 6, %v1629
  %v1631 = vrot.slane %v1602, %v1630
  %v1632 = vlaneseq
  %v1633 = vshrl.u32 %v1632, 7
  %v1634 = vsub.s32 7, %v1633
  %v1635 = vrot.slane %v1602, %v1634
  %v1657 = vunpack.c.l.b16 %v21
  %v1658 = vunpack.c.h.b16 %v21
  %v1659 = vunpack.c.l.b16 %v22
  %v1660 = vunpack.c.h.b16 %v22
  %v1661 = vunpack.c.l.b16 %v23
  %v1662 = vunpack.c.h.b16 %v23
  %v1663 = vunpack.c.l.b16 %v24
  %v1664 = vunpack.c.h.b16 %v24
  %v1665 = vunpack.c.l.b16 %v25
  %v1666 = vunpack.c.h.b16 %v25
  %v1667 = vunpack.c.l.b16 %v26
  %v1668 = vunpack.c.h.b16 %v26
  %v1669 = vunpack.c.l.b16 %v27
  %v1670 = vunpack.c.h.b16 %v27
  %v1671 = vunpack.c.l.b16 %v28
  %v1672 = vunpack.c.h.b16 %v28
  %v1673 = vunpack.c.l.b16 %v29
  %v1674 = vunpack.c.h.b16 %v29
  %v1675 = vunpack.c.l.b16 %v30
  %v1676 = vunpack.c.h.b16 %v30
  %v1677 = vunpack.c.l.b16 %v31
  %v1678 = vunpack.c.h.b16 %v31
  %v1679 = vunpack.c.l.b16 %v32
  %v1680 = vunpack.c.h.b16 %v32
  %v1681 = vunpack.c.l.b16 %v33
  %v1682 = vpack.c.b16 %v1657, %v1657
  %v1683 = vpack.c.b16 %v1658, %v1658
  %v1684 = vpack.c.b16 %v1659, %v1659
  %v1685 = vpack.c.b16 %v1660, %v1660
  %v1686 = vpack.c.b16 %v1661, %v1661
  %v1687 = vpack.c.b16 %v1662, %v1662
  %v1688 = vpack.c.b16 %v1663, %v1663
  %v1689 = vpack.c.b16 %v1664, %v1664
  %v1690 = vpack.c.b16 %v1665, %v1665
  %v1691 = vpack.c.b16 %v1666, %v1666
  %v1692 = vpack.c.b16 %v1667, %v1667
  %v1693 = vpack.c.b16 %v1668, %v1668
  %v1694 = vpack.c.b16 %v1669, %v1669
  %v1695 = vpack.c.b16 %v1670, %v1670
  %v1696 = vpack.c.b16 %v1671, %v1671
  %v1697 = vpack.c.b16 %v1672, %v1672
  %v1698 = vpack.c.b16 %v1673, %v1673
  %v1699 = vpack.c.b16 %v1674, %v1674
  %v1700 = vpack.c.b16 %v1675, %v1675
  %v1701 = vpack.c.b16 %v1676, %v1676
  %v1702 = vpack.c.b16 %v1677, %v1677
  %v1703 = vpack.c.b16 %v1678, %v1678
  %v1704 = vpack.c.b16 %v1679, %v1679
  %v1705 = vpack.c.b16 %v1680, %v1680
  %v1706 = vpack.c.b16 %v1681, %v1681
  %v3299 = vunpack.c.l.b16 %v34
  %v3300 = vunpack.c.h.b16 %v34
  %v3301 = vunpack.c.l.b16 %v35
  %v3302 = vunpack.c.h.b16 %v35
  %v3303 = vunpack.c.l.b16 %v36
  %v3304 = vunpack.c.h.b16 %v36
  %v3305 = vunpack.c.l.b16 %v37
  %v3306 = vunpack.c.h.b16 %v37
  %v3307 = vunpack.c.l.b16 %v38
  %v3308 = vunpack.c.h.b16 %v38
  %v3309 = vunpack.c.l.b16 %v39
  %v3310 = vunpack.c.h.b16 %v39
  %v3311 = vunpack.c.l.b16 %v40
  %v3312 = vunpack.c.h.b16 %v40
  %v3313 = vunpack.c.l.b16 %v41
  %v3314 = vunpack.c.h.b16 %v41
  %v3315 = vunpack.c.l.b16 %v42
  %v3316 = vunpack.c.h.b16 %v42
  %v3317 = vunpack.c.l.b16 %v43
  %v3318 = vunpack.c.h.b16 %v43
  %v3319 = vunpack.c.l.b16 %v44
  %v3320 = vunpack.c.h.b16 %v44
  %v3321 = vunpack.c.l.b16 %v45
  %v3322 = vunpack.c.h.b16 %v45
  %v3323 = vunpack.c.l.b16 %v46
  %v3324 = vunpack.c.h.b16 %v46
  %v3325 = vunpack.c.l.b16 %v47
  %v3326 = vunpack.c.h.b16 %v47
  %v3327 = vunpack.c.l.b16 %v48
  %v3328 = vunpack.c.h.b16 %v48
  %v3329 = vunpack.c.l.b16 %v49
  %v3330 = vunpack.c.h.b16 %v49
  %v3331 = vunpack.c.l.b16 %v50
  %v3332 = vunpack.c.h.b16 %v50
  %v3333 = vunpack.c.l.b16 %v51
  %v3334 = vunpack.c.h.b16 %v51
  %v3335 = vunpack.c.l.b16 %v52
  %v3336 = vunpack.c.h.b16 %v52
  %v3337 = vunpack.c.l.b16 %v53
  %v3338 = vunpack.c.h.b16 %v53
  %v3339 = vunpack.c.l.b16 %v54
  %v3340 = vunpack.c.h.b16 %v54
  %v3341 = vunpack.c.l.b16 %v55
  %v3342 = vunpack.c.h.b16 %v55
  %v3343 = vunpack.c.l.b16 %v56
  %v3344 = vunpack.c.h.b16 %v56
  %v3345 = vunpack.c.l.b16 %v57
  %v3346 = vunpack.c.h.b16 %v57
  %v3347 = vunpack.c.l.b16 %v58
  %v3348 = vunpack.c.h.b16 %v58
  %v3349 = vunpack.c.l.b16 %v59
  %v3350 = vunpack.c.h.b16 %v59
  %v3351 = vunpack.c.l.b16 %v60
  %v3352 = vunpack.c.h.b16 %v60
  %v3353 = vunpack.c.l.b16 %v61
  %v3354 = vunpack.c.h.b16 %v61
  %v3355 = vunpack.c.l.b16 %v62
  %v3356 = vunpack.c.h.b16 %v62
  %v3357 = vunpack.c.l.b16 %v63
  %v3358 = vunpack.c.h.b16 %v63
  %v3359 = vunpack.c.l.b16 %v64
  %v3360 = vunpack.c.h.b16 %v64
  %v3361 = vunpack.c.l.b16 %v65
  %v3362 = vunpack.c.h.b16 %v65
  %v3363 = vunpack.c.l.b16 %v66
  %v3364 = vunpack.c.h.b16 %v66
  %v3365 = vunpack.c.l.b16 %v67
  %v3366 = vunpack.c.h.b16 %v67
  %v3367 = vunpack.c.l.b16 %v68
  %v3368 = vunpack.c.h.b16 %v68
  %v3369 = vunpack.c.l.b16 %v69
  %v3370 = vunpack.c.h.b16 %v69
  %v3371 = vunpack.c.l.b16 %v70
  %v3372 = vunpack.c.h.b16 %v70
  %v3373 = vunpack.c.l.b16 %v71
  %v3374 = vunpack.c.h.b16 %v71
  %v3375 = vunpack.c.l.b16 %v72
  %v3376 = vunpack.c.h.b16 %v72
  %v3377 = vunpack.c.l.b16 %v73
  %v3378 = vunpack.c.h.b16 %v73
  %v3379 = vunpack.c.l.b16 %v74
  %v3380 = vunpack.c.h.b16 %v74
  %v3381 = vunpack.c.l.b16 %v75
  %v3382 = vunpack.c.h.b16 %v75
  %v3383 = vunpack.c.l.b16 %v76
  %v3384 = vunpack.c.h.b16 %v76
  %v3385 = vunpack.c.l.b16 %v77
  %v3386 = vunpack.c.h.b16 %v77
  %v3387 = vunpack.c.l.b16 %v78
  %v3388 = vunpack.c.h.b16 %v78
  %v3389 = vunpack.c.l.b16 %v79
  %v3390 = vunpack.c.h.b16 %v79
  %v3391 = vunpack.c.l.b16 %v80
  %v3392 = vunpack.c.h.b16 %v80
  %v3393 = vunpack.c.l.b16 %v81
  %v3394 = vunpack.c.h.b16 %v81
  %v3395 = vunpack.c.l.b16 %v82
  %v3396 = vunpack.c.h.b16 %v82
  %v3397 = vunpack.c.l.b16 %v83
  %v3398 = vunpack.c.h.b16 %v83
  %v3399 = vunpack.c.l.b16 %v84
  %v3400 = vunpack.c.h.b16 %v84
  %v3401 = vunpack.c.l.b16 %v85
  %v3402 = vunpack.c.h.b16 %v85
  %v3403 = vunpack.c.l.b16 %v86
  %v3404 = vunpack.c.h.b16 %v86
  %v3405 = vunpack.c.l.b16 %v87
  %v3406 = vunpack.c.h.b16 %v87
  %v3407 = vunpack.c.l.b16 %v88
  %v3408 = vunpack.c.h.b16 %v88
  %v3409 = vunpack.c.l.b16 %v89
  %v3410 = vunpack.c.h.b16 %v89
  %v3411 = vunpack.c.l.b16 %v90
  %v3412 = vunpack.c.h.b16 %v90
  %v3413 = vunpack.c.l.b16 %v91
  %v3414 = vunpack.c.h.b16 %v91
  %v3415 = vunpack.c.l.b16 %v92
  %v3416 = vunpack.c.h.b16 %v92
  %v3417 = vunpack.c.l.b16 %v93
  %v3418 = vunpack.c.h.b16 %v93
  %v3419 = vunpack.c.l.b16 %v94
  %v3420 = vunpack.c.h.b16 %v94
  %v3421 = vunpack.c.l.b16 %v95
  %v3422 = vunpack.c.h.b16 %v95
  %v3423 = vunpack.c.l.b16 %v96
  %v3424 = vunpack.c.h.b16 %v96
  %v3425 = vunpack.c.l.b16 %v97
  %v3426 = vunpack.c.h.b16 %v97
  %v3427 = vunpack.c.l.b16 %v98
  %v3428 = vunpack.c.h.b16 %v98
  %v3429 = vunpack.c.l.b16 %v99
  %v3430 = vunpack.c.h.b16 %v99
  %v3431 = vunpack.c.l.b16 %v100
  %v3432 = vunpack.c.h.b16 %v100
  %v3433 = vunpack.c.l.b16 %v101
  %v3434 = vunpack.c.h.b16 %v101
  %v3435 = vunpack.c.l.b16 %v102
  %v3436 = vunpack.c.h.b16 %v102
  %v3437 = vunpack.c.l.b16 %v103
  %v3438 = vunpack.c.h.b16 %v103
  %v3439 = vunpack.c.l.b16 %v104
  %v3440 = vunpack.c.h.b16 %v104
  %v3441 = vunpack.c.l.b16 %v105
  %v3442 = vunpack.c.h.b16 %v105
  %v3443 = vunpack.c.l.b16 %v106
  %v3444 = vunpack.c.h.b16 %v106
  %v3445 = vunpack.c.l.b16 %v107
  %v3446 = vunpack.c.h.b16 %v107
  %v3447 = vunpack.c.l.b16 %v108
  %v3448 = vunpack.c.h.b16 %v108
  %v3449 = vunpack.c.l.b16 %v109
  %v3450 = vunpack.c.h.b16 %v109
  %v3451 = vunpack.c.l.b16 %v110
  %v3452 = vunpack.c.h.b16 %v110
  %v3453 = vunpack.c.l.b16 %v111
  %v3454 = vunpack.c.h.b16 %v111
  %v3455 = vunpack.c.l.b16 %v112
  %v3456 = vunpack.c.h.b16 %v112
  %v3457 = vunpack.c.l.b16 %v113
  %v3458 = vunpack.c.h.b16 %v113
  %v3459 = vunpack.c.l.b16 %v114
  %v3460 = vunpack.c.h.b16 %v114
  %v3461 = vunpack.c.l.b16 %v115
  %v3462 = vunpack.c.h.b16 %v115
  %v3463 = vunpack.c.l.b16 %v116
  %v3464 = vunpack.c.h.b16 %v116
  %v3465 = vunpack.c.l.b16 %v117
  %v3466 = vunpack.c.h.b16 %v117
  %v3467 = vunpack.c.l.b16 %v118
  %v3468 = vunpack.c.h.b16 %v118
  %v3469 = vunpack.c.l.b16 %v119
  %v3470 = vunpack.c.h.b16 %v119
  %v3471 = vunpack.c.l.b16 %v120
  %v3472 = vunpack.c.h.b16 %v120
  %v3473 = vunpack.c.l.b16 %v121
  %v3474 = vunpack.c.h.b16 %v121
  %v3475 = vunpack.c.l.b16 %v122
  %v3476 = vunpack.c.h.b16 %v122
  %v3477 = vunpack.c.l.b16 %v123
  %v3478 = vunpack.c.h.b16 %v123
  %v3479 = vunpack.c.l.b16 %v124
  %v3480 = vunpack.c.h.b16 %v124
  %v3481 = vunpack.c.l.b16 %v125
  %v3482 = vunpack.c.h.b16 %v125
  %v3483 = vunpack.c.l.b16 %v126
  %v3484 = vunpack.c.h.b16 %v126
  %v3485 = vunpack.c.l.b16 %v127
  %v3486 = vunpack.c.h.b16 %v127
  %v3487 = vunpack.c.l.b16 %v128
  %v3488 = vunpack.c.h.b16 %v128
  %v3489 = vunpack.c.l.b16 %v129
  %v3490 = vunpack.c.h.b16 %v129
  %v3491 = vunpack.c.l.b16 %v130
  %v3492 = vunpack.c.h.b16 %v130
  %v3493 = vunpack.c.l.b16 %v131
  %v3494 = vunpack.c.h.b16 %v131
  %v3495 = vunpack.c.l.b16 %v132
  %v3496 = vunpack.c.h.b16 %v132
  %v3497 = vunpack.c.l.b16 %v133
  %v3498 = vunpack.c.h.b16 %v133
  %v3499 = vunpack.c.l.b16 %v134
  %v3500 = vunpack.c.h.b16 %v134
  %v3501 = vunpack.c.l.b16 %v135
  %v3502 = vunpack.c.h.b16 %v135
  %v3503 = vunpack.c.l.b16 %v136
  %v3504 = vunpack.c.h.b16 %v136
  %v3505 = vunpack.c.l.b16 %v137
  %v3506 = vunpack.c.h.b16 %v137
  %v3507 = vunpack.c.l.b16 %v138
  %v3508 = vunpack.c.h.b16 %v138
  %v3509 = vunpack.c.l.b16 %v139
  %v3510 = vunpack.c.h.b16 %v139
  %v3511 = vunpack.c.l.b16 %v140
  %v3512 = vunpack.c.h.b16 %v140
  %v3513 = vunpack.c.l.b16 %v141
  %v3514 = vunpack.c.h.b16 %v141
  %v3515 = vunpack.c.l.b16 %v142
  %v3516 = vunpack.c.h.b16 %v142
  %v3517 = vunpack.c.l.b16 %v143
  %v3518 = vunpack.c.h.b16 %v143
  %v3519 = vunpack.c.l.b16 %v144
  %v3520 = vunpack.c.h.b16 %v144
  %v3521 = vunpack.c.l.b16 %v145
  %v3522 = vunpack.c.h.b16 %v145
  %v3523 = vunpack.c.l.b16 %v146
  %v3524 = vunpack.c.h.b16 %v146
  %v3525 = vunpack.c.l.b16 %v147
  %v3526 = vunpack.c.h.b16 %v147
  %v3527 = vunpack.c.l.b16 %v148
  %v3528 = vunpack.c.h.b16 %v148
  %v3529 = vunpack.c.l.b16 %v149
  %v3530 = vunpack.c.h.b16 %v149
  %v3531 = vunpack.c.l.b16 %v150
  %v3532 = vunpack.c.h.b16 %v150
  %v3533 = vunpack.c.l.b16 %v151
  %v3534 = vunpack.c.h.b16 %v151
  %v3535 = vunpack.c.l.b16 %v152
  %v3536 = vunpack.c.h.b16 %v152
  %v3537 = vunpack.c.l.b16 %v153
  %v3538 = vunpack.c.h.b16 %v153
  %v3539 = vunpack.c.l.b16 %v154
  %v3540 = vunpack.c.h.b16 %v154
  %v3541 = vunpack.c.l.b16 %v155
  %v3542 = vunpack.c.h.b16 %v155
  %v3543 = vunpack.c.l.b16 %v156
  %v3544 = vunpack.c.h.b16 %v156
  %v3545 = vunpack.c.l.b16 %v157
  %v3546 = vunpack.c.h.b16 %v157
  %v3547 = vunpack.c.l.b16 %v158
  %v3548 = vunpack.c.h.b16 %v158
  %v3549 = vunpack.c.l.b16 %v159
  %v3550 = vunpack.c.h.b16 %v159
  %v3551 = vunpack.c.l.b16 %v160
  %v3552 = vunpack.c.h.b16 %v160
  %v3553 = vunpack.c.l.b16 %v161
  %v3554 = vunpack.c.h.b16 %v161
  %v3555 = vunpack.c.l.b16 %v162
  %v3556 = vunpack.c.h.b16 %v162
  %v3557 = vunpack.c.l.b16 %v163
  %v3558 = vunpack.c.h.b16 %v163
  %v3559 = vunpack.c.l.b16 %v164
  %v3560 = vunpack.c.h.b16 %v164
  %v3561 = vunpack.c.l.b16 %v165
  %v3562 = vunpack.c.h.b16 %v165
  %v3563 = vunpack.c.l.b16 %v166
  %v3564 = vunpack.c.h.b16 %v166
  %v3565 = vunpack.c.l.b16 %v167
  %v3566 = vunpack.c.h.b16 %v167
  %v3567 = vunpack.c.l.b16 %v168
  %v3568 = vunpack.c.h.b16 %v168
  %v3569 = vunpack.c.l.b16 %v169
  %v3570 = vunpack.c.h.b16 %v169
  %v3571 = vunpack.c.l.b16 %v170
  %v3572 = vunpack.c.h.b16 %v170
  %v3573 = vunpack.c.l.b16 %v171
  %v3574 = vunpack.c.h.b16 %v171
  %v3575 = vunpack.c.l.b16 %v172
  %v3576 = vunpack.c.h.b16 %v172
  %v3577 = vunpack.c.l.b16 %v173
  %v3578 = vunpack.c.h.b16 %v173
  %v3579 = vunpack.c.l.b16 %v174
  %v3580 = vunpack.c.h.b16 %v174
  %v3581 = vunpack.c.l.b16 %v175
  %v3582 = vunpack.c.h.b16 %v175
  %v3583 = vunpack.c.l.b16 %v176
  %v3584 = vunpack.c.h.b16 %v176
  %v3585 = vunpack.c.l.b16 %v177
  %v3586 = vunpack.c.h.b16 %v177
  %v3587 = vunpack.c.l.b16 %v178
  %v3588 = vunpack.c.h.b16 %v178
  %v3589 = vunpack.c.l.b16 %v179
  %v3590 = vunpack.c.h.b16 %v179
  %v3591 = vunpack.c.l.b16 %v180
  %v3592 = vunpack.c.h.b16 %v180
  %v3593 = vunpack.c.l.b16 %v181
  %v3594 = vunpack.c.h.b16 %v181
  %v3595 = vunpack.c.l.b16 %v182
  %v3596 = vunpack.c.h.b16 %v182
  %v3597 = vunpack.c.l.b16 %v183
  %v3598 = vunpack.c.h.b16 %v183
  %v3599 = vunpack.c.l.b16 %v184
  %v3600 = vunpack.c.h.b16 %v184
  %v3601 = vunpack.c.l.b16 %v185
  %v3602 = vunpack.c.h.b16 %v185
  %v3603 = vunpack.c.l.b16 %v186
  %v3604 = vunpack.c.h.b16 %v186
  %v3605 = vunpack.c.l.b16 %v187
  %v3606 = vunpack.c.h.b16 %v187
  %v3607 = vunpack.c.l.b16 %v188
  %v3608 = vunpack.c.h.b16 %v188
  %v3609 = vunpack.c.l.b16 %v189
  %v3610 = vunpack.c.h.b16 %v189
  %v3611 = vunpack.c.l.b16 %v190
  %v3612 = vunpack.c.h.b16 %v190
  %v3613 = vunpack.c.l.b16 %v191
  %v3614 = vunpack.c.h.b16 %v191
  %v3615 = vunpack.c.l.b16 %v192
  %v3616 = vunpack.c.h.b16 %v192
  %v3617 = vunpack.c.l.b16 %v193
  %v3618 = vunpack.c.h.b16 %v193
  %v3619 = vunpack.c.l.b16 %v194
  %v3620 = vunpack.c.h.b16 %v194
  %v3621 = vunpack.c.l.b16 %v195
  %v3622 = vunpack.c.h.b16 %v195
  %v3623 = vunpack.c.l.b16 %v196
  %v3624 = vunpack.c.h.b16 %v196
  %v3625 = vunpack.c.l.b16 %v197
  %v3626 = vunpack.c.h.b16 %v197
  %v3627 = vunpack.c.l.b16 %v198
  %v3628 = vunpack.c.h.b16 %v198
  %v3629 = vunpack.c.l.b16 %v199
  %v3630 = vunpack.c.h.b16 %v199
  %v3631 = vunpack.c.l.b16 %v200
  %v3632 = vunpack.c.h.b16 %v200
  %v3633 = vunpack.c.l.b16 %v201
  %v3634 = vunpack.c.h.b16 %v201
  %v3635 = vunpack.c.l.b16 %v202
  %v3636 = vunpack.c.h.b16 %v202
  %v3637 = vunpack.c.l.b16 %v203
  %v3638 = vunpack.c.h.b16 %v203
  %v3639 = vunpack.c.l.b16 %v204
  %v3640 = vunpack.c.h.b16 %v204
  %v3641 = vunpack.c.l.b16 %v205
  %v3642 = vunpack.c.h.b16 %v205
  %v3643 = vunpack.c.l.b16 %v206
  %v3644 = vunpack.c.h.b16 %v206
  %v3645 = vunpack.c.l.b16 %v207
  %v3646 = vunpack.c.h.b16 %v207
  %v3647 = vunpack.c.l.b16 %v208
  %v3648 = vunpack.c.h.b16 %v208
  %v3649 = vunpack.c.l.b16 %v209
  %v3650 = vunpack.c.h.b16 %v209
  %v3651 = vunpack.c.l.b16 %v210
  %v3652 = vunpack.c.h.b16 %v210
  %v3653 = vunpack.c.l.b16 %v211
  %v3654 = vunpack.c.h.b16 %v211
  %v3655 = vunpack.c.l.b16 %v212
  %v3656 = vunpack.c.h.b16 %v212
  %v3657 = vunpack.c.l.b16 %v213
  %v3658 = vunpack.c.h.b16 %v213
  %v3659 = vunpack.c.l.b16 %v214
  %v3660 = vunpack.c.h.b16 %v214
  %v3661 = vunpack.c.l.b16 %v215
  %v3662 = vunpack.c.h.b16 %v215
  %v3663 = vunpack.c.l.b16 %v216
  %v3664 = vunpack.c.h.b16 %v216
  %v3665 = vunpack.c.l.b16 %v217
  %v3666 = vunpack.c.h.b16 %v217
  %v3667 = vunpack.c.l.b16 %v218
  %v3668 = vunpack.c.h.b16 %v218
  %v3669 = vunpack.c.l.b16 %v219
  %v3670 = vunpack.c.h.b16 %v219
  %v3671 = vunpack.c.l.b16 %v220
  %v3672 = vunpack.c.h.b16 %v220
  %v3673 = vunpack.c.l.b16 %v221
  %v3674 = vunpack.c.h.b16 %v221
  %v3675 = vunpack.c.l.b16 %v222
  %v3676 = vunpack.c.h.b16 %v222
  %v3677 = vunpack.c.l.b16 %v223
  %v3678 = vunpack.c.h.b16 %v223
  %v3679 = vunpack.c.l.b16 %v224
  %v3680 = vunpack.c.h.b16 %v224
  %v3681 = vunpack.c.l.b16 %v225
  %v3682 = vunpack.c.h.b16 %v225
  %v3683 = vunpack.c.l.b16 %v226
  %v3684 = vunpack.c.h.b16 %v226
  %v3685 = vunpack.c.l.b16 %v227
  %v3686 = vunpack.c.h.b16 %v227
  %v3687 = vunpack.c.l.b16 %v228
  %v3688 = vunpack.c.h.b16 %v228
  %v3689 = vunpack.c.l.b16 %v229
  %v3690 = vunpack.c.h.b16 %v229
  %v3691 = vunpack.c.l.b16 %v230
  %v3692 = vunpack.c.h.b16 %v230
  %v3693 = vunpack.c.l.b16 %v231
  %v3694 = vunpack.c.h.b16 %v231
  %v3695 = vunpack.c.l.b16 %v232
  %v3696 = vunpack.c.h.b16 %v232
  %v3697 = vunpack.c.l.b16 %v233
  %v3698 = vunpack.c.h.b16 %v233
  %v3699 = vunpack.c.l.b16 %v234
  %v3700 = vunpack.c.h.b16 %v234
  %v3701 = vunpack.c.l.b16 %v235
  %v3702 = vunpack.c.h.b16 %v235
  %v3703 = vunpack.c.l.b16 %v236
  %v3704 = vunpack.c.h.b16 %v236
  %v3705 = vunpack.c.l.b16 %v237
  %v3706 = vunpack.c.h.b16 %v237
  %v3707 = vunpack.c.l.b16 %v238
  %v3708 = vunpack.c.h.b16 %v238
  %v3709 = vunpack.c.l.b16 %v239
  %v3710 = vunpack.c.h.b16 %v239
  %v3711 = vunpack.c.l.b16 %v240
  %v3712 = vunpack.c.h.b16 %v240
  %v3713 = vunpack.c.l.b16 %v241
  %v3714 = vunpack.c.h.b16 %v241
  %v3715 = vunpack.c.l.b16 %v242
  %v3716 = vunpack.c.h.b16 %v242
  %v3717 = vunpack.c.l.b16 %v243
  %v3718 = vunpack.c.h.b16 %v243
  %v3719 = vunpack.c.l.b16 %v244
  %v3720 = vunpack.c.h.b16 %v244
  %v3721 = vunpack.c.l.b16 %v245
  %v3722 = vunpack.c.h.b16 %v245
  %v3723 = vunpack.c.l.b16 %v246
  %v3724 = vunpack.c.h.b16 %v246
  %v3725 = vunpack.c.l.b16 %v247
  %v3726 = vunpack.c.h.b16 %v247
  %v3727 = vunpack.c.l.b16 %v248
  %v3728 = vunpack.c.h.b16 %v248
  %v3729 = vunpack.c.l.b16 %v249
  %v3730 = vunpack.c.h.b16 %v249
  %v3731 = vunpack.c.l.b16 %v250
  %v3732 = vunpack.c.h.b16 %v250
  %v3733 = vunpack.c.l.b16 %v251
  %v3734 = vunpack.c.h.b16 %v251
  %v3735 = vunpack.c.l.b16 %v252
  %v3736 = vunpack.c.h.b16 %v252
  %v3737 = vunpack.c.l.b16 %v253
  %v3738 = vunpack.c.h.b16 %v253
  %v3739 = vunpack.c.l.b16 %v254
  %v3740 = vunpack.c.h.b16 %v254
  %v3741 = vunpack.c.l.b16 %v255
  %v3742 = vunpack.c.h.b16 %v255
  %v3743 = vunpack.c.l.b16 %v256
  %v3744 = vunpack.c.h.b16 %v256
  %v3745 = vunpack.c.l.b16 %v257
  %v3746 = vunpack.c.h.b16 %v257
  %v3747 = vunpack.c.l.b16 %v258
  %v3748 = vunpack.c.h.b16 %v258
  %v3749 = vunpack.c.l.b16 %v259
  %v3750 = vunpack.c.h.b16 %v259
  %v3751 = vunpack.c.l.b16 %v260
  %v3752 = vunpack.c.h.b16 %v260
  %v3753 = vunpack.c.l.b16 %v261
  %v3754 = vunpack.c.h.b16 %v261
  %v3755 = vunpack.c.l.b16 %v262
  %v3756 = vunpack.c.h.b16 %v262
  %v3757 = vunpack.c.l.b16 %v263
  %v3758 = vunpack.c.h.b16 %v263
  %v3759 = vunpack.c.l.b16 %v264
  %v3760 = vunpack.c.h.b16 %v264
  %v3761 = vunpack.c.l.b16 %v265
  %v3762 = vunpack.c.h.b16 %v265
  %v3763 = vunpack.c.l.b16 %v266
  %v3764 = vunpack.c.h.b16 %v266
  %v3765 = vunpack.c.l.b16 %v267
  %v3766 = vunpack.c.h.b16 %v267
  %v3767 = vunpack.c.l.b16 %v268
  %v3768 = vunpack.c.h.b16 %v268
  %v3769 = vunpack.c.l.b16 %v269
  %v3770 = vunpack.c.h.b16 %v269
  %v3771 = vunpack.c.l.b16 %v270
  %v3772 = vunpack.c.h.b16 %v270
  %v3773 = vunpack.c.l.b16 %v271
  %v3774 = vunpack.c.h.b16 %v271
  %v3775 = vunpack.c.l.b16 %v272
  %v3776 = vunpack.c.h.b16 %v272
  %v3777 = vunpack.c.l.b16 %v273
  %v3778 = vunpack.c.h.b16 %v273
  %v3779 = vunpack.c.l.b16 %v274
  %v3780 = vunpack.c.h.b16 %v274
  %v3781 = vunpack.c.l.b16 %v275
  %v3782 = vunpack.c.h.b16 %v275
  %v3783 = vunpack.c.l.b16 %v276
  %v3784 = vunpack.c.h.b16 %v276
  %v3785 = vunpack.c.l.b16 %v277
  %v3786 = vunpack.c.h.b16 %v277
  %v3787 = vunpack.c.l.b16 %v278
  %v3788 = vunpack.c.h.b16 %v278
  %v3789 = vunpack.c.l.b16 %v279
  %v3790 = vunpack.c.h.b16 %v279
  %v3791 = vunpack.c.l.b16 %v280
  %v3792 = vunpack.c.h.b16 %v280
  %v3793 = vunpack.c.l.b16 %v281
  %v3794 = vunpack.c.h.b16 %v281
  %v3795 = vunpack.c.l.b16 %v282
  %v3796 = vunpack.c.h.b16 %v282
  %v3797 = vunpack.c.l.b16 %v283
  %v3798 = vunpack.c.h.b16 %v283
  %v3799 = vunpack.c.l.b16 %v284
  %v3800 = vunpack.c.h.b16 %v284
  %v3801 = vunpack.c.l.b16 %v285
  %v3802 = vunpack.c.h.b16 %v285
  %v3803 = vunpack.c.l.b16 %v286
  %v3804 = vunpack.c.h.b16 %v286
  %v3805 = vunpack.c.l.b16 %v287
  %v3806 = vunpack.c.h.b16 %v287
  %v3807 = vunpack.c.l.b16 %v288
  %v3808 = vunpack.c.h.b16 %v288
  %v3809 = vunpack.c.l.b16 %v289
  %v3810 = vunpack.c.h.b16 %v289
  %v3811 = vunpack.c.l.b16 %v290
  %v3812 = vunpack.c.h.b16 %v290
  %v3813 = vunpack.c.l.b16 %v291
  %v3814 = vunpack.c.h.b16 %v291
  %v3815 = vunpack.c.l.b16 %v292
  %v3816 = vunpack.c.h.b16 %v292
  %v3817 = vunpack.c.l.b16 %v293
  %v3818 = vunpack.c.h.b16 %v293
  %v3819 = vunpack.c.l.b16 %v294
  %v3820 = vunpack.c.h.b16 %v294
  %v3821 = vunpack.c.l.b16 %v295
  %v3822 = vunpack.c.h.b16 %v295
  %v3823 = vunpack.c.l.b16 %v296
  %v3824 = vunpack.c.h.b16 %v296
  %v3825 = vunpack.c.l.b16 %v297
  %v3826 = vunpack.c.h.b16 %v297
  %v3827 = vunpack.c.l.b16 %v298
  %v3828 = vunpack.c.h.b16 %v298
  %v3829 = vunpack.c.l.b16 %v299
  %v3830 = vunpack.c.h.b16 %v299
  %v3831 = vunpack.c.l.b16 %v300
  %v3832 = vunpack.c.h.b16 %v300
  %v3833 = vunpack.c.l.b16 %v301
  %v3834 = vunpack.c.h.b16 %v301
  %v3835 = vunpack.c.l.b16 %v302
  %v3836 = vunpack.c.h.b16 %v302
  %v3837 = vunpack.c.l.b16 %v303
  %v3838 = vunpack.c.h.b16 %v303
  %v3839 = vunpack.c.l.b16 %v304
  %v3840 = vunpack.c.h.b16 %v304
  %v3841 = vunpack.c.l.b16 %v305
  %v3842 = vunpack.c.h.b16 %v305
  %v3843 = vunpack.c.l.b16 %v306
  %v3844 = vunpack.c.h.b16 %v306
  %v3845 = vunpack.c.l.b16 %v307
  %v3846 = vunpack.c.h.b16 %v307
  %v3847 = vunpack.c.l.b16 %v308
  %v3848 = vunpack.c.h.b16 %v308
  %v3849 = vunpack.c.l.b16 %v309
  %v3850 = vunpack.c.h.b16 %v309
  %v3851 = vunpack.c.l.b16 %v310
  %v3852 = vunpack.c.h.b16 %v310
  %v3853 = vunpack.c.l.b16 %v311
  %v3854 = vunpack.c.h.b16 %v311
  %v3855 = vunpack.c.l.b16 %v312
  %v3856 = vunpack.c.h.b16 %v312
  %v3857 = vunpack.c.l.b16 %v313
  %v3858 = vunpack.c.h.b16 %v313
  %v3859 = vunpack.c.l.b16 %v314
  %v3860 = vunpack.c.h.b16 %v314
  %v3861 = vunpack.c.l.b16 %v315
  %v3862 = vunpack.c.h.b16 %v315
  %v3863 = vunpack.c.l.b16 %v316
  %v3864 = vunpack.c.h.b16 %v316
  %v3865 = vunpack.c.l.b16 %v317
  %v3866 = vunpack.c.h.b16 %v317
  %v3867 = vunpack.c.l.b16 %v318
  %v3868 = vunpack.c.h.b16 %v318
  %v3869 = vunpack.c.l.b16 %v319
  %v3870 = vunpack.c.h.b16 %v319
  %v3871 = vunpack.c.l.b16 %v320
  %v3872 = vunpack.c.h.b16 %v320
  %v3873 = vunpack.c.l.b16 %v321
  %v3874 = vunpack.c.h.b16 %v321
  %v3875 = vunpack.c.l.b16 %v322
  %v3876 = vunpack.c.h.b16 %v322
  %v3877 = vunpack.c.l.b16 %v323
  %v3878 = vunpack.c.h.b16 %v323
  %v3879 = vunpack.c.l.b16 %v324
  %v3880 = vunpack.c.h.b16 %v324
  %v3881 = vunpack.c.l.b16 %v325
  %v3882 = vunpack.c.h.b16 %v325
  %v3883 = vunpack.c.l.b16 %v326
  %v3884 = vunpack.c.h.b16 %v326
  %v3885 = vunpack.c.l.b16 %v327
  %v3886 = vunpack.c.h.b16 %v327
  %v3887 = vunpack.c.l.b16 %v328
  %v3888 = vunpack.c.h.b16 %v328
  %v3889 = vunpack.c.l.b16 %v329
  %v3890 = vunpack.c.h.b16 %v329
  %v3891 = vunpack.c.l.b16 %v330
  %v3892 = vunpack.c.h.b16 %v330
  %v3893 = vunpack.c.l.b16 %v331
  %v3894 = vunpack.c.h.b16 %v331
  %v3895 = vunpack.c.l.b16 %v332
  %v3896 = vunpack.c.h.b16 %v332
  %v3897 = vunpack.c.l.b16 %v333
  %v3898 = vunpack.c.h.b16 %v333
  %v3899 = vunpack.c.l.b16 %v334
  %v3900 = vunpack.c.h.b16 %v334
  %v3901 = vunpack.c.l.b16 %v335
  %v3902 = vunpack.c.h.b16 %v335
  %v3903 = vunpack.c.l.b16 %v336
  %v3904 = vunpack.c.h.b16 %v336
  %v3905 = vunpack.c.l.b16 %v337
  %v3906 = vunpack.c.h.b16 %v337
  %v3907 = vunpack.c.l.b16 %v338
  %v3908 = vunpack.c.h.b16 %v338
  %v3909 = vunpack.c.l.b16 %v339
  %v3910 = vunpack.c.h.b16 %v339
  %v3911 = vunpack.c.l.b16 %v340
  %v3912 = vunpack.c.h.b16 %v340
  %v3913 = vunpack.c.l.b16 %v341
  %v3914 = vunpack.c.h.b16 %v341
  %v3915 = vunpack.c.l.b16 %v342
  %v3916 = vunpack.c.h.b16 %v342
  %v3917 = vunpack.c.l.b16 %v343
  %v3918 = vunpack.c.h.b16 %v343
  %v3919 = vunpack.c.l.b16 %v344
  %v3920 = vunpack.c.h.b16 %v344
  %v3921 = vunpack.c.l.b16 %v345
  %v3922 = vunpack.c.h.b16 %v345
  %v3923 = vunpack.c.l.b16 %v346
  %v3924 = vunpack.c.h.b16 %v346
  %v3925 = vunpack.c.l.b16 %v347
  %v3926 = vunpack.c.h.b16 %v347
  %v3927 = vunpack.c.l.b16 %v348
  %v3928 = vunpack.c.h.b16 %v348
  %v3929 = vunpack.c.l.b16 %v349
  %v3930 = vunpack.c.h.b16 %v349
  %v3931 = vunpack.c.l.b16 %v350
  %v3932 = vunpack.c.h.b16 %v350
  %v3933 = vunpack.c.l.b16 %v351
  %v3934 = vunpack.c.h.b16 %v351
  %v3935 = vunpack.c.l.b16 %v352
  %v3936 = vunpack.c.h.b16 %v352
  %v3937 = vunpack.c.l.b16 %v353
  %v3938 = vunpack.c.h.b16 %v353
  %v3939 = vunpack.c.l.b16 %v354
  %v3940 = vunpack.c.h.b16 %v354
  %v3941 = vunpack.c.l.b16 %v355
  %v3942 = vunpack.c.h.b16 %v355
  %v3943 = vunpack.c.l.b16 %v356
  %v3944 = vunpack.c.h.b16 %v356
  %v3945 = vunpack.c.l.b16 %v357
  %v3946 = vunpack.c.h.b16 %v357
  %v3947 = vunpack.c.l.b16 %v358
  %v3948 = vunpack.c.h.b16 %v358
  %v3949 = vunpack.c.l.b16 %v359
  %v3950 = vunpack.c.h.b16 %v359
  %v3951 = vunpack.c.l.b16 %v360
  %v3952 = vunpack.c.h.b16 %v360
  %v3953 = vunpack.c.l.b16 %v361
  %v3954 = vunpack.c.h.b16 %v361
  %v3955 = vunpack.c.l.b16 %v362
  %v3956 = vunpack.c.h.b16 %v362
  %v3957 = vunpack.c.l.b16 %v363
  %v3958 = vunpack.c.h.b16 %v363
  %v3959 = vunpack.c.l.b16 %v364
  %v3960 = vunpack.c.h.b16 %v364
  %v3961 = vunpack.c.l.b16 %v365
  %v3962 = vunpack.c.h.b16 %v365
  %v3963 = vunpack.c.l.b16 %v366
  %v3964 = vunpack.c.h.b16 %v366
  %v3965 = vunpack.c.l.b16 %v367
  %v3966 = vunpack.c.h.b16 %v367
  %v3967 = vunpack.c.l.b16 %v368
  %v3968 = vunpack.c.h.b16 %v368
  %v3969 = vunpack.c.l.b16 %v369
  %v3970 = vunpack.c.h.b16 %v369
  %v3971 = vunpack.c.l.b16 %v370
  %v3972 = vunpack.c.h.b16 %v370
  %v3973 = vunpack.c.l.b16 %v371
  %v3974 = vunpack.c.h.b16 %v371
  %v3975 = vunpack.c.l.b16 %v372
  %v3976 = vunpack.c.h.b16 %v372
  %v3977 = vunpack.c.l.b16 %v373
  %v3978 = vunpack.c.h.b16 %v373
  %v3979 = vunpack.c.l.b16 %v374
  %v3980 = vunpack.c.h.b16 %v374
  %v3981 = vunpack.c.l.b16 %v375
  %v3982 = vunpack.c.h.b16 %v375
  %v3983 = vunpack.c.l.b16 %v376
  %v3984 = vunpack.c.h.b16 %v376
  %v3985 = vunpack.c.l.b16 %v377
  %v3986 = vunpack.c.h.b16 %v377
  %v3987 = vunpack.c.l.b16 %v378
  %v3988 = vunpack.c.h.b16 %v378
  %v3989 = vunpack.c.l.b16 %v379
  %v3990 = vunpack.c.h.b16 %v379
  %v3991 = vunpack.c.l.b16 %v380
  %v3992 = vunpack.c.h.b16 %v380
  %v3993 = vunpack.c.l.b16 %v381
  %v3994 = vunpack.c.h.b16 %v381
  %v3995 = vunpack.c.l.b16 %v382
  %v3996 = vunpack.c.h.b16 %v382
  %v3997 = vunpack.c.l.b16 %v383
  %v3998 = vunpack.c.h.b16 %v383
  %v3999 = vunpack.c.l.b16 %v384
  %v4000 = vunpack.c.h.b16 %v384
  %v4001 = vunpack.c.l.b16 %v385
  %v4002 = vunpack.c.h.b16 %v385
  %v4003 = vunpack.c.l.b16 %v386
  %v4004 = vunpack.c.h.b16 %v386
  %v4005 = vunpack.c.l.b16 %v387
  %v4006 = vunpack.c.h.b16 %v387
  %v4007 = vunpack.c.l.b16 %v388
  %v4008 = vunpack.c.h.b16 %v388
  %v4009 = vunpack.c.l.b16 %v389
  %v4010 = vunpack.c.h.b16 %v389
  %v4011 = vunpack.c.l.b16 %v390
  %v4012 = vunpack.c.h.b16 %v390
  %v4013 = vunpack.c.l.b16 %v391
  %v4014 = vunpack.c.h.b16 %v391
  %v4015 = vunpack.c.l.b16 %v392
  %v4016 = vunpack.c.h.b16 %v392
  %v4017 = vunpack.c.l.b16 %v393
  %v4018 = vunpack.c.h.b16 %v393
  %v4019 = vunpack.c.l.b16 %v394
  %v4020 = vunpack.c.h.b16 %v394
  %v4021 = vunpack.c.l.b16 %v395
  %v4022 = vunpack.c.h.b16 %v395
  %v4023 = vunpack.c.l.b16 %v396
  %v4024 = vunpack.c.h.b16 %v396
  %v4025 = vunpack.c.l.b16 %v397
  %v4026 = vunpack.c.h.b16 %v397
  %v4027 = vunpack.c.l.b16 %v398
  %v4028 = vunpack.c.h.b16 %v398
  %v4029 = vunpack.c.l.b16 %v399
  %v4030 = vunpack.c.h.b16 %v399
  %v4031 = vunpack.c.l.b16 %v400
  %v4032 = vunpack.c.h.b16 %v400
  %v4033 = vunpack.c.l.b16 %v401
  %v4034 = vunpack.c.h.b16 %v401
  %v4035 = vunpack.c.l.b16 %v402
  %v4036 = vunpack.c.h.b16 %v402
  %v4037 = vunpack.c.l.b16 %v403
  %v4038 = vunpack.c.h.b16 %v403
  %v4039 = vunpack.c.l.b16 %v404
  %v4040 = vunpack.c.h.b16 %v404
  %v4041 = vunpack.c.l.b16 %v405
  %v4042 = vunpack.c.h.b16 %v405
  %v4043 = vunpack.c.l.b16 %v406
  %v4044 = vunpack.c.h.b16 %v406
  %v4045 = vunpack.c.l.b16 %v407
  %v4046 = vunpack.c.h.b16 %v407
  %v4047 = vunpack.c.l.b16 %v408
  %v4048 = vunpack.c.h.b16 %v408
  %v4049 = vunpack.c.l.b16 %v409
  %v4050 = vunpack.c.h.b16 %v409
  %v4051 = vunpack.c.l.b16 %v410
  %v4052 = vunpack.c.h.b16 %v410
  %v4053 = vunpack.c.l.b16 %v411
  %v4054 = vunpack.c.h.b16 %v411
  %v4055 = vunpack.c.l.b16 %v412
  %v4056 = vunpack.c.h.b16 %v412
  %v4057 = vunpack.c.l.b16 %v413
  %v4058 = vunpack.c.h.b16 %v413
  %v4059 = vunpack.c.l.b16 %v414
  %v4060 = vunpack.c.h.b16 %v414
  %v4061 = vunpack.c.l.b16 %v415
  %v4062 = vunpack.c.h.b16 %v415
  %v4063 = vunpack.c.l.b16 %v416
  %v4064 = vunpack.c.h.b16 %v416
  %v4065 = vunpack.c.l.b16 %v417
  %v4066 = vunpack.c.h.b16 %v417
  %v4067 = vunpack.c.l.b16 %v418
  %v4068 = vunpack.c.h.b16 %v418
  %v4069 = vunpack.c.l.b16 %v419
  %v4070 = vunpack.c.h.b16 %v419
  %v4071 = vunpack.c.l.b16 %v420
  %v4072 = vunpack.c.h.b16 %v420
  %v4073 = vunpack.c.l.b16 %v421
  %v4074 = vunpack.c.h.b16 %v421
  %v4075 = vunpack.c.l.b16 %v422
  %v4076 = vunpack.c.h.b16 %v422
  %v4077 = vunpack.c.l.b16 %v423
  %v4078 = vunpack.c.h.b16 %v423
  %v4079 = vunpack.c.l.b16 %v424
  %v4080 = vunpack.c.h.b16 %v424
  %v4081 = vunpack.c.l.b16 %v425
  %v4082 = vunpack.c.h.b16 %v425
  %v4083 = vunpack.c.l.b16 %v426
  %v4084 = vunpack.c.h.b16 %v426
  %v4085 = vunpack.c.l.b16 %v427
  %v4086 = vunpack.c.h.b16 %v427
  %v4087 = vunpack.c.l.b16 %v428
  %v4088 = vunpack.c.h.b16 %v428
  %v4089 = vunpack.c.l.b16 %v429
  %v4090 = vunpack.c.h.b16 %v429
  %v4091 = vunpack.c.l.b16 %v430
  %v4092 = vunpack.c.h.b16 %v430
  %v4093 = vunpack.c.l.b16 %v431
  %v4094 = vunpack.c.h.b16 %v431
  %v4095 = vunpack.c.l.b16 %v432
  %v4096 = vunpack.c.h.b16 %v432
  %v4097 = vunpack.c.l.b16 %v433
  %v4098 = vunpack.c.h.b16 %v433
  %v4099 = vunpack.c.l.b16 %v434
  %v4100 = vunpack.c.h.b16 %v434
  %v4101 = vunpack.c.l.b16 %v435
  %v4102 = vunpack.c.h.b16 %v435
  %v4103 = vunpack.c.l.b16 %v436
  %v4104 = vunpack.c.h.b16 %v436
  %v4105 = vunpack.c.l.b16 %v437
  %v4106 = vunpack.c.h.b16 %v437
  %v4107 = vunpack.c.l.b16 %v438
  %v4108 = vunpack.c.h.b16 %v438
  %v4109 = vunpack.c.l.b16 %v439
  %v4110 = vunpack.c.h.b16 %v439
  %v4111 = vunpack.c.l.b16 %v440
  %v4112 = vunpack.c.h.b16 %v440
  %v4113 = vunpack.c.l.b16 %v441
  %v4114 = vunpack.c.h.b16 %v441
  %v4115 = vunpack.c.l.b16 %v442
  %v4116 = vunpack.c.h.b16 %v442
  %v4117 = vunpack.c.l.b16 %v443
  %v4118 = vunpack.c.h.b16 %v443
  %v4119 = vunpack.c.l.b16 %v444
  %v4120 = vunpack.c.h.b16 %v444
  %v4121 = vunpack.c.l.b16 %v445
  %v4122 = vunpack.c.h.b16 %v445
  %v4123 = vunpack.c.l.b16 %v446
  %v4124 = vunpack.c.h.b16 %v446
  %v4125 = vunpack.c.l.b16 %v447
  %v4126 = vunpack.c.h.b16 %v447
  %v4127 = vunpack.c.l.b16 %v448
  %v4128 = vunpack.c.h.b16 %v448
  %v4129 = vunpack.c.l.b16 %v449
  %v4130 = vunpack.c.h.b16 %v449
  %v4131 = vunpack.c.l.b16 %v450
  %v4132 = vunpack.c.h.b16 %v450
  %v4133 = vunpack.c.l.b16 %v451
  %v4134 = vunpack.c.h.b16 %v451
  %v4135 = vunpack.c.l.b16 %v452
  %v4136 = vunpack.c.h.b16 %v452
  %v4137 = vunpack.c.l.b16 %v453
  %v4138 = vunpack.c.h.b16 %v453
  %v4139 = vunpack.c.l.b16 %v454
  %v4140 = vunpack.c.h.b16 %v454
  %v4141 = vunpack.c.l.b16 %v455
  %v4142 = vunpack.c.h.b16 %v455
  %v4143 = vunpack.c.l.b16 %v456
  %v4144 = vunpack.c.h.b16 %v456
  %v4145 = vunpack.c.l.b16 %v457
  %v4146 = vunpack.c.h.b16 %v457
  %v4147 = vunpack.c.l.b16 %v458
  %v4148 = vunpack.c.h.b16 %v458
  %v4149 = vunpack.c.l.b16 %v459
  %v4150 = vunpack.c.h.b16 %v459
  %v4151 = vunpack.c.l.b16 %v460
  %v4152 = vunpack.c.h.b16 %v460
  %v4153 = vunpack.c.l.b16 %v461
  %v4154 = vunpack.c.h.b16 %v461
  %v4155 = vunpack.c.l.b16 %v462
  %v4156 = vunpack.c.h.b16 %v462
  %v4157 = vunpack.c.l.b16 %v463
  %v4158 = vunpack.c.h.b16 %v463
  %v4159 = vunpack.c.l.b16 %v464
  %v4160 = vunpack.c.h.b16 %v464
  %v4161 = vunpack.c.l.b16 %v465
  %v4162 = vunpack.c.h.b16 %v465
  %v4163 = vunpack.c.l.b16 %v466
  %v4164 = vunpack.c.h.b16 %v466
  %v4165 = vunpack.c.l.b16 %v467
  %v4166 = vunpack.c.h.b16 %v467
  %v4167 = vunpack.c.l.b16 %v468
  %v4168 = vunpack.c.h.b16 %v468
  %v4169 = vunpack.c.l.b16 %v469
  %v4170 = vunpack.c.h.b16 %v469
  %v4171 = vunpack.c.l.b16 %v470
  %v4172 = vunpack.c.h.b16 %v470
  %v4173 = vunpack.c.l.b16 %v471
  %v4174 = vunpack.c.h.b16 %v471
  %v4175 = vunpack.c.l.b16 %v472
  %v4176 = vunpack.c.h.b16 %v472
  %v4177 = vunpack.c.l.b16 %v473
  %v4178 = vunpack.c.h.b16 %v473
  %v4179 = vunpack.c.l.b16 %v474
  %v4180 = vunpack.c.h.b16 %v474
  %v4181 = vunpack.c.l.b16 %v475
  %v4182 = vunpack.c.h.b16 %v475
  %v4183 = vunpack.c.l.b16 %v476
  %v4184 = vunpack.c.h.b16 %v476
  %v4185 = vunpack.c.l.b16 %v477
  %v4186 = vunpack.c.h.b16 %v477
  %v4187 = vunpack.c.l.b16 %v478
  %v4188 = vunpack.c.h.b16 %v478
  %v4189 = vunpack.c.l.b16 %v479
  %v4190 = vunpack.c.h.b16 %v479
  %v4191 = vunpack.c.l.b16 %v480
  %v4192 = vunpack.c.h.b16 %v480
  %v4193 = vunpack.c.l.b16 %v481
  %v4194 = vunpack.c.h.b16 %v481
  %v4195 = vunpack.c.l.b16 %v482
  %v4196 = vunpack.c.h.b16 %v482
  %v4197 = vunpack.c.l.b16 %v483
  %v4198 = vunpack.c.h.b16 %v483
  %v4199 = vunpack.c.l.b16 %v484
  %v4200 = vunpack.c.h.b16 %v484
  %v4201 = vunpack.c.l.b16 %v485
  %v4202 = vunpack.c.h.b16 %v485
  %v4203 = vunpack.c.l.b16 %v486
  %v4204 = vunpack.c.h.b16 %v486
  %v4205 = vunpack.c.l.b16 %v487
  %v4206 = vunpack.c.h.b16 %v487
  %v4207 = vunpack.c.l.b16 %v488
  %v4208 = vunpack.c.h.b16 %v488
  %v4209 = vunpack.c.l.b16 %v489
  %v4210 = vunpack.c.h.b16 %v489
  %v4211 = vunpack.c.l.b16 %v490
  %v4212 = vunpack.c.h.b16 %v490
  %v4213 = vunpack.c.l.b16 %v491
  %v4214 = vunpack.c.h.b16 %v491
  %v4215 = vunpack.c.l.b16 %v492
  %v4216 = vunpack.c.h.b16 %v492
  %v4217 = vunpack.c.l.b16 %v493
  %v4218 = vunpack.c.h.b16 %v493
  %v4219 = vunpack.c.l.b16 %v494
  %v4220 = vunpack.c.h.b16 %v494
  %v4221 = vunpack.c.l.b16 %v495
  %v4222 = vunpack.c.h.b16 %v495
  %v4223 = vunpack.c.l.b16 %v496
  %v4224 = vunpack.c.h.b16 %v496
  %v4225 = vunpack.c.l.b16 %v497
  %v4226 = vunpack.c.h.b16 %v497
  %v4227 = vunpack.c.l.b16 %v498
  %v4228 = vunpack.c.h.b16 %v498
  %v4229 = vunpack.c.l.b16 %v499
  %v4230 = vunpack.c.h.b16 %v499
  %v4231 = vunpack.c.l.b16 %v500
  %v4232 = vunpack.c.h.b16 %v500
  %v4233 = vunpack.c.l.b16 %v501
  %v4234 = vunpack.c.h.b16 %v501
  %v4235 = vunpack.c.l.b16 %v502
  %v4236 = vunpack.c.h.b16 %v502
  %v4237 = vunpack.c.l.b16 %v503
  %v4238 = vunpack.c.h.b16 %v503
  %v4239 = vunpack.c.l.b16 %v504
  %v4240 = vunpack.c.h.b16 %v504
  %v4241 = vunpack.c.l.b16 %v505
  %v4242 = vunpack.c.h.b16 %v505
  %v4243 = vunpack.c.l.b16 %v506
  %v4244 = vunpack.c.h.b16 %v506
  %v4245 = vunpack.c.l.b16 %v507
  %v4246 = vunpack.c.h.b16 %v507
  %v4247 = vunpack.c.l.b16 %v508
  %v4248 = vunpack.c.h.b16 %v508
  %v4249 = vunpack.c.l.b16 %v509
  %v4250 = vunpack.c.h.b16 %v509
  %v4251 = vunpack.c.l.b16 %v510
  %v4252 = vunpack.c.h.b16 %v510
  %v4253 = vunpack.c.l.b16 %v511
  %v4254 = vunpack.c.h.b16 %v511
  %v4255 = vunpack.c.l.b16 %v512
  %v4256 = vunpack.c.h.b16 %v512
  %v4257 = vunpack.c.l.b16 %v513
  %v4258 = vunpack.c.h.b16 %v513
  %v4259 = vunpack.c.l.b16 %v514
  %v4260 = vunpack.c.h.b16 %v514
  %v4261 = vunpack.c.l.b16 %v515
  %v4262 = vunpack.c.h.b16 %v515
  %v4263 = vunpack.c.l.b16 %v516
  %v4264 = vunpack.c.h.b16 %v516
  %v4265 = vunpack.c.l.b16 %v517
  %v4266 = vunpack.c.h.b16 %v517
  %v4267 = vunpack.c.l.b16 %v518
  %v4268 = vunpack.c.h.b16 %v518
  %v4269 = vunpack.c.l.b16 %v519
  %v4270 = vunpack.c.h.b16 %v519
  %v4271 = vunpack.c.l.b16 %v520
  %v4272 = vunpack.c.h.b16 %v520
  %v4273 = vunpack.c.l.b16 %v521
  %v4274 = vunpack.c.h.b16 %v521
  %v4275 = vunpack.c.l.b16 %v522
  %v4276 = vunpack.c.h.b16 %v522
  %v4277 = vunpack.c.l.b16 %v523
  %v4278 = vunpack.c.h.b16 %v523
  %v4279 = vunpack.c.l.b16 %v524
  %v4280 = vunpack.c.h.b16 %v524
  %v4281 = vunpack.c.l.b16 %v525
  %v4282 = vunpack.c.h.b16 %v525
  %v4283 = vunpack.c.l.b16 %v526
  %v4284 = vunpack.c.h.b16 %v526
  %v4285 = vunpack.c.l.b16 %v527
  %v4286 = vunpack.c.h.b16 %v527
  %v4287 = vunpack.c.l.b16 %v528
  %v4288 = vunpack.c.h.b16 %v528
  %v4289 = vunpack.c.l.b16 %v529
  %v4290 = vunpack.c.h.b16 %v529
  %v4291 = vunpack.c.l.b16 %v530
  %v4292 = vunpack.c.h.b16 %v530
  %v4293 = vunpack.c.l.b16 %v531
  %v4294 = vunpack.c.h.b16 %v531
  %v4295 = vunpack.c.l.b16 %v532
  %v4296 = vunpack.c.h.b16 %v532
  %v4297 = vunpack.c.l.b16 %v533
  %v4298 = vunpack.c.h.b16 %v533
  %v4299 = vunpack.c.l.b16 %v534
  %v4300 = vunpack.c.h.b16 %v534
  %v4301 = vunpack.c.l.b16 %v535
  %v4302 = vunpack.c.h.b16 %v535
  %v4303 = vunpack.c.l.b16 %v536
  %v4304 = vunpack.c.h.b16 %v536
  %v4305 = vunpack.c.l.b16 %v537
  %v4306 = vunpack.c.h.b16 %v537
  %v4307 = vunpack.c.l.b16 %v538
  %v4308 = vunpack.c.h.b16 %v538
  %v4309 = vunpack.c.l.b16 %v539
  %v4310 = vunpack.c.h.b16 %v539
  %v4311 = vunpack.c.l.b16 %v540
  %v4312 = vunpack.c.h.b16 %v540
  %v4313 = vunpack.c.l.b16 %v541
  %v4314 = vunpack.c.h.b16 %v541
  %v4315 = vunpack.c.l.b16 %v542
  %v4316 = vunpack.c.h.b16 %v542
  %v4317 = vunpack.c.l.b16 %v543
  %v4318 = vunpack.c.h.b16 %v543
  %v4319 = vunpack.c.l.b16 %v544
  %v4320 = vunpack.c.h.b16 %v544
  %v4321 = vunpack.c.l.b16 %v545
  %v4322 = vunpack.c.h.b16 %v545
  %v4323 = vunpack.c.l.b16 %v546
  %v4324 = vunpack.c.h.b16 %v546
  %v4325 = vunpack.c.l.b16 %v547
  %v4326 = vunpack.c.h.b16 %v547
  %v4327 = vunpack.c.l.b16 %v548
  %v4328 = vunpack.c.h.b16 %v548
  %v4329 = vunpack.c.l.b16 %v549
  %v4330 = vunpack.c.h.b16 %v549
  %v4331 = vunpack.c.l.b16 %v550
  %v4332 = vunpack.c.h.b16 %v550
  %v4333 = vunpack.c.l.b16 %v551
  %v4334 = vunpack.c.h.b16 %v551
  %v4335 = vunpack.c.l.b16 %v552
  %v4336 = vunpack.c.h.b16 %v552
  %v4337 = vunpack.c.l.b16 %v553
  %v4338 = vunpack.c.h.b16 %v553
  %v4339 = vunpack.c.l.b16 %v554
  %v4340 = vunpack.c.h.b16 %v554
  %v4341 = vunpack.c.l.b16 %v555
  %v4342 = vunpack.c.h.b16 %v555
  %v4343 = vunpack.c.l.b16 %v556
  %v4344 = vunpack.c.h.b16 %v556
  %v4345 = vunpack.c.l.b16 %v557
  %v4346 = vunpack.c.h.b16 %v557
  %v4347 = vunpack.c.l.b16 %v558
  %v4348 = vunpack.c.h.b16 %v558
  %v4349 = vunpack.c.l.b16 %v559
  %v4350 = vunpack.c.h.b16 %v559
  %v4351 = vunpack.c.l.b16 %v560
  %v4352 = vunpack.c.h.b16 %v560
  %v4353 = vunpack.c.l.b16 %v561
  %v4354 = vunpack.c.h.b16 %v561
  %v4355 = vunpack.c.l.b16 %v562
  %v4356 = vunpack.c.h.b16 %v562
  %v4357 = vunpack.c.l.b16 %v563
  %v4358 = vunpack.c.h.b16 %v563
  %v4359 = vunpack.c.l.b16 %v564
  %v4360 = vunpack.c.h.b16 %v564
  %v4361 = vunpack.c.l.b16 %v565
  %v4362 = vunpack.c.h.b16 %v565
  %v4363 = vunpack.c.l.b16 %v566
  %v4364 = vunpack.c.h.b16 %v566
  %v4365 = vunpack.c.l.b16 %v567
  %v4366 = vunpack.c.h.b16 %v567
  %v4367 = vunpack.c.l.b16 %v568
  %v4368 = vunpack.c.h.b16 %v568
  %v4369 = vunpack.c.l.b16 %v569
  %v4370 = vunpack.c.h.b16 %v569
  %v4371 = vunpack.c.l.b16 %v570
  %v4372 = vunpack.c.h.b16 %v570
  %v4373 = vunpack.c.l.b16 %v571
  %v4374 = vunpack.c.h.b16 %v571
  %v4375 = vunpack.c.l.b16 %v572
  %v4376 = vunpack.c.h.b16 %v572
  %v4377 = vunpack.c.l.b16 %v573
  %v4378 = vunpack.c.h.b16 %v573
  %v4379 = vunpack.c.l.b16 %v574
  %v4380 = vunpack.c.h.b16 %v574
  %v4381 = vunpack.c.l.b16 %v575
  %v4382 = vunpack.c.h.b16 %v575
  %v4383 = vunpack.c.l.b16 %v576
  %v4384 = vunpack.c.h.b16 %v576
  %v4385 = vunpack.c.l.b16 %v577
  %v4386 = vunpack.c.h.b16 %v577
  %v4387 = vunpack.c.l.b16 %v578
  %v4388 = vunpack.c.h.b16 %v578
  %v4389 = vunpack.c.l.b16 %v579
  %v4390 = vunpack.c.h.b16 %v579
  %v4391 = vunpack.c.l.b16 %v580
  %v4392 = vunpack.c.h.b16 %v580
  %v4393 = vunpack.c.l.b16 %v581
  %v4394 = vunpack.c.h.b16 %v581
  %v4395 = vunpack.c.l.b16 %v582
  %v4396 = vunpack.c.h.b16 %v582
  %v4397 = vunpack.c.l.b16 %v583
  %v4398 = vunpack.c.h.b16 %v583
  %v4399 = vunpack.c.l.b16 %v584
  %v4400 = vunpack.c.h.b16 %v584
  %v4401 = vunpack.c.l.b16 %v585
  %v4402 = vunpack.c.h.b16 %v585
  %v4403 = vunpack.c.l.b16 %v586
  %v4404 = vunpack.c.h.b16 %v586
  %v4405 = vunpack.c.l.b16 %v587
  %v4406 = vunpack.c.h.b16 %v587
  %v4407 = vunpack.c.l.b16 %v588
  %v4408 = vunpack.c.h.b16 %v588
  %v4409 = vunpack.c.l.b16 %v589
  %v4410 = vunpack.c.h.b16 %v589
  %v4411 = vunpack.c.l.b16 %v590
  %v4412 = vunpack.c.h.b16 %v590
  %v4413 = vunpack.c.l.b16 %v591
  %v4414 = vunpack.c.h.b16 %v591
  %v4415 = vunpack.c.l.b16 %v592
  %v4416 = vunpack.c.h.b16 %v592
  %v4417 = vunpack.c.l.b16 %v593
  %v4418 = vunpack.c.h.b16 %v593
  %v4419 = vunpack.c.l.b16 %v594
  %v4420 = vunpack.c.h.b16 %v594
  %v4421 = vunpack.c.l.b16 %v595
  %v4422 = vunpack.c.h.b16 %v595
  %v4423 = vunpack.c.l.b16 %v596
  %v4424 = vunpack.c.h.b16 %v596
  %v4425 = vunpack.c.l.b16 %v597
  %v4426 = vunpack.c.h.b16 %v597
  %v4427 = vunpack.c.l.b16 %v598
  %v4428 = vunpack.c.h.b16 %v598
  %v4429 = vunpack.c.l.b16 %v599
  %v4430 = vunpack.c.h.b16 %v599
  %v4431 = vunpack.c.l.b16 %v600
  %v4432 = vunpack.c.h.b16 %v600
  %v4433 = vunpack.c.l.b16 %v601
  %v4434 = vunpack.c.h.b16 %v601
  %v4435 = vunpack.c.l.b16 %v602
  %v4436 = vunpack.c.h.b16 %v602
  %v4437 = vunpack.c.l.b16 %v603
  %v4438 = vunpack.c.h.b16 %v603
  %v4439 = vunpack.c.l.b16 %v604
  %v4440 = vunpack.c.h.b16 %v604
  %v4441 = vunpack.c.l.b16 %v605
  %v4442 = vunpack.c.h.b16 %v605
  %v4443 = vunpack.c.l.b16 %v606
  %v4444 = vunpack.c.h.b16 %v606
  %v4445 = vunpack.c.l.b16 %v607
  %v4446 = vunpack.c.h.b16 %v607
  %v4447 = vunpack.c.l.b16 %v608
  %v4448 = vunpack.c.h.b16 %v608
  %v4449 = vunpack.c.l.b16 %v609
  %v4450 = vunpack.c.h.b16 %v609
  %v4451 = vunpack.c.l.b16 %v610
  %v4452 = vunpack.c.h.b16 %v610
  %v4453 = vunpack.c.l.b16 %v611
  %v4454 = vunpack.c.h.b16 %v611
  %v4455 = vunpack.c.l.b16 %v612
  %v4456 = vunpack.c.h.b16 %v612
  %v4457 = vunpack.c.l.b16 %v613
  %v4458 = vunpack.c.h.b16 %v613
  %v4459 = vunpack.c.l.b16 %v614
  %v4460 = vunpack.c.h.b16 %v614
  %v4461 = vunpack.c.l.b16 %v615
  %v4462 = vunpack.c.h.b16 %v615
  %v4463 = vunpack.c.l.b16 %v616
  %v4464 = vunpack.c.h.b16 %v616
  %v4465 = vunpack.c.l.b16 %v617
  %v4466 = vunpack.c.h.b16 %v617
  %v4467 = vunpack.c.l.b16 %v618
  %v4468 = vunpack.c.h.b16 %v618
  %v4469 = vunpack.c.l.b16 %v619
  %v4470 = vunpack.c.h.b16 %v619
  %v4471 = vunpack.c.l.b16 %v620
  %v4472 = vunpack.c.h.b16 %v620
  %v4473 = vunpack.c.l.b16 %v621
  %v4474 = vunpack.c.h.b16 %v621
  %v4475 = vunpack.c.l.b16 %v622
  %v4476 = vunpack.c.h.b16 %v622
  %v4477 = vunpack.c.l.b16 %v623
  %v4478 = vunpack.c.h.b16 %v623
  %v4479 = vunpack.c.l.b16 %v624
  %v4480 = vunpack.c.h.b16 %v624
  %v4481 = vunpack.c.l.b16 %v625
  %v4482 = vunpack.c.h.b16 %v625
  %v4483 = vunpack.c.l.b16 %v626
  %v4484 = vunpack.c.h.b16 %v626
  %v4485 = vunpack.c.l.b16 %v627
  %v4486 = vunpack.c.h.b16 %v627
  %v4487 = vunpack.c.l.b16 %v628
  %v4488 = vunpack.c.h.b16 %v628
  %v4489 = vunpack.c.l.b16 %v629
  %v4490 = vunpack.c.h.b16 %v629
  %v4491 = vunpack.c.l.b16 %v630
  %v4492 = vunpack.c.h.b16 %v630
  %v4493 = vunpack.c.l.b16 %v631
  %v4494 = vunpack.c.h.b16 %v631
  %v4495 = vunpack.c.l.b16 %v632
  %v4496 = vunpack.c.h.b16 %v632
  %v4497 = vunpack.c.l.b16 %v633
  %v4498 = vunpack.c.h.b16 %v633
  %v4499 = vunpack.c.l.b16 %v634
  %v4500 = vunpack.c.h.b16 %v634
  %v4501 = vunpack.c.l.b16 %v635
  %v4502 = vunpack.c.h.b16 %v635
  %v4503 = vunpack.c.l.b16 %v636
  %v4504 = vunpack.c.h.b16 %v636
  %v4505 = vunpack.c.l.b16 %v637
  %v4506 = vunpack.c.h.b16 %v637
  %v4507 = vunpack.c.l.b16 %v638
  %v4508 = vunpack.c.h.b16 %v638
  %v4509 = vunpack.c.l.b16 %v639
  %v4510 = vunpack.c.h.b16 %v639
  %v4511 = vunpack.c.l.b16 %v640
  %v4512 = vunpack.c.h.b16 %v640
  %v4513 = vunpack.c.l.b16 %v641
  %v4514 = vunpack.c.h.b16 %v641
  %v4515 = vunpack.c.l.b16 %v642
  %v4516 = vunpack.c.h.b16 %v642
  %v4517 = vunpack.c.l.b16 %v643
  %v4518 = vunpack.c.h.b16 %v643
  %v4519 = vunpack.c.l.b16 %v644
  %v4520 = vunpack.c.h.b16 %v644
  %v4521 = vunpack.c.l.b16 %v645
  %v4522 = vunpack.c.h.b16 %v645
  %v4523 = vunpack.c.l.b16 %v646
  %v4524 = vunpack.c.h.b16 %v646
  %v4525 = vunpack.c.l.b16 %v647
  %v4526 = vunpack.c.h.b16 %v647
  %v4527 = vunpack.c.l.b16 %v648
  %v4528 = vunpack.c.h.b16 %v648
  %v4529 = vunpack.c.l.b16 %v649
  %v4530 = vunpack.c.h.b16 %v649
  %v4531 = vunpack.c.l.b16 %v650
  %v4532 = vunpack.c.h.b16 %v650
  %v4533 = vunpack.c.l.b16 %v651
  %v4534 = vunpack.c.h.b16 %v651
  %v4535 = vunpack.c.l.b16 %v652
  %v4536 = vunpack.c.h.b16 %v652
  %v4537 = vunpack.c.l.b16 %v653
  %v4538 = vunpack.c.h.b16 %v653
  %v4539 = vunpack.c.l.b16 %v654
  %v4540 = vunpack.c.h.b16 %v654
  %v4541 = vunpack.c.l.b16 %v655
  %v4542 = vunpack.c.h.b16 %v655
  %v4543 = vunpack.c.l.b16 %v656
  %v4544 = vunpack.c.h.b16 %v656
  %v4545 = vunpack.c.l.b16 %v657
  %v4546 = vunpack.c.h.b16 %v657
  %v4547 = vunpack.c.l.b16 %v658
  %v4548 = vunpack.c.h.b16 %v658
  %v4549 = vunpack.c.l.b16 %v659
  %v4550 = vunpack.c.h.b16 %v659
  %v4551 = vunpack.c.l.b16 %v660
  %v4552 = vunpack.c.h.b16 %v660
  %v4553 = vunpack.c.l.b16 %v661
  %v4554 = vunpack.c.h.b16 %v661
  %v4555 = vunpack.c.l.b16 %v662
  %v4556 = vunpack.c.h.b16 %v662
  %v4557 = vunpack.c.l.b16 %v663
  %v4558 = vunpack.c.h.b16 %v663
  %v4559 = vunpack.c.l.b16 %v664
  %v4560 = vunpack.c.h.b16 %v664
  %v4561 = vunpack.c.l.b16 %v665
  %v4562 = vunpack.c.h.b16 %v665
  %v4563 = vunpack.c.l.b16 %v666
  %v4564 = vunpack.c.h.b16 %v666
  %v4565 = vunpack.c.l.b16 %v667
  %v4566 = vunpack.c.h.b16 %v667
  %v4567 = vunpack.c.l.b16 %v668
  %v4568 = vunpack.c.h.b16 %v668
  %v4569 = vunpack.c.l.b16 %v669
  %v4570 = vunpack.c.h.b16 %v669
  %v4571 = vunpack.c.l.b16 %v670
  %v4572 = vunpack.c.h.b16 %v670
  %v4573 = vunpack.c.l.b16 %v671
  %v4574 = vunpack.c.h.b16 %v671
  %v4575 = vunpack.c.l.b16 %v672
  %v4576 = vunpack.c.h.b16 %v672
  %v4577 = vunpack.c.l.b16 %v673
  %v4578 = vunpack.c.h.b16 %v673
  %v4579 = vunpack.c.l.b16 %v674
  %v4580 = vunpack.c.h.b16 %v674
  %v4581 = vunpack.c.l.b16 %v675
  %v4582 = vunpack.c.h.b16 %v675
  %v4583 = vunpack.c.l.b16 %v676
  %v4584 = vunpack.c.h.b16 %v676
  %v4585 = vunpack.c.l.b16 %v677
  %v4586 = vunpack.c.h.b16 %v677
  %v4587 = vunpack.c.l.b16 %v678
  %v4588 = vunpack.c.h.b16 %v678
  %v4589 = vunpack.c.l.b16 %v679
  %v4590 = vunpack.c.h.b16 %v679
  %v4591 = vunpack.c.l.b16 %v680
  %v4592 = vunpack.c.h.b16 %v680
  %v4593 = vunpack.c.l.b16 %v681
  %v4594 = vunpack.c.h.b16 %v681
  %v4595 = vunpack.c.l.b16 %v682
  %v4596 = vunpack.c.h.b16 %v682
  %v4597 = vunpack.c.l.b16 %v683
  %v4598 = vunpack.c.h.b16 %v683
  %v4599 = vunpack.c.l.b16 %v684
  %v4600 = vunpack.c.h.b16 %v684
  %v4601 = vunpack.c.l.b16 %v685
  %v4602 = vunpack.c.h.b16 %v685
  %v4603 = vunpack.c.l.b16 %v686
  %v4604 = vunpack.c.h.b16 %v686
  %v4605 = vunpack.c.l.b16 %v687
  %v4606 = vunpack.c.h.b16 %v687
  %v4607 = vunpack.c.l.b16 %v688
  %v4608 = vunpack.c.h.b16 %v688
  %v4609 = vunpack.c.l.b16 %v689
  %v4610 = vunpack.c.h.b16 %v689
  %v4611 = vunpack.c.l.b16 %v690
  %v4612 = vunpack.c.h.b16 %v690
  %v4613 = vunpack.c.l.b16 %v691
  %v4614 = vunpack.c.h.b16 %v691
  %v4615 = vunpack.c.l.b16 %v692
  %v4616 = vunpack.c.h.b16 %v692
  %v4617 = vunpack.c.l.b16 %v693
  %v4618 = vunpack.c.h.b16 %v693
  %v4619 = vunpack.c.l.b16 %v694
  %v4620 = vunpack.c.h.b16 %v694
  %v4621 = vunpack.c.l.b16 %v695
  %v4622 = vunpack.c.h.b16 %v695
  %v4623 = vunpack.c.l.b16 %v696
  %v4624 = vunpack.c.h.b16 %v696
  %v4625 = vunpack.c.l.b16 %v697
  %v4626 = vunpack.c.h.b16 %v697
  %v4627 = vunpack.c.l.b16 %v698
  %v4628 = vunpack.c.h.b16 %v698
  %v4629 = vunpack.c.l.b16 %v699
  %v4630 = vunpack.c.h.b16 %v699
  %v4631 = vunpack.c.l.b16 %v700
  %v4632 = vunpack.c.h.b16 %v700
  %v4633 = vunpack.c.l.b16 %v701
  %v4634 = vunpack.c.h.b16 %v701
  %v4635 = vunpack.c.l.b16 %v702
  %v4636 = vunpack.c.h.b16 %v702
  %v4637 = vunpack.c.l.b16 %v703
  %v4638 = vunpack.c.h.b16 %v703
  %v4639 = vunpack.c.l.b16 %v704
  %v4640 = vunpack.c.h.b16 %v704
  %v4641 = vunpack.c.l.b16 %v705
  %v4642 = vunpack.c.h.b16 %v705
  %v4643 = vunpack.c.l.b16 %v706
  %v4644 = vunpack.c.h.b16 %v706
  %v4645 = vunpack.c.l.b16 %v707
  %v4646 = vunpack.c.h.b16 %v707
  %v4647 = vunpack.c.l.b16 %v708
  %v4648 = vunpack.c.h.b16 %v708
  %v4649 = vunpack.c.l.b16 %v709
  %v4650 = vunpack.c.h.b16 %v709
  %v4651 = vunpack.c.l.b16 %v710
  %v4652 = vunpack.c.h.b16 %v710
  %v4653 = vunpack.c.l.b16 %v711
  %v4654 = vunpack.c.h.b16 %v711
  %v4655 = vunpack.c.l.b16 %v712
  %v4656 = vunpack.c.h.b16 %v712
  %v4657 = vunpack.c.l.b16 %v713
  %v4658 = vunpack.c.h.b16 %v713
  %v4659 = vunpack.c.l.b16 %v714
  %v4660 = vunpack.c.h.b16 %v714
  %v4661 = vunpack.c.l.b16 %v715
  %v4662 = vunpack.c.h.b16 %v715
  %v4663 = vunpack.c.l.b16 %v716
  %v4664 = vunpack.c.h.b16 %v716
  %v4665 = vunpack.c.l.b16 %v717
  %v4666 = vunpack.c.h.b16 %v717
  %v4667 = vunpack.c.l.b16 %v718
  %v4668 = vunpack.c.h.b16 %v718
  %v4669 = vunpack.c.l.b16 %v719
  %v4670 = vunpack.c.h.b16 %v719
  %v4671 = vunpack.c.l.b16 %v720
  %v4672 = vunpack.c.h.b16 %v720
  %v4673 = vunpack.c.l.b16 %v721
  %v4674 = vunpack.c.h.b16 %v721
  %v4675 = vunpack.c.l.b16 %v722
  %v4676 = vunpack.c.h.b16 %v722
  %v4677 = vunpack.c.l.b16 %v723
  %v4678 = vunpack.c.h.b16 %v723
  %v4679 = vunpack.c.l.b16 %v724
  %v4680 = vunpack.c.h.b16 %v724
  %v4681 = vunpack.c.l.b16 %v725
  %v4682 = vunpack.c.h.b16 %v725
  %v4683 = vunpack.c.l.b16 %v726
  %v4684 = vunpack.c.h.b16 %v726
  %v4685 = vunpack.c.l.b16 %v727
  %v4686 = vunpack.c.h.b16 %v727
  %v4687 = vunpack.c.l.b16 %v728
  %v4688 = vunpack.c.h.b16 %v728
  %v4689 = vunpack.c.l.b16 %v729
  %v4690 = vunpack.c.h.b16 %v729
  %v4691 = vunpack.c.l.b16 %v730
  %v4692 = vunpack.c.h.b16 %v730
  %v4693 = vunpack.c.l.b16 %v731
  %v4694 = vunpack.c.h.b16 %v731
  %v4695 = vunpack.c.l.b16 %v732
  %v4696 = vunpack.c.h.b16 %v732
  %v4697 = vunpack.c.l.b16 %v733
  %v4698 = vunpack.c.h.b16 %v733
  %v4699 = vunpack.c.l.b16 %v734
  %v4700 = vunpack.c.h.b16 %v734
  %v4701 = vunpack.c.l.b16 %v735
  %v4702 = vunpack.c.h.b16 %v735
  %v4703 = vunpack.c.l.b16 %v736
  %v4704 = vunpack.c.h.b16 %v736
  %v4705 = vunpack.c.l.b16 %v737
  %v4706 = vunpack.c.h.b16 %v737
  %v4707 = vunpack.c.l.b16 %v738
  %v4708 = vunpack.c.h.b16 %v738
  %v4709 = vunpack.c.l.b16 %v739
  %v4710 = vunpack.c.h.b16 %v739
  %v4711 = vunpack.c.l.b16 %v740
  %v4712 = vunpack.c.h.b16 %v740
  %v4713 = vunpack.c.l.b16 %v741
  %v4714 = vunpack.c.h.b16 %v741
  %v4715 = vunpack.c.l.b16 %v742
  %v4716 = vunpack.c.h.b16 %v742
  %v4717 = vunpack.c.l.b16 %v743
  %v4718 = vunpack.c.h.b16 %v743
  %v4719 = vunpack.c.l.b16 %v744
  %v4720 = vunpack.c.h.b16 %v744
  %v4721 = vunpack.c.l.b16 %v745
  %v4722 = vunpack.c.h.b16 %v745
  %v4723 = vunpack.c.l.b16 %v746
  %v4724 = vunpack.c.h.b16 %v746
  %v4725 = vunpack.c.l.b16 %v747
  %v4726 = vunpack.c.h.b16 %v747
  %v4727 = vunpack.c.l.b16 %v748
  %v4728 = vunpack.c.h.b16 %v748
  %v4729 = vunpack.c.l.b16 %v749
  %v4730 = vunpack.c.h.b16 %v749
  %v4731 = vunpack.c.l.b16 %v750
  %v4732 = vunpack.c.h.b16 %v750
  %v4733 = vunpack.c.l.b16 %v751
  %v4734 = vunpack.c.h.b16 %v751
  %v4735 = vunpack.c.l.b16 %v752
  %v4736 = vunpack.c.h.b16 %v752
  %v4737 = vunpack.c.l.b16 %v753
  %v4738 = vunpack.c.h.b16 %v753
  %v4739 = vunpack.c.l.b16 %v754
  %v4740 = vunpack.c.h.b16 %v754
  %v4741 = vunpack.c.l.b16 %v755
  %v4742 = vunpack.c.h.b16 %v755
  %v4743 = vunpack.c.l.b16 %v756
  %v4744 = vunpack.c.h.b16 %v756
  %v4745 = vunpack.c.l.b16 %v757
  %v4746 = vunpack.c.h.b16 %v757
  %v4747 = vunpack.c.l.b16 %v758
  %v4748 = vunpack.c.h.b16 %v758
  %v4749 = vunpack.c.l.b16 %v759
  %v4750 = vunpack.c.h.b16 %v759
  %v4751 = vunpack.c.l.b16 %v760
  %v4752 = vunpack.c.h.b16 %v760
  %v4753 = vunpack.c.l.b16 %v761
  %v4754 = vunpack.c.h.b16 %v761
  %v4755 = vunpack.c.l.b16 %v762
  %v4756 = vunpack.c.h.b16 %v762
  %v4757 = vunpack.c.l.b16 %v763
  %v4758 = vunpack.c.h.b16 %v763
  %v4759 = vunpack.c.l.b16 %v764
  %v4760 = vunpack.c.h.b16 %v764
  %v4761 = vunpack.c.l.b16 %v765
  %v4762 = vunpack.c.h.b16 %v765
  %v4763 = vunpack.c.l.b16 %v766
  %v4764 = vunpack.c.h.b16 %v766
  %v4765 = vunpack.c.l.b16 %v767
  %v4766 = vunpack.c.h.b16 %v767
  %v4767 = vunpack.c.l.b16 %v768
  %v4768 = vunpack.c.h.b16 %v768
  %v4769 = vunpack.c.l.b16 %v769
  %v4770 = vunpack.c.h.b16 %v769
  %v4771 = vunpack.c.l.b16 %v770
  %v4772 = vunpack.c.h.b16 %v770
  %v4773 = vunpack.c.l.b16 %v771
  %v4774 = vunpack.c.h.b16 %v771
  %v4775 = vunpack.c.l.b16 %v772
  %v4776 = vunpack.c.h.b16 %v772
  %v4777 = vunpack.c.l.b16 %v773
  %v4778 = vunpack.c.h.b16 %v773
  %v4779 = vunpack.c.l.b16 %v774
  %v4780 = vunpack.c.h.b16 %v774
  %v4781 = vunpack.c.l.b16 %v775
  %v4782 = vunpack.c.h.b16 %v775
  %v4783 = vunpack.c.l.b16 %v776
  %v4784 = vunpack.c.h.b16 %v776
  %v4785 = vunpack.c.l.b16 %v777
  %v4786 = vunpack.c.h.b16 %v777
  %v4787 = vunpack.c.l.b16 %v778
  %v4788 = vunpack.c.h.b16 %v778
  %v4789 = vunpack.c.l.b16 %v779
  %v4790 = vunpack.c.h.b16 %v779
  %v4791 = vunpack.c.l.b16 %v780
  %v4792 = vunpack.c.h.b16 %v780
  %v4793 = vunpack.c.l.b16 %v781
  %v4794 = vunpack.c.h.b16 %v781
  %v4795 = vunpack.c.l.b16 %v782
  %v4796 = vunpack.c.h.b16 %v782
  %v4797 = vunpack.c.l.b16 %v783
  %v4798 = vunpack.c.h.b16 %v783
  %v4799 = vunpack.c.l.b16 %v784
  %v4800 = vunpack.c.h.b16 %v784
  %v4801 = vunpack.c.l.b16 %v785
  %v4802 = vunpack.c.h.b16 %v785
  %v4803 = vunpack.c.l.b16 %v786
  %v4804 = vunpack.c.h.b16 %v786
  %v4805 = vunpack.c.l.b16 %v787
  %v4806 = vunpack.c.h.b16 %v787
  %v4807 = vunpack.c.l.b16 %v788
  %v4808 = vunpack.c.h.b16 %v788
  %v4809 = vunpack.c.l.b16 %v789
  %v4810 = vunpack.c.h.b16 %v789
  %v4811 = vunpack.c.l.b16 %v790
  %v4812 = vunpack.c.h.b16 %v790
  %v4813 = vunpack.c.l.b16 %v791
  %v4814 = vunpack.c.h.b16 %v791
  %v4815 = vunpack.c.l.b16 %v792
  %v4816 = vunpack.c.h.b16 %v792
  %v4817 = vunpack.c.l.b16 %v793
  %v4818 = vunpack.c.h.b16 %v793
  %v4819 = vunpack.c.l.b16 %v794
  %v4820 = vunpack.c.h.b16 %v794
  %v4821 = vunpack.c.l.b16 %v795
  %v4822 = vunpack.c.h.b16 %v795
  %v4823 = vunpack.c.l.b16 %v796
  %v4824 = vunpack.c.h.b16 %v796
  %v4825 = vunpack.c.l.b16 %v797
  %v4826 = vunpack.c.h.b16 %v797
  %v4827 = vunpack.c.l.b16 %v798
  %v4828 = vunpack.c.h.b16 %v798
  %v4829 = vunpack.c.l.b16 %v799
  %v4830 = vunpack.c.h.b16 %v799
  %v4831 = vunpack.c.l.b16 %v800
  %v4832 = vunpack.c.h.b16 %v800
  %v4833 = vunpack.c.l.b16 %v801
  %v4834 = vunpack.c.h.b16 %v801
  %v4835 = vunpack.c.l.b16 %v802
  %v4836 = vunpack.c.h.b16 %v802
  %v4837 = vunpack.c.l.b16 %v803
  %v4838 = vunpack.c.h.b16 %v803
  %v4839 = vunpack.c.l.b16 %v804
  %v4840 = vunpack.c.h.b16 %v804
  %v4841 = vunpack.c.l.b16 %v805
  %v4842 = vunpack.c.h.b16 %v805
  %v4843 = vunpack.c.l.b16 %v806
  %v4844 = vunpack.c.h.b16 %v806
  %v4845 = vunpack.c.l.b16 %v807
  %v4846 = vunpack.c.h.b16 %v807
  %v4847 = vunpack.c.l.b16 %v808
  %v4848 = vunpack.c.h.b16 %v808
  %v4849 = vunpack.c.l.b16 %v809
  %v4850 = vunpack.c.h.b16 %v809
  %v4851 = vunpack.c.l.b16 %v810
  %v4852 = vunpack.c.h.b16 %v810
  %v4853 = vunpack.c.l.b16 %v811
  %v4854 = vunpack.c.h.b16 %v811
  %v4855 = vunpack.c.l.b16 %v812
  %v4856 = vunpack.c.h.b16 %v812
  %v4857 = vunpack.c.l.b16 %v813
  %v4858 = vunpack.c.h.b16 %v813
  %v4859 = vunpack.c.l.b16 %v814
  %v4860 = vunpack.c.h.b16 %v814
  %v4861 = vunpack.c.l.b16 %v815
  %v4862 = vunpack.c.h.b16 %v815
  %v4863 = vunpack.c.l.b16 %v816
  %v4864 = vunpack.c.h.b16 %v816
  %v4865 = vunpack.c.l.b16 %v817
  %v4866 = vunpack.c.h.b16 %v817
  %v4867 = vunpack.c.l.b16 %v818
  %v4868 = vunpack.c.h.b16 %v818
  %v4869 = vunpack.c.l.b16 %v819
  %v4870 = vunpack.c.h.b16 %v819
  %v4871 = vunpack.c.l.b16 %v820
  %v4872 = vunpack.c.h.b16 %v820
  %v4873 = vunpack.c.l.b16 %v821
  %v4874 = vunpack.c.h.b16 %v821
  %v4875 = vunpack.c.l.b16 %v822
  %v4876 = vunpack.c.h.b16 %v822
  %v4877 = vunpack.c.l.b16 %v823
  %v4878 = vunpack.c.h.b16 %v823
  %v4879 = vunpack.c.l.b16 %v824
  %v4880 = vunpack.c.h.b16 %v824
  %v4881 = vunpack.c.l.b16 %v825
  %v4882 = vunpack.c.h.b16 %v825
  %v4883 = vunpack.c.l.b16 %v826
  %v4884 = vunpack.c.h.b16 %v826
  %v4885 = vunpack.c.l.b16 %v827
  %v4886 = vunpack.c.h.b16 %v827
  %v4887 = vunpack.c.l.b16 %v828
  %v4888 = vunpack.c.h.b16 %v828
  %v4889 = vunpack.c.l.b16 %v829
  %v4890 = vunpack.c.h.b16 %v829
  %v4891 = vunpack.c.l.b16 %v830
  %v4892 = vunpack.c.h.b16 %v830
  %v4893 = vunpack.c.l.b16 %v831
  %v4894 = vunpack.c.h.b16 %v831
  %v4895 = vunpack.c.l.b16 %v832
  %v4896 = vunpack.c.h.b16 %v832
  %v4897 = vunpack.c.l.b16 %v833
  %v4898 = vunpack.c.h.b16 %v833
  %v4899 = vunpack.c.l.b16 %v834
  %v4900 = vunpack.c.h.b16 %v834
  %v4901 = vunpack.c.l.b16 %v835
  %v4902 = vunpack.c.h.b16 %v835
  %v4903 = vunpack.c.l.b16 %v836
  %v4904 = vunpack.c.h.b16 %v836
  %v4905 = vunpack.c.l.b16 %v837
  %v4906 = vunpack.c.h.b16 %v837
  %v4907 = vunpack.c.l.b16 %v838
  %v4908 = vunpack.c.h.b16 %v838
  %v4909 = vunpack.c.l.b16 %v839
  %v4910 = vunpack.c.h.b16 %v839
  %v4911 = vunpack.c.l.b16 %v840
  %v4912 = vunpack.c.h.b16 %v840
  %v4913 = vunpack.c.l.b16 %v841
  %v4914 = vunpack.c.h.b16 %v841
  %v4915 = vunpack.c.l.b16 %v842
  %v4916 = vunpack.c.h.b16 %v842
  %v4917 = vunpack.c.l.b16 %v843
  %v4918 = vunpack.c.h.b16 %v843
  %v4919 = vunpack.c.l.b16 %v844
  %v4920 = vunpack.c.h.b16 %v844
  %v4921 = vunpack.c.l.b16 %v845
  %v4922 = vunpack.c.h.b16 %v845
  %v4923 = vunpack.c.l.b16 %v846
  %v4924 = vunpack.c.h.b16 %v846
  %v4925 = vunpack.c.l.b16 %v847
  %v4926 = vunpack.c.h.b16 %v847
  %v4927 = vunpack.c.l.b16 %v848
  %v4928 = vunpack.c.h.b16 %v848
  %v4929 = vunpack.c.l.b16 %v849
  %v4930 = vunpack.c.h.b16 %v849
  %v4931 = vunpack.c.l.b16 %v850
  %v4932 = vunpack.c.h.b16 %v850
  %v4933 = vunpack.c.l.b16 %v851
  %v4934 = vunpack.c.h.b16 %v851
  %v4935 = vunpack.c.l.b16 %v852
  %v4936 = vunpack.c.h.b16 %v852
  %v4937 = vunpack.c.l.b16 %v853
  %v4938 = vunpack.c.h.b16 %v853
  %v4939 = vunpack.c.l.b16 %v854
  %v4940 = vunpack.c.h.b16 %v854
  %v4941 = vunpack.c.l.b16 %v855
  %v4942 = vunpack.c.h.b16 %v855
  %v4943 = vunpack.c.l.b16 %v856
  %v4944 = vunpack.c.h.b16 %v856
  %v4945 = vunpack.c.l.b16 %v857
  %v4946 = vunpack.c.h.b16 %v857
  %v4947 = vunpack.c.l.b16 %v858
  %v4948 = vunpack.c.h.b16 %v858
  %v4949 = vunpack.c.l.b16 %v859
  %v4950 = vunpack.c.h.b16 %v859
  %v4951 = vunpack.c.l.b16 %v860
  %v4952 = vunpack.c.h.b16 %v860
  %v4953 = vunpack.c.l.b16 %v861
  %v4954 = vunpack.c.h.b16 %v861
  %v4955 = vunpack.c.l.b16 %v862
  %v4956 = vunpack.c.h.b16 %v862
  %v4957 = vunpack.c.l.b16 %v863
  %v4958 = vunpack.c.h.b16 %v863
  %v4959 = vunpack.c.l.b16 %v864
  %v4960 = vunpack.c.h.b16 %v864
  %v4961 = vunpack.c.l.b16 %v865
  %v4962 = vunpack.c.h.b16 %v865
  %v4963 = vunpack.c.l.b16 %v866
  %v4964 = vunpack.c.h.b16 %v866
  %v4965 = vunpack.c.l.b16 %v867
  %v4966 = vunpack.c.h.b16 %v867
  %v4967 = vunpack.c.l.b16 %v868
  %v4968 = vunpack.c.h.b16 %v868
  %v4969 = vunpack.c.l.b16 %v869
  %v4970 = vunpack.c.h.b16 %v869
  %v4971 = vunpack.c.l.b16 %v870
  %v4972 = vunpack.c.h.b16 %v870
  %v4973 = vunpack.c.l.b16 %v871
  %v4974 = vunpack.c.h.b16 %v871
  %v4975 = vunpack.c.l.b16 %v872
  %v4976 = vunpack.c.h.b16 %v872
  %v4977 = vunpack.c.l.b16 %v873
  %v4978 = vunpack.c.h.b16 %v873
  %v4979 = vunpack.c.l.b16 %v874
  %v4980 = vunpack.c.h.b16 %v874
  %v4981 = vunpack.c.l.b16 %v875
  %v4982 = vunpack.c.h.b16 %v875
  %v4983 = vunpack.c.l.b16 %v876
  %v4984 = vunpack.c.h.b16 %v876
  %v4985 = vunpack.c.l.b16 %v877
  %v4986 = vunpack.c.h.b16 %v877
  %v4987 = vunpack.c.l.b16 %v878
  %v4988 = vunpack.c.h.b16 %v878
  %v4989 = vunpack.c.l.b16 %v879
  %v4990 = vunpack.c.h.b16 %v879
  %v4991 = vunpack.c.l.b16 %v880
  %v4992 = vunpack.c.h.b16 %v880
  %v4993 = vunpack.c.l.b16 %v881
  %v4994 = vunpack.c.h.b16 %v881
  %v4995 = vunpack.c.l.b16 %v882
  %v4996 = vunpack.c.h.b16 %v882
  %v4997 = vunpack.c.l.b16 %v883
  %v4998 = vunpack.c.h.b16 %v883
  %v4999 = vunpack.c.l.b16 %v884
  %v5000 = vunpack.c.h.b16 %v884
  %v5001 = vunpack.c.l.b16 %v885
  %v5002 = vunpack.c.h.b16 %v885
  %v5003 = vunpack.c.l.b16 %v886
  %v5004 = vunpack.c.h.b16 %v886
  %v5005 = vunpack.c.l.b16 %v887
  %v5006 = vunpack.c.h.b16 %v887
  %v5007 = vunpack.c.l.b16 %v888
  %v5008 = vunpack.c.h.b16 %v888
  %v5009 = vunpack.c.l.b16 %v889
  %v5010 = vunpack.c.h.b16 %v889
  %v5011 = vunpack.c.l.b16 %v890
  %v5012 = vunpack.c.h.b16 %v890
  %v5013 = vunpack.c.l.b16 %v891
  %v5014 = vunpack.c.h.b16 %v891
  %v5015 = vunpack.c.l.b16 %v892
  %v5016 = vunpack.c.h.b16 %v892
  %v5017 = vunpack.c.l.b16 %v893
  %v5018 = vunpack.c.h.b16 %v893
  %v5019 = vunpack.c.l.b16 %v894
  %v5020 = vunpack.c.h.b16 %v894
  %v5021 = vunpack.c.l.b16 %v895
  %v5022 = vunpack.c.h.b16 %v895
  %v5023 = vunpack.c.l.b16 %v896
  %v5024 = vunpack.c.h.b16 %v896
  %v5025 = vunpack.c.l.b16 %v897
  %v5026 = vunpack.c.h.b16 %v897
  %v5027 = vunpack.c.l.b16 %v898
  %v5028 = vunpack.c.h.b16 %v898
  %v5029 = vunpack.c.l.b16 %v899
  %v5030 = vunpack.c.h.b16 %v899
  %v5031 = vunpack.c.l.b16 %v900
  %v5032 = vunpack.c.h.b16 %v900
  %v5033 = vunpack.c.l.b16 %v901
  %v5034 = vunpack.c.h.b16 %v901
  %v5035 = vunpack.c.l.b16 %v902
  %v5036 = vunpack.c.h.b16 %v902
  %v5037 = vunpack.c.l.b16 %v903
  %v5038 = vunpack.c.h.b16 %v903
  %v5039 = vunpack.c.l.b16 %v904
  %v5040 = vunpack.c.h.b16 %v904
  %v5041 = vunpack.c.l.b16 %v905
  %v5042 = vunpack.c.h.b16 %v905
  %v5043 = vunpack.c.l.b16 %v906
  %v5044 = vunpack.c.h.b16 %v906
  %v5045 = vunpack.c.l.b16 %v907
  %v5046 = vunpack.c.h.b16 %v907
  %v5047 = vunpack.c.l.b16 %v908
  %v5048 = vunpack.c.h.b16 %v908
  %v5049 = vunpack.c.l.b16 %v909
  %v5050 = vunpack.c.h.b16 %v909
  %v5051 = vunpack.c.l.b16 %v910
  %v5052 = vunpack.c.h.b16 %v910
  %v5053 = vunpack.c.l.b16 %v911
  %v5054 = vunpack.c.h.b16 %v911
  %v5055 = vunpack.c.l.b16 %v912
  %v5056 = vunpack.c.h.b16 %v912
  %v5057 = vunpack.c.l.b16 %v913
  %v5058 = vunpack.c.h.b16 %v913
  %v5059 = vunpack.c.l.b16 %v914
  %v5060 = vunpack.c.h.b16 %v914
  %v5061 = vunpack.c.l.b16 %v915
  %v5062 = vunpack.c.h.b16 %v915
  %v5063 = vunpack.c.l.b16 %v916
  %v5064 = vunpack.c.h.b16 %v916
  %v5065 = vunpack.c.l.b16 %v917
  %v5066 = vunpack.c.h.b16 %v917
  %v5067 = vunpack.c.l.b16 %v918
  %v5068 = vunpack.c.h.b16 %v918
  %v5069 = vunpack.c.l.b16 %v919
  %v5070 = vunpack.c.h.b16 %v919
  %v5071 = vunpack.c.l.b16 %v920
  %v5072 = vunpack.c.h.b16 %v920
  %v5073 = vunpack.c.l.b16 %v921
  %v5074 = vunpack.c.h.b16 %v921
  %v5075 = vunpack.c.l.b16 %v922
  %v5076 = vunpack.c.h.b16 %v922
  %v5077 = vunpack.c.l.b16 %v923
  %v5078 = vunpack.c.h.b16 %v923
  %v5079 = vunpack.c.l.b16 %v924
  %v5080 = vunpack.c.h.b16 %v924
  %v5081 = vunpack.c.l.b16 %v925
  %v5082 = vunpack.c.h.b16 %v925
  %v5083 = vunpack.c.l.b16 %v926
  %v5084 = vunpack.c.h.b16 %v926
  %v5085 = vunpack.c.l.b16 %v927
  %v5086 = vunpack.c.h.b16 %v927
  %v5087 = vunpack.c.l.b16 %v928
  %v5088 = vunpack.c.h.b16 %v928
  %v5089 = vunpack.c.l.b16 %v929
  %v5090 = vunpack.c.h.b16 %v929
  %v5091 = vunpack.c.l.b16 %v930
  %v5092 = vunpack.c.h.b16 %v930
  %v5093 = vunpack.c.l.b16 %v931
  %v5094 = vunpack.c.h.b16 %v931
  %v5095 = vunpack.c.l.b16 %v932
  %v5096 = vunpack.c.h.b16 %v932
  %v5097 = vunpack.c.l.b16 %v933
  %v5098 = vunpack.c.h.b16 %v933
  %v5099 = vunpack.c.l.b16 %v934
  %v5100 = vunpack.c.h.b16 %v934
  %v5101 = vunpack.c.l.b16 %v935
  %v5102 = vunpack.c.h.b16 %v935
  %v5103 = vunpack.c.l.b16 %v936
  %v5104 = vunpack.c.h.b16 %v936
  %v5105 = vunpack.c.l.b16 %v937
  %v5106 = vunpack.c.h.b16 %v937
  %v5107 = vunpack.c.l.b16 %v938
  %v5108 = vunpack.c.h.b16 %v938
  %v5109 = vunpack.c.l.b16 %v939
  %v5110 = vunpack.c.h.b16 %v939
  %v5111 = vunpack.c.l.b16 %v940
  %v5112 = vunpack.c.h.b16 %v940
  %v5113 = vunpack.c.l.b16 %v941
  %v5114 = vunpack.c.h.b16 %v941
  %v5115 = vunpack.c.l.b16 %v942
  %v5116 = vunpack.c.h.b16 %v942
  %v5117 = vunpack.c.l.b16 %v943
  %v5118 = vunpack.c.h.b16 %v943
  %v5119 = vunpack.c.l.b16 %v944
  %v5120 = vunpack.c.h.b16 %v944
  %v5121 = vunpack.c.l.b16 %v945
  %v5122 = vunpack.c.h.b16 %v945
  %v5123 = vunpack.c.l.b16 %v946
  %v5124 = vunpack.c.h.b16 %v946
  %v5125 = vunpack.c.l.b16 %v947
  %v5126 = vunpack.c.h.b16 %v947
  %v5127 = vunpack.c.l.b16 %v948
  %v5128 = vunpack.c.h.b16 %v948
  %v5129 = vunpack.c.l.b16 %v949
  %v5130 = vunpack.c.h.b16 %v949
  %v5131 = vunpack.c.l.b16 %v950
  %v5132 = vunpack.c.h.b16 %v950
  %v5133 = vunpack.c.l.b16 %v951
  %v5134 = vunpack.c.h.b16 %v951
  %v5135 = vunpack.c.l.b16 %v952
  %v5136 = vunpack.c.h.b16 %v952
  %v5137 = vunpack.c.l.b16 %v953
  %v5138 = vunpack.c.h.b16 %v953
  %v5139 = vunpack.c.l.b16 %v954
  %v5140 = vunpack.c.h.b16 %v954
  %v5141 = vunpack.c.l.b16 %v955
  %v5142 = vunpack.c.h.b16 %v955
  %v5143 = vunpack.c.l.b16 %v956
  %v5144 = vunpack.c.h.b16 %v956
  %v5145 = vunpack.c.l.b16 %v957
  %v5146 = vunpack.c.h.b16 %v957
  %v5147 = vunpack.c.l.b16 %v958
  %v5148 = vunpack.c.h.b16 %v958
  %v5149 = vunpack.c.l.b16 %v959
  %v5150 = vunpack.c.h.b16 %v959
  %v5151 = vunpack.c.l.b16 %v960
  %v5152 = vunpack.c.h.b16 %v960
  %v5153 = vunpack.c.l.b16 %v961
  %v5154 = vunpack.c.h.b16 %v961
  %v5155 = vunpack.c.l.b16 %v962
  %v5156 = vunpack.c.h.b16 %v962
  %v5157 = vunpack.c.l.b16 %v963
  %v5158 = vunpack.c.h.b16 %v963
  %v5159 = vunpack.c.l.b16 %v964
  %v5160 = vunpack.c.h.b16 %v964
  %v5161 = vunpack.c.l.b16 %v965
  %v5162 = vunpack.c.h.b16 %v965
  %v5163 = vunpack.c.l.b16 %v966
  %v5164 = vunpack.c.h.b16 %v966
  %v5165 = vunpack.c.l.b16 %v967
  %v5166 = vunpack.c.h.b16 %v967
  %v5167 = vunpack.c.l.b16 %v968
  %v5168 = vunpack.c.h.b16 %v968
  %v5169 = vunpack.c.l.b16 %v969
  %v5170 = vunpack.c.h.b16 %v969
  %v5171 = vunpack.c.l.b16 %v970
  %v5172 = vunpack.c.h.b16 %v970
  %v5173 = vunpack.c.l.b16 %v971
  %v5174 = vunpack.c.h.b16 %v971
  %v5175 = vunpack.c.l.b16 %v972
  %v5176 = vunpack.c.h.b16 %v972
  %v5177 = vunpack.c.l.b16 %v973
  %v5178 = vunpack.c.h.b16 %v973
  %v5179 = vunpack.c.l.b16 %v974
  %v5180 = vunpack.c.h.b16 %v974
  %v5181 = vunpack.c.l.b16 %v975
  %v5182 = vunpack.c.h.b16 %v975
  %v5183 = vunpack.c.l.b16 %v976
  %v5184 = vunpack.c.h.b16 %v976
  %v5185 = vunpack.c.l.b16 %v977
  %v5186 = vunpack.c.h.b16 %v977
  %v5187 = vunpack.c.l.b16 %v978
  %v5188 = vunpack.c.h.b16 %v978
  %v5189 = vunpack.c.l.b16 %v979
  %v5190 = vunpack.c.h.b16 %v979
  %v5191 = vunpack.c.l.b16 %v980
  %v5192 = vunpack.c.h.b16 %v980
  %v5193 = vunpack.c.l.b16 %v981
  %v5194 = vunpack.c.h.b16 %v981
  %v5195 = vunpack.c.l.b16 %v982
  %v5196 = vunpack.c.h.b16 %v982
  %v5197 = vunpack.c.l.b16 %v983
  %v5198 = vunpack.c.h.b16 %v983
  %v5199 = vunpack.c.l.b16 %v984
  %v5200 = vunpack.c.h.b16 %v984
  %v5201 = vunpack.c.l.b16 %v985
  %v5202 = vunpack.c.h.b16 %v985
  %v5203 = vunpack.c.l.b16 %v986
  %v5204 = vunpack.c.h.b16 %v986
  %v5205 = vunpack.c.l.b16 %v987
  %v5206 = vunpack.c.h.b16 %v987
  %v5207 = vunpack.c.l.b16 %v988
  %v5208 = vunpack.c.h.b16 %v988
  %v5209 = vunpack.c.l.b16 %v989
  %v5210 = vunpack.c.h.b16 %v989
  %v5211 = vunpack.c.l.b16 %v990
  %v5212 = vunpack.c.h.b16 %v990
  %v5213 = vunpack.c.l.b16 %v991
  %v5214 = vunpack.c.h.b16 %v991
  %v5215 = vunpack.c.l.b16 %v992
  %v5216 = vunpack.c.h.b16 %v992
  %v5217 = vunpack.c.l.b16 %v993
  %v5218 = vunpack.c.h.b16 %v993
  %v5219 = vunpack.c.l.b16 %v994
  %v5220 = vunpack.c.h.b16 %v994
  %v5221 = vunpack.c.l.b16 %v995
  %v5222 = vunpack.c.h.b16 %v995
  %v5223 = vunpack.c.l.b16 %v996
  %v5224 = vunpack.c.h.b16 %v996
  %v5225 = vunpack.c.l.b16 %v997
  %v5226 = vunpack.c.h.b16 %v997
  %v5227 = vunpack.c.l.b16 %v998
  %v5228 = vunpack.c.h.b16 %v998
  %v5229 = vunpack.c.l.b16 %v999
  %v5230 = vunpack.c.h.b16 %v999
  %v5231 = vunpack.c.l.b16 %v1000
  %v5232 = vunpack.c.h.b16 %v1000
  %v5233 = vunpack.c.l.b16 %v1001
  %v5234 = vunpack.c.h.b16 %v1001
  %v5235 = vunpack.c.l.b16 %v1002
  %v5236 = vunpack.c.h.b16 %v1002
  %v5237 = vunpack.c.l.b16 %v1003
  %v5238 = vunpack.c.h.b16 %v1003
  %v5239 = vunpack.c.l.b16 %v1004
  %v5240 = vunpack.c.h.b16 %v1004
  %v5241 = vunpack.c.l.b16 %v1005
  %v5242 = vunpack.c.h.b16 %v1005
  %v5243 = vunpack.c.l.b16 %v1006
  %v5244 = vunpack.c.h.b16 %v1006
  %v5245 = vunpack.c.l.b16 %v1007
  %v5246 = vunpack.c.h.b16 %v1007
  %v5247 = vunpack.c.l.b16 %v1008
  %v5248 = vunpack.c.h.b16 %v1008
  %v5249 = vunpack.c.l.b16 %v1009
  %v5250 = vunpack.c.h.b16 %v1009
  %v5251 = vunpack.c.l.b16 %v1010
  %v5252 = vunpack.c.h.b16 %v1010
  %v5253 = vunpack.c.l.b16 %v1011
  %v5254 = vunpack.c.h.b16 %v1011
  %v5255 = vunpack.c.l.b16 %v1012
  %v5256 = vunpack.c.h.b16 %v1012
  %v5257 = vunpack.c.l.b16 %v1013
  %v5258 = vunpack.c.h.b16 %v1013
  %v5259 = vunpack.c.l.b16 %v1014
  %v5260 = vunpack.c.h.b16 %v1014
  %v5261 = vunpack.c.l.b16 %v1015
  %v5262 = vunpack.c.h.b16 %v1015
  %v5263 = vunpack.c.l.b16 %v1016
  %v5264 = vunpack.c.h.b16 %v1016
  %v5265 = vunpack.c.l.b16 %v1017
  %v5266 = vunpack.c.h.b16 %v1017
  %v5267 = vunpack.c.l.b16 %v1018
  %v5268 = vunpack.c.h.b16 %v1018
  %v5269 = vunpack.c.l.b16 %v1019
  %v5270 = vunpack.c.h.b16 %v1019
  %v5271 = vunpack.c.l.b16 %v1020
  %v5272 = vunpack.c.h.b16 %v1020
  %v5273 = vunpack.c.l.b16 %v1021
  %v5274 = vunpack.c.h.b16 %v1021
  %v5275 = vunpack.c.l.b16 %v1022
  %v5276 = vunpack.c.h.b16 %v1022
  %v5277 = vunpack.c.l.b16 %v1023
  %v5278 = vunpack.c.h.b16 %v1023
  %v5279 = vunpack.c.l.b16 %v1024
  %v5280 = vunpack.c.h.b16 %v1024
  %v5281 = vunpack.c.l.b16 %v1025
  %v5282 = vunpack.c.h.b16 %v1025
  %v5283 = vunpack.c.l.b16 %v1026
  %v5284 = vunpack.c.h.b16 %v1026
  %v5285 = vunpack.c.l.b16 %v1027
  %v5286 = vunpack.c.h.b16 %v1027
  %v5287 = vunpack.c.l.b16 %v1028
  %v5288 = vunpack.c.h.b16 %v1028
  %v5289 = vunpack.c.l.b16 %v1029
  %v5290 = vunpack.c.h.b16 %v1029
  %v5291 = vunpack.c.l.b16 %v1030
  %v5292 = vunpack.c.h.b16 %v1030
  %v5293 = vunpack.c.l.b16 %v1031
  %v5294 = vunpack.c.h.b16 %v1031
  %v5295 = vunpack.c.l.b16 %v1032
  %v5296 = vunpack.c.h.b16 %v1032
  %v5297 = vunpack.c.l.b16 %v1033
  %v5298 = vunpack.c.h.b16 %v1033
  %v5299 = vunpack.c.l.b16 %v1034
  %v5300 = vunpack.c.h.b16 %v1034
  %v5301 = vunpack.c.l.b16 %v1035
  %v5302 = vunpack.c.h.b16 %v1035
  %v5303 = vunpack.c.l.b16 %v1036
  %v5304 = vunpack.c.h.b16 %v1036
  %v5305 = vunpack.c.l.b16 %v1037
  %v5306 = vunpack.c.h.b16 %v1037
  %v5307 = vunpack.c.l.b16 %v1038
  %v5308 = vunpack.c.h.b16 %v1038
  %v5309 = vunpack.c.l.b16 %v1039
  %v5310 = vunpack.c.h.b16 %v1039
  %v5311 = vunpack.c.l.b16 %v1040
  %v5312 = vunpack.c.h.b16 %v1040
  %v5313 = vunpack.c.l.b16 %v1041
  %v5314 = vunpack.c.h.b16 %v1041
  %v5315 = vunpack.c.l.b16 %v1042
  %v5316 = vunpack.c.h.b16 %v1042
  %v5317 = vunpack.c.l.b16 %v1043
  %v5318 = vunpack.c.h.b16 %v1043
  %v5319 = vunpack.c.l.b16 %v1044
  %v5320 = vunpack.c.h.b16 %v1044
  %v5321 = vunpack.c.l.b16 %v1045
  %v5322 = vunpack.c.h.b16 %v1045
  %v5323 = vunpack.c.l.b16 %v1046
  %v5324 = vunpack.c.h.b16 %v1046
  %v5325 = vunpack.c.l.b16 %v1047
  %v5326 = vunpack.c.h.b16 %v1047
  %v5327 = vunpack.c.l.b16 %v1048
  %v5328 = vunpack.c.h.b16 %v1048
  %v5329 = vunpack.c.l.b16 %v1049
  %v5330 = vunpack.c.h.b16 %v1049
  %v5331 = vunpack.c.l.b16 %v1050
  %v5332 = vunpack.c.h.b16 %v1050
  %v5333 = vunpack.c.l.b16 %v1051
  %v5334 = vunpack.c.h.b16 %v1051
  %v5335 = vunpack.c.l.b16 %v1052
  %v5336 = vunpack.c.h.b16 %v1052
  %v5337 = vunpack.c.l.b16 %v1053
  %v5338 = vunpack.c.h.b16 %v1053
  %v5339 = vunpack.c.l.b16 %v1054
  %v5340 = vunpack.c.h.b16 %v1054
  %v5341 = vunpack.c.l.b16 %v1055
  %v5342 = vunpack.c.h.b16 %v1055
  %v5343 = vunpack.c.l.b16 %v1056
  %v5344 = vunpack.c.h.b16 %v1056
  %v5345 = vunpack.c.l.b16 %v1057
  %v5346 = vunpack.c.h.b16 %v1057
  %v5347 = vunpack.c.l.b16 %v1058
  %v5348 = vunpack.c.h.b16 %v1058
  %v5349 = vunpack.c.l.b16 %v1059
  %v5350 = vunpack.c.h.b16 %v1059
  %v5351 = vunpack.c.l.b16 %v1060
  %v5352 = vunpack.c.h.b16 %v1060
  %v5353 = vunpack.c.l.b16 %v1061
  %v5354 = vunpack.c.h.b16 %v1061
  %v5355 = vunpack.c.l.b16 %v1062
  %v5356 = vunpack.c.h.b16 %v1062
  %v5357 = vunpack.c.l.b16 %v1063
  %v5358 = vunpack.c.h.b16 %v1063
  %v5359 = vunpack.c.l.b16 %v1064
  %v5360 = vunpack.c.h.b16 %v1064
  %v5361 = vunpack.c.l.b16 %v1065
  %v5362 = vunpack.c.h.b16 %v1065
  %v5363 = vunpack.c.l.b16 %v1066
  %v5364 = vunpack.c.h.b16 %v1066
  %v5365 = vunpack.c.l.b16 %v1067
  %v5366 = vunpack.c.h.b16 %v1067
  %v5367 = vunpack.c.l.b16 %v1068
  %v5368 = vunpack.c.h.b16 %v1068
  %v5369 = vunpack.c.l.b16 %v1069
  %v5370 = vunpack.c.h.b16 %v1069
  %v5371 = vunpack.c.l.b16 %v1070
  %v5372 = vunpack.c.h.b16 %v1070
  %v5373 = vunpack.c.l.b16 %v1071
  %v5374 = vunpack.c.h.b16 %v1071
  %v5375 = vunpack.c.l.b16 %v1072
  %v5376 = vunpack.c.h.b16 %v1072
  %v5377 = vunpack.c.l.b16 %v1073
  %v5378 = vunpack.c.h.b16 %v1073
  %v5379 = vunpack.c.l.b16 %v1074
  %v5380 = vunpack.c.h.b16 %v1074
  %v5381 = vunpack.c.l.b16 %v1075
  %v5382 = vunpack.c.h.b16 %v1075
  %v5383 = vunpack.c.l.b16 %v1076
  %v5384 = vunpack.c.h.b16 %v1076
  %v5385 = vunpack.c.l.b16 %v1077
  %v5386 = vunpack.c.h.b16 %v1077
  %v5387 = vunpack.c.l.b16 %v1078
  %v5388 = vunpack.c.h.b16 %v1078
  %v5389 = vunpack.c.l.b16 %v1079
  %v5390 = vunpack.c.h.b16 %v1079
  %v5391 = vunpack.c.l.b16 %v1080
  %v5392 = vunpack.c.h.b16 %v1080
  %v5393 = vunpack.c.l.b16 %v1081
  %v5394 = vunpack.c.h.b16 %v1081
  %v5395 = vunpack.c.l.b16 %v1082
  %v5396 = vunpack.c.h.b16 %v1082
  %v5397 = vunpack.c.l.b16 %v1083
  %v5398 = vunpack.c.h.b16 %v1083
  %v5399 = vunpack.c.l.b16 %v1084
  %v5400 = vunpack.c.h.b16 %v1084
  %v5401 = vunpack.c.l.b16 %v1085
  %v5402 = vunpack.c.h.b16 %v1085
  %v5403 = vunpack.c.l.b16 %v1086
  %v5404 = vunpack.c.h.b16 %v1086
  %v5405 = vunpack.c.l.b16 %v1087
  %v5406 = vunpack.c.h.b16 %v1087
  %v5407 = vunpack.c.l.b16 %v1088
  %v5408 = vunpack.c.h.b16 %v1088
  %v5409 = vunpack.c.l.b16 %v1089
  %v5410 = vunpack.c.h.b16 %v1089
  %v5411 = vunpack.c.l.b16 %v1090
  %v5412 = vunpack.c.h.b16 %v1090
  %v5413 = vunpack.c.l.b16 %v1091
  %v5414 = vunpack.c.h.b16 %v1091
  %v5415 = vunpack.c.l.b16 %v1092
  %v5416 = vunpack.c.h.b16 %v1092
  %v5417 = vunpack.c.l.b16 %v1093
  %v5418 = vunpack.c.h.b16 %v1093
  %v5419 = vunpack.c.l.b16 %v1094
  %v5420 = vunpack.c.h.b16 %v1094
  %v5421 = vunpack.c.l.b16 %v1095
  %v5422 = vunpack.c.h.b16 %v1095
  %v5423 = vunpack.c.l.b16 %v1096
  %v5424 = vunpack.c.h.b16 %v1096
  %v5425 = vunpack.c.l.b16 %v1097
  %v5426 = vunpack.c.h.b16 %v1097
  %v5427 = vunpack.c.l.b16 %v1098
  %v5428 = vunpack.c.h.b16 %v1098
  %v5429 = vunpack.c.l.b16 %v1099
  %v5430 = vunpack.c.h.b16 %v1099
  %v5431 = vunpack.c.l.b16 %v1100
  %v5432 = vunpack.c.h.b16 %v1100
  %v5433 = vunpack.c.l.b16 %v1101
  %v5434 = vunpack.c.h.b16 %v1101
  %v5435 = vunpack.c.l.b16 %v1102
  %v5436 = vunpack.c.h.b16 %v1102
  %v5437 = vunpack.c.l.b16 %v1103
  %v5438 = vunpack.c.h.b16 %v1103
  %v5439 = vunpack.c.l.b16 %v1104
  %v5440 = vunpack.c.h.b16 %v1104
  %v5441 = vunpack.c.l.b16 %v1105
  %v5442 = vunpack.c.h.b16 %v1105
  %v5443 = vunpack.c.l.b16 %v1106
  %v5444 = vunpack.c.h.b16 %v1106
  %v5445 = vunpack.c.l.b16 %v1107
  %v5446 = vunpack.c.h.b16 %v1107
  %v5447 = vunpack.c.l.b16 %v1108
  %v5448 = vunpack.c.h.b16 %v1108
  %v5449 = vunpack.c.l.b16 %v1109
  %v5450 = vunpack.c.h.b16 %v1109
  %v5451 = vunpack.c.l.b16 %v1110
  %v5452 = vunpack.c.h.b16 %v1110
  %v5453 = vunpack.c.l.b16 %v1111
  %v5454 = vunpack.c.h.b16 %v1111
  %v5455 = vunpack.c.l.b16 %v1112
  %v5456 = vunpack.c.h.b16 %v1112
  %v5457 = vunpack.c.l.b16 %v1113
  %v5458 = vunpack.c.h.b16 %v1113
  %v5459 = vunpack.c.l.b16 %v1114
  %v5460 = vunpack.c.h.b16 %v1114
  %v5461 = vunpack.c.l.b16 %v1115
  %v5462 = vunpack.c.h.b16 %v1115
  %v5463 = vunpack.c.l.b16 %v1116
  %v5464 = vunpack.c.h.b16 %v1116
  %v5465 = vunpack.c.l.b16 %v1117
  %v5466 = vunpack.c.h.b16 %v1117
  %v5467 = vunpack.c.l.b16 %v1118
  %v5468 = vunpack.c.h.b16 %v1118
  %v5469 = vunpack.c.l.b16 %v1119
  %v5470 = vunpack.c.h.b16 %v1119
  %v5471 = vunpack.c.l.b16 %v1120
  %v5472 = vunpack.c.h.b16 %v1120
  %v5473 = vunpack.c.l.b16 %v1121
  %v5474 = vunpack.c.h.b16 %v1121
  %v5475 = vunpack.c.l.b16 %v1122
  %v5476 = vunpack.c.h.b16 %v1122
  %v5477 = vunpack.c.l.b16 %v1123
  %v5478 = vunpack.c.h.b16 %v1123
  %v5479 = vunpack.c.l.b16 %v1124
  %v5480 = vunpack.c.h.b16 %v1124
  %v5481 = vunpack.c.l.b16 %v1125
  %v5482 = vunpack.c.h.b16 %v1125
  %v5483 = vunpack.c.l.b16 %v1126
  %v5484 = vunpack.c.h.b16 %v1126
  %v5485 = vunpack.c.l.b16 %v1127
  %v5486 = vunpack.c.h.b16 %v1127
  %v5487 = vunpack.c.l.b16 %v1128
  %v5488 = vunpack.c.h.b16 %v1128
  %v5489 = vunpack.c.l.b16 %v1129
  %v5490 = vunpack.c.h.b16 %v1129
  %v5491 = vunpack.c.l.b16 %v1130
  %v5492 = vunpack.c.h.b16 %v1130
  %v5493 = vunpack.c.l.b16 %v1131
  %v5494 = vunpack.c.h.b16 %v1131
  %v5495 = vunpack.c.l.b16 %v1132
  %v5496 = vunpack.c.h.b16 %v1132
  %v5497 = vunpack.c.l.b16 %v1133
  %v5498 = vunpack.c.h.b16 %v1133
  %v5499 = vunpack.c.l.b16 %v1134
  %v5500 = vunpack.c.h.b16 %v1134
  %v5501 = vunpack.c.l.b16 %v1135
  %v5502 = vunpack.c.h.b16 %v1135
  %v5503 = vunpack.c.l.b16 %v1136
  %v5504 = vunpack.c.h.b16 %v1136
  %v5505 = vunpack.c.l.b16 %v1137
  %v5506 = vunpack.c.h.b16 %v1137
  %v5507 = vunpack.c.l.b16 %v1138
  %v5508 = vunpack.c.h.b16 %v1138
  %v5509 = vunpack.c.l.b16 %v1139
  %v5510 = vunpack.c.h.b16 %v1139
  %v5511 = vunpack.c.l.b16 %v1140
  %v5512 = vunpack.c.h.b16 %v1140
  %v5513 = vunpack.c.l.b16 %v1141
  %v5514 = vunpack.c.h.b16 %v1141
  %v5515 = vunpack.c.l.b16 %v1142
  %v5516 = vunpack.c.h.b16 %v1142
  %v5517 = vunpack.c.l.b16 %v1143
  %v5518 = vunpack.c.h.b16 %v1143
  %v5519 = vunpack.c.l.b16 %v1144
  %v5520 = vunpack.c.h.b16 %v1144
  %v5521 = vunpack.c.l.b16 %v1145
  %v5522 = vunpack.c.h.b16 %v1145
  %v5523 = vunpack.c.l.b16 %v1146
  %v5524 = vunpack.c.h.b16 %v1146
  %v5525 = vunpack.c.l.b16 %v1147
  %v5526 = vunpack.c.h.b16 %v1147
  %v5527 = vunpack.c.l.b16 %v1148
  %v5528 = vunpack.c.h.b16 %v1148
  %v5529 = vunpack.c.l.b16 %v1149
  %v5530 = vunpack.c.h.b16 %v1149
  %v5531 = vunpack.c.l.b16 %v1150
  %v5532 = vunpack.c.h.b16 %v1150
  %v5533 = vunpack.c.l.b16 %v1151
  %v5534 = vunpack.c.h.b16 %v1151
  %v5535 = vunpack.c.l.b16 %v1152
  %v5536 = vunpack.c.h.b16 %v1152
  %v5537 = vunpack.c.l.b16 %v1153
  %v5538 = vunpack.c.h.b16 %v1153
  %v5539 = vunpack.c.l.b16 %v1154
  %v5540 = vunpack.c.h.b16 %v1154
  %v5541 = vunpack.c.l.b16 %v1155
  %v5542 = vunpack.c.h.b16 %v1155
  %v5543 = vunpack.c.l.b16 %v1156
  %v5544 = vunpack.c.h.b16 %v1156
  %v5545 = vunpack.c.l.b16 %v1157
  %v5546 = vunpack.c.h.b16 %v1157
  %v5547 = vunpack.c.l.b16 %v1158
  %v5548 = vunpack.c.h.b16 %v1158
  %v5549 = vunpack.c.l.b16 %v1159
  %v5550 = vunpack.c.h.b16 %v1159
  %v5551 = vunpack.c.l.b16 %v1160
  %v5552 = vunpack.c.h.b16 %v1160
  %v5553 = vunpack.c.l.b16 %v1161
  %v5554 = vunpack.c.h.b16 %v1161
  %v5555 = vunpack.c.l.b16 %v1162
  %v5556 = vunpack.c.h.b16 %v1162
  %v5557 = vunpack.c.l.b16 %v1163
  %v5558 = vunpack.c.h.b16 %v1163
  %v5559 = vunpack.c.l.b16 %v1164
  %v5560 = vunpack.c.h.b16 %v1164
  %v5561 = vunpack.c.l.b16 %v1165
  %v5562 = vunpack.c.h.b16 %v1165
  %v5563 = vunpack.c.l.b16 %v1166
  %v5564 = vunpack.c.h.b16 %v1166
  %v5565 = vunpack.c.l.b16 %v1167
  %v5566 = vunpack.c.h.b16 %v1167
  %v5567 = vunpack.c.l.b16 %v1168
  %v5568 = vunpack.c.h.b16 %v1168
  %v5569 = vunpack.c.l.b16 %v1169
  %v5570 = vunpack.c.h.b16 %v1169
  %v5571 = vunpack.c.l.b16 %v1170
  %v5572 = vunpack.c.h.b16 %v1170
  %v5573 = vunpack.c.l.b16 %v1171
  %v5574 = vunpack.c.h.b16 %v1171
  %v5575 = vunpack.c.l.b16 %v1172
  %v5576 = vunpack.c.h.b16 %v1172
  %v5577 = vunpack.c.l.b16 %v1173
  %v5578 = vunpack.c.h.b16 %v1173
  %v5579 = vunpack.c.l.b16 %v1174
  %v5580 = vunpack.c.h.b16 %v1174
  %v5581 = vunpack.c.l.b16 %v1175
  %v5582 = vunpack.c.h.b16 %v1175
  %v5583 = vunpack.c.l.b16 %v1176
  %v5584 = vunpack.c.h.b16 %v1176
  %v5585 = vunpack.c.l.b16 %v1177
  %v5586 = vunpack.c.h.b16 %v1177
  %v5587 = vunpack.c.l.b16 %v1178
  %v5588 = vunpack.c.h.b16 %v1178
  %v5589 = vunpack.c.l.b16 %v1179
  %v5590 = vunpack.c.h.b16 %v1179
  %v5591 = vunpack.c.l.b16 %v1180
  %v5592 = vunpack.c.h.b16 %v1180
  %v5593 = vunpack.c.l.b16 %v1181
  %v5594 = vunpack.c.h.b16 %v1181
  %v5595 = vunpack.c.l.b16 %v1182
  %v5596 = vunpack.c.h.b16 %v1182
  %v5597 = vunpack.c.l.b16 %v1183
  %v5598 = vunpack.c.h.b16 %v1183
  %v5599 = vunpack.c.l.b16 %v1184
  %v5600 = vunpack.c.h.b16 %v1184
  %v5601 = vunpack.c.l.b16 %v1185
  %v5602 = vunpack.c.h.b16 %v1185
  %v5603 = vunpack.c.l.b16 %v1186
  %v5604 = vunpack.c.h.b16 %v1186
  %v5605 = vunpack.c.l.b16 %v1187
  %v5606 = vunpack.c.h.b16 %v1187
  %v5607 = vunpack.c.l.b16 %v1188
  %v5608 = vunpack.c.h.b16 %v1188
  %v5609 = vunpack.c.l.b16 %v1189
  %v5610 = vunpack.c.h.b16 %v1189
  %v5611 = vunpack.c.l.b16 %v1190
  %v5612 = vunpack.c.h.b16 %v1190
  %v5613 = vunpack.c.l.b16 %v1191
  %v5614 = vunpack.c.h.b16 %v1191
  %v5615 = vunpack.c.l.b16 %v1192
  %v5616 = vunpack.c.h.b16 %v1192
  %v5617 = vunpack.c.l.b16 %v1193
  %v5618 = vunpack.c.h.b16 %v1193
  %v5619 = vunpack.c.l.b16 %v1194
  %v5620 = vunpack.c.h.b16 %v1194
  %v5621 = vunpack.c.l.b16 %v1195
  %v5622 = vunpack.c.h.b16 %v1195
  %v5623 = vunpack.c.l.b16 %v1196
  %v5624 = vunpack.c.h.b16 %v1196
  %v5625 = vunpack.c.l.b16 %v1197
  %v5626 = vunpack.c.h.b16 %v1197
  %v5627 = vunpack.c.l.b16 %v1198
  %v5628 = vunpack.c.h.b16 %v1198
  %v5629 = vunpack.c.l.b16 %v1199
  %v5630 = vunpack.c.h.b16 %v1199
  %v5631 = vunpack.c.l.b16 %v1200
  %v5632 = vunpack.c.h.b16 %v1200
  %v5633 = vunpack.c.l.b16 %v1201
  %v5634 = vunpack.c.h.b16 %v1201
  %v5635 = vunpack.c.l.b16 %v1202
  %v5636 = vunpack.c.h.b16 %v1202
  %v5637 = vunpack.c.l.b16 %v1203
  %v5638 = vunpack.c.h.b16 %v1203
  %v5639 = vunpack.c.l.b16 %v1204
  %v5640 = vunpack.c.h.b16 %v1204
  %v5641 = vunpack.c.l.b16 %v1205
  %v5642 = vunpack.c.h.b16 %v1205
  %v5643 = vunpack.c.l.b16 %v1206
  %v5644 = vunpack.c.h.b16 %v1206
  %v5645 = vunpack.c.l.b16 %v1207
  %v5646 = vunpack.c.h.b16 %v1207
  %v5647 = vunpack.c.l.b16 %v1208
  %v5648 = vunpack.c.h.b16 %v1208
  %v5649 = vunpack.c.l.b16 %v1209
  %v5650 = vunpack.c.h.b16 %v1209
  %v5651 = vunpack.c.l.b16 %v1210
  %v5652 = vunpack.c.h.b16 %v1210
  %v5653 = vunpack.c.l.b16 %v1211
  %v5654 = vunpack.c.h.b16 %v1211
  %v5655 = vunpack.c.l.b16 %v1212
  %v5656 = vunpack.c.h.b16 %v1212
  %v5657 = vunpack.c.l.b16 %v1213
  %v5658 = vunpack.c.h.b16 %v1213
  %v5659 = vunpack.c.l.b16 %v1214
  %v5660 = vunpack.c.h.b16 %v1214
  %v5661 = vunpack.c.l.b16 %v1215
  %v5662 = vunpack.c.h.b16 %v1215
  %v5663 = vunpack.c.l.b16 %v1216
  %v5664 = vunpack.c.h.b16 %v1216
  %v5665 = vunpack.c.l.b16 %v1217
  %v5666 = vunpack.c.h.b16 %v1217
  %v5667 = vunpack.c.l.b16 %v1218
  %v5668 = vunpack.c.h.b16 %v1218
  %v5669 = vunpack.c.l.b16 %v1219
  %v5670 = vunpack.c.h.b16 %v1219
  %v5671 = vunpack.c.l.b16 %v1220
  %v5672 = vunpack.c.h.b16 %v1220
  %v5673 = vunpack.c.l.b16 %v1221
  %v5674 = vunpack.c.h.b16 %v1221
  %v5675 = vunpack.c.l.b16 %v1222
  %v5676 = vunpack.c.h.b16 %v1222
  %v5677 = vunpack.c.l.b16 %v1223
  %v5678 = vunpack.c.h.b16 %v1223
  %v5679 = vunpack.c.l.b16 %v1224
  %v5680 = vunpack.c.h.b16 %v1224
  %v5681 = vunpack.c.l.b16 %v1225
  %v5682 = vunpack.c.h.b16 %v1225
  %v5683 = vunpack.c.l.b16 %v1226
  %v5684 = vunpack.c.h.b16 %v1226
  %v5685 = vunpack.c.l.b16 %v1227
  %v5686 = vunpack.c.h.b16 %v1227
  %v5687 = vunpack.c.l.b16 %v1228
  %v5688 = vunpack.c.h.b16 %v1228
  %v5689 = vunpack.c.l.b16 %v1229
  %v5690 = vunpack.c.h.b16 %v1229
  %v5691 = vunpack.c.l.b16 %v1230
  %v5692 = vunpack.c.h.b16 %v1230
  %v5693 = vunpack.c.l.b16 %v1231
  %v5694 = vunpack.c.h.b16 %v1231
  %v5695 = vunpack.c.l.b16 %v1232
  %v5696 = vunpack.c.h.b16 %v1232
  %v5697 = vunpack.c.l.b16 %v1233
  %v5698 = vunpack.c.h.b16 %v1233
  %v5699 = vunpack.c.l.b16 %v1234
  %v5700 = vunpack.c.h.b16 %v1234
  %v5701 = vunpack.c.l.b16 %v1235
  %v5702 = vunpack.c.h.b16 %v1235
  %v5703 = vunpack.c.l.b16 %v1236
  %v5704 = vunpack.c.h.b16 %v1236
  %v5705 = vunpack.c.l.b16 %v1237
  %v5706 = vunpack.c.h.b16 %v1237
  %v5707 = vunpack.c.l.b16 %v1238
  %v5708 = vunpack.c.h.b16 %v1238
  %v5709 = vunpack.c.l.b16 %v1239
  %v5710 = vunpack.c.h.b16 %v1239
  %v5711 = vunpack.c.l.b16 %v1240
  %v5712 = vunpack.c.h.b16 %v1240
  %v5713 = vunpack.c.l.b16 %v1241
  %v5714 = vunpack.c.h.b16 %v1241
  %v5715 = vunpack.c.l.b16 %v1242
  %v5716 = vunpack.c.h.b16 %v1242
  %v5717 = vunpack.c.l.b16 %v1243
  %v5718 = vunpack.c.h.b16 %v1243
  %v5719 = vunpack.c.l.b16 %v1244
  %v5720 = vunpack.c.h.b16 %v1244
  %v5721 = vunpack.c.l.b16 %v1245
  %v5722 = vunpack.c.h.b16 %v1245
  %v5723 = vunpack.c.l.b16 %v1246
  %v5724 = vunpack.c.h.b16 %v1246
  %v5725 = vunpack.c.l.b16 %v1247
  %v5726 = vunpack.c.h.b16 %v1247
  %v5727 = vunpack.c.l.b16 %v1248
  %v5728 = vunpack.c.h.b16 %v1248
  %v5729 = vunpack.c.l.b16 %v1249
  %v5730 = vunpack.c.h.b16 %v1249
  %v5731 = vunpack.c.l.b16 %v1250
  %v5732 = vunpack.c.h.b16 %v1250
  %v5733 = vunpack.c.l.b16 %v1251
  %v5734 = vunpack.c.h.b16 %v1251
  %v5735 = vunpack.c.l.b16 %v1252
  %v5736 = vunpack.c.h.b16 %v1252
  %v5737 = vunpack.c.l.b16 %v1253
  %v5738 = vunpack.c.h.b16 %v1253
  %v5739 = vunpack.c.l.b16 %v1254
  %v5740 = vunpack.c.h.b16 %v1254
  %v5741 = vunpack.c.l.b16 %v1255
  %v5742 = vunpack.c.h.b16 %v1255
  %v5743 = vunpack.c.l.b16 %v1256
  %v5744 = vunpack.c.h.b16 %v1256
  %v5745 = vunpack.c.l.b16 %v1257
  %v5746 = vunpack.c.h.b16 %v1257
  %v5747 = vunpack.c.l.b16 %v1258
  %v5748 = vunpack.c.h.b16 %v1258
  %v5749 = vunpack.c.l.b16 %v1259
  %v5750 = vunpack.c.h.b16 %v1259
  %v5751 = vunpack.c.l.b16 %v1260
  %v5752 = vunpack.c.h.b16 %v1260
  %v5753 = vunpack.c.l.b16 %v1261
  %v5754 = vunpack.c.h.b16 %v1261
  %v5755 = vunpack.c.l.b16 %v1262
  %v5756 = vunpack.c.h.b16 %v1262
  %v5757 = vunpack.c.l.b16 %v1263
  %v5758 = vunpack.c.h.b16 %v1263
  %v5759 = vunpack.c.l.b16 %v1264
  %v5760 = vunpack.c.h.b16 %v1264
  %v5761 = vunpack.c.l.b16 %v1265
  %v5762 = vunpack.c.h.b16 %v1265
  %v5763 = vunpack.c.l.b16 %v1266
  %v5764 = vunpack.c.h.b16 %v1266
  %v5765 = vunpack.c.l.b16 %v1267
  %v5766 = vunpack.c.h.b16 %v1267
  %v5767 = vunpack.c.l.b16 %v1268
  %v5768 = vunpack.c.h.b16 %v1268
  %v5769 = vunpack.c.l.b16 %v1269
  %v5770 = vunpack.c.h.b16 %v1269
  %v5771 = vunpack.c.l.b16 %v1270
  %v5772 = vunpack.c.h.b16 %v1270
  %v5773 = vunpack.c.l.b16 %v1271
  %v5774 = vunpack.c.h.b16 %v1271
  %v5775 = vunpack.c.l.b16 %v1272
  %v5776 = vunpack.c.h.b16 %v1272
  %v5777 = vunpack.c.l.b16 %v1273
  %v5778 = vunpack.c.h.b16 %v1273
  %v5779 = vunpack.c.l.b16 %v1274
  %v5780 = vunpack.c.h.b16 %v1274
  %v5781 = vunpack.c.l.b16 %v1275
  %v5782 = vunpack.c.h.b16 %v1275
  %v5783 = vunpack.c.l.b16 %v1276
  %v5784 = vunpack.c.h.b16 %v1276
  %v5785 = vunpack.c.l.b16 %v1277
  %v5786 = vunpack.c.h.b16 %v1277
  %v5787 = vunpack.c.l.b16 %v1278
  %v5788 = vunpack.c.h.b16 %v1278
  %v5789 = vunpack.c.l.b16 %v1279
  %v5790 = vunpack.c.h.b16 %v1279
  %v5791 = vunpack.c.l.b16 %v1280
  %v5792 = vunpack.c.h.b16 %v1280
  %v5793 = vunpack.c.l.b16 %v1281
  %v5794 = vunpack.c.h.b16 %v1281
  %v5795 = vunpack.c.l.b16 %v1282
  %v5796 = vunpack.c.h.b16 %v1282
  %v5797 = vunpack.c.l.b16 %v1283
  %v5798 = vunpack.c.h.b16 %v1283
  %v5799 = vunpack.c.l.b16 %v1284
  %v5800 = vunpack.c.h.b16 %v1284
  %v5801 = vunpack.c.l.b16 %v1285
  %v5802 = vunpack.c.h.b16 %v1285
  %v5803 = vunpack.c.l.b16 %v1286
  %v5804 = vunpack.c.h.b16 %v1286
  %v5805 = vunpack.c.l.b16 %v1287
  %v5806 = vunpack.c.h.b16 %v1287
  %v5807 = vunpack.c.l.b16 %v1288
  %v5808 = vunpack.c.h.b16 %v1288
  %v5809 = vunpack.c.l.b16 %v1289
  %v5810 = vunpack.c.h.b16 %v1289
  %v5811 = vunpack.c.l.b16 %v1290
  %v5812 = vunpack.c.h.b16 %v1290
  %v5813 = vunpack.c.l.b16 %v1291
  %v5814 = vunpack.c.h.b16 %v1291
  %v5815 = vunpack.c.l.b16 %v1292
  %v5816 = vunpack.c.h.b16 %v1292
  %v5817 = vunpack.c.l.b16 %v1293
  %v5818 = vunpack.c.h.b16 %v1293
  %v5819 = vunpack.c.l.b16 %v1294
  %v5820 = vunpack.c.h.b16 %v1294
  %v5821 = vunpack.c.l.b16 %v1295
  %v5822 = vunpack.c.h.b16 %v1295
  %v5823 = vunpack.c.l.b16 %v1296
  %v5824 = vunpack.c.h.b16 %v1296
  %v5825 = vunpack.c.l.b16 %v1297
  %v5826 = vunpack.c.h.b16 %v1297
  %v5827 = vunpack.c.l.b16 %v1298
  %v5828 = vunpack.c.h.b16 %v1298
  %v5829 = vunpack.c.l.b16 %v1299
  %v5830 = vunpack.c.h.b16 %v1299
  %v5831 = vunpack.c.l.b16 %v1300
  %v5832 = vunpack.c.h.b16 %v1300
  %v5833 = vunpack.c.l.b16 %v1301
  %v5834 = vunpack.c.h.b16 %v1301
  %v5835 = vunpack.c.l.b16 %v1302
  %v5836 = vunpack.c.h.b16 %v1302
  %v5837 = vunpack.c.l.b16 %v1303
  %v5838 = vunpack.c.h.b16 %v1303
  %v5839 = vunpack.c.l.b16 %v1304
  %v5840 = vunpack.c.h.b16 %v1304
  %v5841 = vunpack.c.l.b16 %v1305
  %v5842 = vunpack.c.h.b16 %v1305
  %v5843 = vunpack.c.l.b16 %v1306
  %v5844 = vunpack.c.h.b16 %v1306
  %v5845 = vunpack.c.l.b16 %v1307
  %v5846 = vunpack.c.h.b16 %v1307
  %v5847 = vunpack.c.l.b16 %v1308
  %v5848 = vunpack.c.h.b16 %v1308
  %v5849 = vunpack.c.l.b16 %v1309
  %v5850 = vunpack.c.h.b16 %v1309
  %v5851 = vunpack.c.l.b16 %v1310
  %v5852 = vunpack.c.h.b16 %v1310
  %v5853 = vunpack.c.l.b16 %v1311
  %v5854 = vunpack.c.h.b16 %v1311
  %v5855 = vunpack.c.l.b16 %v1312
  %v5856 = vunpack.c.h.b16 %v1312
  %v5857 = vunpack.c.l.b16 %v1313
  %v5858 = vunpack.c.h.b16 %v1313
  %v5859 = vunpack.c.l.b16 %v1314
  %v5860 = vunpack.c.h.b16 %v1314
  %v5861 = vunpack.c.l.b16 %v1315
  %v5862 = vunpack.c.h.b16 %v1315
  %v5863 = vunpack.c.l.b16 %v1316
  %v5864 = vunpack.c.h.b16 %v1316
  %v5865 = vunpack.c.l.b16 %v1317
  %v5866 = vunpack.c.h.b16 %v1317
  %v5867 = vunpack.c.l.b16 %v1318
  %v5868 = vunpack.c.h.b16 %v1318
  %v5869 = vunpack.c.l.b16 %v1319
  %v5870 = vunpack.c.h.b16 %v1319
  %v5871 = vunpack.c.l.b16 %v1320
  %v5872 = vunpack.c.h.b16 %v1320
  %v5873 = vunpack.c.l.b16 %v1321
  %v5874 = vunpack.c.h.b16 %v1321
  %v5875 = vunpack.c.l.b16 %v1322
  %v5876 = vunpack.c.h.b16 %v1322
  %v5877 = vunpack.c.l.b16 %v1323
  %v5878 = vunpack.c.h.b16 %v1323
  %v5879 = vunpack.c.l.b16 %v1324
  %v5880 = vunpack.c.h.b16 %v1324
  %v5881 = vunpack.c.l.b16 %v1325
  %v5882 = vunpack.c.h.b16 %v1325
  %v5883 = vunpack.c.l.b16 %v1326
  %v5884 = vunpack.c.h.b16 %v1326
  %v5885 = vunpack.c.l.b16 %v1327
  %v5886 = vunpack.c.h.b16 %v1327
  %v5887 = vunpack.c.l.b16 %v1328
  %v5888 = vunpack.c.h.b16 %v1328
  %v5889 = vunpack.c.l.b16 %v1329
  %v5890 = vunpack.c.h.b16 %v1329
  %v5891 = vunpack.c.l.b16 %v1330
  %v5892 = vunpack.c.h.b16 %v1330
  %v5893 = vunpack.c.l.b16 %v1331
  %v5894 = vunpack.c.h.b16 %v1331
  %v5895 = vunpack.c.l.b16 %v1332
  %v5896 = vunpack.c.h.b16 %v1332
  %v5897 = vunpack.c.l.b16 %v1333
  %v5898 = vunpack.c.h.b16 %v1333
  %v5899 = vunpack.c.l.b16 %v1334
  %v5900 = vunpack.c.h.b16 %v1334
  %v5901 = vunpack.c.l.b16 %v1335
  %v5902 = vunpack.c.h.b16 %v1335
  %v5903 = vunpack.c.l.b16 %v1336
  %v5904 = vunpack.c.h.b16 %v1336
  %v5905 = vunpack.c.l.b16 %v1337
  %v5906 = vunpack.c.h.b16 %v1337
  %v5907 = vunpack.c.l.b16 %v1338
  %v5908 = vunpack.c.h.b16 %v1338
  %v5909 = vunpack.c.l.b16 %v1339
  %v5910 = vunpack.c.h.b16 %v1339
  %v5911 = vunpack.c.l.b16 %v1340
  %v5912 = vunpack.c.h.b16 %v1340
  %v5913 = vunpack.c.l.b16 %v1341
  %v5914 = vunpack.c.h.b16 %v1341
  %v5915 = vunpack.c.l.b16 %v1342
  %v5916 = vunpack.c.h.b16 %v1342
  %v5917 = vunpack.c.l.b16 %v1343
  %v5918 = vunpack.c.h.b16 %v1343
  %v5919 = vunpack.c.l.b16 %v1344
  %v5920 = vunpack.c.h.b16 %v1344
  %v5921 = vunpack.c.l.b16 %v1345
  %v5922 = vunpack.c.h.b16 %v1345
  %v5923 = vunpack.c.l.b16 %v1346
  %v5924 = vunpack.c.h.b16 %v1346
  %v5925 = vunpack.c.l.b16 %v1347
  %v5926 = vunpack.c.h.b16 %v1347
  %v5927 = vunpack.c.l.b16 %v1348
  %v5928 = vunpack.c.h.b16 %v1348
  %v5929 = vunpack.c.l.b16 %v1349
  %v5930 = vunpack.c.h.b16 %v1349
  %v5931 = vunpack.c.l.b16 %v1350
  %v5932 = vunpack.c.h.b16 %v1350
  %v5933 = vunpack.c.l.b16 %v1351
  %v5934 = vunpack.c.h.b16 %v1351
  %v5935 = vunpack.c.l.b16 %v1352
  %v5936 = vunpack.c.h.b16 %v1352
  %v5937 = vunpack.c.l.b16 %v1353
  %v5938 = vunpack.c.h.b16 %v1353
  %v5939 = vunpack.c.l.b16 %v1354
  %v5940 = vunpack.c.h.b16 %v1354
  %v5941 = vunpack.c.l.b16 %v1355
  %v5942 = vunpack.c.h.b16 %v1355
  %v5943 = vunpack.c.l.b16 %v1356
  %v5944 = vunpack.c.h.b16 %v1356
  %v5945 = vunpack.c.l.b16 %v1357
  %v5946 = vunpack.c.h.b16 %v1357
  %v5947 = vunpack.c.l.b16 %v1358
  %v5948 = vunpack.c.h.b16 %v1358
  %v5949 = vunpack.c.l.b16 %v1359
  %v5950 = vunpack.c.h.b16 %v1359
  %v5951 = vunpack.c.l.b16 %v1360
  %v5952 = vunpack.c.h.b16 %v1360
  %v5953 = vunpack.c.l.b16 %v1361
  %v5954 = vunpack.c.h.b16 %v1361
  %v5955 = vunpack.c.l.b16 %v1362
  %v5956 = vunpack.c.h.b16 %v1362
  %v5957 = vunpack.c.l.b16 %v1363
  %v5958 = vunpack.c.h.b16 %v1363
  %v5959 = vunpack.c.l.b16 %v1364
  %v5960 = vunpack.c.h.b16 %v1364
  %v5961 = vunpack.c.l.b16 %v1365
  %v5962 = vunpack.c.h.b16 %v1365
  %v5963 = vunpack.c.l.b16 %v1366
  %v5964 = vunpack.c.h.b16 %v1366
  %v5965 = vunpack.c.l.b16 %v1367
  %v5966 = vunpack.c.h.b16 %v1367
  %v5967 = vunpack.c.l.b16 %v1368
  %v5968 = vunpack.c.h.b16 %v1368
  %v5969 = vunpack.c.l.b16 %v1369
  %v5970 = vunpack.c.h.b16 %v1369
  %v5971 = vunpack.c.l.b16 %v1370
  %v5972 = vunpack.c.h.b16 %v1370
  %v5973 = vunpack.c.l.b16 %v1371
  %v5974 = vunpack.c.h.b16 %v1371
  %v5975 = vunpack.c.l.b16 %v1372
  %v5976 = vunpack.c.h.b16 %v1372
  %v5977 = vunpack.c.l.b16 %v1373
  %v5978 = vunpack.c.h.b16 %v1373
  %v5979 = vunpack.c.l.b16 %v1374
  %v5980 = vunpack.c.h.b16 %v1374
  %v5981 = vunpack.c.l.b16 %v1375
  %v5982 = vunpack.c.h.b16 %v1375
  %v5983 = vunpack.c.l.b16 %v1376
  %v5984 = vunpack.c.h.b16 %v1376
  %v5985 = vunpack.c.l.b16 %v1377
  %v5986 = vunpack.c.h.b16 %v1377
  %v5987 = vunpack.c.l.b16 %v1378
  %v5988 = vunpack.c.h.b16 %v1378
  %v5989 = vunpack.c.l.b16 %v1379
  %v5990 = vunpack.c.h.b16 %v1379
  %v5991 = vunpack.c.l.b16 %v1380
  %v5992 = vunpack.c.h.b16 %v1380
  %v5993 = vunpack.c.l.b16 %v1381
  %v5994 = vunpack.c.h.b16 %v1381
  %v5995 = vunpack.c.l.b16 %v1382
  %v5996 = vunpack.c.h.b16 %v1382
  %v5997 = vunpack.c.l.b16 %v1383
  %v5998 = vunpack.c.h.b16 %v1383
  %v5999 = vunpack.c.l.b16 %v1384
  %v6000 = vunpack.c.h.b16 %v1384
  %v6001 = vunpack.c.l.b16 %v1385
  %v6002 = vunpack.c.h.b16 %v1385
  %v6003 = vunpack.c.l.b16 %v1386
  %v6004 = vunpack.c.h.b16 %v1386
  %v6005 = vunpack.c.l.b16 %v1387
  %v6006 = vunpack.c.h.b16 %v1387
  %v6007 = vunpack.c.l.b16 %v1388
  %v6008 = vunpack.c.h.b16 %v1388
  %v6009 = vunpack.c.l.b16 %v1389
  %v6010 = vunpack.c.h.b16 %v1389
  %v6011 = vunpack.c.l.b16 %v1390
  %v6012 = vunpack.c.h.b16 %v1390
  %v6013 = vunpack.c.l.b16 %v1391
  %v6014 = vunpack.c.h.b16 %v1391
  %v6015 = vunpack.c.l.b16 %v1392
  %v6016 = vunpack.c.h.b16 %v1392
  %v6017 = vunpack.c.l.b16 %v1393
  %v6018 = vunpack.c.h.b16 %v1393
  %v6019 = vunpack.c.l.b16 %v1394
  %v6020 = vunpack.c.h.b16 %v1394
  %v6021 = vunpack.c.l.b16 %v1395
  %v6022 = vunpack.c.h.b16 %v1395
  %v6023 = vunpack.c.l.b16 %v1396
  %v6024 = vunpack.c.h.b16 %v1396
  %v6025 = vunpack.c.l.b16 %v1397
  %v6026 = vunpack.c.h.b16 %v1397
  %v6027 = vunpack.c.l.b16 %v1398
  %v6028 = vunpack.c.h.b16 %v1398
  %v6029 = vunpack.c.l.b16 %v1399
  %v6030 = vunpack.c.h.b16 %v1399
  %v6031 = vunpack.c.l.b16 %v1400
  %v6032 = vunpack.c.h.b16 %v1400
  %v6033 = vunpack.c.l.b16 %v1401
  %v6034 = vunpack.c.h.b16 %v1401
  %v6035 = vunpack.c.l.b16 %v1402
  %v6036 = vunpack.c.h.b16 %v1402
  %v6037 = vunpack.c.l.b16 %v1403
  %v6038 = vunpack.c.h.b16 %v1403
  %v6039 = vunpack.c.l.b16 %v1404
  %v6040 = vunpack.c.h.b16 %v1404
  %v6041 = vunpack.c.l.b16 %v1405
  %v6042 = vunpack.c.h.b16 %v1405
  %v6043 = vunpack.c.l.b16 %v1406
  %v6044 = vunpack.c.h.b16 %v1406
  %v6045 = vunpack.c.l.b16 %v1407
  %v6046 = vunpack.c.h.b16 %v1407
  %v6047 = vunpack.c.l.b16 %v1408
  %v6048 = vunpack.c.h.b16 %v1408
  %v6049 = vunpack.c.l.b16 %v1409
  %v6050 = vunpack.c.h.b16 %v1409
  %v6051 = vunpack.c.l.b16 %v1410
  %v6052 = vunpack.c.h.b16 %v1410
  %v6053 = vunpack.c.l.b16 %v1411
  %v6054 = vunpack.c.h.b16 %v1411
  %v6055 = vunpack.c.l.b16 %v1412
  %v6056 = vunpack.c.h.b16 %v1412
  %v6057 = vunpack.c.l.b16 %v1413
  %v6058 = vunpack.c.h.b16 %v1413
  %v6059 = vunpack.c.l.b16 %v1414
  %v6060 = vunpack.c.h.b16 %v1414
  %v6061 = vunpack.c.l.b16 %v1415
  %v6062 = vunpack.c.h.b16 %v1415
  %v6063 = vunpack.c.l.b16 %v1416
  %v6064 = vunpack.c.h.b16 %v1416
  %v6065 = vunpack.c.l.b16 %v1417
  %v6066 = vunpack.c.h.b16 %v1417
  %v6067 = vunpack.c.l.b16 %v1418
  %v6068 = vunpack.c.h.b16 %v1418
  %v6069 = vunpack.c.l.b16 %v1419
  %v6070 = vunpack.c.h.b16 %v1419
  %v6071 = vunpack.c.l.b16 %v1420
  %v6072 = vunpack.c.h.b16 %v1420
  %v6073 = vunpack.c.l.b16 %v1421
  %v6074 = vunpack.c.h.b16 %v1421
  %v6075 = vunpack.c.l.b16 %v1422
  %v6076 = vunpack.c.h.b16 %v1422
  %v6077 = vunpack.c.l.b16 %v1423
  %v6078 = vunpack.c.h.b16 %v1423
  %v6079 = vunpack.c.l.b16 %v1424
  %v6080 = vunpack.c.h.b16 %v1424
  %v6081 = vunpack.c.l.b16 %v1425
  %v6082 = vunpack.c.h.b16 %v1425
  %v6083 = vunpack.c.l.b16 %v1426
  %v6084 = vunpack.c.h.b16 %v1426
  %v6085 = vunpack.c.l.b16 %v1427
  %v6086 = vunpack.c.h.b16 %v1427
  %v6087 = vunpack.c.l.b16 %v1428
  %v6088 = vunpack.c.h.b16 %v1428
  %v6089 = vunpack.c.l.b16 %v1429
  %v6090 = vunpack.c.h.b16 %v1429
  %v6091 = vunpack.c.l.b16 %v1430
  %v6092 = vunpack.c.h.b16 %v1430
  %v6093 = vunpack.c.l.b16 %v1431
  %v6094 = vunpack.c.h.b16 %v1431
  %v6095 = vunpack.c.l.b16 %v1432
  %v6096 = vunpack.c.h.b16 %v1432
  %v6097 = vunpack.c.l.b16 %v1433
  %v6098 = vunpack.c.h.b16 %v1433
  %v6099 = vunpack.c.l.b16 %v1434
  %v6100 = vunpack.c.h.b16 %v1434
  %v6101 = vunpack.c.l.b16 %v1435
  %v6102 = vunpack.c.h.b16 %v1435
  %v6103 = vunpack.c.l.b16 %v1436
  %v6104 = vunpack.c.h.b16 %v1436
  %v6105 = vunpack.c.l.b16 %v1437
  %v6106 = vunpack.c.h.b16 %v1437
  %v6107 = vunpack.c.l.b16 %v1438
  %v6108 = vunpack.c.h.b16 %v1438
  %v6109 = vunpack.c.l.b16 %v1439
  %v6110 = vunpack.c.h.b16 %v1439
  %v6111 = vunpack.c.l.b16 %v1440
  %v6112 = vunpack.c.h.b16 %v1440
  %v6113 = vunpack.c.l.b16 %v1441
  %v6114 = vunpack.c.h.b16 %v1441
  %v6115 = vunpack.c.l.b16 %v1442
  %v6116 = vunpack.c.h.b16 %v1442
  %v6117 = vunpack.c.l.b16 %v1443
  %v6118 = vunpack.c.h.b16 %v1443
  %v6119 = vunpack.c.l.b16 %v1444
  %v6120 = vunpack.c.h.b16 %v1444
  %v6121 = vunpack.c.l.b16 %v1445
  %v6122 = vunpack.c.h.b16 %v1445
  %v6123 = vunpack.c.l.b16 %v1446
  %v6124 = vunpack.c.h.b16 %v1446
  %v6125 = vunpack.c.l.b16 %v1447
  %v6126 = vunpack.c.h.b16 %v1447
  %v6127 = vunpack.c.l.b16 %v1448
  %v6128 = vunpack.c.h.b16 %v1448
  %v6129 = vunpack.c.l.b16 %v1449
  %v6130 = vunpack.c.h.b16 %v1449
  %v6131 = vunpack.c.l.b16 %v1450
  %v6132 = vunpack.c.h.b16 %v1450
  %v6133 = vunpack.c.l.b16 %v1451
  %v6134 = vunpack.c.h.b16 %v1451
  %v6135 = vunpack.c.l.b16 %v1452
  %v6136 = vunpack.c.h.b16 %v1452
  %v6137 = vunpack.c.l.b16 %v1453
  %v6138 = vunpack.c.h.b16 %v1453
  %v6139 = vunpack.c.l.b16 %v1454
  %v6140 = vunpack.c.h.b16 %v1454
  %v6141 = vunpack.c.l.b16 %v1455
  %v6142 = vunpack.c.h.b16 %v1455
  %v6143 = vunpack.c.l.b16 %v1456
  %v6144 = vunpack.c.h.b16 %v1456
  %v6145 = vunpack.c.l.b16 %v1457
  %v6146 = vunpack.c.h.b16 %v1457
  %v6147 = vunpack.c.l.b16 %v1458
  %v6148 = vunpack.c.h.b16 %v1458
  %v6149 = vunpack.c.l.b16 %v1459
  %v6150 = vunpack.c.h.b16 %v1459
  %v6151 = vunpack.c.l.b16 %v1460
  %v6152 = vunpack.c.h.b16 %v1460
  %v6153 = vunpack.c.l.b16 %v1461
  %v6154 = vunpack.c.h.b16 %v1461
  %v6155 = vunpack.c.l.b16 %v1462
  %v6156 = vunpack.c.h.b16 %v1462
  %v6157 = vunpack.c.l.b16 %v1463
  %v6158 = vunpack.c.h.b16 %v1463
  %v6159 = vunpack.c.l.b16 %v1464
  %v6160 = vunpack.c.h.b16 %v1464
  %v6161 = vunpack.c.l.b16 %v1465
  %v6162 = vunpack.c.h.b16 %v1465
  %v6163 = vunpack.c.l.b16 %v1466
  %v6164 = vunpack.c.h.b16 %v1466
  %v6165 = vunpack.c.l.b16 %v1467
  %v6166 = vunpack.c.h.b16 %v1467
  %v6167 = vunpack.c.l.b16 %v1468
  %v6168 = vunpack.c.h.b16 %v1468
  %v6169 = vunpack.c.l.b16 %v1469
  %v6170 = vunpack.c.h.b16 %v1469
  %v6171 = vunpack.c.l.b16 %v1470
  %v6172 = vunpack.c.h.b16 %v1470
  %v6173 = vunpack.c.l.b16 %v1471
  %v6174 = vunpack.c.h.b16 %v1471
  %v6175 = vunpack.c.l.b16 %v1472
  %v6176 = vunpack.c.h.b16 %v1472
  %v6177 = vunpack.c.l.b16 %v1473
  %v6178 = vunpack.c.h.b16 %v1473
  %v6179 = vunpack.c.l.b16 %v1474
  %v6180 = vunpack.c.h.b16 %v1474
  %v6181 = vunpack.c.l.b16 %v1475
  %v6182 = vunpack.c.h.b16 %v1475
  %v6183 = vunpack.c.l.b16 %v1476
  %v6184 = vunpack.c.h.b16 %v1476
  %v6185 = vunpack.c.l.b16 %v1477
  %v6186 = vunpack.c.h.b16 %v1477
  %v6187 = vunpack.c.l.b16 %v1478
  %v6188 = vunpack.c.h.b16 %v1478
  %v6189 = vunpack.c.l.b16 %v1479
  %v6190 = vunpack.c.h.b16 %v1479
  %v6191 = vunpack.c.l.b16 %v1480
  %v6192 = vunpack.c.h.b16 %v1480
  %v6193 = vunpack.c.l.b16 %v1481
  %v6194 = vunpack.c.h.b16 %v1481
  %v6195 = vunpack.c.l.b16 %v1482
  %v6196 = vunpack.c.h.b16 %v1482
  %v6197 = vunpack.c.l.b16 %v1483
  %v6198 = vunpack.c.h.b16 %v1483
  %v6199 = vunpack.c.l.b16 %v1484
  %v6200 = vunpack.c.h.b16 %v1484
  %v6201 = vunpack.c.l.b16 %v1485
  %v6202 = vunpack.c.h.b16 %v1485
  %v6203 = vunpack.c.l.b16 %v1486
  %v6204 = vunpack.c.h.b16 %v1486
  %v6205 = vunpack.c.l.b16 %v1487
  %v6206 = vunpack.c.h.b16 %v1487
  %v6207 = vunpack.c.l.b16 %v1488
  %v6208 = vunpack.c.h.b16 %v1488
  %v6209 = vunpack.c.l.b16 %v1489
  %v6210 = vunpack.c.h.b16 %v1489
  %v6211 = vunpack.c.l.b16 %v1490
  %v6212 = vunpack.c.h.b16 %v1490
  %v6213 = vunpack.c.l.b16 %v1491
  %v6214 = vunpack.c.h.b16 %v1491
  %v6215 = vunpack.c.l.b16 %v1492
  %v6216 = vunpack.c.h.b16 %v1492
  %v6217 = vunpack.c.l.b16 %v1493
  %v6218 = vunpack.c.h.b16 %v1493
  %v6219 = vunpack.c.l.b16 %v1494
  %v6220 = vunpack.c.h.b16 %v1494
  %v6221 = vunpack.c.l.b16 %v1495
  %v6222 = vunpack.c.h.b16 %v1495
  %v6223 = vunpack.c.l.b16 %v1496
  %v6224 = vunpack.c.h.b16 %v1496
  %v6225 = vunpack.c.l.b16 %v1497
  %v6226 = vunpack.c.h.b16 %v1497
  %v6227 = vunpack.c.l.b16 %v1498
  %v6228 = vunpack.c.h.b16 %v1498
  %v6229 = vunpack.c.l.b16 %v1499
  %v6230 = vunpack.c.h.b16 %v1499
  %v6231 = vunpack.c.l.b16 %v1500
  %v6232 = vunpack.c.h.b16 %v1500
  %v6233 = vunpack.c.l.b16 %v1501
  %v6234 = vunpack.c.h.b16 %v1501
  %v6235 = vunpack.c.l.b16 %v1502
  %v6236 = vunpack.c.h.b16 %v1502
  %v6237 = vunpack.c.l.b16 %v1503
  %v6238 = vunpack.c.h.b16 %v1503
  %v6239 = vunpack.c.l.b16 %v1504
  %v6240 = vunpack.c.h.b16 %v1504
  %v6241 = vunpack.c.l.b16 %v1505
  %v6242 = vunpack.c.h.b16 %v1505
  %v6243 = vunpack.c.l.b16 %v1506
  %v6244 = vunpack.c.h.b16 %v1506
  %v6245 = vunpack.c.l.b16 %v1507
  %v6246 = vunpack.c.h.b16 %v1507
  %v6247 = vunpack.c.l.b16 %v1508
  %v6248 = vunpack.c.h.b16 %v1508
  %v6249 = vunpack.c.l.b16 %v1509
  %v6250 = vunpack.c.h.b16 %v1509
  %v6251 = vunpack.c.l.b16 %v1510
  %v6252 = vunpack.c.h.b16 %v1510
  %v6253 = vunpack.c.l.b16 %v1511
  %v6254 = vunpack.c.h.b16 %v1511
  %v6255 = vunpack.c.l.b16 %v1512
  %v6256 = vunpack.c.h.b16 %v1512
  %v6257 = vunpack.c.l.b16 %v1513
  %v6258 = vunpack.c.h.b16 %v1513
  %v6259 = vunpack.c.l.b16 %v1514
  %v6260 = vunpack.c.h.b16 %v1514
  %v6261 = vunpack.c.l.b16 %v1515
  %v6262 = vunpack.c.h.b16 %v1515
  %v6263 = vunpack.c.l.b16 %v1516
  %v6264 = vunpack.c.h.b16 %v1516
  %v6265 = vunpack.c.l.b16 %v1517
  %v6266 = vunpack.c.h.b16 %v1517
  %v6267 = vunpack.c.l.b16 %v1518
  %v6268 = vunpack.c.h.b16 %v1518
  %v6269 = vunpack.c.l.b16 %v1519
  %v6270 = vunpack.c.h.b16 %v1519
  %v6271 = vunpack.c.l.b16 %v1520
  %v6272 = vunpack.c.h.b16 %v1520
  %v6273 = vunpack.c.l.b16 %v1521
  %v6274 = vunpack.c.h.b16 %v1521
  %v6275 = vunpack.c.l.b16 %v1522
  %v6276 = vunpack.c.h.b16 %v1522
  %v6277 = vunpack.c.l.b16 %v1523
  %v6278 = vunpack.c.h.b16 %v1523
  %v6279 = vunpack.c.l.b16 %v1524
  %v6280 = vunpack.c.h.b16 %v1524
  %v6281 = vunpack.c.l.b16 %v1525
  %v6282 = vunpack.c.h.b16 %v1525
  %v6283 = vunpack.c.l.b16 %v1526
  %v6284 = vunpack.c.h.b16 %v1526
  %v6285 = vunpack.c.l.b16 %v1527
  %v6286 = vunpack.c.h.b16 %v1527
  %v6287 = vunpack.c.l.b16 %v1528
  %v6288 = vunpack.c.h.b16 %v1528
  %v6289 = vunpack.c.l.b16 %v1529
  %v6290 = vunpack.c.h.b16 %v1529
  %v6291 = vunpack.c.l.b16 %v1530
  %v6292 = vunpack.c.h.b16 %v1530
  %v6293 = vunpack.c.l.b16 %v1531
  %v6294 = vunpack.c.h.b16 %v1531
  %v6295 = vunpack.c.l.b16 %v1532
  %v6296 = vunpack.c.h.b16 %v1532
  %v6297 = vunpack.c.l.b16 %v1533
  %v6298 = vunpack.c.h.b16 %v1533
  %v6299 = vunpack.c.l.b16 %v1534
  %v6300 = vunpack.c.h.b16 %v1534
  %v6301 = vunpack.c.l.b16 %v1535
  %v6302 = vunpack.c.h.b16 %v1535
  %v6303 = vunpack.c.l.b16 %v1536
  %v6304 = vunpack.c.h.b16 %v1536
  %v6305 = vunpack.c.l.b16 %v1537
  %v6306 = vunpack.c.h.b16 %v1537
  %v6307 = vunpack.c.l.b16 %v1538
  %v6308 = vunpack.c.h.b16 %v1538
  %v6309 = vunpack.c.l.b16 %v1539
  %v6310 = vunpack.c.h.b16 %v1539
  %v6311 = vunpack.c.l.b16 %v1540
  %v6312 = vunpack.c.h.b16 %v1540
  %v6313 = vunpack.c.l.b16 %v1541
  %v6314 = vunpack.c.h.b16 %v1541
  %v6315 = vunpack.c.l.b16 %v1542
  %v6316 = vunpack.c.h.b16 %v1542
  %v6317 = vunpack.c.l.b16 %v1543
  %v6318 = vunpack.c.h.b16 %v1543
  %v6319 = vunpack.c.l.b16 %v1544
  %v6320 = vunpack.c.h.b16 %v1544
  %v6321 = vunpack.c.l.b16 %v1545
  %v6322 = vunpack.c.h.b16 %v1545
  %v6323 = vunpack.c.l.b16 %v1546
  %v6324 = vunpack.c.h.b16 %v1546
  %v6325 = vunpack.c.l.b16 %v1547
  %v6326 = vunpack.c.h.b16 %v1547
  %v6327 = vunpack.c.l.b16 %v1548
  %v6328 = vunpack.c.h.b16 %v1548
  %v6329 = vunpack.c.l.b16 %v1549
  %v6330 = vunpack.c.h.b16 %v1549
  %v6331 = vunpack.c.l.b16 %v1550
  %v6332 = vunpack.c.h.b16 %v1550
  %v6333 = vunpack.c.l.b16 %v1551
  %v6334 = vunpack.c.h.b16 %v1551
  %v6335 = vunpack.c.l.b16 %v1552
  %v6336 = vunpack.c.h.b16 %v1552
  %v6337 = vunpack.c.l.b16 %v1553
  %v6338 = vunpack.c.h.b16 %v1553
  %v6339 = vunpack.c.l.b16 %v1554
  %v6340 = vunpack.c.h.b16 %v1554
  %v6341 = vunpack.c.l.b16 %v1555
  %v6342 = vunpack.c.h.b16 %v1555
  %v6343 = vunpack.c.l.b16 %v1556
  %v6344 = vunpack.c.h.b16 %v1556
  %v6345 = vunpack.c.l.b16 %v1557
  %v6346 = vunpack.c.h.b16 %v1557
  %v6347 = vunpack.c.l.b16 %v1558
  %v6348 = vunpack.c.h.b16 %v1558
  %v6349 = vunpack.c.l.b16 %v1559
  %v6350 = vunpack.c.h.b16 %v1559
  %v6351 = vunpack.c.l.b16 %v1560
  %v6352 = vunpack.c.h.b16 %v1560
  %v6353 = vunpack.c.l.b16 %v1561
  %v6354 = vunpack.c.h.b16 %v1561
  %v6355 = vunpack.c.l.b16 %v1562
  %v6356 = vunpack.c.h.b16 %v1562
  %v6357 = vunpack.c.l.b16 %v1563
  %v6358 = vunpack.c.h.b16 %v1563
  %v6359 = vunpack.c.l.b16 %v1564
  %v6360 = vunpack.c.h.b16 %v1564
  %v6361 = vunpack.c.l.b16 %v1565
  %v6362 = vunpack.c.h.b16 %v1565
  %v6363 = vunpack.c.l.b16 %v1566
  %v6364 = vunpack.c.h.b16 %v1566
  %v6365 = vunpack.c.l.b16 %v1567
  %v6366 = vunpack.c.h.b16 %v1567
  %v6367 = vunpack.c.l.b16 %v1568
  %v6368 = vunpack.c.h.b16 %v1568
  %v6369 = vunpack.c.l.b16 %v1569
  %v6370 = vunpack.c.h.b16 %v1569
  %v6371 = vunpack.c.l.b16 %v1570
  %v6372 = vunpack.c.h.b16 %v1570
  %v6373 = vunpack.c.l.b16 %v1571
  %v6374 = vunpack.c.h.b16 %v1571
  %v6375 = vunpack.c.l.b16 %v1572
  %v6376 = vunpack.c.h.b16 %v1572
  %v6377 = vunpack.c.l.b16 %v1573
  %v6378 = vunpack.c.h.b16 %v1573
  %v6379 = vunpack.c.l.b16 %v1574
  %v6380 = vunpack.c.h.b16 %v1574
  %v6381 = vunpack.c.l.b16 %v1575
  %v6382 = vunpack.c.h.b16 %v1575
  %v6383 = vunpack.c.l.b16 %v1576
  %v6384 = vunpack.c.h.b16 %v1576
  %v6385 = vunpack.c.l.b16 %v1577
  %v6386 = vunpack.c.h.b16 %v1577
  %v6387 = vunpack.c.l.b16 %v1578
  %v6388 = vunpack.c.h.b16 %v1578
  %v6389 = vunpack.c.l.b16 %v1579
  %v6390 = vunpack.c.h.b16 %v1579
  %v6391 = vunpack.c.l.b16 %v1580
  %v6392 = vunpack.c.h.b16 %v1580
  %v6393 = vunpack.c.l.b16 %v1581
  %v6394 = vunpack.c.h.b16 %v1581
  %v6395 = vunpack.c.l.b16 %v1582
  %v6396 = vunpack.c.h.b16 %v1582
  %v6397 = vunpack.c.l.b16 %v1583
  %v6398 = vunpack.c.h.b16 %v1583
  %v6399 = vunpack.c.l.b16 %v1584
  %v6400 = vunpack.c.h.b16 %v1584
  %v6401 = vunpack.c.l.b16 %v1585
  %v6402 = vunpack.c.h.b16 %v1585
  %v6403 = vunpack.c.l.b16 %v1586
  %v6404 = vunpack.c.h.b16 %v1586
  %v6405 = vunpack.c.l.b16 %v1587
  %v6406 = vunpack.c.h.b16 %v1587
  %v6407 = vunpack.c.l.b16 %v1588
  %v6408 = vunpack.c.h.b16 %v1588
  %v6409 = vunpack.c.l.b16 %v1589
  %v6410 = vunpack.c.h.b16 %v1589
  %v6411 = vunpack.c.l.b16 %v1590
  %v6412 = vunpack.c.h.b16 %v1590
  %v6413 = vunpack.c.l.b16 %v1591
  %v6414 = vunpack.c.h.b16 %v1591
  %v6415 = vunpack.c.l.b16 %v1592
  %v6416 = vunpack.c.h.b16 %v1592
  %v6417 = vunpack.c.l.b16 %v1593
  %v6418 = vunpack.c.h.b16 %v1593
  %v6419 = vunpack.c.l.b16 %v1594
  %v6420 = vunpack.c.h.b16 %v1594
  %v6421 = vunpack.c.l.b16 %v1595
  %v6422 = vunpack.c.h.b16 %v1595
  %v6423 = vunpack.c.l.b16 %v1596
  %v6424 = vunpack.c.h.b16 %v1596
  %v6425 = vunpack.c.l.b16 %v1597
  %v6426 = vunpack.c.h.b16 %v1597
  %v6427 = vunpack.c.l.b16 %v1598
  %v6428 = vunpack.c.h.b16 %v1598
  %v6429 = vunpack.c.l.b16 %v1599
  %v6430 = vunpack.c.h.b16 %v1599
  %v6431 = vunpack.c.l.b16 %v1600
  %v6432 = vunpack.c.h.b16 %v1600
  %v6433 = vunpack.c.l.b16 %v1601
  %v6434 = vunpack.c.h.b16 %v1601
  %v6435 = vpack.c.b16 %v3307, %v3299
  %v6436 = vpack.c.b16 %v3308, %v3300
  %v6437 = vpack.c.b16 %v3309, %v3301
  %v6438 = vpack.c.b16 %v3310, %v3302
  %v6439 = vpack.c.b16 %v3311, %v3303
  %v6440 = vpack.c.b16 %v3312, %v3304
  %v6441 = vpack.c.b16 %v3313, %v3305
  %v6442 = vpack.c.b16 %v3314, %v3306
  %v6443 = vpack.c.b16 %v3323, %v3315
  %v6444 = vpack.c.b16 %v3324, %v3316
  %v6445 = vpack.c.b16 %v3325, %v3317
  %v6446 = vpack.c.b16 %v3326, %v3318
  %v6447 = vpack.c.b16 %v3327, %v3319
  %v6448 = vpack.c.b16 %v3328, %v3320
  %v6449 = vpack.c.b16 %v3329, %v3321
  %v6450 = vpack.c.b16 %v3330, %v3322
  %v6451 = vpack.c.b16 %v3339, %v3331
  %v6452 = vpack.c.b16 %v3340, %v3332
  %v6453 = vpack.c.b16 %v3341, %v3333
  %v6454 = vpack.c.b16 %v3342, %v3334
  %v6455 = vpack.c.b16 %v3343, %v3335
  %v6456 = vpack.c.b16 %v3344, %v3336
  %v6457 = vpack.c.b16 %v3345, %v3337
  %v6458 = vpack.c.b16 %v3346, %v3338
  %v6459 = vpack.c.b16 %v3355, %v3347
  %v6460 = vpack.c.b16 %v3356, %v3348
  %v6461 = vpack.c.b16 %v3357, %v3349
  %v6462 = vpack.c.b16 %v3358, %v3350
  %v6463 = vpack.c.b16 %v3359, %v3351
  %v6464 = vpack.c.b16 %v3360, %v3352
  %v6465 = vpack.c.b16 %v3361, %v3353
  %v6466 = vpack.c.b16 %v3362, %v3354
  %v6467 = vpack.c.b16 %v3371, %v3363
  %v6468 = vpack.c.b16 %v3372, %v3364
  %v6469 = vpack.c.b16 %v3373, %v3365
  %v6470 = vpack.c.b16 %v3374, %v3366
  %v6471 = vpack.c.b16 %v3375, %v3367
  %v6472 = vpack.c.b16 %v3376, %v3368
  %v6473 = vpack.c.b16 %v3377, %v3369
  %v6474 = vpack.c.b16 %v3378, %v3370
  %v6475 = vpack.c.b16 %v3387, %v3379
  %v6476 = vpack.c.b16 %v3388, %v3380
  %v6477 = vpack.c.b16 %v3389, %v3381
  %v6478 = vpack.c.b16 %v3390, %v3382
  %v6479 = vpack.c.b16 %v3391, %v3383
  %v6480 = vpack.c.b16 %v3392, %v3384
  %v6481 = vpack.c.b16 %v3393, %v3385
  %v6482 = vpack.c.b16 %v3394, %v3386
  %v6483 = vpack.c.b16 %v3403, %v3395
  %v6484 = vpack.c.b16 %v3404, %v3396
  %v6485 = vpack.c.b16 %v3405, %v3397
  %v6486 = vpack.c.b16 %v3406, %v3398
  %v6487 = vpack.c.b16 %v3407, %v3399
  %v6488 = vpack.c.b16 %v3408, %v3400
  %v6489 = vpack.c.b16 %v3409, %v3401
  %v6490 = vpack.c.b16 %v3410, %v3402
  %v6491 = vpack.c.b16 %v3419, %v3411
  %v6492 = vpack.c.b16 %v3420, %v3412
  %v6493 = vpack.c.b16 %v3421, %v3413
  %v6494 = vpack.c.b16 %v3422, %v3414
  %v6495 = vpack.c.b16 %v3423, %v3415
  %v6496 = vpack.c.b16 %v3424, %v3416
  %v6497 = vpack.c.b16 %v3425, %v3417
  %v6498 = vpack.c.b16 %v3426, %v3418
  %v6499 = vpack.c.b16 %v3435, %v3427
  %v6500 = vpack.c.b16 %v3436, %v3428
  %v6501 = vpack.c.b16 %v3437, %v3429
  %v6502 = vpack.c.b16 %v3438, %v3430
  %v6503 = vpack.c.b16 %v3439, %v3431
  %v6504 = vpack.c.b16 %v3440, %v3432
  %v6505 = vpack.c.b16 %v3441, %v3433
  %v6506 = vpack.c.b16 %v3442, %v3434
  %v6507 = vpack.c.b16 %v3451, %v3443
  %v6508 = vpack.c.b16 %v3452, %v3444
  %v6509 = vpack.c.b16 %v3453, %v3445
  %v6510 = vpack.c.b16 %v3454, %v3446
  %v6511 = vpack.c.b16 %v3455, %v3447
  %v6512 = vpack.c.b16 %v3456, %v3448
  %v6513 = vpack.c.b16 %v3457, %v3449
  %v6514 = vpack.c.b16 %v3458, %v3450
  %v6515 = vpack.c.b16 %v3467, %v3459
  %v6516 = vpack.c.b16 %v3468, %v3460
  %v6517 = vpack.c.b16 %v3469, %v3461
  %v6518 = vpack.c.b16 %v3470, %v3462
  %v6519 = vpack.c.b16 %v3471, %v3463
  %v6520 = vpack.c.b16 %v3472, %v3464
  %v6521 = vpack.c.b16 %v3473, %v3465
  %v6522 = vpack.c.b16 %v3474, %v3466
  %v6523 = vpack.c.b16 %v3483, %v3475
  %v6524 = vpack.c.b16 %v3484, %v3476
  %v6525 = vpack.c.b16 %v3485, %v3477
  %v6526 = vpack.c.b16 %v3486, %v3478
  %v6527 = vpack.c.b16 %v3487, %v3479
  %v6528 = vpack.c.b16 %v3488, %v3480
  %v6529 = vpack.c.b16 %v3489, %v3481
  %v6530 = vpack.c.b16 %v3490, %v3482
  %v6531 = vpack.c.b16 %v3499, %v3491
  %v6532 = vpack.c.b16 %v3500, %v3492
  %v6533 = vpack.c.b16 %v3501, %v3493
  %v6534 = vpack.c.b16 %v3502, %v3494
  %v6535 = vpack.c.b16 %v3503, %v3495
  %v6536 = vpack.c.b16 %v3504, %v3496
  %v6537 = vpack.c.b16 %v3505, %v3497
  %v6538 = vpack.c.b16 %v3506, %v3498
  %v6539 = vpack.c.b16 %v3515, %v3507
  %v6540 = vpack.c.b16 %v3516, %v3508
  %v6541 = vpack.c.b16 %v3517, %v3509
  %v6542 = vpack.c.b16 %v3518, %v3510
  %v6543 = vpack.c.b16 %v3519, %v3511
  %v6544 = vpack.c.b16 %v3520, %v3512
  %v6545 = vpack.c.b16 %v3521, %v3513
  %v6546 = vpack.c.b16 %v3522, %v3514
  %v6547 = vpack.c.b16 %v3531, %v3523
  %v6548 = vpack.c.b16 %v3532, %v3524
  %v6549 = vpack.c.b16 %v3533, %v3525
  %v6550 = vpack.c.b16 %v3534, %v3526
  %v6551 = vpack.c.b16 %v3535, %v3527
  %v6552 = vpack.c.b16 %v3536, %v3528
  %v6553 = vpack.c.b16 %v3537, %v3529
  %v6554 = vpack.c.b16 %v3538, %v3530
  %v6555 = vpack.c.b16 %v3547, %v3539
  %v6556 = vpack.c.b16 %v3548, %v3540
  %v6557 = vpack.c.b16 %v3549, %v3541
  %v6558 = vpack.c.b16 %v3550, %v3542
  %v6559 = vpack.c.b16 %v3551, %v3543
  %v6560 = vpack.c.b16 %v3552, %v3544
  %v6561 = vpack.c.b16 %v3553, %v3545
  %v6562 = vpack.c.b16 %v3554, %v3546
  %v6563 = vpack.c.b16 %v3563, %v3555
  %v6564 = vpack.c.b16 %v3564, %v3556
  %v6565 = vpack.c.b16 %v3565, %v3557
  %v6566 = vpack.c.b16 %v3566, %v3558
  %v6567 = vpack.c.b16 %v3567, %v3559
  %v6568 = vpack.c.b16 %v3568, %v3560
  %v6569 = vpack.c.b16 %v3569, %v3561
  %v6570 = vpack.c.b16 %v3570, %v3562
  %v6571 = vpack.c.b16 %v3579, %v3571
  %v6572 = vpack.c.b16 %v3580, %v3572
  %v6573 = vpack.c.b16 %v3581, %v3573
  %v6574 = vpack.c.b16 %v3582, %v3574
  %v6575 = vpack.c.b16 %v3583, %v3575
  %v6576 = vpack.c.b16 %v3584, %v3576
  %v6577 = vpack.c.b16 %v3585, %v3577
  %v6578 = vpack.c.b16 %v3586, %v3578
  %v6579 = vpack.c.b16 %v3595, %v3587
  %v6580 = vpack.c.b16 %v3596, %v3588
  %v6581 = vpack.c.b16 %v3597, %v3589
  %v6582 = vpack.c.b16 %v3598, %v3590
  %v6583 = vpack.c.b16 %v3599, %v3591
  %v6584 = vpack.c.b16 %v3600, %v3592
  %v6585 = vpack.c.b16 %v3601, %v3593
  %v6586 = vpack.c.b16 %v3602, %v3594
  %v6587 = vpack.c.b16 %v3611, %v3603
  %v6588 = vpack.c.b16 %v3612, %v3604
  %v6589 = vpack.c.b16 %v3613, %v3605
  %v6590 = vpack.c.b16 %v3614, %v3606
  %v6591 = vpack.c.b16 %v3615, %v3607
  %v6592 = vpack.c.b16 %v3616, %v3608
  %v6593 = vpack.c.b16 %v3617, %v3609
  %v6594 = vpack.c.b16 %v3618, %v3610
  %v6595 = vpack.c.b16 %v3627, %v3619
  %v6596 = vpack.c.b16 %v3628, %v3620
  %v6597 = vpack.c.b16 %v3629, %v3621
  %v6598 = vpack.c.b16 %v3630, %v3622
  %v6599 = vpack.c.b16 %v3631, %v3623
  %v6600 = vpack.c.b16 %v3632, %v3624
  %v6601 = vpack.c.b16 %v3633, %v3625
  %v6602 = vpack.c.b16 %v3634, %v3626
  %v6603 = vpack.c.b16 %v3643, %v3635
  %v6604 = vpack.c.b16 %v3644, %v3636
  %v6605 = vpack.c.b16 %v3645, %v3637
  %v6606 = vpack.c.b16 %v3646, %v3638
  %v6607 = vpack.c.b16 %v3647, %v3639
  %v6608 = vpack.c.b16 %v3648, %v3640
  %v6609 = vpack.c.b16 %v3649, %v3641
  %v6610 = vpack.c.b16 %v3650, %v3642
  %v6611 = vpack.c.b16 %v3659, %v3651
  %v6612 = vpack.c.b16 %v3660, %v3652
  %v6613 = vpack.c.b16 %v3661, %v3653
  %v6614 = vpack.c.b16 %v3662, %v3654
  %v6615 = vpack.c.b16 %v3663, %v3655
  %v6616 = vpack.c.b16 %v3664, %v3656
  %v6617 = vpack.c.b16 %v3665, %v3657
  %v6618 = vpack.c.b16 %v3666, %v3658
  %v6619 = vpack.c.b16 %v3675, %v3667
  %v6620 = vpack.c.b16 %v3676, %v3668
  %v6621 = vpack.c.b16 %v3677, %v3669
  %v6622 = vpack.c.b16 %v3678, %v3670
  %v6623 = vpack.c.b16 %v3679, %v3671
  %v6624 = vpack.c.b16 %v3680, %v3672
  %v6625 = vpack.c.b16 %v3681, %v3673
  %v6626 = vpack.c.b16 %v3682, %v3674
  %v6627 = vpack.c.b16 %v3691, %v3683
  %v6628 = vpack.c.b16 %v3692, %v3684
  %v6629 = vpack.c.b16 %v3693, %v3685
  %v6630 = vpack.c.b16 %v3694, %v3686
  %v6631 = vpack.c.b16 %v3695, %v3687
  %v6632 = vpack.c.b16 %v3696, %v3688
  %v6633 = vpack.c.b16 %v3697, %v3689
  %v6634 = vpack.c.b16 %v3698, %v3690
  %v6635 = vpack.c.b16 %v3707, %v3699
  %v6636 = vpack.c.b16 %v3708, %v3700
  %v6637 = vpack.c.b16 %v3709, %v3701
  %v6638 = vpack.c.b16 %v3710, %v3702
  %v6639 = vpack.c.b16 %v3711, %v3703
  %v6640 = vpack.c.b16 %v3712, %v3704
  %v6641 = vpack.c.b16 %v3713, %v3705
  %v6642 = vpack.c.b16 %v3714, %v3706
  %v6643 = vpack.c.b16 %v3723, %v3715
  %v6644 = vpack.c.b16 %v3724, %v3716
  %v6645 = vpack.c.b16 %v3725, %v3717
  %v6646 = vpack.c.b16 %v3726, %v3718
  %v6647 = vpack.c.b16 %v3727, %v3719
  %v6648 = vpack.c.b16 %v3728, %v3720
  %v6649 = vpack.c.b16 %v3729, %v3721
  %v6650 = vpack.c.b16 %v3730, %v3722
  %v6651 = vpack.c.b16 %v3739, %v3731
  %v6652 = vpack.c.b16 %v3740, %v3732
  %v6653 = vpack.c.b16 %v3741, %v3733
  %v6654 = vpack.c.b16 %v3742, %v3734
  %v6655 = vpack.c.b16 %v3743, %v3735
  %v6656 = vpack.c.b16 %v3744, %v3736
  %v6657 = vpack.c.b16 %v3745, %v3737
  %v6658 = vpack.c.b16 %v3746, %v3738
  %v6659 = vpack.c.b16 %v3755, %v3747
  %v6660 = vpack.c.b16 %v3756, %v3748
  %v6661 = vpack.c.b16 %v3757, %v3749
  %v6662 = vpack.c.b16 %v3758, %v3750
  %v6663 = vpack.c.b16 %v3759, %v3751
  %v6664 = vpack.c.b16 %v3760, %v3752
  %v6665 = vpack.c.b16 %v3761, %v3753
  %v6666 = vpack.c.b16 %v3762, %v3754
  %v6667 = vpack.c.b16 %v3771, %v3763
  %v6668 = vpack.c.b16 %v3772, %v3764
  %v6669 = vpack.c.b16 %v3773, %v3765
  %v6670 = vpack.c.b16 %v3774, %v3766
  %v6671 = vpack.c.b16 %v3775, %v3767
  %v6672 = vpack.c.b16 %v3776, %v3768
  %v6673 = vpack.c.b16 %v3777, %v3769
  %v6674 = vpack.c.b16 %v3778, %v3770
  %v6675 = vpack.c.b16 %v3787, %v3779
  %v6676 = vpack.c.b16 %v3788, %v3780
  %v6677 = vpack.c.b16 %v3789, %v3781
  %v6678 = vpack.c.b16 %v3790, %v3782
  %v6679 = vpack.c.b16 %v3791, %v3783
  %v6680 = vpack.c.b16 %v3792, %v3784
  %v6681 = vpack.c.b16 %v3793, %v3785
  %v6682 = vpack.c.b16 %v3794, %v3786
  %v6683 = vpack.c.b16 %v3803, %v3795
  %v6684 = vpack.c.b16 %v3804, %v3796
  %v6685 = vpack.c.b16 %v3805, %v3797
  %v6686 = vpack.c.b16 %v3806, %v3798
  %v6687 = vpack.c.b16 %v3807, %v3799
  %v6688 = vpack.c.b16 %v3808, %v3800
  %v6689 = vpack.c.b16 %v3809, %v3801
  %v6690 = vpack.c.b16 %v3810, %v3802
  %v6691 = vpack.c.b16 %v3819, %v3811
  %v6692 = vpack.c.b16 %v3820, %v3812
  %v6693 = vpack.c.b16 %v3821, %v3813
  %v6694 = vpack.c.b16 %v3822, %v3814
  %v6695 = vpack.c.b16 %v3823, %v3815
  %v6696 = vpack.c.b16 %v3824, %v3816
  %v6697 = vpack.c.b16 %v3825, %v3817
  %v6698 = vpack.c.b16 %v3826, %v3818
  %v6699 = vpack.c.b16 %v3835, %v3827
  %v6700 = vpack.c.b16 %v3836, %v3828
  %v6701 = vpack.c.b16 %v3837, %v3829
  %v6702 = vpack.c.b16 %v3838, %v3830
  %v6703 = vpack.c.b16 %v3839, %v3831
  %v6704 = vpack.c.b16 %v3840, %v3832
  %v6705 = vpack.c.b16 %v3841, %v3833
  %v6706 = vpack.c.b16 %v3842, %v3834
  %v6707 = vpack.c.b16 %v3851, %v3843
  %v6708 = vpack.c.b16 %v3852, %v3844
  %v6709 = vpack.c.b16 %v3853, %v3845
  %v6710 = vpack.c.b16 %v3854, %v3846
  %v6711 = vpack.c.b16 %v3855, %v3847
  %v6712 = vpack.c.b16 %v3856, %v3848
  %v6713 = vpack.c.b16 %v3857, %v3849
  %v6714 = vpack.c.b16 %v3858, %v3850
  %v6715 = vpack.c.b16 %v3867, %v3859
  %v6716 = vpack.c.b16 %v3868, %v3860
  %v6717 = vpack.c.b16 %v3869, %v3861
  %v6718 = vpack.c.b16 %v3870, %v3862
  %v6719 = vpack.c.b16 %v3871, %v3863
  %v6720 = vpack.c.b16 %v3872, %v3864
  %v6721 = vpack.c.b16 %v3873, %v3865
  %v6722 = vpack.c.b16 %v3874, %v3866
  %v6723 = vpack.c.b16 %v3883, %v3875
  %v6724 = vpack.c.b16 %v3884, %v3876
  %v6725 = vpack.c.b16 %v3885, %v3877
  %v6726 = vpack.c.b16 %v3886, %v3878
  %v6727 = vpack.c.b16 %v3887, %v3879
  %v6728 = vpack.c.b16 %v3888, %v3880
  %v6729 = vpack.c.b16 %v3889, %v3881
  %v6730 = vpack.c.b16 %v3890, %v3882
  %v6731 = vpack.c.b16 %v3899, %v3891
  %v6732 = vpack.c.b16 %v3900, %v3892
  %v6733 = vpack.c.b16 %v3901, %v3893
  %v6734 = vpack.c.b16 %v3902, %v3894
  %v6735 = vpack.c.b16 %v3903, %v3895
  %v6736 = vpack.c.b16 %v3904, %v3896
  %v6737 = vpack.c.b16 %v3905, %v3897
  %v6738 = vpack.c.b16 %v3906, %v3898
  %v6739 = vpack.c.b16 %v3915, %v3907
  %v6740 = vpack.c.b16 %v3916, %v3908
  %v6741 = vpack.c.b16 %v3917, %v3909
  %v6742 = vpack.c.b16 %v3918, %v3910
  %v6743 = vpack.c.b16 %v3919, %v3911
  %v6744 = vpack.c.b16 %v3920, %v3912
  %v6745 = vpack.c.b16 %v3921, %v3913
  %v6746 = vpack.c.b16 %v3922, %v3914
  %v6747 = vpack.c.b16 %v3931, %v3923
  %v6748 = vpack.c.b16 %v3932, %v3924
  %v6749 = vpack.c.b16 %v3933, %v3925
  %v6750 = vpack.c.b16 %v3934, %v3926
  %v6751 = vpack.c.b16 %v3935, %v3927
  %v6752 = vpack.c.b16 %v3936, %v3928
  %v6753 = vpack.c.b16 %v3937, %v3929
  %v6754 = vpack.c.b16 %v3938, %v3930
  %v6755 = vpack.c.b16 %v3947, %v3939
  %v6756 = vpack.c.b16 %v3948, %v3940
  %v6757 = vpack.c.b16 %v3949, %v3941
  %v6758 = vpack.c.b16 %v3950, %v3942
  %v6759 = vpack.c.b16 %v3951, %v3943
  %v6760 = vpack.c.b16 %v3952, %v3944
  %v6761 = vpack.c.b16 %v3953, %v3945
  %v6762 = vpack.c.b16 %v3954, %v3946
  %v6763 = vpack.c.b16 %v3963, %v3955
  %v6764 = vpack.c.b16 %v3964, %v3956
  %v6765 = vpack.c.b16 %v3965, %v3957
  %v6766 = vpack.c.b16 %v3966, %v3958
  %v6767 = vpack.c.b16 %v3967, %v3959
  %v6768 = vpack.c.b16 %v3968, %v3960
  %v6769 = vpack.c.b16 %v3969, %v3961
  %v6770 = vpack.c.b16 %v3970, %v3962
  %v6771 = vpack.c.b16 %v3979, %v3971
  %v6772 = vpack.c.b16 %v3980, %v3972
  %v6773 = vpack.c.b16 %v3981, %v3973
  %v6774 = vpack.c.b16 %v3982, %v3974
  %v6775 = vpack.c.b16 %v3983, %v3975
  %v6776 = vpack.c.b16 %v3984, %v3976
  %v6777 = vpack.c.b16 %v3985, %v3977
  %v6778 = vpack.c.b16 %v3986, %v3978
  %v6779 = vpack.c.b16 %v3995, %v3987
  %v6780 = vpack.c.b16 %v3996, %v3988
  %v6781 = vpack.c.b16 %v3997, %v3989
  %v6782 = vpack.c.b16 %v3998, %v3990
  %v6783 = vpack.c.b16 %v3999, %v3991
  %v6784 = vpack.c.b16 %v4000, %v3992
  %v6785 = vpack.c.b16 %v4001, %v3993
  %v6786 = vpack.c.b16 %v4002, %v3994
  %v6787 = vpack.c.b16 %v4011, %v4003
  %v6788 = vpack.c.b16 %v4012, %v4004
  %v6789 = vpack.c.b16 %v4013, %v4005
  %v6790 = vpack.c.b16 %v4014, %v4006
  %v6791 = vpack.c.b16 %v4015, %v4007
  %v6792 = vpack.c.b16 %v4016, %v4008
  %v6793 = vpack.c.b16 %v4017, %v4009
  %v6794 = vpack.c.b16 %v4018, %v4010
  %v6795 = vpack.c.b16 %v4027, %v4019
  %v6796 = vpack.c.b16 %v4028, %v4020
  %v6797 = vpack.c.b16 %v4029, %v4021
  %v6798 = vpack.c.b16 %v4030, %v4022
  %v6799 = vpack.c.b16 %v4031, %v4023
  %v6800 = vpack.c.b16 %v4032, %v4024
  %v6801 = vpack.c.b16 %v4033, %v4025
  %v6802 = vpack.c.b16 %v4034, %v4026
  %v6803 = vpack.c.b16 %v4043, %v4035
  %v6804 = vpack.c.b16 %v4044, %v4036
  %v6805 = vpack.c.b16 %v4045, %v4037
  %v6806 = vpack.c.b16 %v4046, %v4038
  %v6807 = vpack.c.b16 %v4047, %v4039
  %v6808 = vpack.c.b16 %v4048, %v4040
  %v6809 = vpack.c.b16 %v4049, %v4041
  %v6810 = vpack.c.b16 %v4050, %v4042
  %v6811 = vpack.c.b16 %v4059, %v4051
  %v6812 = vpack.c.b16 %v4060, %v4052
  %v6813 = vpack.c.b16 %v4061, %v4053
  %v6814 = vpack.c.b16 %v4062, %v4054
  %v6815 = vpack.c.b16 %v4063, %v4055
  %v6816 = vpack.c.b16 %v4064, %v4056
  %v6817 = vpack.c.b16 %v4065, %v4057
  %v6818 = vpack.c.b16 %v4066, %v4058
  %v6819 = vpack.c.b16 %v4075, %v4067
  %v6820 = vpack.c.b16 %v4076, %v4068
  %v6821 = vpack.c.b16 %v4077, %v4069
  %v6822 = vpack.c.b16 %v4078, %v4070
  %v6823 = vpack.c.b16 %v4079, %v4071
  %v6824 = vpack.c.b16 %v4080, %v4072
  %v6825 = vpack.c.b16 %v4081, %v4073
  %v6826 = vpack.c.b16 %v4082, %v4074
  %v6827 = vpack.c.b16 %v4091, %v4083
  %v6828 = vpack.c.b16 %v4092, %v4084
  %v6829 = vpack.c.b16 %v4093, %v4085
  %v6830 = vpack.c.b16 %v4094, %v4086
  %v6831 = vpack.c.b16 %v4095, %v4087
  %v6832 = vpack.c.b16 %v4096, %v4088
  %v6833 = vpack.c.b16 %v4097, %v4089
  %v6834 = vpack.c.b16 %v4098, %v4090
  %v6835 = vpack.c.b16 %v4107, %v4099
  %v6836 = vpack.c.b16 %v4108, %v4100
  %v6837 = vpack.c.b16 %v4109, %v4101
  %v6838 = vpack.c.b16 %v4110, %v4102
  %v6839 = vpack.c.b16 %v4111, %v4103
  %v6840 = vpack.c.b16 %v4112, %v4104
  %v6841 = vpack.c.b16 %v4113, %v4105
  %v6842 = vpack.c.b16 %v4114, %v4106
  %v6843 = vpack.c.b16 %v4123, %v4115
  %v6844 = vpack.c.b16 %v4124, %v4116
  %v6845 = vpack.c.b16 %v4125, %v4117
  %v6846 = vpack.c.b16 %v4126, %v4118
  %v6847 = vpack.c.b16 %v4127, %v4119
  %v6848 = vpack.c.b16 %v4128, %v4120
  %v6849 = vpack.c.b16 %v4129, %v4121
  %v6850 = vpack.c.b16 %v4130, %v4122
  %v6851 = vpack.c.b16 %v4139, %v4131
  %v6852 = vpack.c.b16 %v4140, %v4132
  %v6853 = vpack.c.b16 %v4141, %v4133
  %v6854 = vpack.c.b16 %v4142, %v4134
  %v6855 = vpack.c.b16 %v4143, %v4135
  %v6856 = vpack.c.b16 %v4144, %v4136
  %v6857 = vpack.c.b16 %v4145, %v4137
  %v6858 = vpack.c.b16 %v4146, %v4138
  %v6859 = vpack.c.b16 %v4155, %v4147
  %v6860 = vpack.c.b16 %v4156, %v4148
  %v6861 = vpack.c.b16 %v4157, %v4149
  %v6862 = vpack.c.b16 %v4158, %v4150
  %v6863 = vpack.c.b16 %v4159, %v4151
  %v6864 = vpack.c.b16 %v4160, %v4152
  %v6865 = vpack.c.b16 %v4161, %v4153
  %v6866 = vpack.c.b16 %v4162, %v4154
  %v6867 = vpack.c.b16 %v4171, %v4163
  %v6868 = vpack.c.b16 %v4172, %v4164
  %v6869 = vpack.c.b16 %v4173, %v4165
  %v6870 = vpack.c.b16 %v4174, %v4166
  %v6871 = vpack.c.b16 %v4175, %v4167
  %v6872 = vpack.c.b16 %v4176, %v4168
  %v6873 = vpack.c.b16 %v4177, %v4169
  %v6874 = vpack.c.b16 %v4178, %v4170
  %v6875 = vpack.c.b16 %v4187, %v4179
  %v6876 = vpack.c.b16 %v4188, %v4180
  %v6877 = vpack.c.b16 %v4189, %v4181
  %v6878 = vpack.c.b16 %v4190, %v4182
  %v6879 = vpack.c.b16 %v4191, %v4183
  %v6880 = vpack.c.b16 %v4192, %v4184
  %v6881 = vpack.c.b16 %v4193, %v4185
  %v6882 = vpack.c.b16 %v4194, %v4186
  %v6883 = vpack.c.b16 %v4203, %v4195
  %v6884 = vpack.c.b16 %v4204, %v4196
  %v6885 = vpack.c.b16 %v4205, %v4197
  %v6886 = vpack.c.b16 %v4206, %v4198
  %v6887 = vpack.c.b16 %v4207, %v4199
  %v6888 = vpack.c.b16 %v4208, %v4200
  %v6889 = vpack.c.b16 %v4209, %v4201
  %v6890 = vpack.c.b16 %v4210, %v4202
  %v6891 = vpack.c.b16 %v4219, %v4211
  %v6892 = vpack.c.b16 %v4220, %v4212
  %v6893 = vpack.c.b16 %v4221, %v4213
  %v6894 = vpack.c.b16 %v4222, %v4214
  %v6895 = vpack.c.b16 %v4223, %v4215
  %v6896 = vpack.c.b16 %v4224, %v4216
  %v6897 = vpack.c.b16 %v4225, %v4217
  %v6898 = vpack.c.b16 %v4226, %v4218
  %v6899 = vpack.c.b16 %v4235, %v4227
  %v6900 = vpack.c.b16 %v4236, %v4228
  %v6901 = vpack.c.b16 %v4237, %v4229
  %v6902 = vpack.c.b16 %v4238, %v4230
  %v6903 = vpack.c.b16 %v4239, %v4231
  %v6904 = vpack.c.b16 %v4240, %v4232
  %v6905 = vpack.c.b16 %v4241, %v4233
  %v6906 = vpack.c.b16 %v4242, %v4234
  %v6907 = vpack.c.b16 %v4251, %v4243
  %v6908 = vpack.c.b16 %v4252, %v4244
  %v6909 = vpack.c.b16 %v4253, %v4245
  %v6910 = vpack.c.b16 %v4254, %v4246
  %v6911 = vpack.c.b16 %v4255, %v4247
  %v6912 = vpack.c.b16 %v4256, %v4248
  %v6913 = vpack.c.b16 %v4257, %v4249
  %v6914 = vpack.c.b16 %v4258, %v4250
  %v6915 = vpack.c.b16 %v4267, %v4259
  %v6916 = vpack.c.b16 %v4268, %v4260
  %v6917 = vpack.c.b16 %v4269, %v4261
  %v6918 = vpack.c.b16 %v4270, %v4262
  %v6919 = vpack.c.b16 %v4271, %v4263
  %v6920 = vpack.c.b16 %v4272, %v4264
  %v6921 = vpack.c.b16 %v4273, %v4265
  %v6922 = vpack.c.b16 %v4274, %v4266
  %v6923 = vpack.c.b16 %v4283, %v4275
  %v6924 = vpack.c.b16 %v4284, %v4276
  %v6925 = vpack.c.b16 %v4285, %v4277
  %v6926 = vpack.c.b16 %v4286, %v4278
  %v6927 = vpack.c.b16 %v4287, %v4279
  %v6928 = vpack.c.b16 %v4288, %v4280
  %v6929 = vpack.c.b16 %v4289, %v4281
  %v6930 = vpack.c.b16 %v4290, %v4282
  %v6931 = vpack.c.b16 %v4299, %v4291
  %v6932 = vpack.c.b16 %v4300, %v4292
  %v6933 = vpack.c.b16 %v4301, %v4293
  %v6934 = vpack.c.b16 %v4302, %v4294
  %v6935 = vpack.c.b16 %v4303, %v4295
  %v6936 = vpack.c.b16 %v4304, %v4296
  %v6937 = vpack.c.b16 %v4305, %v4297
  %v6938 = vpack.c.b16 %v4306, %v4298
  %v6939 = vpack.c.b16 %v4315, %v4307
  %v6940 = vpack.c.b16 %v4316, %v4308
  %v6941 = vpack.c.b16 %v4317, %v4309
  %v6942 = vpack.c.b16 %v4318, %v4310
  %v6943 = vpack.c.b16 %v4319, %v4311
  %v6944 = vpack.c.b16 %v4320, %v4312
  %v6945 = vpack.c.b16 %v4321, %v4313
  %v6946 = vpack.c.b16 %v4322, %v4314
  %v6947 = vpack.c.b16 %v4331, %v4323
  %v6948 = vpack.c.b16 %v4332, %v4324
  %v6949 = vpack.c.b16 %v4333, %v4325
  %v6950 = vpack.c.b16 %v4334, %v4326
  %v6951 = vpack.c.b16 %v4335, %v4327
  %v6952 = vpack.c.b16 %v4336, %v4328
  %v6953 = vpack.c.b16 %v4337, %v4329
  %v6954 = vpack.c.b16 %v4338, %v4330
  %v6955 = vpack.c.b16 %v4347, %v4339
  %v6956 = vpack.c.b16 %v4348, %v4340
  %v6957 = vpack.c.b16 %v4349, %v4341
  %v6958 = vpack.c.b16 %v4350, %v4342
  %v6959 = vpack.c.b16 %v4351, %v4343
  %v6960 = vpack.c.b16 %v4352, %v4344
  %v6961 = vpack.c.b16 %v4353, %v4345
  %v6962 = vpack.c.b16 %v4354, %v4346
  %v6963 = vpack.c.b16 %v4363, %v4355
  %v6964 = vpack.c.b16 %v4364, %v4356
  %v6965 = vpack.c.b16 %v4365, %v4357
  %v6966 = vpack.c.b16 %v4366, %v4358
  %v6967 = vpack.c.b16 %v4367, %v4359
  %v6968 = vpack.c.b16 %v4368, %v4360
  %v6969 = vpack.c.b16 %v4369, %v4361
  %v6970 = vpack.c.b16 %v4370, %v4362
  %v6971 = vpack.c.b16 %v4379, %v4371
  %v6972 = vpack.c.b16 %v4380, %v4372
  %v6973 = vpack.c.b16 %v4381, %v4373
  %v6974 = vpack.c.b16 %v4382, %v4374
  %v6975 = vpack.c.b16 %v4383, %v4375
  %v6976 = vpack.c.b16 %v4384, %v4376
  %v6977 = vpack.c.b16 %v4385, %v4377
  %v6978 = vpack.c.b16 %v4386, %v4378
  %v6979 = vpack.c.b16 %v4395, %v4387
  %v6980 = vpack.c.b16 %v4396, %v4388
  %v6981 = vpack.c.b16 %v4397, %v4389
  %v6982 = vpack.c.b16 %v4398, %v4390
  %v6983 = vpack.c.b16 %v4399, %v4391
  %v6984 = vpack.c.b16 %v4400, %v4392
  %v6985 = vpack.c.b16 %v4401, %v4393
  %v6986 = vpack.c.b16 %v4402, %v4394
  %v6987 = vpack.c.b16 %v4411, %v4403
  %v6988 = vpack.c.b16 %v4412, %v4404
  %v6989 = vpack.c.b16 %v4413, %v4405
  %v6990 = vpack.c.b16 %v4414, %v4406
  %v6991 = vpack.c.b16 %v4415, %v4407
  %v6992 = vpack.c.b16 %v4416, %v4408
  %v6993 = vpack.c.b16 %v4417, %v4409
  %v6994 = vpack.c.b16 %v4418, %v4410
  %v6995 = vpack.c.b16 %v4427, %v4419
  %v6996 = vpack.c.b16 %v4428, %v4420
  %v6997 = vpack.c.b16 %v4429, %v4421
  %v6998 = vpack.c.b16 %v4430, %v4422
  %v6999 = vpack.c.b16 %v4431, %v4423
  %v7000 = vpack.c.b16 %v4432, %v4424
  %v7001 = vpack.c.b16 %v4433, %v4425
  %v7002 = vpack.c.b16 %v4434, %v4426
  %v7003 = vpack.c.b16 %v4443, %v4435
  %v7004 = vpack.c.b16 %v4444, %v4436
  %v7005 = vpack.c.b16 %v4445, %v4437
  %v7006 = vpack.c.b16 %v4446, %v4438
  %v7007 = vpack.c.b16 %v4447, %v4439
  %v7008 = vpack.c.b16 %v4448, %v4440
  %v7009 = vpack.c.b16 %v4449, %v4441
  %v7010 = vpack.c.b16 %v4450, %v4442
  %v7011 = vpack.c.b16 %v4459, %v4451
  %v7012 = vpack.c.b16 %v4460, %v4452
  %v7013 = vpack.c.b16 %v4461, %v4453
  %v7014 = vpack.c.b16 %v4462, %v4454
  %v7015 = vpack.c.b16 %v4463, %v4455
  %v7016 = vpack.c.b16 %v4464, %v4456
  %v7017 = vpack.c.b16 %v4465, %v4457
  %v7018 = vpack.c.b16 %v4466, %v4458
  %v7019 = vpack.c.b16 %v4475, %v4467
  %v7020 = vpack.c.b16 %v4476, %v4468
  %v7021 = vpack.c.b16 %v4477, %v4469
  %v7022 = vpack.c.b16 %v4478, %v4470
  %v7023 = vpack.c.b16 %v4479, %v4471
  %v7024 = vpack.c.b16 %v4480, %v4472
  %v7025 = vpack.c.b16 %v4481, %v4473
  %v7026 = vpack.c.b16 %v4482, %v4474
  %v7027 = vpack.c.b16 %v4491, %v4483
  %v7028 = vpack.c.b16 %v4492, %v4484
  %v7029 = vpack.c.b16 %v4493, %v4485
  %v7030 = vpack.c.b16 %v4494, %v4486
  %v7031 = vpack.c.b16 %v4495, %v4487
  %v7032 = vpack.c.b16 %v4496, %v4488
  %v7033 = vpack.c.b16 %v4497, %v4489
  %v7034 = vpack.c.b16 %v4498, %v4490
  %v7035 = vpack.c.b16 %v4507, %v4499
  %v7036 = vpack.c.b16 %v4508, %v4500
  %v7037 = vpack.c.b16 %v4509, %v4501
  %v7038 = vpack.c.b16 %v4510, %v4502
  %v7039 = vpack.c.b16 %v4511, %v4503
  %v7040 = vpack.c.b16 %v4512, %v4504
  %v7041 = vpack.c.b16 %v4513, %v4505
  %v7042 = vpack.c.b16 %v4514, %v4506
  %v7043 = vpack.c.b16 %v4523, %v4515
  %v7044 = vpack.c.b16 %v4524, %v4516
  %v7045 = vpack.c.b16 %v4525, %v4517
  %v7046 = vpack.c.b16 %v4526, %v4518
  %v7047 = vpack.c.b16 %v4527, %v4519
  %v7048 = vpack.c.b16 %v4528, %v4520
  %v7049 = vpack.c.b16 %v4529, %v4521
  %v7050 = vpack.c.b16 %v4530, %v4522
  %v7051 = vpack.c.b16 %v4539, %v4531
  %v7052 = vpack.c.b16 %v4540, %v4532
  %v7053 = vpack.c.b16 %v4541, %v4533
  %v7054 = vpack.c.b16 %v4542, %v4534
  %v7055 = vpack.c.b16 %v4543, %v4535
  %v7056 = vpack.c.b16 %v4544, %v4536
  %v7057 = vpack.c.b16 %v4545, %v4537
  %v7058 = vpack.c.b16 %v4546, %v4538
  %v7059 = vpack.c.b16 %v4555, %v4547
  %v7060 = vpack.c.b16 %v4556, %v4548
  %v7061 = vpack.c.b16 %v4557, %v4549
  %v7062 = vpack.c.b16 %v4558, %v4550
  %v7063 = vpack.c.b16 %v4559, %v4551
  %v7064 = vpack.c.b16 %v4560, %v4552
  %v7065 = vpack.c.b16 %v4561, %v4553
  %v7066 = vpack.c.b16 %v4562, %v4554
  %v7067 = vpack.c.b16 %v4571, %v4563
  %v7068 = vpack.c.b16 %v4572, %v4564
  %v7069 = vpack.c.b16 %v4573, %v4565
  %v7070 = vpack.c.b16 %v4574, %v4566
  %v7071 = vpack.c.b16 %v4575, %v4567
  %v7072 = vpack.c.b16 %v4576, %v4568
  %v7073 = vpack.c.b16 %v4577, %v4569
  %v7074 = vpack.c.b16 %v4578, %v4570
  %v7075 = vpack.c.b16 %v4587, %v4579
  %v7076 = vpack.c.b16 %v4588, %v4580
  %v7077 = vpack.c.b16 %v4589, %v4581
  %v7078 = vpack.c.b16 %v4590, %v4582
  %v7079 = vpack.c.b16 %v4591, %v4583
  %v7080 = vpack.c.b16 %v4592, %v4584
  %v7081 = vpack.c.b16 %v4593, %v4585
  %v7082 = vpack.c.b16 %v4594, %v4586
  %v7083 = vpack.c.b16 %v4603, %v4595
  %v7084 = vpack.c.b16 %v4604, %v4596
  %v7085 = vpack.c.b16 %v4605, %v4597
  %v7086 = vpack.c.b16 %v4606, %v4598
  %v7087 = vpack.c.b16 %v4607, %v4599
  %v7088 = vpack.c.b16 %v4608, %v4600
  %v7089 = vpack.c.b16 %v4609, %v4601
  %v7090 = vpack.c.b16 %v4610, %v4602
  %v7091 = vpack.c.b16 %v4619, %v4611
  %v7092 = vpack.c.b16 %v4620, %v4612
  %v7093 = vpack.c.b16 %v4621, %v4613
  %v7094 = vpack.c.b16 %v4622, %v4614
  %v7095 = vpack.c.b16 %v4623, %v4615
  %v7096 = vpack.c.b16 %v4624, %v4616
  %v7097 = vpack.c.b16 %v4625, %v4617
  %v7098 = vpack.c.b16 %v4626, %v4618
  %v7099 = vpack.c.b16 %v4635, %v4627
  %v7100 = vpack.c.b16 %v4636, %v4628
  %v7101 = vpack.c.b16 %v4637, %v4629
  %v7102 = vpack.c.b16 %v4638, %v4630
  %v7103 = vpack.c.b16 %v4639, %v4631
  %v7104 = vpack.c.b16 %v4640, %v4632
  %v7105 = vpack.c.b16 %v4641, %v4633
  %v7106 = vpack.c.b16 %v4642, %v4634
  %v7107 = vpack.c.b16 %v4651, %v4643
  %v7108 = vpack.c.b16 %v4652, %v4644
  %v7109 = vpack.c.b16 %v4653, %v4645
  %v7110 = vpack.c.b16 %v4654, %v4646
  %v7111 = vpack.c.b16 %v4655, %v4647
  %v7112 = vpack.c.b16 %v4656, %v4648
  %v7113 = vpack.c.b16 %v4657, %v4649
  %v7114 = vpack.c.b16 %v4658, %v4650
  %v7115 = vpack.c.b16 %v4667, %v4659
  %v7116 = vpack.c.b16 %v4668, %v4660
  %v7117 = vpack.c.b16 %v4669, %v4661
  %v7118 = vpack.c.b16 %v4670, %v4662
  %v7119 = vpack.c.b16 %v4671, %v4663
  %v7120 = vpack.c.b16 %v4672, %v4664
  %v7121 = vpack.c.b16 %v4673, %v4665
  %v7122 = vpack.c.b16 %v4674, %v4666
  %v7123 = vpack.c.b16 %v4683, %v4675
  %v7124 = vpack.c.b16 %v4684, %v4676
  %v7125 = vpack.c.b16 %v4685, %v4677
  %v7126 = vpack.c.b16 %v4686, %v4678
  %v7127 = vpack.c.b16 %v4687, %v4679
  %v7128 = vpack.c.b16 %v4688, %v4680
  %v7129 = vpack.c.b16 %v4689, %v4681
  %v7130 = vpack.c.b16 %v4690, %v4682
  %v7131 = vpack.c.b16 %v4699, %v4691
  %v7132 = vpack.c.b16 %v4700, %v4692
  %v7133 = vpack.c.b16 %v4701, %v4693
  %v7134 = vpack.c.b16 %v4702, %v4694
  %v7135 = vpack.c.b16 %v4703, %v4695
  %v7136 = vpack.c.b16 %v4704, %v4696
  %v7137 = vpack.c.b16 %v4705, %v4697
  %v7138 = vpack.c.b16 %v4706, %v4698
  %v7139 = vpack.c.b16 %v4715, %v4707
  %v7140 = vpack.c.b16 %v4716, %v4708
  %v7141 = vpack.c.b16 %v4717, %v4709
  %v7142 = vpack.c.b16 %v4718, %v4710
  %v7143 = vpack.c.b16 %v4719, %v4711
  %v7144 = vpack.c.b16 %v4720, %v4712
  %v7145 = vpack.c.b16 %v4721, %v4713
  %v7146 = vpack.c.b16 %v4722, %v4714
  %v7147 = vpack.c.b16 %v4731, %v4723
  %v7148 = vpack.c.b16 %v4732, %v4724
  %v7149 = vpack.c.b16 %v4733, %v4725
  %v7150 = vpack.c.b16 %v4734, %v4726
  %v7151 = vpack.c.b16 %v4735, %v4727
  %v7152 = vpack.c.b16 %v4736, %v4728
  %v7153 = vpack.c.b16 %v4737, %v4729
  %v7154 = vpack.c.b16 %v4738, %v4730
  %v7155 = vpack.c.b16 %v4747, %v4739
  %v7156 = vpack.c.b16 %v4748, %v4740
  %v7157 = vpack.c.b16 %v4749, %v4741
  %v7158 = vpack.c.b16 %v4750, %v4742
  %v7159 = vpack.c.b16 %v4751, %v4743
  %v7160 = vpack.c.b16 %v4752, %v4744
  %v7161 = vpack.c.b16 %v4753, %v4745
  %v7162 = vpack.c.b16 %v4754, %v4746
  %v7163 = vpack.c.b16 %v4763, %v4755
  %v7164 = vpack.c.b16 %v4764, %v4756
  %v7165 = vpack.c.b16 %v4765, %v4757
  %v7166 = vpack.c.b16 %v4766, %v4758
  %v7167 = vpack.c.b16 %v4767, %v4759
  %v7168 = vpack.c.b16 %v4768, %v4760
  %v7169 = vpack.c.b16 %v4769, %v4761
  %v7170 = vpack.c.b16 %v4770, %v4762
  %v7171 = vpack.c.b16 %v4779, %v4771
  %v7172 = vpack.c.b16 %v4780, %v4772
  %v7173 = vpack.c.b16 %v4781, %v4773
  %v7174 = vpack.c.b16 %v4782, %v4774
  %v7175 = vpack.c.b16 %v4783, %v4775
  %v7176 = vpack.c.b16 %v4784, %v4776
  %v7177 = vpack.c.b16 %v4785, %v4777
  %v7178 = vpack.c.b16 %v4786, %v4778
  %v7179 = vpack.c.b16 %v4795, %v4787
  %v7180 = vpack.c.b16 %v4796, %v4788
  %v7181 = vpack.c.b16 %v4797, %v4789
  %v7182 = vpack.c.b16 %v4798, %v4790
  %v7183 = vpack.c.b16 %v4799, %v4791
  %v7184 = vpack.c.b16 %v4800, %v4792
  %v7185 = vpack.c.b16 %v4801, %v4793
  %v7186 = vpack.c.b16 %v4802, %v4794
  %v7187 = vpack.c.b16 %v4811, %v4803
  %v7188 = vpack.c.b16 %v4812, %v4804
  %v7189 = vpack.c.b16 %v4813, %v4805
  %v7190 = vpack.c.b16 %v4814, %v4806
  %v7191 = vpack.c.b16 %v4815, %v4807
  %v7192 = vpack.c.b16 %v4816, %v4808
  %v7193 = vpack.c.b16 %v4817, %v4809
  %v7194 = vpack.c.b16 %v4818, %v4810
  %v7195 = vpack.c.b16 %v4827, %v4819
  %v7196 = vpack.c.b16 %v4828, %v4820
  %v7197 = vpack.c.b16 %v4829, %v4821
  %v7198 = vpack.c.b16 %v4830, %v4822
  %v7199 = vpack.c.b16 %v4831, %v4823
  %v7200 = vpack.c.b16 %v4832, %v4824
  %v7201 = vpack.c.b16 %v4833, %v4825
  %v7202 = vpack.c.b16 %v4834, %v4826
  %v7203 = vpack.c.b16 %v4843, %v4835
  %v7204 = vpack.c.b16 %v4844, %v4836
  %v7205 = vpack.c.b16 %v4845, %v4837
  %v7206 = vpack.c.b16 %v4846, %v4838
  %v7207 = vpack.c.b16 %v4847, %v4839
  %v7208 = vpack.c.b16 %v4848, %v4840
  %v7209 = vpack.c.b16 %v4849, %v4841
  %v7210 = vpack.c.b16 %v4850, %v4842
  %v7211 = vpack.c.b16 %v4859, %v4851
  %v7212 = vpack.c.b16 %v4860, %v4852
  %v7213 = vpack.c.b16 %v4861, %v4853
  %v7214 = vpack.c.b16 %v4862, %v4854
  %v7215 = vpack.c.b16 %v4863, %v4855
  %v7216 = vpack.c.b16 %v4864, %v4856
  %v7217 = vpack.c.b16 %v4865, %v4857
  %v7218 = vpack.c.b16 %v4866, %v4858
  %v7219 = vpack.c.b16 %v4875, %v4867
  %v7220 = vpack.c.b16 %v4876, %v4868
  %v7221 = vpack.c.b16 %v4877, %v4869
  %v7222 = vpack.c.b16 %v4878, %v4870
  %v7223 = vpack.c.b16 %v4879, %v4871
  %v7224 = vpack.c.b16 %v4880, %v4872
  %v7225 = vpack.c.b16 %v4881, %v4873
  %v7226 = vpack.c.b16 %v4882, %v4874
  %v7227 = vpack.c.b16 %v4891, %v4883
  %v7228 = vpack.c.b16 %v4892, %v4884
  %v7229 = vpack.c.b16 %v4893, %v4885
  %v7230 = vpack.c.b16 %v4894, %v4886
  %v7231 = vpack.c.b16 %v4895, %v4887
  %v7232 = vpack.c.b16 %v4896, %v4888
  %v7233 = vpack.c.b16 %v4897, %v4889
  %v7234 = vpack.c.b16 %v4898, %v4890
  %v7235 = vpack.c.b16 %v4907, %v4899
  %v7236 = vpack.c.b16 %v4908, %v4900
  %v7237 = vpack.c.b16 %v4909, %v4901
  %v7238 = vpack.c.b16 %v4910, %v4902
  %v7239 = vpack.c.b16 %v4911, %v4903
  %v7240 = vpack.c.b16 %v4912, %v4904
  %v7241 = vpack.c.b16 %v4913, %v4905
  %v7242 = vpack.c.b16 %v4914, %v4906
  %v7243 = vpack.c.b16 %v4923, %v4915
  %v7244 = vpack.c.b16 %v4924, %v4916
  %v7245 = vpack.c.b16 %v4925, %v4917
  %v7246 = vpack.c.b16 %v4926, %v4918
  %v7247 = vpack.c.b16 %v4927, %v4919
  %v7248 = vpack.c.b16 %v4928, %v4920
  %v7249 = vpack.c.b16 %v4929, %v4921
  %v7250 = vpack.c.b16 %v4930, %v4922
  %v7251 = vpack.c.b16 %v4939, %v4931
  %v7252 = vpack.c.b16 %v4940, %v4932
  %v7253 = vpack.c.b16 %v4941, %v4933
  %v7254 = vpack.c.b16 %v4942, %v4934
  %v7255 = vpack.c.b16 %v4943, %v4935
  %v7256 = vpack.c.b16 %v4944, %v4936
  %v7257 = vpack.c.b16 %v4945, %v4937
  %v7258 = vpack.c.b16 %v4946, %v4938
  %v7259 = vpack.c.b16 %v4955, %v4947
  %v7260 = vpack.c.b16 %v4956, %v4948
  %v7261 = vpack.c.b16 %v4957, %v4949
  %v7262 = vpack.c.b16 %v4958, %v4950
  %v7263 = vpack.c.b16 %v4959, %v4951
  %v7264 = vpack.c.b16 %v4960, %v4952
  %v7265 = vpack.c.b16 %v4961, %v4953
  %v7266 = vpack.c.b16 %v4962, %v4954
  %v7267 = vpack.c.b16 %v4971, %v4963
  %v7268 = vpack.c.b16 %v4972, %v4964
  %v7269 = vpack.c.b16 %v4973, %v4965
  %v7270 = vpack.c.b16 %v4974, %v4966
  %v7271 = vpack.c.b16 %v4975, %v4967
  %v7272 = vpack.c.b16 %v4976, %v4968
  %v7273 = vpack.c.b16 %v4977, %v4969
  %v7274 = vpack.c.b16 %v4978, %v4970
  %v7275 = vpack.c.b16 %v4987, %v4979
  %v7276 = vpack.c.b16 %v4988, %v4980
  %v7277 = vpack.c.b16 %v4989, %v4981
  %v7278 = vpack.c.b16 %v4990, %v4982
  %v7279 = vpack.c.b16 %v4991, %v4983
  %v7280 = vpack.c.b16 %v4992, %v4984
  %v7281 = vpack.c.b16 %v4993, %v4985
  %v7282 = vpack.c.b16 %v4994, %v4986
  %v7283 = vpack.c.b16 %v5003, %v4995
  %v7284 = vpack.c.b16 %v5004, %v4996
  %v7285 = vpack.c.b16 %v5005, %v4997
  %v7286 = vpack.c.b16 %v5006, %v4998
  %v7287 = vpack.c.b16 %v5007, %v4999
  %v7288 = vpack.c.b16 %v5008, %v5000
  %v7289 = vpack.c.b16 %v5009, %v5001
  %v7290 = vpack.c.b16 %v5010, %v5002
  %v7291 = vpack.c.b16 %v5019, %v5011
  %v7292 = vpack.c.b16 %v5020, %v5012
  %v7293 = vpack.c.b16 %v5021, %v5013
  %v7294 = vpack.c.b16 %v5022, %v5014
  %v7295 = vpack.c.b16 %v5023, %v5015
  %v7296 = vpack.c.b16 %v5024, %v5016
  %v7297 = vpack.c.b16 %v5025, %v5017
  %v7298 = vpack.c.b16 %v5026, %v5018
  %v7299 = vpack.c.b16 %v5035, %v5027
  %v7300 = vpack.c.b16 %v5036, %v5028
  %v7301 = vpack.c.b16 %v5037, %v5029
  %v7302 = vpack.c.b16 %v5038, %v5030
  %v7303 = vpack.c.b16 %v5039, %v5031
  %v7304 = vpack.c.b16 %v5040, %v5032
  %v7305 = vpack.c.b16 %v5041, %v5033
  %v7306 = vpack.c.b16 %v5042, %v5034
  %v7307 = vpack.c.b16 %v5051, %v5043
  %v7308 = vpack.c.b16 %v5052, %v5044
  %v7309 = vpack.c.b16 %v5053, %v5045
  %v7310 = vpack.c.b16 %v5054, %v5046
  %v7311 = vpack.c.b16 %v5055, %v5047
  %v7312 = vpack.c.b16 %v5056, %v5048
  %v7313 = vpack.c.b16 %v5057, %v5049
  %v7314 = vpack.c.b16 %v5058, %v5050
  %v7315 = vpack.c.b16 %v5067, %v5059
  %v7316 = vpack.c.b16 %v5068, %v5060
  %v7317 = vpack.c.b16 %v5069, %v5061
  %v7318 = vpack.c.b16 %v5070, %v5062
  %v7319 = vpack.c.b16 %v5071, %v5063
  %v7320 = vpack.c.b16 %v5072, %v5064
  %v7321 = vpack.c.b16 %v5073, %v5065
  %v7322 = vpack.c.b16 %v5074, %v5066
  %v7323 = vpack.c.b16 %v5083, %v5075
  %v7324 = vpack.c.b16 %v5084, %v5076
  %v7325 = vpack.c.b16 %v5085, %v5077
  %v7326 = vpack.c.b16 %v5086, %v5078
  %v7327 = vpack.c.b16 %v5087, %v5079
  %v7328 = vpack.c.b16 %v5088, %v5080
  %v7329 = vpack.c.b16 %v5089, %v5081
  %v7330 = vpack.c.b16 %v5090, %v5082
  %v7331 = vpack.c.b16 %v5099, %v5091
  %v7332 = vpack.c.b16 %v5100, %v5092
  %v7333 = vpack.c.b16 %v5101, %v5093
  %v7334 = vpack.c.b16 %v5102, %v5094
  %v7335 = vpack.c.b16 %v5103, %v5095
  %v7336 = vpack.c.b16 %v5104, %v5096
  %v7337 = vpack.c.b16 %v5105, %v5097
  %v7338 = vpack.c.b16 %v5106, %v5098
  %v7339 = vpack.c.b16 %v5115, %v5107
  %v7340 = vpack.c.b16 %v5116, %v5108
  %v7341 = vpack.c.b16 %v5117, %v5109
  %v7342 = vpack.c.b16 %v5118, %v5110
  %v7343 = vpack.c.b16 %v5119, %v5111
  %v7344 = vpack.c.b16 %v5120, %v5112
  %v7345 = vpack.c.b16 %v5121, %v5113
  %v7346 = vpack.c.b16 %v5122, %v5114
  %v7347 = vpack.c.b16 %v5131, %v5123
  %v7348 = vpack.c.b16 %v5132, %v5124
  %v7349 = vpack.c.b16 %v5133, %v5125
  %v7350 = vpack.c.b16 %v5134, %v5126
  %v7351 = vpack.c.b16 %v5135, %v5127
  %v7352 = vpack.c.b16 %v5136, %v5128
  %v7353 = vpack.c.b16 %v5137, %v5129
  %v7354 = vpack.c.b16 %v5138, %v5130
  %v7355 = vpack.c.b16 %v5147, %v5139
  %v7356 = vpack.c.b16 %v5148, %v5140
  %v7357 = vpack.c.b16 %v5149, %v5141
  %v7358 = vpack.c.b16 %v5150, %v5142
  %v7359 = vpack.c.b16 %v5151, %v5143
  %v7360 = vpack.c.b16 %v5152, %v5144
  %v7361 = vpack.c.b16 %v5153, %v5145
  %v7362 = vpack.c.b16 %v5154, %v5146
  %v7363 = vpack.c.b16 %v5163, %v5155
  %v7364 = vpack.c.b16 %v5164, %v5156
  %v7365 = vpack.c.b16 %v5165, %v5157
  %v7366 = vpack.c.b16 %v5166, %v5158
  %v7367 = vpack.c.b16 %v5167, %v5159
  %v7368 = vpack.c.b16 %v5168, %v5160
  %v7369 = vpack.c.b16 %v5169, %v5161
  %v7370 = vpack.c.b16 %v5170, %v5162
  %v7371 = vpack.c.b16 %v5179, %v5171
  %v7372 = vpack.c.b16 %v5180, %v5172
  %v7373 = vpack.c.b16 %v5181, %v5173
  %v7374 = vpack.c.b16 %v5182, %v5174
  %v7375 = vpack.c.b16 %v5183, %v5175
  %v7376 = vpack.c.b16 %v5184, %v5176
  %v7377 = vpack.c.b16 %v5185, %v5177
  %v7378 = vpack.c.b16 %v5186, %v5178
  %v7379 = vpack.c.b16 %v5195, %v5187
  %v7380 = vpack.c.b16 %v5196, %v5188
  %v7381 = vpack.c.b16 %v5197, %v5189
  %v7382 = vpack.c.b16 %v5198, %v5190
  %v7383 = vpack.c.b16 %v5199, %v5191
  %v7384 = vpack.c.b16 %v5200, %v5192
  %v7385 = vpack.c.b16 %v5201, %v5193
  %v7386 = vpack.c.b16 %v5202, %v5194
  %v7387 = vpack.c.b16 %v5211, %v5203
  %v7388 = vpack.c.b16 %v5212, %v5204
  %v7389 = vpack.c.b16 %v5213, %v5205
  %v7390 = vpack.c.b16 %v5214, %v5206
  %v7391 = vpack.c.b16 %v5215, %v5207
  %v7392 = vpack.c.b16 %v5216, %v5208
  %v7393 = vpack.c.b16 %v5217, %v5209
  %v7394 = vpack.c.b16 %v5218, %v5210
  %v7395 = vpack.c.b16 %v5227, %v5219
  %v7396 = vpack.c.b16 %v5228, %v5220
  %v7397 = vpack.c.b16 %v5229, %v5221
  %v7398 = vpack.c.b16 %v5230, %v5222
  %v7399 = vpack.c.b16 %v5231, %v5223
  %v7400 = vpack.c.b16 %v5232, %v5224
  %v7401 = vpack.c.b16 %v5233, %v5225
  %v7402 = vpack.c.b16 %v5234, %v5226
  %v7403 = vpack.c.b16 %v5243, %v5235
  %v7404 = vpack.c.b16 %v5244, %v5236
  %v7405 = vpack.c.b16 %v5245, %v5237
  %v7406 = vpack.c.b16 %v5246, %v5238
  %v7407 = vpack.c.b16 %v5247, %v5239
  %v7408 = vpack.c.b16 %v5248, %v5240
  %v7409 = vpack.c.b16 %v5249, %v5241
  %v7410 = vpack.c.b16 %v5250, %v5242
  %v7411 = vpack.c.b16 %v5259, %v5251
  %v7412 = vpack.c.b16 %v5260, %v5252
  %v7413 = vpack.c.b16 %v5261, %v5253
  %v7414 = vpack.c.b16 %v5262, %v5254
  %v7415 = vpack.c.b16 %v5263, %v5255
  %v7416 = vpack.c.b16 %v5264, %v5256
  %v7417 = vpack.c.b16 %v5265, %v5257
  %v7418 = vpack.c.b16 %v5266, %v5258
  %v7419 = vpack.c.b16 %v5275, %v5267
  %v7420 = vpack.c.b16 %v5276, %v5268
  %v7421 = vpack.c.b16 %v5277, %v5269
  %v7422 = vpack.c.b16 %v5278, %v5270
  %v7423 = vpack.c.b16 %v5279, %v5271
  %v7424 = vpack.c.b16 %v5280, %v5272
  %v7425 = vpack.c.b16 %v5281, %v5273
  %v7426 = vpack.c.b16 %v5282, %v5274
  %v7427 = vpack.c.b16 %v5291, %v5283
  %v7428 = vpack.c.b16 %v5292, %v5284
  %v7429 = vpack.c.b16 %v5293, %v5285
  %v7430 = vpack.c.b16 %v5294, %v5286
  %v7431 = vpack.c.b16 %v5295, %v5287
  %v7432 = vpack.c.b16 %v5296, %v5288
  %v7433 = vpack.c.b16 %v5297, %v5289
  %v7434 = vpack.c.b16 %v5298, %v5290
  %v7435 = vpack.c.b16 %v5307, %v5299
  %v7436 = vpack.c.b16 %v5308, %v5300
  %v7437 = vpack.c.b16 %v5309, %v5301
  %v7438 = vpack.c.b16 %v5310, %v5302
  %v7439 = vpack.c.b16 %v5311, %v5303
  %v7440 = vpack.c.b16 %v5312, %v5304
  %v7441 = vpack.c.b16 %v5313, %v5305
  %v7442 = vpack.c.b16 %v5314, %v5306
  %v7443 = vpack.c.b16 %v5323, %v5315
  %v7444 = vpack.c.b16 %v5324, %v5316
  %v7445 = vpack.c.b16 %v5325, %v5317
  %v7446 = vpack.c.b16 %v5326, %v5318
  %v7447 = vpack.c.b16 %v5327, %v5319
  %v7448 = vpack.c.b16 %v5328, %v5320
  %v7449 = vpack.c.b16 %v5329, %v5321
  %v7450 = vpack.c.b16 %v5330, %v5322
  %v7451 = vpack.c.b16 %v5339, %v5331
  %v7452 = vpack.c.b16 %v5340, %v5332
  %v7453 = vpack.c.b16 %v5341, %v5333
  %v7454 = vpack.c.b16 %v5342, %v5334
  %v7455 = vpack.c.b16 %v5343, %v5335
  %v7456 = vpack.c.b16 %v5344, %v5336
  %v7457 = vpack.c.b16 %v5345, %v5337
  %v7458 = vpack.c.b16 %v5346, %v5338
  %v7459 = vpack.c.b16 %v5355, %v5347
  %v7460 = vpack.c.b16 %v5356, %v5348
  %v7461 = vpack.c.b16 %v5357, %v5349
  %v7462 = vpack.c.b16 %v5358, %v5350
  %v7463 = vpack.c.b16 %v5359, %v5351
  %v7464 = vpack.c.b16 %v5360, %v5352
  %v7465 = vpack.c.b16 %v5361, %v5353
  %v7466 = vpack.c.b16 %v5362, %v5354
  %v7467 = vpack.c.b16 %v5371, %v5363
  %v7468 = vpack.c.b16 %v5372, %v5364
  %v7469 = vpack.c.b16 %v5373, %v5365
  %v7470 = vpack.c.b16 %v5374, %v5366
  %v7471 = vpack.c.b16 %v5375, %v5367
  %v7472 = vpack.c.b16 %v5376, %v5368
  %v7473 = vpack.c.b16 %v5377, %v5369
  %v7474 = vpack.c.b16 %v5378, %v5370
  %v7475 = vpack.c.b16 %v5387, %v5379
  %v7476 = vpack.c.b16 %v5388, %v5380
  %v7477 = vpack.c.b16 %v5389, %v5381
  %v7478 = vpack.c.b16 %v5390, %v5382
  %v7479 = vpack.c.b16 %v5391, %v5383
  %v7480 = vpack.c.b16 %v5392, %v5384
  %v7481 = vpack.c.b16 %v5393, %v5385
  %v7482 = vpack.c.b16 %v5394, %v5386
  %v7483 = vpack.c.b16 %v5403, %v5395
  %v7484 = vpack.c.b16 %v5404, %v5396
  %v7485 = vpack.c.b16 %v5405, %v5397
  %v7486 = vpack.c.b16 %v5406, %v5398
  %v7487 = vpack.c.b16 %v5407, %v5399
  %v7488 = vpack.c.b16 %v5408, %v5400
  %v7489 = vpack.c.b16 %v5409, %v5401
  %v7490 = vpack.c.b16 %v5410, %v5402
  %v7491 = vpack.c.b16 %v5419, %v5411
  %v7492 = vpack.c.b16 %v5420, %v5412
  %v7493 = vpack.c.b16 %v5421, %v5413
  %v7494 = vpack.c.b16 %v5422, %v5414
  %v7495 = vpack.c.b16 %v5423, %v5415
  %v7496 = vpack.c.b16 %v5424, %v5416
  %v7497 = vpack.c.b16 %v5425, %v5417
  %v7498 = vpack.c.b16 %v5426, %v5418
  %v7499 = vpack.c.b16 %v5435, %v5427
  %v7500 = vpack.c.b16 %v5436, %v5428
  %v7501 = vpack.c.b16 %v5437, %v5429
  %v7502 = vpack.c.b16 %v5438, %v5430
  %v7503 = vpack.c.b16 %v5439, %v5431
  %v7504 = vpack.c.b16 %v5440, %v5432
  %v7505 = vpack.c.b16 %v5441, %v5433
  %v7506 = vpack.c.b16 %v5442, %v5434
  %v7507 = vpack.c.b16 %v5451, %v5443
  %v7508 = vpack.c.b16 %v5452, %v5444
  %v7509 = vpack.c.b16 %v5453, %v5445
  %v7510 = vpack.c.b16 %v5454, %v5446
  %v7511 = vpack.c.b16 %v5455, %v5447
  %v7512 = vpack.c.b16 %v5456, %v5448
  %v7513 = vpack.c.b16 %v5457, %v5449
  %v7514 = vpack.c.b16 %v5458, %v5450
  %v7515 = vpack.c.b16 %v5467, %v5459
  %v7516 = vpack.c.b16 %v5468, %v5460
  %v7517 = vpack.c.b16 %v5469, %v5461
  %v7518 = vpack.c.b16 %v5470, %v5462
  %v7519 = vpack.c.b16 %v5471, %v5463
  %v7520 = vpack.c.b16 %v5472, %v5464
  %v7521 = vpack.c.b16 %v5473, %v5465
  %v7522 = vpack.c.b16 %v5474, %v5466
  %v7523 = vpack.c.b16 %v5483, %v5475
  %v7524 = vpack.c.b16 %v5484, %v5476
  %v7525 = vpack.c.b16 %v5485, %v5477
  %v7526 = vpack.c.b16 %v5486, %v5478
  %v7527 = vpack.c.b16 %v5487, %v5479
  %v7528 = vpack.c.b16 %v5488, %v5480
  %v7529 = vpack.c.b16 %v5489, %v5481
  %v7530 = vpack.c.b16 %v5490, %v5482
  %v7531 = vpack.c.b16 %v5499, %v5491
  %v7532 = vpack.c.b16 %v5500, %v5492
  %v7533 = vpack.c.b16 %v5501, %v5493
  %v7534 = vpack.c.b16 %v5502, %v5494
  %v7535 = vpack.c.b16 %v5503, %v5495
  %v7536 = vpack.c.b16 %v5504, %v5496
  %v7537 = vpack.c.b16 %v5505, %v5497
  %v7538 = vpack.c.b16 %v5506, %v5498
  %v7539 = vpack.c.b16 %v5515, %v5507
  %v7540 = vpack.c.b16 %v5516, %v5508
  %v7541 = vpack.c.b16 %v5517, %v5509
  %v7542 = vpack.c.b16 %v5518, %v5510
  %v7543 = vpack.c.b16 %v5519, %v5511
  %v7544 = vpack.c.b16 %v5520, %v5512
  %v7545 = vpack.c.b16 %v5521, %v5513
  %v7546 = vpack.c.b16 %v5522, %v5514
  %v7547 = vpack.c.b16 %v5531, %v5523
  %v7548 = vpack.c.b16 %v5532, %v5524
  %v7549 = vpack.c.b16 %v5533, %v5525
  %v7550 = vpack.c.b16 %v5534, %v5526
  %v7551 = vpack.c.b16 %v5535, %v5527
  %v7552 = vpack.c.b16 %v5536, %v5528
  %v7553 = vpack.c.b16 %v5537, %v5529
  %v7554 = vpack.c.b16 %v5538, %v5530
  %v7555 = vpack.c.b16 %v5547, %v5539
  %v7556 = vpack.c.b16 %v5548, %v5540
  %v7557 = vpack.c.b16 %v5549, %v5541
  %v7558 = vpack.c.b16 %v5550, %v5542
  %v7559 = vpack.c.b16 %v5551, %v5543
  %v7560 = vpack.c.b16 %v5552, %v5544
  %v7561 = vpack.c.b16 %v5553, %v5545
  %v7562 = vpack.c.b16 %v5554, %v5546
  %v7563 = vpack.c.b16 %v5563, %v5555
  %v7564 = vpack.c.b16 %v5564, %v5556
  %v7565 = vpack.c.b16 %v5565, %v5557
  %v7566 = vpack.c.b16 %v5566, %v5558
  %v7567 = vpack.c.b16 %v5567, %v5559
  %v7568 = vpack.c.b16 %v5568, %v5560
  %v7569 = vpack.c.b16 %v5569, %v5561
  %v7570 = vpack.c.b16 %v5570, %v5562
  %v7571 = vpack.c.b16 %v5579, %v5571
  %v7572 = vpack.c.b16 %v5580, %v5572
  %v7573 = vpack.c.b16 %v5581, %v5573
  %v7574 = vpack.c.b16 %v5582, %v5574
  %v7575 = vpack.c.b16 %v5583, %v5575
  %v7576 = vpack.c.b16 %v5584, %v5576
  %v7577 = vpack.c.b16 %v5585, %v5577
  %v7578 = vpack.c.b16 %v5586, %v5578
  %v7579 = vpack.c.b16 %v5595, %v5587
  %v7580 = vpack.c.b16 %v5596, %v5588
  %v7581 = vpack.c.b16 %v5597, %v5589
  %v7582 = vpack.c.b16 %v5598, %v5590
  %v7583 = vpack.c.b16 %v5599, %v5591
  %v7584 = vpack.c.b16 %v5600, %v5592
  %v7585 = vpack.c.b16 %v5601, %v5593
  %v7586 = vpack.c.b16 %v5602, %v5594
  %v7587 = vpack.c.b16 %v5611, %v5603
  %v7588 = vpack.c.b16 %v5612, %v5604
  %v7589 = vpack.c.b16 %v5613, %v5605
  %v7590 = vpack.c.b16 %v5614, %v5606
  %v7591 = vpack.c.b16 %v5615, %v5607
  %v7592 = vpack.c.b16 %v5616, %v5608
  %v7593 = vpack.c.b16 %v5617, %v5609
  %v7594 = vpack.c.b16 %v5618, %v5610
  %v7595 = vpack.c.b16 %v5627, %v5619
  %v7596 = vpack.c.b16 %v5628, %v5620
  %v7597 = vpack.c.b16 %v5629, %v5621
  %v7598 = vpack.c.b16 %v5630, %v5622
  %v7599 = vpack.c.b16 %v5631, %v5623
  %v7600 = vpack.c.b16 %v5632, %v5624
  %v7601 = vpack.c.b16 %v5633, %v5625
  %v7602 = vpack.c.b16 %v5634, %v5626
  %v7603 = vpack.c.b16 %v5643, %v5635
  %v7604 = vpack.c.b16 %v5644, %v5636
  %v7605 = vpack.c.b16 %v5645, %v5637
  %v7606 = vpack.c.b16 %v5646, %v5638
  %v7607 = vpack.c.b16 %v5647, %v5639
  %v7608 = vpack.c.b16 %v5648, %v5640
  %v7609 = vpack.c.b16 %v5649, %v5641
  %v7610 = vpack.c.b16 %v5650, %v5642
  %v7611 = vpack.c.b16 %v5659, %v5651
  %v7612 = vpack.c.b16 %v5660, %v5652
  %v7613 = vpack.c.b16 %v5661, %v5653
  %v7614 = vpack.c.b16 %v5662, %v5654
  %v7615 = vpack.c.b16 %v5663, %v5655
  %v7616 = vpack.c.b16 %v5664, %v5656
  %v7617 = vpack.c.b16 %v5665, %v5657
  %v7618 = vpack.c.b16 %v5666, %v5658
  %v7619 = vpack.c.b16 %v5675, %v5667
  %v7620 = vpack.c.b16 %v5676, %v5668
  %v7621 = vpack.c.b16 %v5677, %v5669
  %v7622 = vpack.c.b16 %v5678, %v5670
  %v7623 = vpack.c.b16 %v5679, %v5671
  %v7624 = vpack.c.b16 %v5680, %v5672
  %v7625 = vpack.c.b16 %v5681, %v5673
  %v7626 = vpack.c.b16 %v5682, %v5674
  %v7627 = vpack.c.b16 %v5691, %v5683
  %v7628 = vpack.c.b16 %v5692, %v5684
  %v7629 = vpack.c.b16 %v5693, %v5685
  %v7630 = vpack.c.b16 %v5694, %v5686
  %v7631 = vpack.c.b16 %v5695, %v5687
  %v7632 = vpack.c.b16 %v5696, %v5688
  %v7633 = vpack.c.b16 %v5697, %v5689
  %v7634 = vpack.c.b16 %v5698, %v5690
  %v7635 = vpack.c.b16 %v5707, %v5699
  %v7636 = vpack.c.b16 %v5708, %v5700
  %v7637 = vpack.c.b16 %v5709, %v5701
  %v7638 = vpack.c.b16 %v5710, %v5702
  %v7639 = vpack.c.b16 %v5711, %v5703
  %v7640 = vpack.c.b16 %v5712, %v5704
  %v7641 = vpack.c.b16 %v5713, %v5705
  %v7642 = vpack.c.b16 %v5714, %v5706
  %v7643 = vpack.c.b16 %v5723, %v5715
  %v7644 = vpack.c.b16 %v5724, %v5716
  %v7645 = vpack.c.b16 %v5725, %v5717
  %v7646 = vpack.c.b16 %v5726, %v5718
  %v7647 = vpack.c.b16 %v5727, %v5719
  %v7648 = vpack.c.b16 %v5728, %v5720
  %v7649 = vpack.c.b16 %v5729, %v5721
  %v7650 = vpack.c.b16 %v5730, %v5722
  %v7651 = vpack.c.b16 %v5739, %v5731
  %v7652 = vpack.c.b16 %v5740, %v5732
  %v7653 = vpack.c.b16 %v5741, %v5733
  %v7654 = vpack.c.b16 %v5742, %v5734
  %v7655 = vpack.c.b16 %v5743, %v5735
  %v7656 = vpack.c.b16 %v5744, %v5736
  %v7657 = vpack.c.b16 %v5745, %v5737
  %v7658 = vpack.c.b16 %v5746, %v5738
  %v7659 = vpack.c.b16 %v5755, %v5747
  %v7660 = vpack.c.b16 %v5756, %v5748
  %v7661 = vpack.c.b16 %v5757, %v5749
  %v7662 = vpack.c.b16 %v5758, %v5750
  %v7663 = vpack.c.b16 %v5759, %v5751
  %v7664 = vpack.c.b16 %v5760, %v5752
  %v7665 = vpack.c.b16 %v5761, %v5753
  %v7666 = vpack.c.b16 %v5762, %v5754
  %v7667 = vpack.c.b16 %v5771, %v5763
  %v7668 = vpack.c.b16 %v5772, %v5764
  %v7669 = vpack.c.b16 %v5773, %v5765
  %v7670 = vpack.c.b16 %v5774, %v5766
  %v7671 = vpack.c.b16 %v5775, %v5767
  %v7672 = vpack.c.b16 %v5776, %v5768
  %v7673 = vpack.c.b16 %v5777, %v5769
  %v7674 = vpack.c.b16 %v5778, %v5770
  %v7675 = vpack.c.b16 %v5787, %v5779
  %v7676 = vpack.c.b16 %v5788, %v5780
  %v7677 = vpack.c.b16 %v5789, %v5781
  %v7678 = vpack.c.b16 %v5790, %v5782
  %v7679 = vpack.c.b16 %v5791, %v5783
  %v7680 = vpack.c.b16 %v5792, %v5784
  %v7681 = vpack.c.b16 %v5793, %v5785
  %v7682 = vpack.c.b16 %v5794, %v5786
  %v7683 = vpack.c.b16 %v5803, %v5795
  %v7684 = vpack.c.b16 %v5804, %v5796
  %v7685 = vpack.c.b16 %v5805, %v5797
  %v7686 = vpack.c.b16 %v5806, %v5798
  %v7687 = vpack.c.b16 %v5807, %v5799
  %v7688 = vpack.c.b16 %v5808, %v5800
  %v7689 = vpack.c.b16 %v5809, %v5801
  %v7690 = vpack.c.b16 %v5810, %v5802
  %v7691 = vpack.c.b16 %v5819, %v5811
  %v7692 = vpack.c.b16 %v5820, %v5812
  %v7693 = vpack.c.b16 %v5821, %v5813
  %v7694 = vpack.c.b16 %v5822, %v5814
  %v7695 = vpack.c.b16 %v5823, %v5815
  %v7696 = vpack.c.b16 %v5824, %v5816
  %v7697 = vpack.c.b16 %v5825, %v5817
  %v7698 = vpack.c.b16 %v5826, %v5818
  %v7699 = vpack.c.b16 %v5835, %v5827
  %v7700 = vpack.c.b16 %v5836, %v5828
  %v7701 = vpack.c.b16 %v5837, %v5829
  %v7702 = vpack.c.b16 %v5838, %v5830
  %v7703 = vpack.c.b16 %v5839, %v5831
  %v7704 = vpack.c.b16 %v5840, %v5832
  %v7705 = vpack.c.b16 %v5841, %v5833
  %v7706 = vpack.c.b16 %v5842, %v5834
  %v7707 = vpack.c.b16 %v5851, %v5843
  %v7708 = vpack.c.b16 %v5852, %v5844
  %v7709 = vpack.c.b16 %v5853, %v5845
  %v7710 = vpack.c.b16 %v5854, %v5846
  %v7711 = vpack.c.b16 %v5855, %v5847
  %v7712 = vpack.c.b16 %v5856, %v5848
  %v7713 = vpack.c.b16 %v5857, %v5849
  %v7714 = vpack.c.b16 %v5858, %v5850
  %v7715 = vpack.c.b16 %v5867, %v5859
  %v7716 = vpack.c.b16 %v5868, %v5860
  %v7717 = vpack.c.b16 %v5869, %v5861
  %v7718 = vpack.c.b16 %v5870, %v5862
  %v7719 = vpack.c.b16 %v5871, %v5863
  %v7720 = vpack.c.b16 %v5872, %v5864
  %v7721 = vpack.c.b16 %v5873, %v5865
  %v7722 = vpack.c.b16 %v5874, %v5866
  %v7723 = vpack.c.b16 %v5883, %v5875
  %v7724 = vpack.c.b16 %v5884, %v5876
  %v7725 = vpack.c.b16 %v5885, %v5877
  %v7726 = vpack.c.b16 %v5886, %v5878
  %v7727 = vpack.c.b16 %v5887, %v5879
  %v7728 = vpack.c.b16 %v5888, %v5880
  %v7729 = vpack.c.b16 %v5889, %v5881
  %v7730 = vpack.c.b16 %v5890, %v5882
  %v7731 = vpack.c.b16 %v5899, %v5891
  %v7732 = vpack.c.b16 %v5900, %v5892
  %v7733 = vpack.c.b16 %v5901, %v5893
  %v7734 = vpack.c.b16 %v5902, %v5894
  %v7735 = vpack.c.b16 %v5903, %v5895
  %v7736 = vpack.c.b16 %v5904, %v5896
  %v7737 = vpack.c.b16 %v5905, %v5897
  %v7738 = vpack.c.b16 %v5906, %v5898
  %v7739 = vpack.c.b16 %v5915, %v5907
  %v7740 = vpack.c.b16 %v5916, %v5908
  %v7741 = vpack.c.b16 %v5917, %v5909
  %v7742 = vpack.c.b16 %v5918, %v5910
  %v7743 = vpack.c.b16 %v5919, %v5911
  %v7744 = vpack.c.b16 %v5920, %v5912
  %v7745 = vpack.c.b16 %v5921, %v5913
  %v7746 = vpack.c.b16 %v5922, %v5914
  %v7747 = vpack.c.b16 %v5931, %v5923
  %v7748 = vpack.c.b16 %v5932, %v5924
  %v7749 = vpack.c.b16 %v5933, %v5925
  %v7750 = vpack.c.b16 %v5934, %v5926
  %v7751 = vpack.c.b16 %v5935, %v5927
  %v7752 = vpack.c.b16 %v5936, %v5928
  %v7753 = vpack.c.b16 %v5937, %v5929
  %v7754 = vpack.c.b16 %v5938, %v5930
  %v7755 = vpack.c.b16 %v5947, %v5939
  %v7756 = vpack.c.b16 %v5948, %v5940
  %v7757 = vpack.c.b16 %v5949, %v5941
  %v7758 = vpack.c.b16 %v5950, %v5942
  %v7759 = vpack.c.b16 %v5951, %v5943
  %v7760 = vpack.c.b16 %v5952, %v5944
  %v7761 = vpack.c.b16 %v5953, %v5945
  %v7762 = vpack.c.b16 %v5954, %v5946
  %v7763 = vpack.c.b16 %v5963, %v5955
  %v7764 = vpack.c.b16 %v5964, %v5956
  %v7765 = vpack.c.b16 %v5965, %v5957
  %v7766 = vpack.c.b16 %v5966, %v5958
  %v7767 = vpack.c.b16 %v5967, %v5959
  %v7768 = vpack.c.b16 %v5968, %v5960
  %v7769 = vpack.c.b16 %v5969, %v5961
  %v7770 = vpack.c.b16 %v5970, %v5962
  %v7771 = vpack.c.b16 %v5979, %v5971
  %v7772 = vpack.c.b16 %v5980, %v5972
  %v7773 = vpack.c.b16 %v5981, %v5973
  %v7774 = vpack.c.b16 %v5982, %v5974
  %v7775 = vpack.c.b16 %v5983, %v5975
  %v7776 = vpack.c.b16 %v5984, %v5976
  %v7777 = vpack.c.b16 %v5985, %v5977
  %v7778 = vpack.c.b16 %v5986, %v5978
  %v7779 = vpack.c.b16 %v5995, %v5987
  %v7780 = vpack.c.b16 %v5996, %v5988
  %v7781 = vpack.c.b16 %v5997, %v5989
  %v7782 = vpack.c.b16 %v5998, %v5990
  %v7783 = vpack.c.b16 %v5999, %v5991
  %v7784 = vpack.c.b16 %v6000, %v5992
  %v7785 = vpack.c.b16 %v6001, %v5993
  %v7786 = vpack.c.b16 %v6002, %v5994
  %v7787 = vpack.c.b16 %v6011, %v6003
  %v7788 = vpack.c.b16 %v6012, %v6004
  %v7789 = vpack.c.b16 %v6013, %v6005
  %v7790 = vpack.c.b16 %v6014, %v6006
  %v7791 = vpack.c.b16 %v6015, %v6007
  %v7792 = vpack.c.b16 %v6016, %v6008
  %v7793 = vpack.c.b16 %v6017, %v6009
  %v7794 = vpack.c.b16 %v6018, %v6010
  %v7795 = vpack.c.b16 %v6027, %v6019
  %v7796 = vpack.c.b16 %v6028, %v6020
  %v7797 = vpack.c.b16 %v6029, %v6021
  %v7798 = vpack.c.b16 %v6030, %v6022
  %v7799 = vpack.c.b16 %v6031, %v6023
  %v7800 = vpack.c.b16 %v6032, %v6024
  %v7801 = vpack.c.b16 %v6033, %v6025
  %v7802 = vpack.c.b16 %v6034, %v6026
  %v7803 = vpack.c.b16 %v6043, %v6035
  %v7804 = vpack.c.b16 %v6044, %v6036
  %v7805 = vpack.c.b16 %v6045, %v6037
  %v7806 = vpack.c.b16 %v6046, %v6038
  %v7807 = vpack.c.b16 %v6047, %v6039
  %v7808 = vpack.c.b16 %v6048, %v6040
  %v7809 = vpack.c.b16 %v6049, %v6041
  %v7810 = vpack.c.b16 %v6050, %v6042
  %v7811 = vpack.c.b16 %v6059, %v6051
  %v7812 = vpack.c.b16 %v6060, %v6052
  %v7813 = vpack.c.b16 %v6061, %v6053
  %v7814 = vpack.c.b16 %v6062, %v6054
  %v7815 = vpack.c.b16 %v6063, %v6055
  %v7816 = vpack.c.b16 %v6064, %v6056
  %v7817 = vpack.c.b16 %v6065, %v6057
  %v7818 = vpack.c.b16 %v6066, %v6058
  %v7819 = vpack.c.b16 %v6075, %v6067
  %v7820 = vpack.c.b16 %v6076, %v6068
  %v7821 = vpack.c.b16 %v6077, %v6069
  %v7822 = vpack.c.b16 %v6078, %v6070
  %v7823 = vpack.c.b16 %v6079, %v6071
  %v7824 = vpack.c.b16 %v6080, %v6072
  %v7825 = vpack.c.b16 %v6081, %v6073
  %v7826 = vpack.c.b16 %v6082, %v6074
  %v7827 = vpack.c.b16 %v6091, %v6083
  %v7828 = vpack.c.b16 %v6092, %v6084
  %v7829 = vpack.c.b16 %v6093, %v6085
  %v7830 = vpack.c.b16 %v6094, %v6086
  %v7831 = vpack.c.b16 %v6095, %v6087
  %v7832 = vpack.c.b16 %v6096, %v6088
  %v7833 = vpack.c.b16 %v6097, %v6089
  %v7834 = vpack.c.b16 %v6098, %v6090
  %v7835 = vpack.c.b16 %v6107, %v6099
  %v7836 = vpack.c.b16 %v6108, %v6100
  %v7837 = vpack.c.b16 %v6109, %v6101
  %v7838 = vpack.c.b16 %v6110, %v6102
  %v7839 = vpack.c.b16 %v6111, %v6103
  %v7840 = vpack.c.b16 %v6112, %v6104
  %v7841 = vpack.c.b16 %v6113, %v6105
  %v7842 = vpack.c.b16 %v6114, %v6106
  %v7843 = vpack.c.b16 %v6123, %v6115
  %v7844 = vpack.c.b16 %v6124, %v6116
  %v7845 = vpack.c.b16 %v6125, %v6117
  %v7846 = vpack.c.b16 %v6126, %v6118
  %v7847 = vpack.c.b16 %v6127, %v6119
  %v7848 = vpack.c.b16 %v6128, %v6120
  %v7849 = vpack.c.b16 %v6129, %v6121
  %v7850 = vpack.c.b16 %v6130, %v6122
  %v7851 = vpack.c.b16 %v6139, %v6131
  %v7852 = vpack.c.b16 %v6140, %v6132
  %v7853 = vpack.c.b16 %v6141, %v6133
  %v7854 = vpack.c.b16 %v6142, %v6134
  %v7855 = vpack.c.b16 %v6143, %v6135
  %v7856 = vpack.c.b16 %v6144, %v6136
  %v7857 = vpack.c.b16 %v6145, %v6137
  %v7858 = vpack.c.b16 %v6146, %v6138
  %v7859 = vpack.c.b16 %v6155, %v6147
  %v7860 = vpack.c.b16 %v6156, %v6148
  %v7861 = vpack.c.b16 %v6157, %v6149
  %v7862 = vpack.c.b16 %v6158, %v6150
  %v7863 = vpack.c.b16 %v6159, %v6151
  %v7864 = vpack.c.b16 %v6160, %v6152
  %v7865 = vpack.c.b16 %v6161, %v6153
  %v7866 = vpack.c.b16 %v6162, %v6154
  %v7867 = vpack.c.b16 %v6171, %v6163
  %v7868 = vpack.c.b16 %v6172, %v6164
  %v7869 = vpack.c.b16 %v6173, %v6165
  %v7870 = vpack.c.b16 %v6174, %v6166
  %v7871 = vpack.c.b16 %v6175, %v6167
  %v7872 = vpack.c.b16 %v6176, %v6168
  %v7873 = vpack.c.b16 %v6177, %v6169
  %v7874 = vpack.c.b16 %v6178, %v6170
  %v7875 = vpack.c.b16 %v6187, %v6179
  %v7876 = vpack.c.b16 %v6188, %v6180
  %v7877 = vpack.c.b16 %v6189, %v6181
  %v7878 = vpack.c.b16 %v6190, %v6182
  %v7879 = vpack.c.b16 %v6191, %v6183
  %v7880 = vpack.c.b16 %v6192, %v6184
  %v7881 = vpack.c.b16 %v6193, %v6185
  %v7882 = vpack.c.b16 %v6194, %v6186
  %v7883 = vpack.c.b16 %v6203, %v6195
  %v7884 = vpack.c.b16 %v6204, %v6196
  %v7885 = vpack.c.b16 %v6205, %v6197
  %v7886 = vpack.c.b16 %v6206, %v6198
  %v7887 = vpack.c.b16 %v6207, %v6199
  %v7888 = vpack.c.b16 %v6208, %v6200
  %v7889 = vpack.c.b16 %v6209, %v6201
  %v7890 = vpack.c.b16 %v6210, %v6202
  %v7891 = vpack.c.b16 %v6219, %v6211
  %v7892 = vpack.c.b16 %v6220, %v6212
  %v7893 = vpack.c.b16 %v6221, %v6213
  %v7894 = vpack.c.b16 %v6222, %v6214
  %v7895 = vpack.c.b16 %v6223, %v6215
  %v7896 = vpack.c.b16 %v6224, %v6216
  %v7897 = vpack.c.b16 %v6225, %v6217
  %v7898 = vpack.c.b16 %v6226, %v6218
  %v7899 = vpack.c.b16 %v6235, %v6227
  %v7900 = vpack.c.b16 %v6236, %v6228
  %v7901 = vpack.c.b16 %v6237, %v6229
  %v7902 = vpack.c.b16 %v6238, %v6230
  %v7903 = vpack.c.b16 %v6239, %v6231
  %v7904 = vpack.c.b16 %v6240, %v6232
  %v7905 = vpack.c.b16 %v6241, %v6233
  %v7906 = vpack.c.b16 %v6242, %v6234
  %v7907 = vpack.c.b16 %v6251, %v6243
  %v7908 = vpack.c.b16 %v6252, %v6244
  %v7909 = vpack.c.b16 %v6253, %v6245
  %v7910 = vpack.c.b16 %v6254, %v6246
  %v7911 = vpack.c.b16 %v6255, %v6247
  %v7912 = vpack.c.b16 %v6256, %v6248
  %v7913 = vpack.c.b16 %v6257, %v6249
  %v7914 = vpack.c.b16 %v6258, %v6250
  %v7915 = vpack.c.b16 %v6267, %v6259
  %v7916 = vpack.c.b16 %v6268, %v6260
  %v7917 = vpack.c.b16 %v6269, %v6261
  %v7918 = vpack.c.b16 %v6270, %v6262
  %v7919 = vpack.c.b16 %v6271, %v6263
  %v7920 = vpack.c.b16 %v6272, %v6264
  %v7921 = vpack.c.b16 %v6273, %v6265
  %v7922 = vpack.c.b16 %v6274, %v6266
  %v7923 = vpack.c.b16 %v6283, %v6275
  %v7924 = vpack.c.b16 %v6284, %v6276
  %v7925 = vpack.c.b16 %v6285, %v6277
  %v7926 = vpack.c.b16 %v6286, %v6278
  %v7927 = vpack.c.b16 %v6287, %v6279
  %v7928 = vpack.c.b16 %v6288, %v6280
  %v7929 = vpack.c.b16 %v6289, %v6281
  %v7930 = vpack.c.b16 %v6290, %v6282
  %v7931 = vpack.c.b16 %v6299, %v6291
  %v7932 = vpack.c.b16 %v6300, %v6292
  %v7933 = vpack.c.b16 %v6301, %v6293
  %v7934 = vpack.c.b16 %v6302, %v6294
  %v7935 = vpack.c.b16 %v6303, %v6295
  %v7936 = vpack.c.b16 %v6304, %v6296
  %v7937 = vpack.c.b16 %v6305, %v6297
  %v7938 = vpack.c.b16 %v6306, %v6298
  %v7939 = vpack.c.b16 %v6315, %v6307
  %v7940 = vpack.c.b16 %v6316, %v6308
  %v7941 = vpack.c.b16 %v6317, %v6309
  %v7942 = vpack.c.b16 %v6318, %v6310
  %v7943 = vpack.c.b16 %v6319, %v6311
  %v7944 = vpack.c.b16 %v6320, %v6312
  %v7945 = vpack.c.b16 %v6321, %v6313
  %v7946 = vpack.c.b16 %v6322, %v6314
  %v7947 = vpack.c.b16 %v6331, %v6323
  %v7948 = vpack.c.b16 %v6332, %v6324
  %v7949 = vpack.c.b16 %v6333, %v6325
  %v7950 = vpack.c.b16 %v6334, %v6326
  %v7951 = vpack.c.b16 %v6335, %v6327
  %v7952 = vpack.c.b16 %v6336, %v6328
  %v7953 = vpack.c.b16 %v6337, %v6329
  %v7954 = vpack.c.b16 %v6338, %v6330
  %v7955 = vpack.c.b16 %v6347, %v6339
  %v7956 = vpack.c.b16 %v6348, %v6340
  %v7957 = vpack.c.b16 %v6349, %v6341
  %v7958 = vpack.c.b16 %v6350, %v6342
  %v7959 = vpack.c.b16 %v6351, %v6343
  %v7960 = vpack.c.b16 %v6352, %v6344
  %v7961 = vpack.c.b16 %v6353, %v6345
  %v7962 = vpack.c.b16 %v6354, %v6346
  %v7963 = vpack.c.b16 %v6363, %v6355
  %v7964 = vpack.c.b16 %v6364, %v6356
  %v7965 = vpack.c.b16 %v6365, %v6357
  %v7966 = vpack.c.b16 %v6366, %v6358
  %v7967 = vpack.c.b16 %v6367, %v6359
  %v7968 = vpack.c.b16 %v6368, %v6360
  %v7969 = vpack.c.b16 %v6369, %v6361
  %v7970 = vpack.c.b16 %v6370, %v6362
  %v7971 = vpack.c.b16 %v6379, %v6371
  %v7972 = vpack.c.b16 %v6380, %v6372
  %v7973 = vpack.c.b16 %v6381, %v6373
  %v7974 = vpack.c.b16 %v6382, %v6374
  %v7975 = vpack.c.b16 %v6383, %v6375
  %v7976 = vpack.c.b16 %v6384, %v6376
  %v7977 = vpack.c.b16 %v6385, %v6377
  %v7978 = vpack.c.b16 %v6386, %v6378
  %v7979 = vpack.c.b16 %v6395, %v6387
  %v7980 = vpack.c.b16 %v6396, %v6388
  %v7981 = vpack.c.b16 %v6397, %v6389
  %v7982 = vpack.c.b16 %v6398, %v6390
  %v7983 = vpack.c.b16 %v6399, %v6391
  %v7984 = vpack.c.b16 %v6400, %v6392
  %v7985 = vpack.c.b16 %v6401, %v6393
  %v7986 = vpack.c.b16 %v6402, %v6394
  %v7987 = vpack.c.b16 %v6411, %v6403
  %v7988 = vpack.c.b16 %v6412, %v6404
  %v7989 = vpack.c.b16 %v6413, %v6405
  %v7990 = vpack.c.b16 %v6414, %v6406
  %v7991 = vpack.c.b16 %v6415, %v6407
  %v7992 = vpack.c.b16 %v6416, %v6408
  %v7993 = vpack.c.b16 %v6417, %v6409
  %v7994 = vpack.c.b16 %v6418, %v6410
  %v7995 = vpack.c.b16 %v6427, %v6419
  %v7996 = vpack.c.b16 %v6428, %v6420
  %v7997 = vpack.c.b16 %v6429, %v6421
  %v7998 = vpack.c.b16 %v6430, %v6422
  %v7999 = vpack.c.b16 %v6431, %v6423
  %v8000 = vpack.c.b16 %v6432, %v6424
  %v8001 = vpack.c.b16 %v6433, %v6425
  %v8002 = vpack.c.b16 %v6434, %v6426
  %vm9571 = vcmask 523264
  %v9573 = vsel %vm9571, %v1706, 0
  %9575 = vmatprep.subr.bf16.mxu0 %v6436
  %9576 = vmatpush1.bf16.msra.mxu0 %v6435
  %9577 = vmatprep.subr.bf16.mxu0 %v6444
  %9578 = vmatpush1.bf16.msra.mxu0 %v6443
  %9579 = vmatprep.subr.bf16.mxu0 %v6452
  %9580 = vmatpush1.bf16.msra.mxu0 %v6451
  %9581 = vmatprep.subr.bf16.mxu0 %v6460
  %9582 = vmatpush1.bf16.msra.mxu0 %v6459
  %9583 = vmatprep.subr.bf16.mxu0 %v6468
  %9584 = vmatpush1.bf16.msra.mxu0 %v6467
  %9585 = vmatprep.subr.bf16.mxu0 %v6476
  %9586 = vmatpush1.bf16.msra.mxu0 %v6475
  %9587 = vmatprep.subr.bf16.mxu0 %v6484
  %9588 = vmatpush1.bf16.msra.mxu0 %v6483
  %9589 = vmatprep.subr.bf16.mxu0 %v6492
  %9590 = vmatpush1.bf16.msra.mxu0 %v6491
  %9591 = vmatprep.subr.bf16.mxu0 %v6500
  %9592 = vmatpush1.bf16.msra.mxu0 %v6499
  %9593 = vmatprep.subr.bf16.mxu0 %v6508
  %9594 = vmatpush1.bf16.msra.mxu0 %v6507
  %9595 = vmatprep.subr.bf16.mxu0 %v6516
  %9596 = vmatpush1.bf16.msra.mxu0 %v6515
  %9597 = vmatprep.subr.bf16.mxu0 %v6524
  %9598 = vmatpush1.bf16.msra.mxu0 %v6523
  %9599 = vmatprep.subr.bf16.mxu0 %v6532
  %9600 = vmatpush1.bf16.msra.mxu0 %v6531
  %9601 = vmatprep.subr.bf16.mxu0 %v6540
  %9602 = vmatpush1.bf16.msra.mxu0 %v6539
  %9603 = vmatprep.subr.bf16.mxu0 %v6548
  %9604 = vmatpush1.bf16.msra.mxu0 %v6547
  %9605 = vmatprep.subr.bf16.mxu0 %v6556
  %9606 = vmatpush1.bf16.msra.mxu0 %v6555
  %9607 = vmatprep.mubr.bf16.mxu0 %v1683
  %9608 = vmatmul.mubr.bf16.gmra.mrb[0].mxu0 %v1682
  %v9609 = vpop.f32.mrb[0].mxu0
  %v9610 = vadd.f32 %v1607, %v9609
  %v9611 = vpop.f32.mrb[0].mxu0
  %v9612 = vadd.f32 %v1611, %v9611
  %v9613 = vpop.f32.mrb[0].mxu0
  %v9614 = vpop.f32.mrb[0].mxu0
  %9615 = vdwg.mxu0
  %9616 = vmatprep.subr.bf16.mxu0 %v6564
  %9617 = vmatpush1.bf16.msra.mxu0 %v6563
  %9618 = vmatprep.subr.bf16.mxu0 %v6572
  %9619 = vmatpush1.bf16.msra.mxu0 %v6571
  %9620 = vmatprep.subr.bf16.mxu0 %v6580
  %9621 = vmatpush1.bf16.msra.mxu0 %v6579
  %9622 = vmatprep.subr.bf16.mxu0 %v6588
  %9623 = vmatpush1.bf16.msra.mxu0 %v6587
  %9624 = vmatprep.subr.bf16.mxu0 %v6596
  %9625 = vmatpush1.bf16.msra.mxu0 %v6595
  %9626 = vmatprep.subr.bf16.mxu0 %v6604
  %9627 = vmatpush1.bf16.msra.mxu0 %v6603
  %9628 = vmatprep.subr.bf16.mxu0 %v6612
  %9629 = vmatpush1.bf16.msra.mxu0 %v6611
  %9630 = vmatprep.subr.bf16.mxu0 %v6620
  %9631 = vmatpush1.bf16.msra.mxu0 %v6619
  %9632 = vmatprep.subr.bf16.mxu0 %v6628
  %9633 = vmatpush1.bf16.msra.mxu0 %v6627
  %9634 = vmatprep.subr.bf16.mxu0 %v6636
  %9635 = vmatpush1.bf16.msra.mxu0 %v6635
  %9636 = vmatprep.subr.bf16.mxu0 %v6644
  %9637 = vmatpush1.bf16.msra.mxu0 %v6643
  %9638 = vmatprep.subr.bf16.mxu0 %v6652
  %9639 = vmatpush1.bf16.msra.mxu0 %v6651
  %9640 = vmatprep.subr.bf16.mxu0 %v6660
  %9641 = vmatpush1.bf16.msra.mxu0 %v6659
  %9642 = vmatprep.subr.bf16.mxu0 %v6668
  %9643 = vmatpush1.bf16.msra.mxu0 %v6667
  %9644 = vmatprep.subr.bf16.mxu0 %v6676
  %9645 = vmatpush1.bf16.msra.mxu0 %v6675
  %9646 = vmatprep.subr.bf16.mxu0 %v6684
  %9647 = vmatpush1.bf16.msra.mxu0 %v6683
  %9648 = vmatprep.mubr.bf16.mxu0 %v1685
  %9649 = vmatmul.mubr.bf16.gmra.mrb[0].mxu0 %v1684
  %v9650 = vpop.f32.mrb[0].mxu0
  %v9651 = vadd.f32 %v9610, %v9650
  %v9652 = vpop.f32.mrb[0].mxu0
  %v9653 = vadd.f32 %v9612, %v9652
  %v9654 = vpop.f32.mrb[0].mxu0
  %v9655 = vpop.f32.mrb[0].mxu0
  %9656 = vdwg.mxu0
  %9657 = vmatprep.subr.bf16.mxu0 %v6692
  %9658 = vmatpush1.bf16.msra.mxu0 %v6691
  %9659 = vmatprep.subr.bf16.mxu0 %v6700
  %9660 = vmatpush1.bf16.msra.mxu0 %v6699
  %9661 = vmatprep.subr.bf16.mxu0 %v6708
  %9662 = vmatpush1.bf16.msra.mxu0 %v6707
  %9663 = vmatprep.subr.bf16.mxu0 %v6716
  %9664 = vmatpush1.bf16.msra.mxu0 %v6715
  %9665 = vmatprep.subr.bf16.mxu0 %v6724
  %9666 = vmatpush1.bf16.msra.mxu0 %v6723
  %9667 = vmatprep.subr.bf16.mxu0 %v6732
  %9668 = vmatpush1.bf16.msra.mxu0 %v6731
  %9669 = vmatprep.subr.bf16.mxu0 %v6740
  %9670 = vmatpush1.bf16.msra.mxu0 %v6739
  %9671 = vmatprep.subr.bf16.mxu0 %v6748
  %9672 = vmatpush1.bf16.msra.mxu0 %v6747
  %9673 = vmatprep.subr.bf16.mxu0 %v6756
  %9674 = vmatpush1.bf16.msra.mxu0 %v6755
  %9675 = vmatprep.subr.bf16.mxu0 %v6764
  %9676 = vmatpush1.bf16.msra.mxu0 %v6763
  %9677 = vmatprep.subr.bf16.mxu0 %v6772
  %9678 = vmatpush1.bf16.msra.mxu0 %v6771
  %9679 = vmatprep.subr.bf16.mxu0 %v6780
  %9680 = vmatpush1.bf16.msra.mxu0 %v6779
  %9681 = vmatprep.subr.bf16.mxu0 %v6788
  %9682 = vmatpush1.bf16.msra.mxu0 %v6787
  %9683 = vmatprep.subr.bf16.mxu0 %v6796
  %9684 = vmatpush1.bf16.msra.mxu0 %v6795
  %9685 = vmatprep.subr.bf16.mxu0 %v6804
  %9686 = vmatpush1.bf16.msra.mxu0 %v6803
  %9687 = vmatprep.subr.bf16.mxu0 %v6812
  %9688 = vmatpush1.bf16.msra.mxu0 %v6811
  %9689 = vmatprep.mubr.bf16.mxu0 %v1687
  %9690 = vmatmul.mubr.bf16.gmra.mrb[0].mxu0 %v1686
  %v9691 = vpop.f32.mrb[0].mxu0
  %v9692 = vadd.f32 %v9651, %v9691
  %v9693 = vpop.f32.mrb[0].mxu0
  %v9694 = vadd.f32 %v9653, %v9693
  %v9695 = vpop.f32.mrb[0].mxu0
  %v9696 = vpop.f32.mrb[0].mxu0
  %9697 = vdwg.mxu0
  %9698 = vmatprep.subr.bf16.mxu0 %v6820
  %9699 = vmatpush1.bf16.msra.mxu0 %v6819
  %9700 = vmatprep.subr.bf16.mxu0 %v6828
  %9701 = vmatpush1.bf16.msra.mxu0 %v6827
  %9702 = vmatprep.subr.bf16.mxu0 %v6836
  %9703 = vmatpush1.bf16.msra.mxu0 %v6835
  %9704 = vmatprep.subr.bf16.mxu0 %v6844
  %9705 = vmatpush1.bf16.msra.mxu0 %v6843
  %9706 = vmatprep.subr.bf16.mxu0 %v6852
  %9707 = vmatpush1.bf16.msra.mxu0 %v6851
  %9708 = vmatprep.subr.bf16.mxu0 %v6860
  %9709 = vmatpush1.bf16.msra.mxu0 %v6859
  %9710 = vmatprep.subr.bf16.mxu0 %v6868
  %9711 = vmatpush1.bf16.msra.mxu0 %v6867
  %9712 = vmatprep.subr.bf16.mxu0 %v6876
  %9713 = vmatpush1.bf16.msra.mxu0 %v6875
  %9714 = vmatprep.subr.bf16.mxu0 %v6884
  %9715 = vmatpush1.bf16.msra.mxu0 %v6883
  %9716 = vmatprep.subr.bf16.mxu0 %v6892
  %9717 = vmatpush1.bf16.msra.mxu0 %v6891
  %9718 = vmatprep.subr.bf16.mxu0 %v6900
  %9719 = vmatpush1.bf16.msra.mxu0 %v6899
  %9720 = vmatprep.subr.bf16.mxu0 %v6908
  %9721 = vmatpush1.bf16.msra.mxu0 %v6907
  %9722 = vmatprep.subr.bf16.mxu0 %v6916
  %9723 = vmatpush1.bf16.msra.mxu0 %v6915
  %9724 = vmatprep.subr.bf16.mxu0 %v6924
  %9725 = vmatpush1.bf16.msra.mxu0 %v6923
  %9726 = vmatprep.subr.bf16.mxu0 %v6932
  %9727 = vmatpush1.bf16.msra.mxu0 %v6931
  %9728 = vmatprep.subr.bf16.mxu0 %v6940
  %9729 = vmatpush1.bf16.msra.mxu0 %v6939
  %9730 = vmatprep.mubr.bf16.mxu0 %v1689
  %9731 = vmatmul.mubr.bf16.gmra.mrb[0].mxu0 %v1688
  %v9732 = vpop.f32.mrb[0].mxu0
  %v9733 = vadd.f32 %v9692, %v9732
  %v9734 = vpop.f32.mrb[0].mxu0
  %v9735 = vadd.f32 %v9694, %v9734
  %v9736 = vpop.f32.mrb[0].mxu0
  %v9737 = vpop.f32.mrb[0].mxu0
  %9738 = vdwg.mxu0
  %9739 = vmatprep.subr.bf16.mxu0 %v6948
  %9740 = vmatpush1.bf16.msra.mxu0 %v6947
  %9741 = vmatprep.subr.bf16.mxu0 %v6956
  %9742 = vmatpush1.bf16.msra.mxu0 %v6955
  %9743 = vmatprep.subr.bf16.mxu0 %v6964
  %9744 = vmatpush1.bf16.msra.mxu0 %v6963
  %9745 = vmatprep.subr.bf16.mxu0 %v6972
  %9746 = vmatpush1.bf16.msra.mxu0 %v6971
  %9747 = vmatprep.subr.bf16.mxu0 %v6980
  %9748 = vmatpush1.bf16.msra.mxu0 %v6979
  %9749 = vmatprep.subr.bf16.mxu0 %v6988
  %9750 = vmatpush1.bf16.msra.mxu0 %v6987
  %9751 = vmatprep.subr.bf16.mxu0 %v6996
  %9752 = vmatpush1.bf16.msra.mxu0 %v6995
  %9753 = vmatprep.subr.bf16.mxu0 %v7004
  %9754 = vmatpush1.bf16.msra.mxu0 %v7003
  %9755 = vmatprep.subr.bf16.mxu0 %v7012
  %9756 = vmatpush1.bf16.msra.mxu0 %v7011
  %9757 = vmatprep.subr.bf16.mxu0 %v7020
  %9758 = vmatpush1.bf16.msra.mxu0 %v7019
  %9759 = vmatprep.subr.bf16.mxu0 %v7028
  %9760 = vmatpush1.bf16.msra.mxu0 %v7027
  %9761 = vmatprep.subr.bf16.mxu0 %v7036
  %9762 = vmatpush1.bf16.msra.mxu0 %v7035
  %9763 = vmatprep.subr.bf16.mxu0 %v7044
  %9764 = vmatpush1.bf16.msra.mxu0 %v7043
  %9765 = vmatprep.subr.bf16.mxu0 %v7052
  %9766 = vmatpush1.bf16.msra.mxu0 %v7051
  %9767 = vmatprep.subr.bf16.mxu0 %v7060
  %9768 = vmatpush1.bf16.msra.mxu0 %v7059
  %9769 = vmatprep.subr.bf16.mxu0 %v7068
  %9770 = vmatpush1.bf16.msra.mxu0 %v7067
  %9771 = vmatprep.mubr.bf16.mxu0 %v1691
  %9772 = vmatmul.mubr.bf16.gmra.mrb[0].mxu0 %v1690
  %v9773 = vpop.f32.mrb[0].mxu0
  %v9774 = vadd.f32 %v9733, %v9773
  %v9775 = vpop.f32.mrb[0].mxu0
  %v9776 = vadd.f32 %v9735, %v9775
  %v9777 = vpop.f32.mrb[0].mxu0
  %v9778 = vpop.f32.mrb[0].mxu0
  %9779 = vdwg.mxu0
  %9780 = vmatprep.subr.bf16.mxu0 %v7076
  %9781 = vmatpush1.bf16.msra.mxu0 %v7075
  %9782 = vmatprep.subr.bf16.mxu0 %v7084
  %9783 = vmatpush1.bf16.msra.mxu0 %v7083
  %9784 = vmatprep.subr.bf16.mxu0 %v7092
  %9785 = vmatpush1.bf16.msra.mxu0 %v7091
  %9786 = vmatprep.subr.bf16.mxu0 %v7100
  %9787 = vmatpush1.bf16.msra.mxu0 %v7099
  %9788 = vmatprep.subr.bf16.mxu0 %v7108
  %9789 = vmatpush1.bf16.msra.mxu0 %v7107
  %9790 = vmatprep.subr.bf16.mxu0 %v7116
  %9791 = vmatpush1.bf16.msra.mxu0 %v7115
  %9792 = vmatprep.subr.bf16.mxu0 %v7124
  %9793 = vmatpush1.bf16.msra.mxu0 %v7123
  %9794 = vmatprep.subr.bf16.mxu0 %v7132
  %9795 = vmatpush1.bf16.msra.mxu0 %v7131
  %9796 = vmatprep.subr.bf16.mxu0 %v7140
  %9797 = vmatpush1.bf16.msra.mxu0 %v7139
  %9798 = vmatprep.subr.bf16.mxu0 %v7148
  %9799 = vmatpush1.bf16.msra.mxu0 %v7147
  %9800 = vmatprep.subr.bf16.mxu0 %v7156
  %9801 = vmatpush1.bf16.msra.mxu0 %v7155
  %9802 = vmatprep.subr.bf16.mxu0 %v7164
  %9803 = vmatpush1.bf16.msra.mxu0 %v7163
  %9804 = vmatprep.subr.bf16.mxu0 %v7172
  %9805 = vmatpush1.bf16.msra.mxu0 %v7171
  %9806 = vmatprep.subr.bf16.mxu0 %v7180
  %9807 = vmatpush1.bf16.msra.mxu0 %v7179
  %9808 = vmatprep.subr.bf16.mxu0 %v7188
  %9809 = vmatpush1.bf16.msra.mxu0 %v7187
  %9810 = vmatprep.subr.bf16.mxu0 %v7196
  %9811 = vmatpush1.bf16.msra.mxu0 %v7195
  %9812 = vmatprep.mubr.bf16.mxu0 %v1693
  %9813 = vmatmul.mubr.bf16.gmra.mrb[0].mxu0 %v1692
  %v9814 = vpop.f32.mrb[0].mxu0
  %v9815 = vadd.f32 %v9774, %v9814
  %v9816 = vpop.f32.mrb[0].mxu0
  %v9817 = vadd.f32 %v9776, %v9816
  %v9818 = vpop.f32.mrb[0].mxu0
  %v9819 = vpop.f32.mrb[0].mxu0
  %9820 = vdwg.mxu0
  %9821 = vmatprep.subr.bf16.mxu0 %v7204
  %9822 = vmatpush1.bf16.msra.mxu0 %v7203
  %9823 = vmatprep.subr.bf16.mxu0 %v7212
  %9824 = vmatpush1.bf16.msra.mxu0 %v7211
  %9825 = vmatprep.subr.bf16.mxu0 %v7220
  %9826 = vmatpush1.bf16.msra.mxu0 %v7219
  %9827 = vmatprep.subr.bf16.mxu0 %v7228
  %9828 = vmatpush1.bf16.msra.mxu0 %v7227
  %9829 = vmatprep.subr.bf16.mxu0 %v7236
  %9830 = vmatpush1.bf16.msra.mxu0 %v7235
  %9831 = vmatprep.subr.bf16.mxu0 %v7244
  %9832 = vmatpush1.bf16.msra.mxu0 %v7243
  %9833 = vmatprep.subr.bf16.mxu0 %v7252
  %9834 = vmatpush1.bf16.msra.mxu0 %v7251
  %9835 = vmatprep.subr.bf16.mxu0 %v7260
  %9836 = vmatpush1.bf16.msra.mxu0 %v7259
  %9837 = vmatprep.subr.bf16.mxu0 %v7268
  %9838 = vmatpush1.bf16.msra.mxu0 %v7267
  %9839 = vmatprep.subr.bf16.mxu0 %v7276
  %9840 = vmatpush1.bf16.msra.mxu0 %v7275
  %9841 = vmatprep.subr.bf16.mxu0 %v7284
  %9842 = vmatpush1.bf16.msra.mxu0 %v7283
  %9843 = vmatprep.subr.bf16.mxu0 %v7292
  %9844 = vmatpush1.bf16.msra.mxu0 %v7291
  %9845 = vmatprep.subr.bf16.mxu0 %v7300
  %9846 = vmatpush1.bf16.msra.mxu0 %v7299
  %9847 = vmatprep.subr.bf16.mxu0 %v7308
  %9848 = vmatpush1.bf16.msra.mxu0 %v7307
  %9849 = vmatprep.subr.bf16.mxu0 %v7316
  %9850 = vmatpush1.bf16.msra.mxu0 %v7315
  %9851 = vmatprep.subr.bf16.mxu0 %v7324
  %9852 = vmatpush1.bf16.msra.mxu0 %v7323
  %9853 = vmatprep.mubr.bf16.mxu0 %v1695
  %9854 = vmatmul.mubr.bf16.gmra.mrb[0].mxu0 %v1694
  %v9855 = vpop.f32.mrb[0].mxu0
  %v9856 = vadd.f32 %v9815, %v9855
  %v9857 = vpop.f32.mrb[0].mxu0
  %v9858 = vadd.f32 %v9817, %v9857
  %v9859 = vpop.f32.mrb[0].mxu0
  %v9860 = vpop.f32.mrb[0].mxu0
  %9861 = vdwg.mxu0
  %9862 = vmatprep.subr.bf16.mxu0 %v7332
  %9863 = vmatpush1.bf16.msra.mxu0 %v7331
  %9864 = vmatprep.subr.bf16.mxu0 %v7340
  %9865 = vmatpush1.bf16.msra.mxu0 %v7339
  %9866 = vmatprep.subr.bf16.mxu0 %v7348
  %9867 = vmatpush1.bf16.msra.mxu0 %v7347
  %9868 = vmatprep.subr.bf16.mxu0 %v7356
  %9869 = vmatpush1.bf16.msra.mxu0 %v7355
  %9870 = vmatprep.subr.bf16.mxu0 %v7364
  %9871 = vmatpush1.bf16.msra.mxu0 %v7363
  %9872 = vmatprep.subr.bf16.mxu0 %v7372
  %9873 = vmatpush1.bf16.msra.mxu0 %v7371
  %9874 = vmatprep.subr.bf16.mxu0 %v7380
  %9875 = vmatpush1.bf16.msra.mxu0 %v7379
  %9876 = vmatprep.subr.bf16.mxu0 %v7388
  %9877 = vmatpush1.bf16.msra.mxu0 %v7387
  %9878 = vmatprep.subr.bf16.mxu0 %v7396
  %9879 = vmatpush1.bf16.msra.mxu0 %v7395
  %9880 = vmatprep.subr.bf16.mxu0 %v7404
  %9881 = vmatpush1.bf16.msra.mxu0 %v7403
  %9882 = vmatprep.subr.bf16.mxu0 %v7412
  %9883 = vmatpush1.bf16.msra.mxu0 %v7411
  %9884 = vmatprep.subr.bf16.mxu0 %v7420
  %9885 = vmatpush1.bf16.msra.mxu0 %v7419
  %9886 = vmatprep.subr.bf16.mxu0 %v7428
  %9887 = vmatpush1.bf16.msra.mxu0 %v7427
  %9888 = vmatprep.subr.bf16.mxu0 %v7436
  %9889 = vmatpush1.bf16.msra.mxu0 %v7435
  %9890 = vmatprep.subr.bf16.mxu0 %v7444
  %9891 = vmatpush1.bf16.msra.mxu0 %v7443
  %9892 = vmatprep.subr.bf16.mxu0 %v7452
  %9893 = vmatpush1.bf16.msra.mxu0 %v7451
  %9894 = vmatprep.mubr.bf16.mxu0 %v1697
  %9895 = vmatmul.mubr.bf16.gmra.mrb[0].mxu0 %v1696
  %v9896 = vpop.f32.mrb[0].mxu0
  %v9897 = vadd.f32 %v9856, %v9896
  %v9898 = vpop.f32.mrb[0].mxu0
  %v9899 = vadd.f32 %v9858, %v9898
  %v9900 = vpop.f32.mrb[0].mxu0
  %v9901 = vpop.f32.mrb[0].mxu0
  %9902 = vdwg.mxu0
  %9903 = vmatprep.subr.bf16.mxu0 %v7460
  %9904 = vmatpush1.bf16.msra.mxu0 %v7459
  %9905 = vmatprep.subr.bf16.mxu0 %v7468
  %9906 = vmatpush1.bf16.msra.mxu0 %v7467
  %9907 = vmatprep.subr.bf16.mxu0 %v7476
  %9908 = vmatpush1.bf16.msra.mxu0 %v7475
  %9909 = vmatprep.subr.bf16.mxu0 %v7484
  %9910 = vmatpush1.bf16.msra.mxu0 %v7483
  %9911 = vmatprep.subr.bf16.mxu0 %v7492
  %9912 = vmatpush1.bf16.msra.mxu0 %v7491
  %9913 = vmatprep.subr.bf16.mxu0 %v7500
  %9914 = vmatpush1.bf16.msra.mxu0 %v7499
  %9915 = vmatprep.subr.bf16.mxu0 %v7508
  %9916 = vmatpush1.bf16.msra.mxu0 %v7507
  %9917 = vmatprep.subr.bf16.mxu0 %v7516
  %9918 = vmatpush1.bf16.msra.mxu0 %v7515
  %9919 = vmatprep.subr.bf16.mxu0 %v7524
  %9920 = vmatpush1.bf16.msra.mxu0 %v7523
  %9921 = vmatprep.subr.bf16.mxu0 %v7532
  %9922 = vmatpush1.bf16.msra.mxu0 %v7531
  %9923 = vmatprep.subr.bf16.mxu0 %v7540
  %9924 = vmatpush1.bf16.msra.mxu0 %v7539
  %9925 = vmatprep.subr.bf16.mxu0 %v7548
  %9926 = vmatpush1.bf16.msra.mxu0 %v7547
  %9927 = vmatprep.subr.bf16.mxu0 %v7556
  %9928 = vmatpush1.bf16.msra.mxu0 %v7555
  %9929 = vmatprep.subr.bf16.mxu0 %v7564
  %9930 = vmatpush1.bf16.msra.mxu0 %v7563
  %9931 = vmatprep.subr.bf16.mxu0 %v7572
  %9932 = vmatpush1.bf16.msra.mxu0 %v7571
  %9933 = vmatprep.subr.bf16.mxu0 %v7580
  %9934 = vmatpush1.bf16.msra.mxu0 %v7579
  %9935 = vmatprep.mubr.bf16.mxu0 %v1699
  %9936 = vmatmul.mubr.bf16.gmra.mrb[0].mxu0 %v1698
  %v9937 = vpop.f32.mrb[0].mxu0
  %v9938 = vadd.f32 %v9897, %v9937
  %v9939 = vpop.f32.mrb[0].mxu0
  %v9940 = vadd.f32 %v9899, %v9939
  %v9941 = vpop.f32.mrb[0].mxu0
  %v9942 = vpop.f32.mrb[0].mxu0
  %9943 = vdwg.mxu0
  %9944 = vmatprep.subr.bf16.mxu0 %v7588
  %9945 = vmatpush1.bf16.msra.mxu0 %v7587
  %9946 = vmatprep.subr.bf16.mxu0 %v7596
  %9947 = vmatpush1.bf16.msra.mxu0 %v7595
  %9948 = vmatprep.subr.bf16.mxu0 %v7604
  %9949 = vmatpush1.bf16.msra.mxu0 %v7603
  %9950 = vmatprep.subr.bf16.mxu0 %v7612
  %9951 = vmatpush1.bf16.msra.mxu0 %v7611
  %9952 = vmatprep.subr.bf16.mxu0 %v7620
  %9953 = vmatpush1.bf16.msra.mxu0 %v7619
  %9954 = vmatprep.subr.bf16.mxu0 %v7628
  %9955 = vmatpush1.bf16.msra.mxu0 %v7627
  %9956 = vmatprep.subr.bf16.mxu0 %v7636
  %9957 = vmatpush1.bf16.msra.mxu0 %v7635
  %9958 = vmatprep.subr.bf16.mxu0 %v7644
  %9959 = vmatpush1.bf16.msra.mxu0 %v7643
  %9960 = vmatprep.subr.bf16.mxu0 %v7652
  %9961 = vmatpush1.bf16.msra.mxu0 %v7651
  %9962 = vmatprep.subr.bf16.mxu0 %v7660
  %9963 = vmatpush1.bf16.msra.mxu0 %v7659
  %9964 = vmatprep.subr.bf16.mxu0 %v7668
  %9965 = vmatpush1.bf16.msra.mxu0 %v7667
  %9966 = vmatprep.subr.bf16.mxu0 %v7676
  %9967 = vmatpush1.bf16.msra.mxu0 %v7675
  %9968 = vmatprep.subr.bf16.mxu0 %v7684
  %9969 = vmatpush1.bf16.msra.mxu0 %v7683
  %9970 = vmatprep.subr.bf16.mxu0 %v7692
  %9971 = vmatpush1.bf16.msra.mxu0 %v7691
  %9972 = vmatprep.subr.bf16.mxu0 %v7700
  %9973 = vmatpush1.bf16.msra.mxu0 %v7699
  %9974 = vmatprep.subr.bf16.mxu0 %v7708
  %9975 = vmatpush1.bf16.msra.mxu0 %v7707
  %9976 = vmatprep.mubr.bf16.mxu0 %v1701
  %9977 = vmatmul.mubr.bf16.gmra.mrb[0].mxu0 %v1700
  %v9978 = vpop.f32.mrb[0].mxu0
  %v9979 = vadd.f32 %v9938, %v9978
  %v9980 = vpop.f32.mrb[0].mxu0
  %v9981 = vadd.f32 %v9940, %v9980
  %v9982 = vpop.f32.mrb[0].mxu0
  %v9983 = vpop.f32.mrb[0].mxu0
  %9984 = vdwg.mxu0
  %9985 = vmatprep.subr.bf16.mxu0 %v7716
  %9986 = vmatpush1.bf16.msra.mxu0 %v7715
  %9987 = vmatprep.subr.bf16.mxu0 %v7724
  %9988 = vmatpush1.bf16.msra.mxu0 %v7723
  %9989 = vmatprep.subr.bf16.mxu0 %v7732
  %9990 = vmatpush1.bf16.msra.mxu0 %v7731
  %9991 = vmatprep.subr.bf16.mxu0 %v7740
  %9992 = vmatpush1.bf16.msra.mxu0 %v7739
  %9993 = vmatprep.subr.bf16.mxu0 %v7748
  %9994 = vmatpush1.bf16.msra.mxu0 %v7747
  %9995 = vmatprep.subr.bf16.mxu0 %v7756
  %9996 = vmatpush1.bf16.msra.mxu0 %v7755
  %9997 = vmatprep.subr.bf16.mxu0 %v7764
  %9998 = vmatpush1.bf16.msra.mxu0 %v7763
  %9999 = vmatprep.subr.bf16.mxu0 %v7772
  %10000 = vmatpush1.bf16.msra.mxu0 %v7771
  %10001 = vmatprep.subr.bf16.mxu0 %v7780
  %10002 = vmatpush1.bf16.msra.mxu0 %v7779
  %10003 = vmatprep.subr.bf16.mxu0 %v7788
  %10004 = vmatpush1.bf16.msra.mxu0 %v7787
  %10005 = vmatprep.subr.bf16.mxu0 %v7796
  %10006 = vmatpush1.bf16.msra.mxu0 %v7795
  %10007 = vmatprep.subr.bf16.mxu0 %v7804
  %10008 = vmatpush1.bf16.msra.mxu0 %v7803
  %10009 = vmatprep.subr.bf16.mxu0 %v7812
  %10010 = vmatpush1.bf16.msra.mxu0 %v7811
  %10011 = vmatprep.subr.bf16.mxu0 %v7820
  %10012 = vmatpush1.bf16.msra.mxu0 %v7819
  %10013 = vmatprep.subr.bf16.mxu0 %v7828
  %10014 = vmatpush1.bf16.msra.mxu0 %v7827
  %10015 = vmatprep.subr.bf16.mxu0 %v7836
  %10016 = vmatpush1.bf16.msra.mxu0 %v7835
  %10017 = vmatprep.mubr.bf16.mxu0 %v1703
  %10018 = vmatmul.mubr.bf16.gmra.mrb[0].mxu0 %v1702
  %v10019 = vpop.f32.mrb[0].mxu0
  %v10020 = vadd.f32 %v9979, %v10019
  %v10021 = vpop.f32.mrb[0].mxu0
  %v10022 = vadd.f32 %v9981, %v10021
  %v10023 = vpop.f32.mrb[0].mxu0
  %v10024 = vpop.f32.mrb[0].mxu0
  %10025 = vdwg.mxu0
  %10026 = vmatprep.subr.bf16.mxu0 %v7844
  %10027 = vmatpush1.bf16.msra.mxu0 %v7843
  %10028 = vmatprep.subr.bf16.mxu0 %v7852
  %10029 = vmatpush1.bf16.msra.mxu0 %v7851
  %10030 = vmatprep.subr.bf16.mxu0 %v7860
  %10031 = vmatpush1.bf16.msra.mxu0 %v7859
  %10032 = vmatprep.subr.bf16.mxu0 %v7868
  %10033 = vmatpush1.bf16.msra.mxu0 %v7867
  %10034 = vmatprep.subr.bf16.mxu0 %v7876
  %10035 = vmatpush1.bf16.msra.mxu0 %v7875
  %10036 = vmatprep.subr.bf16.mxu0 %v7884
  %10037 = vmatpush1.bf16.msra.mxu0 %v7883
  %10038 = vmatprep.subr.bf16.mxu0 %v7892
  %10039 = vmatpush1.bf16.msra.mxu0 %v7891
  %10040 = vmatprep.subr.bf16.mxu0 %v7900
  %10041 = vmatpush1.bf16.msra.mxu0 %v7899
  %10042 = vmatprep.subr.bf16.mxu0 %v7908
  %10043 = vmatpush1.bf16.msra.mxu0 %v7907
  %10044 = vmatprep.subr.bf16.mxu0 %v7916
  %10045 = vmatpush1.bf16.msra.mxu0 %v7915
  %10046 = vmatprep.subr.bf16.mxu0 %v7924
  %10047 = vmatpush1.bf16.msra.mxu0 %v7923
  %10048 = vmatprep.subr.bf16.mxu0 %v7932
  %10049 = vmatpush1.bf16.msra.mxu0 %v7931
  %10050 = vmatprep.subr.bf16.mxu0 %v7940
  %10051 = vmatpush1.bf16.msra.mxu0 %v7939
  %10052 = vmatprep.subr.bf16.mxu0 %v7948
  %10053 = vmatpush1.bf16.msra.mxu0 %v7947
  %10054 = vmatprep.subr.bf16.mxu0 %v7956
  %10055 = vmatpush1.bf16.msra.mxu0 %v7955
  %10056 = vmatprep.subr.bf16.mxu0 %v7964
  %10057 = vmatpush1.bf16.msra.mxu0 %v7963
  %10058 = vmatprep.mubr.bf16.mxu0 %v1705
  %10059 = vmatmul.mubr.bf16.gmra.mrb[0].mxu0 %v1704
  %v10060 = vpop.f32.mrb[0].mxu0
  %v10061 = vadd.f32 %v10020, %v10060
  %v10062 = vpop.f32.mrb[0].mxu0
  %v10063 = vadd.f32 %v10022, %v10062
  %v10064 = vpop.f32.mrb[0].mxu0
  %v10065 = vpop.f32.mrb[0].mxu0
  %10066 = vdwg.mxu0
  %10067 = vmatprep.subr.bf16.mxu0 %v7972
  %10068 = vmatpush1.bf16.msra.mxu0 %v7971
  %10069 = vmatprep.subr.bf16.mxu0 %v7980
  %10070 = vmatpush1.bf16.msra.mxu0 %v7979
  %10071 = vmatprep.subr.bf16.mxu0 %v7988
  %10072 = vmatpush1.bf16.msra.mxu0 %v7987
  %10073 = vmatprep.subr.bf16.mxu0 %v7996
  %10074 = vmatpush1.bf16.msra.mxu0 %v7995
  %10075 = vmatprep.subr.bf16.mxu0 0
  %10076 = vmatpush1.bf16.msra.mxu0 0
  %10077 = vmatprep.subr.bf16.mxu0 0
  %10078 = vmatpush1.bf16.msra.mxu0 0
  %10079 = vmatprep.subr.bf16.mxu0 0
  %10080 = vmatpush1.bf16.msra.mxu0 0
  %10081 = vmatprep.subr.bf16.mxu0 0
  %10082 = vmatpush1.bf16.msra.mxu0 0
  %10083 = vmatprep.subr.bf16.mxu0 0
  %10084 = vmatpush1.bf16.msra.mxu0 0
  %10085 = vmatprep.subr.bf16.mxu0 0
  %10086 = vmatpush1.bf16.msra.mxu0 0
  %10087 = vmatprep.subr.bf16.mxu0 0
  %10088 = vmatpush1.bf16.msra.mxu0 0
  %10089 = vmatprep.subr.bf16.mxu0 0
  %10090 = vmatpush1.bf16.msra.mxu0 0
  %10091 = vmatprep.subr.bf16.mxu0 0
  %10092 = vmatpush1.bf16.msra.mxu0 0
  %10093 = vmatprep.subr.bf16.mxu0 0
  %10094 = vmatpush1.bf16.msra.mxu0 0
  %10095 = vmatprep.subr.bf16.mxu0 0
  %10096 = vmatpush1.bf16.msra.mxu0 0
  %10097 = vmatprep.subr.bf16.mxu0 0
  %10098 = vmatpush1.bf16.msra.mxu0 0
  %10099 = vmatprep.mubr.bf16.mxu0 0
  %10100 = vmatmul.mubr.bf16.gmra.mrb[0].mxu0 %v9573
  %v10101 = vpop.f32.mrb[0].mxu0
  %v10102 = vadd.f32 %v10061, %v10101
  %v10103 = vpop.f32.mrb[0].mxu0
  %v10104 = vadd.f32 %v10063, %v10103
  %v10105 = vpop.f32.mrb[0].mxu0
  %v10106 = vpop.f32.mrb[0].mxu0
  %10107 = vdwg.mxu0
  %10108 = vmatprep.subr.bf16.mxu0 %v6438
  %10109 = vmatpush1.bf16.msra.mxu0 %v6437
  %10110 = vmatprep.subr.bf16.mxu0 %v6446
  %10111 = vmatpush1.bf16.msra.mxu0 %v6445
  %10112 = vmatprep.subr.bf16.mxu0 %v6454
  %10113 = vmatpush1.bf16.msra.mxu0 %v6453
  %10114 = vmatprep.subr.bf16.mxu0 %v6462
  %10115 = vmatpush1.bf16.msra.mxu0 %v6461
  %10116 = vmatprep.subr.bf16.mxu0 %v6470
  %10117 = vmatpush1.bf16.msra.mxu0 %v6469
  %10118 = vmatprep.subr.bf16.mxu0 %v6478
  %10119 = vmatpush1.bf16.msra.mxu0 %v6477
  %10120 = vmatprep.subr.bf16.mxu0 %v6486
  %10121 = vmatpush1.bf16.msra.mxu0 %v6485
  %10122 = vmatprep.subr.bf16.mxu0 %v6494
  %10123 = vmatpush1.bf16.msra.mxu0 %v6493
  %10124 = vmatprep.subr.bf16.mxu0 %v6502
  %10125 = vmatpush1.bf16.msra.mxu0 %v6501
  %10126 = vmatprep.subr.bf16.mxu0 %v6510
  %10127 = vmatpush1.bf16.msra.mxu0 %v6509
  %10128 = vmatprep.subr.bf16.mxu0 %v6518
  %10129 = vmatpush1.bf16.msra.mxu0 %v6517
  %10130 = vmatprep.subr.bf16.mxu0 %v6526
  %10131 = vmatpush1.bf16.msra.mxu0 %v6525
  %10132 = vmatprep.subr.bf16.mxu0 %v6534
  %10133 = vmatpush1.bf16.msra.mxu0 %v6533
  %10134 = vmatprep.subr.bf16.mxu0 %v6542
  %10135 = vmatpush1.bf16.msra.mxu0 %v6541
  %10136 = vmatprep.subr.bf16.mxu0 %v6550
  %10137 = vmatpush1.bf16.msra.mxu0 %v6549
  %10138 = vmatprep.subr.bf16.mxu0 %v6558
  %10139 = vmatpush1.bf16.msra.mxu0 %v6557
  %10140 = vmatprep.mubr.bf16.mxu0 %v1683
  %10141 = vmatmul.mubr.bf16.gmra.mrb[0].mxu0 %v1682
  %v10142 = vpop.f32.mrb[0].mxu0
  %v10143 = vadd.f32 %v1615, %v10142
  %v10144 = vpop.f32.mrb[0].mxu0
  %v10145 = vadd.f32 %v1619, %v10144
  %v10146 = vpop.f32.mrb[0].mxu0
  %v10147 = vpop.f32.mrb[0].mxu0
  %10148 = vdwg.mxu0
  %10149 = vmatprep.subr.bf16.mxu0 %v6566
  %10150 = vmatpush1.bf16.msra.mxu0 %v6565
  %10151 = vmatprep.subr.bf16.mxu0 %v6574
  %10152 = vmatpush1.bf16.msra.mxu0 %v6573
  %10153 = vmatprep.subr.bf16.mxu0 %v6582
  %10154 = vmatpush1.bf16.msra.mxu0 %v6581
  %10155 = vmatprep.subr.bf16.mxu0 %v6590
  %10156 = vmatpush1.bf16.msra.mxu0 %v6589
  %10157 = vmatprep.subr.bf16.mxu0 %v6598
  %10158 = vmatpush1.bf16.msra.mxu0 %v6597
  %10159 = vmatprep.subr.bf16.mxu0 %v6606
  %10160 = vmatpush1.bf16.msra.mxu0 %v6605
  %10161 = vmatprep.subr.bf16.mxu0 %v6614
  %10162 = vmatpush1.bf16.msra.mxu0 %v6613
  %10163 = vmatprep.subr.bf16.mxu0 %v6622
  %10164 = vmatpush1.bf16.msra.mxu0 %v6621
  %10165 = vmatprep.subr.bf16.mxu0 %v6630
  %10166 = vmatpush1.bf16.msra.mxu0 %v6629
  %10167 = vmatprep.subr.bf16.mxu0 %v6638
  %10168 = vmatpush1.bf16.msra.mxu0 %v6637
  %10169 = vmatprep.subr.bf16.mxu0 %v6646
  %10170 = vmatpush1.bf16.msra.mxu0 %v6645
  %10171 = vmatprep.subr.bf16.mxu0 %v6654
  %10172 = vmatpush1.bf16.msra.mxu0 %v6653
  %10173 = vmatprep.subr.bf16.mxu0 %v6662
  %10174 = vmatpush1.bf16.msra.mxu0 %v6661
  %10175 = vmatprep.subr.bf16.mxu0 %v6670
  %10176 = vmatpush1.bf16.msra.mxu0 %v6669
  %10177 = vmatprep.subr.bf16.mxu0 %v6678
  %10178 = vmatpush1.bf16.msra.mxu0 %v6677
  %10179 = vmatprep.subr.bf16.mxu0 %v6686
  %10180 = vmatpush1.bf16.msra.mxu0 %v6685
  %10181 = vmatprep.mubr.bf16.mxu0 %v1685
  %10182 = vmatmul.mubr.bf16.gmra.mrb[0].mxu0 %v1684
  %v10183 = vpop.f32.mrb[0].mxu0
  %v10184 = vadd.f32 %v10143, %v10183
  %v10185 = vpop.f32.mrb[0].mxu0
  %v10186 = vadd.f32 %v10145, %v10185
  %v10187 = vpop.f32.mrb[0].mxu0
  %v10188 = vpop.f32.mrb[0].mxu0
  %10189 = vdwg.mxu0
  %10190 = vmatprep.subr.bf16.mxu0 %v6694
  %10191 = vmatpush1.bf16.msra.mxu0 %v6693
  %10192 = vmatprep.subr.bf16.mxu0 %v6702
  %10193 = vmatpush1.bf16.msra.mxu0 %v6701
  %10194 = vmatprep.subr.bf16.mxu0 %v6710
  %10195 = vmatpush1.bf16.msra.mxu0 %v6709
  %10196 = vmatprep.subr.bf16.mxu0 %v6718
  %10197 = vmatpush1.bf16.msra.mxu0 %v6717
  %10198 = vmatprep.subr.bf16.mxu0 %v6726
  %10199 = vmatpush1.bf16.msra.mxu0 %v6725
  %10200 = vmatprep.subr.bf16.mxu0 %v6734
  %10201 = vmatpush1.bf16.msra.mxu0 %v6733
  %10202 = vmatprep.subr.bf16.mxu0 %v6742
  %10203 = vmatpush1.bf16.msra.mxu0 %v6741
  %10204 = vmatprep.subr.bf16.mxu0 %v6750
  %10205 = vmatpush1.bf16.msra.mxu0 %v6749
  %10206 = vmatprep.subr.bf16.mxu0 %v6758
  %10207 = vmatpush1.bf16.msra.mxu0 %v6757
  %10208 = vmatprep.subr.bf16.mxu0 %v6766
  %10209 = vmatpush1.bf16.msra.mxu0 %v6765
  %10210 = vmatprep.subr.bf16.mxu0 %v6774
  %10211 = vmatpush1.bf16.msra.mxu0 %v6773
  %10212 = vmatprep.subr.bf16.mxu0 %v6782
  %10213 = vmatpush1.bf16.msra.mxu0 %v6781
  %10214 = vmatprep.subr.bf16.mxu0 %v6790
  %10215 = vmatpush1.bf16.msra.mxu0 %v6789
  %10216 = vmatprep.subr.bf16.mxu0 %v6798
  %10217 = vmatpush1.bf16.msra.mxu0 %v6797
  %10218 = vmatprep.subr.bf16.mxu0 %v6806
  %10219 = vmatpush1.bf16.msra.mxu0 %v6805
  %10220 = vmatprep.subr.bf16.mxu0 %v6814
  %10221 = vmatpush1.bf16.msra.mxu0 %v6813
  %10222 = vmatprep.mubr.bf16.mxu0 %v1687
  %10223 = vmatmul.mubr.bf16.gmra.mrb[0].mxu0 %v1686
  %v10224 = vpop.f32.mrb[0].mxu0
  %v10225 = vadd.f32 %v10184, %v10224
  %v10226 = vpop.f32.mrb[0].mxu0
  %v10227 = vadd.f32 %v10186, %v10226
  %v10228 = vpop.f32.mrb[0].mxu0
  %v10229 = vpop.f32.mrb[0].mxu0
  %10230 = vdwg.mxu0
  %10231 = vmatprep.subr.bf16.mxu0 %v6822
  %10232 = vmatpush1.bf16.msra.mxu0 %v6821
  %10233 = vmatprep.subr.bf16.mxu0 %v6830
  %10234 = vmatpush1.bf16.msra.mxu0 %v6829
  %10235 = vmatprep.subr.bf16.mxu0 %v6838
  %10236 = vmatpush1.bf16.msra.mxu0 %v6837
  %10237 = vmatprep.subr.bf16.mxu0 %v6846
  %10238 = vmatpush1.bf16.msra.mxu0 %v6845
  %10239 = vmatprep.subr.bf16.mxu0 %v6854
  %10240 = vmatpush1.bf16.msra.mxu0 %v6853
  %10241 = vmatprep.subr.bf16.mxu0 %v6862
  %10242 = vmatpush1.bf16.msra.mxu0 %v6861
  %10243 = vmatprep.subr.bf16.mxu0 %v6870
  %10244 = vmatpush1.bf16.msra.mxu0 %v6869
  %10245 = vmatprep.subr.bf16.mxu0 %v6878
  %10246 = vmatpush1.bf16.msra.mxu0 %v6877
  %10247 = vmatprep.subr.bf16.mxu0 %v6886
  %10248 = vmatpush1.bf16.msra.mxu0 %v6885
  %10249 = vmatprep.subr.bf16.mxu0 %v6894
  %10250 = vmatpush1.bf16.msra.mxu0 %v6893
  %10251 = vmatprep.subr.bf16.mxu0 %v6902
  %10252 = vmatpush1.bf16.msra.mxu0 %v6901
  %10253 = vmatprep.subr.bf16.mxu0 %v6910
  %10254 = vmatpush1.bf16.msra.mxu0 %v6909
  %10255 = vmatprep.subr.bf16.mxu0 %v6918
  %10256 = vmatpush1.bf16.msra.mxu0 %v6917
  %10257 = vmatprep.subr.bf16.mxu0 %v6926
  %10258 = vmatpush1.bf16.msra.mxu0 %v6925
  %10259 = vmatprep.subr.bf16.mxu0 %v6934
  %10260 = vmatpush1.bf16.msra.mxu0 %v6933
  %10261 = vmatprep.subr.bf16.mxu0 %v6942
  %10262 = vmatpush1.bf16.msra.mxu0 %v6941
  %10263 = vmatprep.mubr.bf16.mxu0 %v1689
  %10264 = vmatmul.mubr.bf16.gmra.mrb[0].mxu0 %v1688
  %v10265 = vpop.f32.mrb[0].mxu0
  %v10266 = vadd.f32 %v10225, %v10265
  %v10267 = vpop.f32.mrb[0].mxu0
  %v10268 = vadd.f32 %v10227, %v10267
  %v10269 = vpop.f32.mrb[0].mxu0
  %v10270 = vpop.f32.mrb[0].mxu0
  %10271 = vdwg.mxu0
  %10272 = vmatprep.subr.bf16.mxu0 %v6950
  %10273 = vmatpush1.bf16.msra.mxu0 %v6949
  %10274 = vmatprep.subr.bf16.mxu0 %v6958
  %10275 = vmatpush1.bf16.msra.mxu0 %v6957
  %10276 = vmatprep.subr.bf16.mxu0 %v6966
  %10277 = vmatpush1.bf16.msra.mxu0 %v6965
  %10278 = vmatprep.subr.bf16.mxu0 %v6974
  %10279 = vmatpush1.bf16.msra.mxu0 %v6973
  %10280 = vmatprep.subr.bf16.mxu0 %v6982
  %10281 = vmatpush1.bf16.msra.mxu0 %v6981
  %10282 = vmatprep.subr.bf16.mxu0 %v6990
  %10283 = vmatpush1.bf16.msra.mxu0 %v6989
  %10284 = vmatprep.subr.bf16.mxu0 %v6998
  %10285 = vmatpush1.bf16.msra.mxu0 %v6997
  %10286 = vmatprep.subr.bf16.mxu0 %v7006
  %10287 = vmatpush1.bf16.msra.mxu0 %v7005
  %10288 = vmatprep.subr.bf16.mxu0 %v7014
  %10289 = vmatpush1.bf16.msra.mxu0 %v7013
  %10290 = vmatprep.subr.bf16.mxu0 %v7022
  %10291 = vmatpush1.bf16.msra.mxu0 %v7021
  %10292 = vmatprep.subr.bf16.mxu0 %v7030
  %10293 = vmatpush1.bf16.msra.mxu0 %v7029
  %10294 = vmatprep.subr.bf16.mxu0 %v7038
  %10295 = vmatpush1.bf16.msra.mxu0 %v7037
  %10296 = vmatprep.subr.bf16.mxu0 %v7046
  %10297 = vmatpush1.bf16.msra.mxu0 %v7045
  %10298 = vmatprep.subr.bf16.mxu0 %v7054
  %10299 = vmatpush1.bf16.msra.mxu0 %v7053
  %10300 = vmatprep.subr.bf16.mxu0 %v7062
  %10301 = vmatpush1.bf16.msra.mxu0 %v7061
  %10302 = vmatprep.subr.bf16.mxu0 %v7070
  %10303 = vmatpush1.bf16.msra.mxu0 %v7069
  %10304 = vmatprep.mubr.bf16.mxu0 %v1691
  %10305 = vmatmul.mubr.bf16.gmra.mrb[0].mxu0 %v1690
  %v10306 = vpop.f32.mrb[0].mxu0
  %v10307 = vadd.f32 %v10266, %v10306
  %v10308 = vpop.f32.mrb[0].mxu0
  %v10309 = vadd.f32 %v10268, %v10308
  %v10310 = vpop.f32.mrb[0].mxu0
  %v10311 = vpop.f32.mrb[0].mxu0
  %10312 = vdwg.mxu0
  %10313 = vmatprep.subr.bf16.mxu0 %v7078
  %10314 = vmatpush1.bf16.msra.mxu0 %v7077
  %10315 = vmatprep.subr.bf16.mxu0 %v7086
  %10316 = vmatpush1.bf16.msra.mxu0 %v7085
  %10317 = vmatprep.subr.bf16.mxu0 %v7094
  %10318 = vmatpush1.bf16.msra.mxu0 %v7093
  %10319 = vmatprep.subr.bf16.mxu0 %v7102
  %10320 = vmatpush1.bf16.msra.mxu0 %v7101
  %10321 = vmatprep.subr.bf16.mxu0 %v7110
  %10322 = vmatpush1.bf16.msra.mxu0 %v7109
  %10323 = vmatprep.subr.bf16.mxu0 %v7118
  %10324 = vmatpush1.bf16.msra.mxu0 %v7117
  %10325 = vmatprep.subr.bf16.mxu0 %v7126
  %10326 = vmatpush1.bf16.msra.mxu0 %v7125
  %10327 = vmatprep.subr.bf16.mxu0 %v7134
  %10328 = vmatpush1.bf16.msra.mxu0 %v7133
  %10329 = vmatprep.subr.bf16.mxu0 %v7142
  %10330 = vmatpush1.bf16.msra.mxu0 %v7141
  %10331 = vmatprep.subr.bf16.mxu0 %v7150
  %10332 = vmatpush1.bf16.msra.mxu0 %v7149
  %10333 = vmatprep.subr.bf16.mxu0 %v7158
  %10334 = vmatpush1.bf16.msra.mxu0 %v7157
  %10335 = vmatprep.subr.bf16.mxu0 %v7166
  %10336 = vmatpush1.bf16.msra.mxu0 %v7165
  %10337 = vmatprep.subr.bf16.mxu0 %v7174
  %10338 = vmatpush1.bf16.msra.mxu0 %v7173
  %10339 = vmatprep.subr.bf16.mxu0 %v7182
  %10340 = vmatpush1.bf16.msra.mxu0 %v7181
  %10341 = vmatprep.subr.bf16.mxu0 %v7190
  %10342 = vmatpush1.bf16.msra.mxu0 %v7189
  %10343 = vmatprep.subr.bf16.mxu0 %v7198
  %10344 = vmatpush1.bf16.msra.mxu0 %v7197
  %10345 = vmatprep.mubr.bf16.mxu0 %v1693
  %10346 = vmatmul.mubr.bf16.gmra.mrb[0].mxu0 %v1692
  %v10347 = vpop.f32.mrb[0].mxu0
  %v10348 = vadd.f32 %v10307, %v10347
  %v10349 = vpop.f32.mrb[0].mxu0
  %v10350 = vadd.f32 %v10309, %v10349
  %v10351 = vpop.f32.mrb[0].mxu0
  %v10352 = vpop.f32.mrb[0].mxu0
  %10353 = vdwg.mxu0
  %10354 = vmatprep.subr.bf16.mxu0 %v7206
  %10355 = vmatpush1.bf16.msra.mxu0 %v7205
  %10356 = vmatprep.subr.bf16.mxu0 %v7214
  %10357 = vmatpush1.bf16.msra.mxu0 %v7213
  %10358 = vmatprep.subr.bf16.mxu0 %v7222
  %10359 = vmatpush1.bf16.msra.mxu0 %v7221
  %10360 = vmatprep.subr.bf16.mxu0 %v7230
  %10361 = vmatpush1.bf16.msra.mxu0 %v7229
  %10362 = vmatprep.subr.bf16.mxu0 %v7238
  %10363 = vmatpush1.bf16.msra.mxu0 %v7237
  %10364 = vmatprep.subr.bf16.mxu0 %v7246
  %10365 = vmatpush1.bf16.msra.mxu0 %v7245
  %10366 = vmatprep.subr.bf16.mxu0 %v7254
  %10367 = vmatpush1.bf16.msra.mxu0 %v7253
  %10368 = vmatprep.subr.bf16.mxu0 %v7262
  %10369 = vmatpush1.bf16.msra.mxu0 %v7261
  %10370 = vmatprep.subr.bf16.mxu0 %v7270
  %10371 = vmatpush1.bf16.msra.mxu0 %v7269
  %10372 = vmatprep.subr.bf16.mxu0 %v7278
  %10373 = vmatpush1.bf16.msra.mxu0 %v7277
  %10374 = vmatprep.subr.bf16.mxu0 %v7286
  %10375 = vmatpush1.bf16.msra.mxu0 %v7285
  %10376 = vmatprep.subr.bf16.mxu0 %v7294
  %10377 = vmatpush1.bf16.msra.mxu0 %v7293
  %10378 = vmatprep.subr.bf16.mxu0 %v7302
  %10379 = vmatpush1.bf16.msra.mxu0 %v7301
  %10380 = vmatprep.subr.bf16.mxu0 %v7310
  %10381 = vmatpush1.bf16.msra.mxu0 %v7309
  %10382 = vmatprep.subr.bf16.mxu0 %v7318
  %10383 = vmatpush1.bf16.msra.mxu0 %v7317
  %10384 = vmatprep.subr.bf16.mxu0 %v7326
  %10385 = vmatpush1.bf16.msra.mxu0 %v7325
  %10386 = vmatprep.mubr.bf16.mxu0 %v1695
  %10387 = vmatmul.mubr.bf16.gmra.mrb[0].mxu0 %v1694
  %v10388 = vpop.f32.mrb[0].mxu0
  %v10389 = vadd.f32 %v10348, %v10388
  %v10390 = vpop.f32.mrb[0].mxu0
  %v10391 = vadd.f32 %v10350, %v10390
  %v10392 = vpop.f32.mrb[0].mxu0
  %v10393 = vpop.f32.mrb[0].mxu0
  %10394 = vdwg.mxu0
  %10395 = vmatprep.subr.bf16.mxu0 %v7334
  %10396 = vmatpush1.bf16.msra.mxu0 %v7333
  %10397 = vmatprep.subr.bf16.mxu0 %v7342
  %10398 = vmatpush1.bf16.msra.mxu0 %v7341
  %10399 = vmatprep.subr.bf16.mxu0 %v7350
  %10400 = vmatpush1.bf16.msra.mxu0 %v7349
  %10401 = vmatprep.subr.bf16.mxu0 %v7358
  %10402 = vmatpush1.bf16.msra.mxu0 %v7357
  %10403 = vmatprep.subr.bf16.mxu0 %v7366
  %10404 = vmatpush1.bf16.msra.mxu0 %v7365
  %10405 = vmatprep.subr.bf16.mxu0 %v7374
  %10406 = vmatpush1.bf16.msra.mxu0 %v7373
  %10407 = vmatprep.subr.bf16.mxu0 %v7382
  %10408 = vmatpush1.bf16.msra.mxu0 %v7381
  %10409 = vmatprep.subr.bf16.mxu0 %v7390
  %10410 = vmatpush1.bf16.msra.mxu0 %v7389
  %10411 = vmatprep.subr.bf16.mxu0 %v7398
  %10412 = vmatpush1.bf16.msra.mxu0 %v7397
  %10413 = vmatprep.subr.bf16.mxu0 %v7406
  %10414 = vmatpush1.bf16.msra.mxu0 %v7405
  %10415 = vmatprep.subr.bf16.mxu0 %v7414
  %10416 = vmatpush1.bf16.msra.mxu0 %v7413
  %10417 = vmatprep.subr.bf16.mxu0 %v7422
  %10418 = vmatpush1.bf16.msra.mxu0 %v7421
  %10419 = vmatprep.subr.bf16.mxu0 %v7430
  %10420 = vmatpush1.bf16.msra.mxu0 %v7429
  %10421 = vmatprep.subr.bf16.mxu0 %v7438
  %10422 = vmatpush1.bf16.msra.mxu0 %v7437
  %10423 = vmatprep.subr.bf16.mxu0 %v7446
  %10424 = vmatpush1.bf16.msra.mxu0 %v7445
  %10425 = vmatprep.subr.bf16.mxu0 %v7454
  %10426 = vmatpush1.bf16.msra.mxu0 %v7453
  %10427 = vmatprep.mubr.bf16.mxu0 %v1697
  %10428 = vmatmul.mubr.bf16.gmra.mrb[0].mxu0 %v1696
  %v10429 = vpop.f32.mrb[0].mxu0
  %v10430 = vadd.f32 %v10389, %v10429
  %v10431 = vpop.f32.mrb[0].mxu0
  %v10432 = vadd.f32 %v10391, %v10431
  %v10433 = vpop.f32.mrb[0].mxu0
  %v10434 = vpop.f32.mrb[0].mxu0
  %10435 = vdwg.mxu0
  %10436 = vmatprep.subr.bf16.mxu0 %v7462
  %10437 = vmatpush1.bf16.msra.mxu0 %v7461
  %10438 = vmatprep.subr.bf16.mxu0 %v7470
  %10439 = vmatpush1.bf16.msra.mxu0 %v7469
  %10440 = vmatprep.subr.bf16.mxu0 %v7478
  %10441 = vmatpush1.bf16.msra.mxu0 %v7477
  %10442 = vmatprep.subr.bf16.mxu0 %v7486
  %10443 = vmatpush1.bf16.msra.mxu0 %v7485
  %10444 = vmatprep.subr.bf16.mxu0 %v7494
  %10445 = vmatpush1.bf16.msra.mxu0 %v7493
  %10446 = vmatprep.subr.bf16.mxu0 %v7502
  %10447 = vmatpush1.bf16.msra.mxu0 %v7501
  %10448 = vmatprep.subr.bf16.mxu0 %v7510
  %10449 = vmatpush1.bf16.msra.mxu0 %v7509
  %10450 = vmatprep.subr.bf16.mxu0 %v7518
  %10451 = vmatpush1.bf16.msra.mxu0 %v7517
  %10452 = vmatprep.subr.bf16.mxu0 %v7526
  %10453 = vmatpush1.bf16.msra.mxu0 %v7525
  %10454 = vmatprep.subr.bf16.mxu0 %v7534
  %10455 = vmatpush1.bf16.msra.mxu0 %v7533
  %10456 = vmatprep.subr.bf16.mxu0 %v7542
  %10457 = vmatpush1.bf16.msra.mxu0 %v7541
  %10458 = vmatprep.subr.bf16.mxu0 %v7550
  %10459 = vmatpush1.bf16.msra.mxu0 %v7549
  %10460 = vmatprep.subr.bf16.mxu0 %v7558
  %10461 = vmatpush1.bf16.msra.mxu0 %v7557
  %10462 = vmatprep.subr.bf16.mxu0 %v7566
  %10463 = vmatpush1.bf16.msra.mxu0 %v7565
  %10464 = vmatprep.subr.bf16.mxu0 %v7574
  %10465 = vmatpush1.bf16.msra.mxu0 %v7573
  %10466 = vmatprep.subr.bf16.mxu0 %v7582
  %10467 = vmatpush1.bf16.msra.mxu0 %v7581
  %10468 = vmatprep.mubr.bf16.mxu0 %v1699
  %10469 = vmatmul.mubr.bf16.gmra.mrb[0].mxu0 %v1698
  %v10470 = vpop.f32.mrb[0].mxu0
  %v10471 = vadd.f32 %v10430, %v10470
  %v10472 = vpop.f32.mrb[0].mxu0
  %v10473 = vadd.f32 %v10432, %v10472
  %v10474 = vpop.f32.mrb[0].mxu0
  %v10475 = vpop.f32.mrb[0].mxu0
  %10476 = vdwg.mxu0
  %10477 = vmatprep.subr.bf16.mxu0 %v7590
  %10478 = vmatpush1.bf16.msra.mxu0 %v7589
  %10479 = vmatprep.subr.bf16.mxu0 %v7598
  %10480 = vmatpush1.bf16.msra.mxu0 %v7597
  %10481 = vmatprep.subr.bf16.mxu0 %v7606
  %10482 = vmatpush1.bf16.msra.mxu0 %v7605
  %10483 = vmatprep.subr.bf16.mxu0 %v7614
  %10484 = vmatpush1.bf16.msra.mxu0 %v7613
  %10485 = vmatprep.subr.bf16.mxu0 %v7622
  %10486 = vmatpush1.bf16.msra.mxu0 %v7621
  %10487 = vmatprep.subr.bf16.mxu0 %v7630
  %10488 = vmatpush1.bf16.msra.mxu0 %v7629
  %10489 = vmatprep.subr.bf16.mxu0 %v7638
  %10490 = vmatpush1.bf16.msra.mxu0 %v7637
  %10491 = vmatprep.subr.bf16.mxu0 %v7646
  %10492 = vmatpush1.bf16.msra.mxu0 %v7645
  %10493 = vmatprep.subr.bf16.mxu0 %v7654
  %10494 = vmatpush1.bf16.msra.mxu0 %v7653
  %10495 = vmatprep.subr.bf16.mxu0 %v7662
  %10496 = vmatpush1.bf16.msra.mxu0 %v7661
  %10497 = vmatprep.subr.bf16.mxu0 %v7670
  %10498 = vmatpush1.bf16.msra.mxu0 %v7669
  %10499 = vmatprep.subr.bf16.mxu0 %v7678
  %10500 = vmatpush1.bf16.msra.mxu0 %v7677
  %10501 = vmatprep.subr.bf16.mxu0 %v7686
  %10502 = vmatpush1.bf16.msra.mxu0 %v7685
  %10503 = vmatprep.subr.bf16.mxu0 %v7694
  %10504 = vmatpush1.bf16.msra.mxu0 %v7693
  %10505 = vmatprep.subr.bf16.mxu0 %v7702
  %10506 = vmatpush1.bf16.msra.mxu0 %v7701
  %10507 = vmatprep.subr.bf16.mxu0 %v7710
  %10508 = vmatpush1.bf16.msra.mxu0 %v7709
  %10509 = vmatprep.mubr.bf16.mxu0 %v1701
  %10510 = vmatmul.mubr.bf16.gmra.mrb[0].mxu0 %v1700
  %v10511 = vpop.f32.mrb[0].mxu0
  %v10512 = vadd.f32 %v10471, %v10511
  %v10513 = vpop.f32.mrb[0].mxu0
  %v10514 = vadd.f32 %v10473, %v10513
  %v10515 = vpop.f32.mrb[0].mxu0
  %v10516 = vpop.f32.mrb[0].mxu0
  %10517 = vdwg.mxu0
  %10518 = vmatprep.subr.bf16.mxu0 %v7718
  %10519 = vmatpush1.bf16.msra.mxu0 %v7717
  %10520 = vmatprep.subr.bf16.mxu0 %v7726
  %10521 = vmatpush1.bf16.msra.mxu0 %v7725
  %10522 = vmatprep.subr.bf16.mxu0 %v7734
  %10523 = vmatpush1.bf16.msra.mxu0 %v7733
  %10524 = vmatprep.subr.bf16.mxu0 %v7742
  %10525 = vmatpush1.bf16.msra.mxu0 %v7741
  %10526 = vmatprep.subr.bf16.mxu0 %v7750
  %10527 = vmatpush1.bf16.msra.mxu0 %v7749
  %10528 = vmatprep.subr.bf16.mxu0 %v7758
  %10529 = vmatpush1.bf16.msra.mxu0 %v7757
  %10530 = vmatprep.subr.bf16.mxu0 %v7766
  %10531 = vmatpush1.bf16.msra.mxu0 %v7765
  %10532 = vmatprep.subr.bf16.mxu0 %v7774
  %10533 = vmatpush1.bf16.msra.mxu0 %v7773
  %10534 = vmatprep.subr.bf16.mxu0 %v7782
  %10535 = vmatpush1.bf16.msra.mxu0 %v7781
  %10536 = vmatprep.subr.bf16.mxu0 %v7790
  %10537 = vmatpush1.bf16.msra.mxu0 %v7789
  %10538 = vmatprep.subr.bf16.mxu0 %v7798
  %10539 = vmatpush1.bf16.msra.mxu0 %v7797
  %10540 = vmatprep.subr.bf16.mxu0 %v7806
  %10541 = vmatpush1.bf16.msra.mxu0 %v7805
  %10542 = vmatprep.subr.bf16.mxu0 %v7814
  %10543 = vmatpush1.bf16.msra.mxu0 %v7813
  %10544 = vmatprep.subr.bf16.mxu0 %v7822
  %10545 = vmatpush1.bf16.msra.mxu0 %v7821
  %10546 = vmatprep.subr.bf16.mxu0 %v7830
  %10547 = vmatpush1.bf16.msra.mxu0 %v7829
  %10548 = vmatprep.subr.bf16.mxu0 %v7838
  %10549 = vmatpush1.bf16.msra.mxu0 %v7837
  %10550 = vmatprep.mubr.bf16.mxu0 %v1703
  %10551 = vmatmul.mubr.bf16.gmra.mrb[0].mxu0 %v1702
  %v10552 = vpop.f32.mrb[0].mxu0
  %v10553 = vadd.f32 %v10512, %v10552
  %v10554 = vpop.f32.mrb[0].mxu0
  %v10555 = vadd.f32 %v10514, %v10554
  %v10556 = vpop.f32.mrb[0].mxu0
  %v10557 = vpop.f32.mrb[0].mxu0
  %10558 = vdwg.mxu0
  %10559 = vmatprep.subr.bf16.mxu0 %v7846
  %10560 = vmatpush1.bf16.msra.mxu0 %v7845
  %10561 = vmatprep.subr.bf16.mxu0 %v7854
  %10562 = vmatpush1.bf16.msra.mxu0 %v7853
  %10563 = vmatprep.subr.bf16.mxu0 %v7862
  %10564 = vmatpush1.bf16.msra.mxu0 %v7861
  %10565 = vmatprep.subr.bf16.mxu0 %v7870
  %10566 = vmatpush1.bf16.msra.mxu0 %v7869
  %10567 = vmatprep.subr.bf16.mxu0 %v7878
  %10568 = vmatpush1.bf16.msra.mxu0 %v7877
  %10569 = vmatprep.subr.bf16.mxu0 %v7886
  %10570 = vmatpush1.bf16.msra.mxu0 %v7885
  %10571 = vmatprep.subr.bf16.mxu0 %v7894
  %10572 = vmatpush1.bf16.msra.mxu0 %v7893
  %10573 = vmatprep.subr.bf16.mxu0 %v7902
  %10574 = vmatpush1.bf16.msra.mxu0 %v7901
  %10575 = vmatprep.subr.bf16.mxu0 %v7910
  %10576 = vmatpush1.bf16.msra.mxu0 %v7909
  %10577 = vmatprep.subr.bf16.mxu0 %v7918
  %10578 = vmatpush1.bf16.msra.mxu0 %v7917
  %10579 = vmatprep.subr.bf16.mxu0 %v7926
  %10580 = vmatpush1.bf16.msra.mxu0 %v7925
  %10581 = vmatprep.subr.bf16.mxu0 %v7934
  %10582 = vmatpush1.bf16.msra.mxu0 %v7933
  %10583 = vmatprep.subr.bf16.mxu0 %v7942
  %10584 = vmatpush1.bf16.msra.mxu0 %v7941
  %10585 = vmatprep.subr.bf16.mxu0 %v7950
  %10586 = vmatpush1.bf16.msra.mxu0 %v7949
  %10587 = vmatprep.subr.bf16.mxu0 %v7958
  %10588 = vmatpush1.bf16.msra.mxu0 %v7957
  %10589 = vmatprep.subr.bf16.mxu0 %v7966
  %10590 = vmatpush1.bf16.msra.mxu0 %v7965
  %10591 = vmatprep.mubr.bf16.mxu0 %v1705
  %10592 = vmatmul.mubr.bf16.gmra.mrb[0].mxu0 %v1704
  %v10593 = vpop.f32.mrb[0].mxu0
  %v10594 = vadd.f32 %v10553, %v10593
  %v10595 = vpop.f32.mrb[0].mxu0
  %v10596 = vadd.f32 %v10555, %v10595
  %v10597 = vpop.f32.mrb[0].mxu0
  %v10598 = vpop.f32.mrb[0].mxu0
  %10599 = vdwg.mxu0
  %10600 = vmatprep.subr.bf16.mxu0 %v7974
  %10601 = vmatpush1.bf16.msra.mxu0 %v7973
  %10602 = vmatprep.subr.bf16.mxu0 %v7982
  %10603 = vmatpush1.bf16.msra.mxu0 %v7981
  %10604 = vmatprep.subr.bf16.mxu0 %v7990
  %10605 = vmatpush1.bf16.msra.mxu0 %v7989
  %10606 = vmatprep.subr.bf16.mxu0 %v7998
  %10607 = vmatpush1.bf16.msra.mxu0 %v7997
  %10608 = vmatprep.subr.bf16.mxu0 0
  %10609 = vmatpush1.bf16.msra.mxu0 0
  %10610 = vmatprep.subr.bf16.mxu0 0
  %10611 = vmatpush1.bf16.msra.mxu0 0
  %10612 = vmatprep.subr.bf16.mxu0 0
  %10613 = vmatpush1.bf16.msra.mxu0 0
  %10614 = vmatprep.subr.bf16.mxu0 0
  %10615 = vmatpush1.bf16.msra.mxu0 0
  %10616 = vmatprep.subr.bf16.mxu0 0
  %10617 = vmatpush1.bf16.msra.mxu0 0
  %10618 = vmatprep.subr.bf16.mxu0 0
  %10619 = vmatpush1.bf16.msra.mxu0 0
  %10620 = vmatprep.subr.bf16.mxu0 0
  %10621 = vmatpush1.bf16.msra.mxu0 0
  %10622 = vmatprep.subr.bf16.mxu0 0
  %10623 = vmatpush1.bf16.msra.mxu0 0
  %10624 = vmatprep.subr.bf16.mxu0 0
  %10625 = vmatpush1.bf16.msra.mxu0 0
  %10626 = vmatprep.subr.bf16.mxu0 0
  %10627 = vmatpush1.bf16.msra.mxu0 0
  %10628 = vmatprep.subr.bf16.mxu0 0
  %10629 = vmatpush1.bf16.msra.mxu0 0
  %10630 = vmatprep.subr.bf16.mxu0 0
  %10631 = vmatpush1.bf16.msra.mxu0 0
  %10632 = vmatprep.mubr.bf16.mxu0 0
  %10633 = vmatmul.mubr.bf16.gmra.mrb[0].mxu0 %v9573
  %v10634 = vpop.f32.mrb[0].mxu0
  %v10635 = vadd.f32 %v10594, %v10634
  %v10636 = vpop.f32.mrb[0].mxu0
  %v10637 = vadd.f32 %v10596, %v10636
  %v10638 = vpop.f32.mrb[0].mxu0
  %v10639 = vpop.f32.mrb[0].mxu0
  %10640 = vdwg.mxu0
  %10641 = vmatprep.subr.bf16.mxu0 %v6440
  %10642 = vmatpush1.bf16.msra.mxu0 %v6439
  %10643 = vmatprep.subr.bf16.mxu0 %v6448
  %10644 = vmatpush1.bf16.msra.mxu0 %v6447
  %10645 = vmatprep.subr.bf16.mxu0 %v6456
  %10646 = vmatpush1.bf16.msra.mxu0 %v6455
  %10647 = vmatprep.subr.bf16.mxu0 %v6464
  %10648 = vmatpush1.bf16.msra.mxu0 %v6463
  %10649 = vmatprep.subr.bf16.mxu0 %v6472
  %10650 = vmatpush1.bf16.msra.mxu0 %v6471
  %10651 = vmatprep.subr.bf16.mxu0 %v6480
  %10652 = vmatpush1.bf16.msra.mxu0 %v6479
  %10653 = vmatprep.subr.bf16.mxu0 %v6488
  %10654 = vmatpush1.bf16.msra.mxu0 %v6487
  %10655 = vmatprep.subr.bf16.mxu0 %v6496
  %10656 = vmatpush1.bf16.msra.mxu0 %v6495
  %10657 = vmatprep.subr.bf16.mxu0 %v6504
  %10658 = vmatpush1.bf16.msra.mxu0 %v6503
  %10659 = vmatprep.subr.bf16.mxu0 %v6512
  %10660 = vmatpush1.bf16.msra.mxu0 %v6511
  %10661 = vmatprep.subr.bf16.mxu0 %v6520
  %10662 = vmatpush1.bf16.msra.mxu0 %v6519
  %10663 = vmatprep.subr.bf16.mxu0 %v6528
  %10664 = vmatpush1.bf16.msra.mxu0 %v6527
  %10665 = vmatprep.subr.bf16.mxu0 %v6536
  %10666 = vmatpush1.bf16.msra.mxu0 %v6535
  %10667 = vmatprep.subr.bf16.mxu0 %v6544
  %10668 = vmatpush1.bf16.msra.mxu0 %v6543
  %10669 = vmatprep.subr.bf16.mxu0 %v6552
  %10670 = vmatpush1.bf16.msra.mxu0 %v6551
  %10671 = vmatprep.subr.bf16.mxu0 %v6560
  %10672 = vmatpush1.bf16.msra.mxu0 %v6559
  %10673 = vmatprep.mubr.bf16.mxu0 %v1683
  %10674 = vmatmul.mubr.bf16.gmra.mrb[0].mxu0 %v1682
  %v10675 = vpop.f32.mrb[0].mxu0
  %v10676 = vadd.f32 %v1623, %v10675
  %v10677 = vpop.f32.mrb[0].mxu0
  %v10678 = vadd.f32 %v1627, %v10677
  %v10679 = vpop.f32.mrb[0].mxu0
  %v10680 = vpop.f32.mrb[0].mxu0
  %10681 = vdwg.mxu0
  %10682 = vmatprep.subr.bf16.mxu0 %v6568
  %10683 = vmatpush1.bf16.msra.mxu0 %v6567
  %10684 = vmatprep.subr.bf16.mxu0 %v6576
  %10685 = vmatpush1.bf16.msra.mxu0 %v6575
  %10686 = vmatprep.subr.bf16.mxu0 %v6584
  %10687 = vmatpush1.bf16.msra.mxu0 %v6583
  %10688 = vmatprep.subr.bf16.mxu0 %v6592
  %10689 = vmatpush1.bf16.msra.mxu0 %v6591
  %10690 = vmatprep.subr.bf16.mxu0 %v6600
  %10691 = vmatpush1.bf16.msra.mxu0 %v6599
  %10692 = vmatprep.subr.bf16.mxu0 %v6608
  %10693 = vmatpush1.bf16.msra.mxu0 %v6607
  %10694 = vmatprep.subr.bf16.mxu0 %v6616
  %10695 = vmatpush1.bf16.msra.mxu0 %v6615
  %10696 = vmatprep.subr.bf16.mxu0 %v6624
  %10697 = vmatpush1.bf16.msra.mxu0 %v6623
  %10698 = vmatprep.subr.bf16.mxu0 %v6632
  %10699 = vmatpush1.bf16.msra.mxu0 %v6631
  %10700 = vmatprep.subr.bf16.mxu0 %v6640
  %10701 = vmatpush1.bf16.msra.mxu0 %v6639
  %10702 = vmatprep.subr.bf16.mxu0 %v6648
  %10703 = vmatpush1.bf16.msra.mxu0 %v6647
  %10704 = vmatprep.subr.bf16.mxu0 %v6656
  %10705 = vmatpush1.bf16.msra.mxu0 %v6655
  %10706 = vmatprep.subr.bf16.mxu0 %v6664
  %10707 = vmatpush1.bf16.msra.mxu0 %v6663
  %10708 = vmatprep.subr.bf16.mxu0 %v6672
  %10709 = vmatpush1.bf16.msra.mxu0 %v6671
  %10710 = vmatprep.subr.bf16.mxu0 %v6680
  %10711 = vmatpush1.bf16.msra.mxu0 %v6679
  %10712 = vmatprep.subr.bf16.mxu0 %v6688
  %10713 = vmatpush1.bf16.msra.mxu0 %v6687
  %10714 = vmatprep.mubr.bf16.mxu0 %v1685
  %10715 = vmatmul.mubr.bf16.gmra.mrb[0].mxu0 %v1684
  %v10716 = vpop.f32.mrb[0].mxu0
  %v10717 = vadd.f32 %v10676, %v10716
  %v10718 = vpop.f32.mrb[0].mxu0
  %v10719 = vadd.f32 %v10678, %v10718
  %v10720 = vpop.f32.mrb[0].mxu0
  %v10721 = vpop.f32.mrb[0].mxu0
  %10722 = vdwg.mxu0
  %10723 = vmatprep.subr.bf16.mxu0 %v6696
  %10724 = vmatpush1.bf16.msra.mxu0 %v6695
  %10725 = vmatprep.subr.bf16.mxu0 %v6704
  %10726 = vmatpush1.bf16.msra.mxu0 %v6703
  %10727 = vmatprep.subr.bf16.mxu0 %v6712
  %10728 = vmatpush1.bf16.msra.mxu0 %v6711
  %10729 = vmatprep.subr.bf16.mxu0 %v6720
  %10730 = vmatpush1.bf16.msra.mxu0 %v6719
  %10731 = vmatprep.subr.bf16.mxu0 %v6728
  %10732 = vmatpush1.bf16.msra.mxu0 %v6727
  %10733 = vmatprep.subr.bf16.mxu0 %v6736
  %10734 = vmatpush1.bf16.msra.mxu0 %v6735
  %10735 = vmatprep.subr.bf16.mxu0 %v6744
  %10736 = vmatpush1.bf16.msra.mxu0 %v6743
  %10737 = vmatprep.subr.bf16.mxu0 %v6752
  %10738 = vmatpush1.bf16.msra.mxu0 %v6751
  %10739 = vmatprep.subr.bf16.mxu0 %v6760
  %10740 = vmatpush1.bf16.msra.mxu0 %v6759
  %10741 = vmatprep.subr.bf16.mxu0 %v6768
  %10742 = vmatpush1.bf16.msra.mxu0 %v6767
  %10743 = vmatprep.subr.bf16.mxu0 %v6776
  %10744 = vmatpush1.bf16.msra.mxu0 %v6775
  %10745 = vmatprep.subr.bf16.mxu0 %v6784
  %10746 = vmatpush1.bf16.msra.mxu0 %v6783
  %10747 = vmatprep.subr.bf16.mxu0 %v6792
  %10748 = vmatpush1.bf16.msra.mxu0 %v6791
  %10749 = vmatprep.subr.bf16.mxu0 %v6800
  %10750 = vmatpush1.bf16.msra.mxu0 %v6799
  %10751 = vmatprep.subr.bf16.mxu0 %v6808
  %10752 = vmatpush1.bf16.msra.mxu0 %v6807
  %10753 = vmatprep.subr.bf16.mxu0 %v6816
  %10754 = vmatpush1.bf16.msra.mxu0 %v6815
  %10755 = vmatprep.mubr.bf16.mxu0 %v1687
  %10756 = vmatmul.mubr.bf16.gmra.mrb[0].mxu0 %v1686
  %v10757 = vpop.f32.mrb[0].mxu0
  %v10758 = vadd.f32 %v10717, %v10757
  %v10759 = vpop.f32.mrb[0].mxu0
  %v10760 = vadd.f32 %v10719, %v10759
  %v10761 = vpop.f32.mrb[0].mxu0
  %v10762 = vpop.f32.mrb[0].mxu0
  %10763 = vdwg.mxu0
  %10764 = vmatprep.subr.bf16.mxu0 %v6824
  %10765 = vmatpush1.bf16.msra.mxu0 %v6823
  %10766 = vmatprep.subr.bf16.mxu0 %v6832
  %10767 = vmatpush1.bf16.msra.mxu0 %v6831
  %10768 = vmatprep.subr.bf16.mxu0 %v6840
  %10769 = vmatpush1.bf16.msra.mxu0 %v6839
  %10770 = vmatprep.subr.bf16.mxu0 %v6848
  %10771 = vmatpush1.bf16.msra.mxu0 %v6847
  %10772 = vmatprep.subr.bf16.mxu0 %v6856
  %10773 = vmatpush1.bf16.msra.mxu0 %v6855
  %10774 = vmatprep.subr.bf16.mxu0 %v6864
  %10775 = vmatpush1.bf16.msra.mxu0 %v6863
  %10776 = vmatprep.subr.bf16.mxu0 %v6872
  %10777 = vmatpush1.bf16.msra.mxu0 %v6871
  %10778 = vmatprep.subr.bf16.mxu0 %v6880
  %10779 = vmatpush1.bf16.msra.mxu0 %v6879
  %10780 = vmatprep.subr.bf16.mxu0 %v6888
  %10781 = vmatpush1.bf16.msra.mxu0 %v6887
  %10782 = vmatprep.subr.bf16.mxu0 %v6896
  %10783 = vmatpush1.bf16.msra.mxu0 %v6895
  %10784 = vmatprep.subr.bf16.mxu0 %v6904
  %10785 = vmatpush1.bf16.msra.mxu0 %v6903
  %10786 = vmatprep.subr.bf16.mxu0 %v6912
  %10787 = vmatpush1.bf16.msra.mxu0 %v6911
  %10788 = vmatprep.subr.bf16.mxu0 %v6920
  %10789 = vmatpush1.bf16.msra.mxu0 %v6919
  %10790 = vmatprep.subr.bf16.mxu0 %v6928
  %10791 = vmatpush1.bf16.msra.mxu0 %v6927
  %10792 = vmatprep.subr.bf16.mxu0 %v6936
  %10793 = vmatpush1.bf16.msra.mxu0 %v6935
  %10794 = vmatprep.subr.bf16.mxu0 %v6944
  %10795 = vmatpush1.bf16.msra.mxu0 %v6943
  %10796 = vmatprep.mubr.bf16.mxu0 %v1689
  %10797 = vmatmul.mubr.bf16.gmra.mrb[0].mxu0 %v1688
  %v10798 = vpop.f32.mrb[0].mxu0
  %v10799 = vadd.f32 %v10758, %v10798
  %v10800 = vpop.f32.mrb[0].mxu0
  %v10801 = vadd.f32 %v10760, %v10800
  %v10802 = vpop.f32.mrb[0].mxu0
  %v10803 = vpop.f32.mrb[0].mxu0
  %10804 = vdwg.mxu0
  %10805 = vmatprep.subr.bf16.mxu0 %v6952
  %10806 = vmatpush1.bf16.msra.mxu0 %v6951
  %10807 = vmatprep.subr.bf16.mxu0 %v6960
  %10808 = vmatpush1.bf16.msra.mxu0 %v6959
  %10809 = vmatprep.subr.bf16.mxu0 %v6968
  %10810 = vmatpush1.bf16.msra.mxu0 %v6967
  %10811 = vmatprep.subr.bf16.mxu0 %v6976
  %10812 = vmatpush1.bf16.msra.mxu0 %v6975
  %10813 = vmatprep.subr.bf16.mxu0 %v6984
  %10814 = vmatpush1.bf16.msra.mxu0 %v6983
  %10815 = vmatprep.subr.bf16.mxu0 %v6992
  %10816 = vmatpush1.bf16.msra.mxu0 %v6991
  %10817 = vmatprep.subr.bf16.mxu0 %v7000
  %10818 = vmatpush1.bf16.msra.mxu0 %v6999
  %10819 = vmatprep.subr.bf16.mxu0 %v7008
  %10820 = vmatpush1.bf16.msra.mxu0 %v7007
  %10821 = vmatprep.subr.bf16.mxu0 %v7016
  %10822 = vmatpush1.bf16.msra.mxu0 %v7015
  %10823 = vmatprep.subr.bf16.mxu0 %v7024
  %10824 = vmatpush1.bf16.msra.mxu0 %v7023
  %10825 = vmatprep.subr.bf16.mxu0 %v7032
  %10826 = vmatpush1.bf16.msra.mxu0 %v7031
  %10827 = vmatprep.subr.bf16.mxu0 %v7040
  %10828 = vmatpush1.bf16.msra.mxu0 %v7039
  %10829 = vmatprep.subr.bf16.mxu0 %v7048
  %10830 = vmatpush1.bf16.msra.mxu0 %v7047
  %10831 = vmatprep.subr.bf16.mxu0 %v7056
  %10832 = vmatpush1.bf16.msra.mxu0 %v7055
  %10833 = vmatprep.subr.bf16.mxu0 %v7064
  %10834 = vmatpush1.bf16.msra.mxu0 %v7063
  %10835 = vmatprep.subr.bf16.mxu0 %v7072
  %10836 = vmatpush1.bf16.msra.mxu0 %v7071
  %10837 = vmatprep.mubr.bf16.mxu0 %v1691
  %10838 = vmatmul.mubr.bf16.gmra.mrb[0].mxu0 %v1690
  %v10839 = vpop.f32.mrb[0].mxu0
  %v10840 = vadd.f32 %v10799, %v10839
  %v10841 = vpop.f32.mrb[0].mxu0
  %v10842 = vadd.f32 %v10801, %v10841
  %v10843 = vpop.f32.mrb[0].mxu0
  %v10844 = vpop.f32.mrb[0].mxu0
  %10845 = vdwg.mxu0
  %10846 = vmatprep.subr.bf16.mxu0 %v7080
  %10847 = vmatpush1.bf16.msra.mxu0 %v7079
  %10848 = vmatprep.subr.bf16.mxu0 %v7088
  %10849 = vmatpush1.bf16.msra.mxu0 %v7087
  %10850 = vmatprep.subr.bf16.mxu0 %v7096
  %10851 = vmatpush1.bf16.msra.mxu0 %v7095
  %10852 = vmatprep.subr.bf16.mxu0 %v7104
  %10853 = vmatpush1.bf16.msra.mxu0 %v7103
  %10854 = vmatprep.subr.bf16.mxu0 %v7112
  %10855 = vmatpush1.bf16.msra.mxu0 %v7111
  %10856 = vmatprep.subr.bf16.mxu0 %v7120
  %10857 = vmatpush1.bf16.msra.mxu0 %v7119
  %10858 = vmatprep.subr.bf16.mxu0 %v7128
  %10859 = vmatpush1.bf16.msra.mxu0 %v7127
  %10860 = vmatprep.subr.bf16.mxu0 %v7136
  %10861 = vmatpush1.bf16.msra.mxu0 %v7135
  %10862 = vmatprep.subr.bf16.mxu0 %v7144
  %10863 = vmatpush1.bf16.msra.mxu0 %v7143
  %10864 = vmatprep.subr.bf16.mxu0 %v7152
  %10865 = vmatpush1.bf16.msra.mxu0 %v7151
  %10866 = vmatprep.subr.bf16.mxu0 %v7160
  %10867 = vmatpush1.bf16.msra.mxu0 %v7159
  %10868 = vmatprep.subr.bf16.mxu0 %v7168
  %10869 = vmatpush1.bf16.msra.mxu0 %v7167
  %10870 = vmatprep.subr.bf16.mxu0 %v7176
  %10871 = vmatpush1.bf16.msra.mxu0 %v7175
  %10872 = vmatprep.subr.bf16.mxu0 %v7184
  %10873 = vmatpush1.bf16.msra.mxu0 %v7183
  %10874 = vmatprep.subr.bf16.mxu0 %v7192
  %10875 = vmatpush1.bf16.msra.mxu0 %v7191
  %10876 = vmatprep.subr.bf16.mxu0 %v7200
  %10877 = vmatpush1.bf16.msra.mxu0 %v7199
  %10878 = vmatprep.mubr.bf16.mxu0 %v1693
  %10879 = vmatmul.mubr.bf16.gmra.mrb[0].mxu0 %v1692
  %v10880 = vpop.f32.mrb[0].mxu0
  %v10881 = vadd.f32 %v10840, %v10880
  %v10882 = vpop.f32.mrb[0].mxu0
  %v10883 = vadd.f32 %v10842, %v10882
  %v10884 = vpop.f32.mrb[0].mxu0
  %v10885 = vpop.f32.mrb[0].mxu0
  %10886 = vdwg.mxu0
  %10887 = vmatprep.subr.bf16.mxu0 %v7208
  %10888 = vmatpush1.bf16.msra.mxu0 %v7207
  %10889 = vmatprep.subr.bf16.mxu0 %v7216
  %10890 = vmatpush1.bf16.msra.mxu0 %v7215
  %10891 = vmatprep.subr.bf16.mxu0 %v7224
  %10892 = vmatpush1.bf16.msra.mxu0 %v7223
  %10893 = vmatprep.subr.bf16.mxu0 %v7232
  %10894 = vmatpush1.bf16.msra.mxu0 %v7231
  %10895 = vmatprep.subr.bf16.mxu0 %v7240
  %10896 = vmatpush1.bf16.msra.mxu0 %v7239
  %10897 = vmatprep.subr.bf16.mxu0 %v7248
  %10898 = vmatpush1.bf16.msra.mxu0 %v7247
  %10899 = vmatprep.subr.bf16.mxu0 %v7256
  %10900 = vmatpush1.bf16.msra.mxu0 %v7255
  %10901 = vmatprep.subr.bf16.mxu0 %v7264
  %10902 = vmatpush1.bf16.msra.mxu0 %v7263
  %10903 = vmatprep.subr.bf16.mxu0 %v7272
  %10904 = vmatpush1.bf16.msra.mxu0 %v7271
  %10905 = vmatprep.subr.bf16.mxu0 %v7280
  %10906 = vmatpush1.bf16.msra.mxu0 %v7279
  %10907 = vmatprep.subr.bf16.mxu0 %v7288
  %10908 = vmatpush1.bf16.msra.mxu0 %v7287
  %10909 = vmatprep.subr.bf16.mxu0 %v7296
  %10910 = vmatpush1.bf16.msra.mxu0 %v7295
  %10911 = vmatprep.subr.bf16.mxu0 %v7304
  %10912 = vmatpush1.bf16.msra.mxu0 %v7303
  %10913 = vmatprep.subr.bf16.mxu0 %v7312
  %10914 = vmatpush1.bf16.msra.mxu0 %v7311
  %10915 = vmatprep.subr.bf16.mxu0 %v7320
  %10916 = vmatpush1.bf16.msra.mxu0 %v7319
  %10917 = vmatprep.subr.bf16.mxu0 %v7328
  %10918 = vmatpush1.bf16.msra.mxu0 %v7327
  %10919 = vmatprep.mubr.bf16.mxu0 %v1695
  %10920 = vmatmul.mubr.bf16.gmra.mrb[0].mxu0 %v1694
  %v10921 = vpop.f32.mrb[0].mxu0
  %v10922 = vadd.f32 %v10881, %v10921
  %v10923 = vpop.f32.mrb[0].mxu0
  %v10924 = vadd.f32 %v10883, %v10923
  %v10925 = vpop.f32.mrb[0].mxu0
  %v10926 = vpop.f32.mrb[0].mxu0
  %10927 = vdwg.mxu0
  %10928 = vmatprep.subr.bf16.mxu0 %v7336
  %10929 = vmatpush1.bf16.msra.mxu0 %v7335
  %10930 = vmatprep.subr.bf16.mxu0 %v7344
  %10931 = vmatpush1.bf16.msra.mxu0 %v7343
  %10932 = vmatprep.subr.bf16.mxu0 %v7352
  %10933 = vmatpush1.bf16.msra.mxu0 %v7351
  %10934 = vmatprep.subr.bf16.mxu0 %v7360
  %10935 = vmatpush1.bf16.msra.mxu0 %v7359
  %10936 = vmatprep.subr.bf16.mxu0 %v7368
  %10937 = vmatpush1.bf16.msra.mxu0 %v7367
  %10938 = vmatprep.subr.bf16.mxu0 %v7376
  %10939 = vmatpush1.bf16.msra.mxu0 %v7375
  %10940 = vmatprep.subr.bf16.mxu0 %v7384
  %10941 = vmatpush1.bf16.msra.mxu0 %v7383
  %10942 = vmatprep.subr.bf16.mxu0 %v7392
  %10943 = vmatpush1.bf16.msra.mxu0 %v7391
  %10944 = vmatprep.subr.bf16.mxu0 %v7400
  %10945 = vmatpush1.bf16.msra.mxu0 %v7399
  %10946 = vmatprep.subr.bf16.mxu0 %v7408
  %10947 = vmatpush1.bf16.msra.mxu0 %v7407
  %10948 = vmatprep.subr.bf16.mxu0 %v7416
  %10949 = vmatpush1.bf16.msra.mxu0 %v7415
  %10950 = vmatprep.subr.bf16.mxu0 %v7424
  %10951 = vmatpush1.bf16.msra.mxu0 %v7423
  %10952 = vmatprep.subr.bf16.mxu0 %v7432
  %10953 = vmatpush1.bf16.msra.mxu0 %v7431
  %10954 = vmatprep.subr.bf16.mxu0 %v7440
  %10955 = vmatpush1.bf16.msra.mxu0 %v7439
  %10956 = vmatprep.subr.bf16.mxu0 %v7448
  %10957 = vmatpush1.bf16.msra.mxu0 %v7447
  %10958 = vmatprep.subr.bf16.mxu0 %v7456
  %10959 = vmatpush1.bf16.msra.mxu0 %v7455
  %10960 = vmatprep.mubr.bf16.mxu0 %v1697
  %10961 = vmatmul.mubr.bf16.gmra.mrb[0].mxu0 %v1696
  %v10962 = vpop.f32.mrb[0].mxu0
  %v10963 = vadd.f32 %v10922, %v10962
  %v10964 = vpop.f32.mrb[0].mxu0
  %v10965 = vadd.f32 %v10924, %v10964
  %v10966 = vpop.f32.mrb[0].mxu0
  %v10967 = vpop.f32.mrb[0].mxu0
  %10968 = vdwg.mxu0
  %10969 = vmatprep.subr.bf16.mxu0 %v7464
  %10970 = vmatpush1.bf16.msra.mxu0 %v7463
  %10971 = vmatprep.subr.bf16.mxu0 %v7472
  %10972 = vmatpush1.bf16.msra.mxu0 %v7471
  %10973 = vmatprep.subr.bf16.mxu0 %v7480
  %10974 = vmatpush1.bf16.msra.mxu0 %v7479
  %10975 = vmatprep.subr.bf16.mxu0 %v7488
  %10976 = vmatpush1.bf16.msra.mxu0 %v7487
  %10977 = vmatprep.subr.bf16.mxu0 %v7496
  %10978 = vmatpush1.bf16.msra.mxu0 %v7495
  %10979 = vmatprep.subr.bf16.mxu0 %v7504
  %10980 = vmatpush1.bf16.msra.mxu0 %v7503
  %10981 = vmatprep.subr.bf16.mxu0 %v7512
  %10982 = vmatpush1.bf16.msra.mxu0 %v7511
  %10983 = vmatprep.subr.bf16.mxu0 %v7520
  %10984 = vmatpush1.bf16.msra.mxu0 %v7519
  %10985 = vmatprep.subr.bf16.mxu0 %v7528
  %10986 = vmatpush1.bf16.msra.mxu0 %v7527
  %10987 = vmatprep.subr.bf16.mxu0 %v7536
  %10988 = vmatpush1.bf16.msra.mxu0 %v7535
  %10989 = vmatprep.subr.bf16.mxu0 %v7544
  %10990 = vmatpush1.bf16.msra.mxu0 %v7543
  %10991 = vmatprep.subr.bf16.mxu0 %v7552
  %10992 = vmatpush1.bf16.msra.mxu0 %v7551
  %10993 = vmatprep.subr.bf16.mxu0 %v7560
  %10994 = vmatpush1.bf16.msra.mxu0 %v7559
  %10995 = vmatprep.subr.bf16.mxu0 %v7568
  %10996 = vmatpush1.bf16.msra.mxu0 %v7567
  %10997 = vmatprep.subr.bf16.mxu0 %v7576
  %10998 = vmatpush1.bf16.msra.mxu0 %v7575
  %10999 = vmatprep.subr.bf16.mxu0 %v7584
  %11000 = vmatpush1.bf16.msra.mxu0 %v7583
  %11001 = vmatprep.mubr.bf16.mxu0 %v1699
  %11002 = vmatmul.mubr.bf16.gmra.mrb[0].mxu0 %v1698
  %v11003 = vpop.f32.mrb[0].mxu0
  %v11004 = vadd.f32 %v10963, %v11003
  %v11005 = vpop.f32.mrb[0].mxu0
  %v11006 = vadd.f32 %v10965, %v11005
  %v11007 = vpop.f32.mrb[0].mxu0
  %v11008 = vpop.f32.mrb[0].mxu0
  %11009 = vdwg.mxu0
  %11010 = vmatprep.subr.bf16.mxu0 %v7592
  %11011 = vmatpush1.bf16.msra.mxu0 %v7591
  %11012 = vmatprep.subr.bf16.mxu0 %v7600
  %11013 = vmatpush1.bf16.msra.mxu0 %v7599
  %11014 = vmatprep.subr.bf16.mxu0 %v7608
  %11015 = vmatpush1.bf16.msra.mxu0 %v7607
  %11016 = vmatprep.subr.bf16.mxu0 %v7616
  %11017 = vmatpush1.bf16.msra.mxu0 %v7615
  %11018 = vmatprep.subr.bf16.mxu0 %v7624
  %11019 = vmatpush1.bf16.msra.mxu0 %v7623
  %11020 = vmatprep.subr.bf16.mxu0 %v7632
  %11021 = vmatpush1.bf16.msra.mxu0 %v7631
  %11022 = vmatprep.subr.bf16.mxu0 %v7640
  %11023 = vmatpush1.bf16.msra.mxu0 %v7639
  %11024 = vmatprep.subr.bf16.mxu0 %v7648
  %11025 = vmatpush1.bf16.msra.mxu0 %v7647
  %11026 = vmatprep.subr.bf16.mxu0 %v7656
  %11027 = vmatpush1.bf16.msra.mxu0 %v7655
  %11028 = vmatprep.subr.bf16.mxu0 %v7664
  %11029 = vmatpush1.bf16.msra.mxu0 %v7663
  %11030 = vmatprep.subr.bf16.mxu0 %v7672
  %11031 = vmatpush1.bf16.msra.mxu0 %v7671
  %11032 = vmatprep.subr.bf16.mxu0 %v7680
  %11033 = vmatpush1.bf16.msra.mxu0 %v7679
  %11034 = vmatprep.subr.bf16.mxu0 %v7688
  %11035 = vmatpush1.bf16.msra.mxu0 %v7687
  %11036 = vmatprep.subr.bf16.mxu0 %v7696
  %11037 = vmatpush1.bf16.msra.mxu0 %v7695
  %11038 = vmatprep.subr.bf16.mxu0 %v7704
  %11039 = vmatpush1.bf16.msra.mxu0 %v7703
  %11040 = vmatprep.subr.bf16.mxu0 %v7712
  %11041 = vmatpush1.bf16.msra.mxu0 %v7711
  %11042 = vmatprep.mubr.bf16.mxu0 %v1701
  %11043 = vmatmul.mubr.bf16.gmra.mrb[0].mxu0 %v1700
  %v11044 = vpop.f32.mrb[0].mxu0
  %v11045 = vadd.f32 %v11004, %v11044
  %v11046 = vpop.f32.mrb[0].mxu0
  %v11047 = vadd.f32 %v11006, %v11046
  %v11048 = vpop.f32.mrb[0].mxu0
  %v11049 = vpop.f32.mrb[0].mxu0
  %11050 = vdwg.mxu0
  %11051 = vmatprep.subr.bf16.mxu0 %v7720
  %11052 = vmatpush1.bf16.msra.mxu0 %v7719
  %11053 = vmatprep.subr.bf16.mxu0 %v7728
  %11054 = vmatpush1.bf16.msra.mxu0 %v7727
  %11055 = vmatprep.subr.bf16.mxu0 %v7736
  %11056 = vmatpush1.bf16.msra.mxu0 %v7735
  %11057 = vmatprep.subr.bf16.mxu0 %v7744
  %11058 = vmatpush1.bf16.msra.mxu0 %v7743
  %11059 = vmatprep.subr.bf16.mxu0 %v7752
  %11060 = vmatpush1.bf16.msra.mxu0 %v7751
  %11061 = vmatprep.subr.bf16.mxu0 %v7760
  %11062 = vmatpush1.bf16.msra.mxu0 %v7759
  %11063 = vmatprep.subr.bf16.mxu0 %v7768
  %11064 = vmatpush1.bf16.msra.mxu0 %v7767
  %11065 = vmatprep.subr.bf16.mxu0 %v7776
  %11066 = vmatpush1.bf16.msra.mxu0 %v7775
  %11067 = vmatprep.subr.bf16.mxu0 %v7784
  %11068 = vmatpush1.bf16.msra.mxu0 %v7783
  %11069 = vmatprep.subr.bf16.mxu0 %v7792
  %11070 = vmatpush1.bf16.msra.mxu0 %v7791
  %11071 = vmatprep.subr.bf16.mxu0 %v7800
  %11072 = vmatpush1.bf16.msra.mxu0 %v7799
  %11073 = vmatprep.subr.bf16.mxu0 %v7808
  %11074 = vmatpush1.bf16.msra.mxu0 %v7807
  %11075 = vmatprep.subr.bf16.mxu0 %v7816
  %11076 = vmatpush1.bf16.msra.mxu0 %v7815
  %11077 = vmatprep.subr.bf16.mxu0 %v7824
  %11078 = vmatpush1.bf16.msra.mxu0 %v7823
  %11079 = vmatprep.subr.bf16.mxu0 %v7832
  %11080 = vmatpush1.bf16.msra.mxu0 %v7831
  %11081 = vmatprep.subr.bf16.mxu0 %v7840
  %11082 = vmatpush1.bf16.msra.mxu0 %v7839
  %11083 = vmatprep.mubr.bf16.mxu0 %v1703
  %11084 = vmatmul.mubr.bf16.gmra.mrb[0].mxu0 %v1702
  %v11085 = vpop.f32.mrb[0].mxu0
  %v11086 = vadd.f32 %v11045, %v11085
  %v11087 = vpop.f32.mrb[0].mxu0
  %v11088 = vadd.f32 %v11047, %v11087
  %v11089 = vpop.f32.mrb[0].mxu0
  %v11090 = vpop.f32.mrb[0].mxu0
  %11091 = vdwg.mxu0
  %11092 = vmatprep.subr.bf16.mxu0 %v7848
  %11093 = vmatpush1.bf16.msra.mxu0 %v7847
  %11094 = vmatprep.subr.bf16.mxu0 %v7856
  %11095 = vmatpush1.bf16.msra.mxu0 %v7855
  %11096 = vmatprep.subr.bf16.mxu0 %v7864
  %11097 = vmatpush1.bf16.msra.mxu0 %v7863
  %11098 = vmatprep.subr.bf16.mxu0 %v7872
  %11099 = vmatpush1.bf16.msra.mxu0 %v7871
  %11100 = vmatprep.subr.bf16.mxu0 %v7880
  %11101 = vmatpush1.bf16.msra.mxu0 %v7879
  %11102 = vmatprep.subr.bf16.mxu0 %v7888
  %11103 = vmatpush1.bf16.msra.mxu0 %v7887
  %11104 = vmatprep.subr.bf16.mxu0 %v7896
  %11105 = vmatpush1.bf16.msra.mxu0 %v7895
  %11106 = vmatprep.subr.bf16.mxu0 %v7904
  %11107 = vmatpush1.bf16.msra.mxu0 %v7903
  %11108 = vmatprep.subr.bf16.mxu0 %v7912
  %11109 = vmatpush1.bf16.msra.mxu0 %v7911
  %11110 = vmatprep.subr.bf16.mxu0 %v7920
  %11111 = vmatpush1.bf16.msra.mxu0 %v7919
  %11112 = vmatprep.subr.bf16.mxu0 %v7928
  %11113 = vmatpush1.bf16.msra.mxu0 %v7927
  %11114 = vmatprep.subr.bf16.mxu0 %v7936
  %11115 = vmatpush1.bf16.msra.mxu0 %v7935
  %11116 = vmatprep.subr.bf16.mxu0 %v7944
  %11117 = vmatpush1.bf16.msra.mxu0 %v7943
  %11118 = vmatprep.subr.bf16.mxu0 %v7952
  %11119 = vmatpush1.bf16.msra.mxu0 %v7951
  %11120 = vmatprep.subr.bf16.mxu0 %v7960
  %11121 = vmatpush1.bf16.msra.mxu0 %v7959
  %11122 = vmatprep.subr.bf16.mxu0 %v7968
  %11123 = vmatpush1.bf16.msra.mxu0 %v7967
  %11124 = vmatprep.mubr.bf16.mxu0 %v1705
  %11125 = vmatmul.mubr.bf16.gmra.mrb[0].mxu0 %v1704
  %v11126 = vpop.f32.mrb[0].mxu0
  %v11127 = vadd.f32 %v11086, %v11126
  %v11128 = vpop.f32.mrb[0].mxu0
  %v11129 = vadd.f32 %v11088, %v11128
  %v11130 = vpop.f32.mrb[0].mxu0
  %v11131 = vpop.f32.mrb[0].mxu0
  %11132 = vdwg.mxu0
  %11133 = vmatprep.subr.bf16.mxu0 %v7976
  %11134 = vmatpush1.bf16.msra.mxu0 %v7975
  %11135 = vmatprep.subr.bf16.mxu0 %v7984
  %11136 = vmatpush1.bf16.msra.mxu0 %v7983
  %11137 = vmatprep.subr.bf16.mxu0 %v7992
  %11138 = vmatpush1.bf16.msra.mxu0 %v7991
  %11139 = vmatprep.subr.bf16.mxu0 %v8000
  %11140 = vmatpush1.bf16.msra.mxu0 %v7999
  %11141 = vmatprep.subr.bf16.mxu0 0
  %11142 = vmatpush1.bf16.msra.mxu0 0
  %11143 = vmatprep.subr.bf16.mxu0 0
  %11144 = vmatpush1.bf16.msra.mxu0 0
  %11145 = vmatprep.subr.bf16.mxu0 0
  %11146 = vmatpush1.bf16.msra.mxu0 0
  %11147 = vmatprep.subr.bf16.mxu0 0
  %11148 = vmatpush1.bf16.msra.mxu0 0
  %11149 = vmatprep.subr.bf16.mxu0 0
  %11150 = vmatpush1.bf16.msra.mxu0 0
  %11151 = vmatprep.subr.bf16.mxu0 0
  %11152 = vmatpush1.bf16.msra.mxu0 0
  %11153 = vmatprep.subr.bf16.mxu0 0
  %11154 = vmatpush1.bf16.msra.mxu0 0
  %11155 = vmatprep.subr.bf16.mxu0 0
  %11156 = vmatpush1.bf16.msra.mxu0 0
  %11157 = vmatprep.subr.bf16.mxu0 0
  %11158 = vmatpush1.bf16.msra.mxu0 0
  %11159 = vmatprep.subr.bf16.mxu0 0
  %11160 = vmatpush1.bf16.msra.mxu0 0
  %11161 = vmatprep.subr.bf16.mxu0 0
  %11162 = vmatpush1.bf16.msra.mxu0 0
  %11163 = vmatprep.subr.bf16.mxu0 0
  %11164 = vmatpush1.bf16.msra.mxu0 0
  %11165 = vmatprep.mubr.bf16.mxu0 0
  %11166 = vmatmul.mubr.bf16.gmra.mrb[0].mxu0 %v9573
  %v11167 = vpop.f32.mrb[0].mxu0
  %v11168 = vadd.f32 %v11127, %v11167
  %v11169 = vpop.f32.mrb[0].mxu0
  %v11170 = vadd.f32 %v11129, %v11169
  %v11171 = vpop.f32.mrb[0].mxu0
  %v11172 = vpop.f32.mrb[0].mxu0
  %11173 = vdwg.mxu0
  %11174 = vmatprep.subr.bf16.mxu0 %v6442
  %11175 = vmatpush1.bf16.msra.mxu0 %v6441
  %11176 = vmatprep.subr.bf16.mxu0 %v6450
  %11177 = vmatpush1.bf16.msra.mxu0 %v6449
  %11178 = vmatprep.subr.bf16.mxu0 %v6458
  %11179 = vmatpush1.bf16.msra.mxu0 %v6457
  %11180 = vmatprep.subr.bf16.mxu0 %v6466
  %11181 = vmatpush1.bf16.msra.mxu0 %v6465
  %11182 = vmatprep.subr.bf16.mxu0 %v6474
  %11183 = vmatpush1.bf16.msra.mxu0 %v6473
  %11184 = vmatprep.subr.bf16.mxu0 %v6482
  %11185 = vmatpush1.bf16.msra.mxu0 %v6481
  %11186 = vmatprep.subr.bf16.mxu0 %v6490
  %11187 = vmatpush1.bf16.msra.mxu0 %v6489
  %11188 = vmatprep.subr.bf16.mxu0 %v6498
  %11189 = vmatpush1.bf16.msra.mxu0 %v6497
  %11190 = vmatprep.subr.bf16.mxu0 %v6506
  %11191 = vmatpush1.bf16.msra.mxu0 %v6505
  %11192 = vmatprep.subr.bf16.mxu0 %v6514
  %11193 = vmatpush1.bf16.msra.mxu0 %v6513
  %11194 = vmatprep.subr.bf16.mxu0 %v6522
  %11195 = vmatpush1.bf16.msra.mxu0 %v6521
  %11196 = vmatprep.subr.bf16.mxu0 %v6530
  %11197 = vmatpush1.bf16.msra.mxu0 %v6529
  %11198 = vmatprep.subr.bf16.mxu0 %v6538
  %11199 = vmatpush1.bf16.msra.mxu0 %v6537
  %11200 = vmatprep.subr.bf16.mxu0 %v6546
  %11201 = vmatpush1.bf16.msra.mxu0 %v6545
  %11202 = vmatprep.subr.bf16.mxu0 %v6554
  %11203 = vmatpush1.bf16.msra.mxu0 %v6553
  %11204 = vmatprep.subr.bf16.mxu0 %v6562
  %11205 = vmatpush1.bf16.msra.mxu0 %v6561
  %11206 = vmatprep.mubr.bf16.mxu0 %v1683
  %11207 = vmatmul.mubr.bf16.gmra.mrb[0].mxu0 %v1682
  %v11208 = vpop.f32.mrb[0].mxu0
  %v11209 = vadd.f32 %v1631, %v11208
  %v11210 = vpop.f32.mrb[0].mxu0
  %v11211 = vadd.f32 %v1635, %v11210
  %v11212 = vpop.f32.mrb[0].mxu0
  %v11213 = vpop.f32.mrb[0].mxu0
  %11214 = vdwg.mxu0
  %11215 = vmatprep.subr.bf16.mxu0 %v6570
  %11216 = vmatpush1.bf16.msra.mxu0 %v6569
  %11217 = vmatprep.subr.bf16.mxu0 %v6578
  %11218 = vmatpush1.bf16.msra.mxu0 %v6577
  %11219 = vmatprep.subr.bf16.mxu0 %v6586
  %11220 = vmatpush1.bf16.msra.mxu0 %v6585
  %11221 = vmatprep.subr.bf16.mxu0 %v6594
  %11222 = vmatpush1.bf16.msra.mxu0 %v6593
  %11223 = vmatprep.subr.bf16.mxu0 %v6602
  %11224 = vmatpush1.bf16.msra.mxu0 %v6601
  %11225 = vmatprep.subr.bf16.mxu0 %v6610
  %11226 = vmatpush1.bf16.msra.mxu0 %v6609
  %11227 = vmatprep.subr.bf16.mxu0 %v6618
  %11228 = vmatpush1.bf16.msra.mxu0 %v6617
  %11229 = vmatprep.subr.bf16.mxu0 %v6626
  %11230 = vmatpush1.bf16.msra.mxu0 %v6625
  %11231 = vmatprep.subr.bf16.mxu0 %v6634
  %11232 = vmatpush1.bf16.msra.mxu0 %v6633
  %11233 = vmatprep.subr.bf16.mxu0 %v6642
  %11234 = vmatpush1.bf16.msra.mxu0 %v6641
  %11235 = vmatprep.subr.bf16.mxu0 %v6650
  %11236 = vmatpush1.bf16.msra.mxu0 %v6649
  %11237 = vmatprep.subr.bf16.mxu0 %v6658
  %11238 = vmatpush1.bf16.msra.mxu0 %v6657
  %11239 = vmatprep.subr.bf16.mxu0 %v6666
  %11240 = vmatpush1.bf16.msra.mxu0 %v6665
  %11241 = vmatprep.subr.bf16.mxu0 %v6674
  %11242 = vmatpush1.bf16.msra.mxu0 %v6673
  %11243 = vmatprep.subr.bf16.mxu0 %v6682
  %11244 = vmatpush1.bf16.msra.mxu0 %v6681
  %11245 = vmatprep.subr.bf16.mxu0 %v6690
  %11246 = vmatpush1.bf16.msra.mxu0 %v6689
  %11247 = vmatprep.mubr.bf16.mxu0 %v1685
  %11248 = vmatmul.mubr.bf16.gmra.mrb[0].mxu0 %v1684
  %v11249 = vpop.f32.mrb[0].mxu0
  %v11250 = vadd.f32 %v11209, %v11249
  %v11251 = vpop.f32.mrb[0].mxu0
  %v11252 = vadd.f32 %v11211, %v11251
  %v11253 = vpop.f32.mrb[0].mxu0
  %v11254 = vpop.f32.mrb[0].mxu0
  %11255 = vdwg.mxu0
  %11256 = vmatprep.subr.bf16.mxu0 %v6698
  %11257 = vmatpush1.bf16.msra.mxu0 %v6697
  %11258 = vmatprep.subr.bf16.mxu0 %v6706
  %11259 = vmatpush1.bf16.msra.mxu0 %v6705
  %11260 = vmatprep.subr.bf16.mxu0 %v6714
  %11261 = vmatpush1.bf16.msra.mxu0 %v6713
  %11262 = vmatprep.subr.bf16.mxu0 %v6722
  %11263 = vmatpush1.bf16.msra.mxu0 %v6721
  %11264 = vmatprep.subr.bf16.mxu0 %v6730
  %11265 = vmatpush1.bf16.msra.mxu0 %v6729
  %11266 = vmatprep.subr.bf16.mxu0 %v6738
  %11267 = vmatpush1.bf16.msra.mxu0 %v6737
  %11268 = vmatprep.subr.bf16.mxu0 %v6746
  %11269 = vmatpush1.bf16.msra.mxu0 %v6745
  %11270 = vmatprep.subr.bf16.mxu0 %v6754
  %11271 = vmatpush1.bf16.msra.mxu0 %v6753
  %11272 = vmatprep.subr.bf16.mxu0 %v6762
  %11273 = vmatpush1.bf16.msra.mxu0 %v6761
  %11274 = vmatprep.subr.bf16.mxu0 %v6770
  %11275 = vmatpush1.bf16.msra.mxu0 %v6769
  %11276 = vmatprep.subr.bf16.mxu0 %v6778
  %11277 = vmatpush1.bf16.msra.mxu0 %v6777
  %11278 = vmatprep.subr.bf16.mxu0 %v6786
  %11279 = vmatpush1.bf16.msra.mxu0 %v6785
  %11280 = vmatprep.subr.bf16.mxu0 %v6794
  %11281 = vmatpush1.bf16.msra.mxu0 %v6793
  %11282 = vmatprep.subr.bf16.mxu0 %v6802
  %11283 = vmatpush1.bf16.msra.mxu0 %v6801
  %11284 = vmatprep.subr.bf16.mxu0 %v6810
  %11285 = vmatpush1.bf16.msra.mxu0 %v6809
  %11286 = vmatprep.subr.bf16.mxu0 %v6818
  %11287 = vmatpush1.bf16.msra.mxu0 %v6817
  %11288 = vmatprep.mubr.bf16.mxu0 %v1687
  %11289 = vmatmul.mubr.bf16.gmra.mrb[0].mxu0 %v1686
  %v11290 = vpop.f32.mrb[0].mxu0
  %v11291 = vadd.f32 %v11250, %v11290
  %v11292 = vpop.f32.mrb[0].mxu0
  %v11293 = vadd.f32 %v11252, %v11292
  %v11294 = vpop.f32.mrb[0].mxu0
  %v11295 = vpop.f32.mrb[0].mxu0
  %11296 = vdwg.mxu0
  %11297 = vmatprep.subr.bf16.mxu0 %v6826
  %11298 = vmatpush1.bf16.msra.mxu0 %v6825
  %11299 = vmatprep.subr.bf16.mxu0 %v6834
  %11300 = vmatpush1.bf16.msra.mxu0 %v6833
  %11301 = vmatprep.subr.bf16.mxu0 %v6842
  %11302 = vmatpush1.bf16.msra.mxu0 %v6841
  %11303 = vmatprep.subr.bf16.mxu0 %v6850
  %11304 = vmatpush1.bf16.msra.mxu0 %v6849
  %11305 = vmatprep.subr.bf16.mxu0 %v6858
  %11306 = vmatpush1.bf16.msra.mxu0 %v6857
  %11307 = vmatprep.subr.bf16.mxu0 %v6866
  %11308 = vmatpush1.bf16.msra.mxu0 %v6865
  %11309 = vmatprep.subr.bf16.mxu0 %v6874
  %11310 = vmatpush1.bf16.msra.mxu0 %v6873
  %11311 = vmatprep.subr.bf16.mxu0 %v6882
  %11312 = vmatpush1.bf16.msra.mxu0 %v6881
  %11313 = vmatprep.subr.bf16.mxu0 %v6890
  %11314 = vmatpush1.bf16.msra.mxu0 %v6889
  %11315 = vmatprep.subr.bf16.mxu0 %v6898
  %11316 = vmatpush1.bf16.msra.mxu0 %v6897
  %11317 = vmatprep.subr.bf16.mxu0 %v6906
  %11318 = vmatpush1.bf16.msra.mxu0 %v6905
  %11319 = vmatprep.subr.bf16.mxu0 %v6914
  %11320 = vmatpush1.bf16.msra.mxu0 %v6913
  %11321 = vmatprep.subr.bf16.mxu0 %v6922
  %11322 = vmatpush1.bf16.msra.mxu0 %v6921
  %11323 = vmatprep.subr.bf16.mxu0 %v6930
  %11324 = vmatpush1.bf16.msra.mxu0 %v6929
  %11325 = vmatprep.subr.bf16.mxu0 %v6938
  %11326 = vmatpush1.bf16.msra.mxu0 %v6937
  %11327 = vmatprep.subr.bf16.mxu0 %v6946
  %11328 = vmatpush1.bf16.msra.mxu0 %v6945
  %11329 = vmatprep.mubr.bf16.mxu0 %v1689
  %11330 = vmatmul.mubr.bf16.gmra.mrb[0].mxu0 %v1688
  %v11331 = vpop.f32.mrb[0].mxu0
  %v11332 = vadd.f32 %v11291, %v11331
  %v11333 = vpop.f32.mrb[0].mxu0
  %v11334 = vadd.f32 %v11293, %v11333
  %v11335 = vpop.f32.mrb[0].mxu0
  %v11336 = vpop.f32.mrb[0].mxu0
  %11337 = vdwg.mxu0
  %11338 = vmatprep.subr.bf16.mxu0 %v6954
  %11339 = vmatpush1.bf16.msra.mxu0 %v6953
  %11340 = vmatprep.subr.bf16.mxu0 %v6962
  %11341 = vmatpush1.bf16.msra.mxu0 %v6961
  %11342 = vmatprep.subr.bf16.mxu0 %v6970
  %11343 = vmatpush1.bf16.msra.mxu0 %v6969
  %11344 = vmatprep.subr.bf16.mxu0 %v6978
  %11345 = vmatpush1.bf16.msra.mxu0 %v6977
  %11346 = vmatprep.subr.bf16.mxu0 %v6986
  %11347 = vmatpush1.bf16.msra.mxu0 %v6985
  %11348 = vmatprep.subr.bf16.mxu0 %v6994
  %11349 = vmatpush1.bf16.msra.mxu0 %v6993
  %11350 = vmatprep.subr.bf16.mxu0 %v7002
  %11351 = vmatpush1.bf16.msra.mxu0 %v7001
  %11352 = vmatprep.subr.bf16.mxu0 %v7010
  %11353 = vmatpush1.bf16.msra.mxu0 %v7009
  %11354 = vmatprep.subr.bf16.mxu0 %v7018
  %11355 = vmatpush1.bf16.msra.mxu0 %v7017
  %11356 = vmatprep.subr.bf16.mxu0 %v7026
  %11357 = vmatpush1.bf16.msra.mxu0 %v7025
  %11358 = vmatprep.subr.bf16.mxu0 %v7034
  %11359 = vmatpush1.bf16.msra.mxu0 %v7033
  %11360 = vmatprep.subr.bf16.mxu0 %v7042
  %11361 = vmatpush1.bf16.msra.mxu0 %v7041
  %11362 = vmatprep.subr.bf16.mxu0 %v7050
  %11363 = vmatpush1.bf16.msra.mxu0 %v7049
  %11364 = vmatprep.subr.bf16.mxu0 %v7058
  %11365 = vmatpush1.bf16.msra.mxu0 %v7057
  %11366 = vmatprep.subr.bf16.mxu0 %v7066
  %11367 = vmatpush1.bf16.msra.mxu0 %v7065
  %11368 = vmatprep.subr.bf16.mxu0 %v7074
  %11369 = vmatpush1.bf16.msra.mxu0 %v7073
  %11370 = vmatprep.mubr.bf16.mxu0 %v1691
  %11371 = vmatmul.mubr.bf16.gmra.mrb[0].mxu0 %v1690
  %v11372 = vpop.f32.mrb[0].mxu0
  %v11373 = vadd.f32 %v11332, %v11372
  %v11374 = vpop.f32.mrb[0].mxu0
  %v11375 = vadd.f32 %v11334, %v11374
  %v11376 = vpop.f32.mrb[0].mxu0
  %v11377 = vpop.f32.mrb[0].mxu0
  %11378 = vdwg.mxu0
  %11379 = vmatprep.subr.bf16.mxu0 %v7082
  %11380 = vmatpush1.bf16.msra.mxu0 %v7081
  %11381 = vmatprep.subr.bf16.mxu0 %v7090
  %11382 = vmatpush1.bf16.msra.mxu0 %v7089
  %11383 = vmatprep.subr.bf16.mxu0 %v7098
  %11384 = vmatpush1.bf16.msra.mxu0 %v7097
  %11385 = vmatprep.subr.bf16.mxu0 %v7106
  %11386 = vmatpush1.bf16.msra.mxu0 %v7105
  %11387 = vmatprep.subr.bf16.mxu0 %v7114
  %11388 = vmatpush1.bf16.msra.mxu0 %v7113
  %11389 = vmatprep.subr.bf16.mxu0 %v7122
  %11390 = vmatpush1.bf16.msra.mxu0 %v7121
  %11391 = vmatprep.subr.bf16.mxu0 %v7130
  %11392 = vmatpush1.bf16.msra.mxu0 %v7129
  %11393 = vmatprep.subr.bf16.mxu0 %v7138
  %11394 = vmatpush1.bf16.msra.mxu0 %v7137
  %11395 = vmatprep.subr.bf16.mxu0 %v7146
  %11396 = vmatpush1.bf16.msra.mxu0 %v7145
  %11397 = vmatprep.subr.bf16.mxu0 %v7154
  %11398 = vmatpush1.bf16.msra.mxu0 %v7153
  %11399 = vmatprep.subr.bf16.mxu0 %v7162
  %11400 = vmatpush1.bf16.msra.mxu0 %v7161
  %11401 = vmatprep.subr.bf16.mxu0 %v7170
  %11402 = vmatpush1.bf16.msra.mxu0 %v7169
  %11403 = vmatprep.subr.bf16.mxu0 %v7178
  %11404 = vmatpush1.bf16.msra.mxu0 %v7177
  %11405 = vmatprep.subr.bf16.mxu0 %v7186
  %11406 = vmatpush1.bf16.msra.mxu0 %v7185
  %11407 = vmatprep.subr.bf16.mxu0 %v7194
  %11408 = vmatpush1.bf16.msra.mxu0 %v7193
  %11409 = vmatprep.subr.bf16.mxu0 %v7202
  %11410 = vmatpush1.bf16.msra.mxu0 %v7201
  %11411 = vmatprep.mubr.bf16.mxu0 %v1693
  %11412 = vmatmul.mubr.bf16.gmra.mrb[0].mxu0 %v1692
  %v11413 = vpop.f32.mrb[0].mxu0
  %v11414 = vadd.f32 %v11373, %v11413
  %v11415 = vpop.f32.mrb[0].mxu0
  %v11416 = vadd.f32 %v11375, %v11415
  %v11417 = vpop.f32.mrb[0].mxu0
  %v11418 = vpop.f32.mrb[0].mxu0
  %11419 = vdwg.mxu0
  %11420 = vmatprep.subr.bf16.mxu0 %v7210
  %11421 = vmatpush1.bf16.msra.mxu0 %v7209
  %11422 = vmatprep.subr.bf16.mxu0 %v7218
  %11423 = vmatpush1.bf16.msra.mxu0 %v7217
  %11424 = vmatprep.subr.bf16.mxu0 %v7226
  %11425 = vmatpush1.bf16.msra.mxu0 %v7225
  %11426 = vmatprep.subr.bf16.mxu0 %v7234
  %11427 = vmatpush1.bf16.msra.mxu0 %v7233
  %11428 = vmatprep.subr.bf16.mxu0 %v7242
  %11429 = vmatpush1.bf16.msra.mxu0 %v7241
  %11430 = vmatprep.subr.bf16.mxu0 %v7250
  %11431 = vmatpush1.bf16.msra.mxu0 %v7249
  %11432 = vmatprep.subr.bf16.mxu0 %v7258
  %11433 = vmatpush1.bf16.msra.mxu0 %v7257
  %11434 = vmatprep.subr.bf16.mxu0 %v7266
  %11435 = vmatpush1.bf16.msra.mxu0 %v7265
  %11436 = vmatprep.subr.bf16.mxu0 %v7274
  %11437 = vmatpush1.bf16.msra.mxu0 %v7273
  %11438 = vmatprep.subr.bf16.mxu0 %v7282
  %11439 = vmatpush1.bf16.msra.mxu0 %v7281
  %11440 = vmatprep.subr.bf16.mxu0 %v7290
  %11441 = vmatpush1.bf16.msra.mxu0 %v7289
  %11442 = vmatprep.subr.bf16.mxu0 %v7298
  %11443 = vmatpush1.bf16.msra.mxu0 %v7297
  %11444 = vmatprep.subr.bf16.mxu0 %v7306
  %11445 = vmatpush1.bf16.msra.mxu0 %v7305
  %11446 = vmatprep.subr.bf16.mxu0 %v7314
  %11447 = vmatpush1.bf16.msra.mxu0 %v7313
  %11448 = vmatprep.subr.bf16.mxu0 %v7322
  %11449 = vmatpush1.bf16.msra.mxu0 %v7321
  %11450 = vmatprep.subr.bf16.mxu0 %v7330
  %11451 = vmatpush1.bf16.msra.mxu0 %v7329
  %11452 = vmatprep.mubr.bf16.mxu0 %v1695
  %11453 = vmatmul.mubr.bf16.gmra.mrb[0].mxu0 %v1694
  %v11454 = vpop.f32.mrb[0].mxu0
  %v11455 = vadd.f32 %v11414, %v11454
  %v11456 = vpop.f32.mrb[0].mxu0
  %v11457 = vadd.f32 %v11416, %v11456
  %v11458 = vpop.f32.mrb[0].mxu0
  %v11459 = vpop.f32.mrb[0].mxu0
  %11460 = vdwg.mxu0
  %11461 = vmatprep.subr.bf16.mxu0 %v7338
  %11462 = vmatpush1.bf16.msra.mxu0 %v7337
  %11463 = vmatprep.subr.bf16.mxu0 %v7346
  %11464 = vmatpush1.bf16.msra.mxu0 %v7345
  %11465 = vmatprep.subr.bf16.mxu0 %v7354
  %11466 = vmatpush1.bf16.msra.mxu0 %v7353
  %11467 = vmatprep.subr.bf16.mxu0 %v7362
  %11468 = vmatpush1.bf16.msra.mxu0 %v7361
  %11469 = vmatprep.subr.bf16.mxu0 %v7370
  %11470 = vmatpush1.bf16.msra.mxu0 %v7369
  %11471 = vmatprep.subr.bf16.mxu0 %v7378
  %11472 = vmatpush1.bf16.msra.mxu0 %v7377
  %11473 = vmatprep.subr.bf16.mxu0 %v7386
  %11474 = vmatpush1.bf16.msra.mxu0 %v7385
  %11475 = vmatprep.subr.bf16.mxu0 %v7394
  %11476 = vmatpush1.bf16.msra.mxu0 %v7393
  %11477 = vmatprep.subr.bf16.mxu0 %v7402
  %11478 = vmatpush1.bf16.msra.mxu0 %v7401
  %11479 = vmatprep.subr.bf16.mxu0 %v7410
  %11480 = vmatpush1.bf16.msra.mxu0 %v7409
  %11481 = vmatprep.subr.bf16.mxu0 %v7418
  %11482 = vmatpush1.bf16.msra.mxu0 %v7417
  %11483 = vmatprep.subr.bf16.mxu0 %v7426
  %11484 = vmatpush1.bf16.msra.mxu0 %v7425
  %11485 = vmatprep.subr.bf16.mxu0 %v7434
  %11486 = vmatpush1.bf16.msra.mxu0 %v7433
  %11487 = vmatprep.subr.bf16.mxu0 %v7442
  %11488 = vmatpush1.bf16.msra.mxu0 %v7441
  %11489 = vmatprep.subr.bf16.mxu0 %v7450
  %11490 = vmatpush1.bf16.msra.mxu0 %v7449
  %11491 = vmatprep.subr.bf16.mxu0 %v7458
  %11492 = vmatpush1.bf16.msra.mxu0 %v7457
  %11493 = vmatprep.mubr.bf16.mxu0 %v1697
  %11494 = vmatmul.mubr.bf16.gmra.mrb[0].mxu0 %v1696
  %v11495 = vpop.f32.mrb[0].mxu0
  %v11496 = vadd.f32 %v11455, %v11495
  %v11497 = vpop.f32.mrb[0].mxu0
  %v11498 = vadd.f32 %v11457, %v11497
  %v11499 = vpop.f32.mrb[0].mxu0
  %v11500 = vpop.f32.mrb[0].mxu0
  %11501 = vdwg.mxu0
  %11502 = vmatprep.subr.bf16.mxu0 %v7466
  %11503 = vmatpush1.bf16.msra.mxu0 %v7465
  %11504 = vmatprep.subr.bf16.mxu0 %v7474
  %11505 = vmatpush1.bf16.msra.mxu0 %v7473
  %11506 = vmatprep.subr.bf16.mxu0 %v7482
  %11507 = vmatpush1.bf16.msra.mxu0 %v7481
  %11508 = vmatprep.subr.bf16.mxu0 %v7490
  %11509 = vmatpush1.bf16.msra.mxu0 %v7489
  %11510 = vmatprep.subr.bf16.mxu0 %v7498
  %11511 = vmatpush1.bf16.msra.mxu0 %v7497
  %11512 = vmatprep.subr.bf16.mxu0 %v7506
  %11513 = vmatpush1.bf16.msra.mxu0 %v7505
  %11514 = vmatprep.subr.bf16.mxu0 %v7514
  %11515 = vmatpush1.bf16.msra.mxu0 %v7513
  %11516 = vmatprep.subr.bf16.mxu0 %v7522
  %11517 = vmatpush1.bf16.msra.mxu0 %v7521
  %11518 = vmatprep.subr.bf16.mxu0 %v7530
  %11519 = vmatpush1.bf16.msra.mxu0 %v7529
  %11520 = vmatprep.subr.bf16.mxu0 %v7538
  %11521 = vmatpush1.bf16.msra.mxu0 %v7537
  %11522 = vmatprep.subr.bf16.mxu0 %v7546
  %11523 = vmatpush1.bf16.msra.mxu0 %v7545
  %11524 = vmatprep.subr.bf16.mxu0 %v7554
  %11525 = vmatpush1.bf16.msra.mxu0 %v7553
  %11526 = vmatprep.subr.bf16.mxu0 %v7562
  %11527 = vmatpush1.bf16.msra.mxu0 %v7561
  %11528 = vmatprep.subr.bf16.mxu0 %v7570
  %11529 = vmatpush1.bf16.msra.mxu0 %v7569
  %11530 = vmatprep.subr.bf16.mxu0 %v7578
  %11531 = vmatpush1.bf16.msra.mxu0 %v7577
  %11532 = vmatprep.subr.bf16.mxu0 %v7586
  %11533 = vmatpush1.bf16.msra.mxu0 %v7585
  %11534 = vmatprep.mubr.bf16.mxu0 %v1699
  %11535 = vmatmul.mubr.bf16.gmra.mrb[0].mxu0 %v1698
  %v11536 = vpop.f32.mrb[0].mxu0
  %v11537 = vadd.f32 %v11496, %v11536
  %v11538 = vpop.f32.mrb[0].mxu0
  %v11539 = vadd.f32 %v11498, %v11538
  %v11540 = vpop.f32.mrb[0].mxu0
  %v11541 = vpop.f32.mrb[0].mxu0
  %11542 = vdwg.mxu0
  %11543 = vmatprep.subr.bf16.mxu0 %v7594
  %11544 = vmatpush1.bf16.msra.mxu0 %v7593
  %11545 = vmatprep.subr.bf16.mxu0 %v7602
  %11546 = vmatpush1.bf16.msra.mxu0 %v7601
  %11547 = vmatprep.subr.bf16.mxu0 %v7610
  %11548 = vmatpush1.bf16.msra.mxu0 %v7609
  %11549 = vmatprep.subr.bf16.mxu0 %v7618
  %11550 = vmatpush1.bf16.msra.mxu0 %v7617
  %11551 = vmatprep.subr.bf16.mxu0 %v7626
  %11552 = vmatpush1.bf16.msra.mxu0 %v7625
  %11553 = vmatprep.subr.bf16.mxu0 %v7634
  %11554 = vmatpush1.bf16.msra.mxu0 %v7633
  %11555 = vmatprep.subr.bf16.mxu0 %v7642
  %11556 = vmatpush1.bf16.msra.mxu0 %v7641
  %11557 = vmatprep.subr.bf16.mxu0 %v7650
  %11558 = vmatpush1.bf16.msra.mxu0 %v7649
  %11559 = vmatprep.subr.bf16.mxu0 %v7658
  %11560 = vmatpush1.bf16.msra.mxu0 %v7657
  %11561 = vmatprep.subr.bf16.mxu0 %v7666
  %11562 = vmatpush1.bf16.msra.mxu0 %v7665
  %11563 = vmatprep.subr.bf16.mxu0 %v7674
  %11564 = vmatpush1.bf16.msra.mxu0 %v7673
  %11565 = vmatprep.subr.bf16.mxu0 %v7682
  %11566 = vmatpush1.bf16.msra.mxu0 %v7681
  %11567 = vmatprep.subr.bf16.mxu0 %v7690
  %11568 = vmatpush1.bf16.msra.mxu0 %v7689
  %11569 = vmatprep.subr.bf16.mxu0 %v7698
  %11570 = vmatpush1.bf16.msra.mxu0 %v7697
  %11571 = vmatprep.subr.bf16.mxu0 %v7706
  %11572 = vmatpush1.bf16.msra.mxu0 %v7705
  %11573 = vmatprep.subr.bf16.mxu0 %v7714
  %11574 = vmatpush1.bf16.msra.mxu0 %v7713
  %11575 = vmatprep.mubr.bf16.mxu0 %v1701
  %11576 = vmatmul.mubr.bf16.gmra.mrb[0].mxu0 %v1700
  %v11577 = vpop.f32.mrb[0].mxu0
  %v11578 = vadd.f32 %v11537, %v11577
  %v11579 = vpop.f32.mrb[0].mxu0
  %v11580 = vadd.f32 %v11539, %v11579
  %v11581 = vpop.f32.mrb[0].mxu0
  %v11582 = vpop.f32.mrb[0].mxu0
  %11583 = vdwg.mxu0
  %11584 = vmatprep.subr.bf16.mxu0 %v7722
  %11585 = vmatpush1.bf16.msra.mxu0 %v7721
  %11586 = vmatprep.subr.bf16.mxu0 %v7730
  %11587 = vmatpush1.bf16.msra.mxu0 %v7729
  %11588 = vmatprep.subr.bf16.mxu0 %v7738
  %11589 = vmatpush1.bf16.msra.mxu0 %v7737
  %11590 = vmatprep.subr.bf16.mxu0 %v7746
  %11591 = vmatpush1.bf16.msra.mxu0 %v7745
  %11592 = vmatprep.subr.bf16.mxu0 %v7754
  %11593 = vmatpush1.bf16.msra.mxu0 %v7753
  %11594 = vmatprep.subr.bf16.mxu0 %v7762
  %11595 = vmatpush1.bf16.msra.mxu0 %v7761
  %11596 = vmatprep.subr.bf16.mxu0 %v7770
  %11597 = vmatpush1.bf16.msra.mxu0 %v7769
  %11598 = vmatprep.subr.bf16.mxu0 %v7778
  %11599 = vmatpush1.bf16.msra.mxu0 %v7777
  %11600 = vmatprep.subr.bf16.mxu0 %v7786
  %11601 = vmatpush1.bf16.msra.mxu0 %v7785
  %11602 = vmatprep.subr.bf16.mxu0 %v7794
  %11603 = vmatpush1.bf16.msra.mxu0 %v7793
  %11604 = vmatprep.subr.bf16.mxu0 %v7802
  %11605 = vmatpush1.bf16.msra.mxu0 %v7801
  %11606 = vmatprep.subr.bf16.mxu0 %v7810
  %11607 = vmatpush1.bf16.msra.mxu0 %v7809
  %11608 = vmatprep.subr.bf16.mxu0 %v7818
  %11609 = vmatpush1.bf16.msra.mxu0 %v7817
  %11610 = vmatprep.subr.bf16.mxu0 %v7826
  %11611 = vmatpush1.bf16.msra.mxu0 %v7825
  %11612 = vmatprep.subr.bf16.mxu0 %v7834
  %11613 = vmatpush1.bf16.msra.mxu0 %v7833
  %11614 = vmatprep.subr.bf16.mxu0 %v7842
  %11615 = vmatpush1.bf16.msra.mxu0 %v7841
  %11616 = vmatprep.mubr.bf16.mxu0 %v1703
  %11617 = vmatmul.mubr.bf16.gmra.mrb[0].mxu0 %v1702
  %v11618 = vpop.f32.mrb[0].mxu0
  %v11619 = vadd.f32 %v11578, %v11618
  %v11620 = vpop.f32.mrb[0].mxu0
  %v11621 = vadd.f32 %v11580, %v11620
  %v11622 = vpop.f32.mrb[0].mxu0
  %v11623 = vpop.f32.mrb[0].mxu0
  %11624 = vdwg.mxu0
  %11625 = vmatprep.subr.bf16.mxu0 %v7850
  %11626 = vmatpush1.bf16.msra.mxu0 %v7849
  %11627 = vmatprep.subr.bf16.mxu0 %v7858
  %11628 = vmatpush1.bf16.msra.mxu0 %v7857
  %11629 = vmatprep.subr.bf16.mxu0 %v7866
  %11630 = vmatpush1.bf16.msra.mxu0 %v7865
  %11631 = vmatprep.subr.bf16.mxu0 %v7874
  %11632 = vmatpush1.bf16.msra.mxu0 %v7873
  %11633 = vmatprep.subr.bf16.mxu0 %v7882
  %11634 = vmatpush1.bf16.msra.mxu0 %v7881
  %11635 = vmatprep.subr.bf16.mxu0 %v7890
  %11636 = vmatpush1.bf16.msra.mxu0 %v7889
  %11637 = vmatprep.subr.bf16.mxu0 %v7898
  %11638 = vmatpush1.bf16.msra.mxu0 %v7897
  %11639 = vmatprep.subr.bf16.mxu0 %v7906
  %11640 = vmatpush1.bf16.msra.mxu0 %v7905
  %11641 = vmatprep.subr.bf16.mxu0 %v7914
  %11642 = vmatpush1.bf16.msra.mxu0 %v7913
  %11643 = vmatprep.subr.bf16.mxu0 %v7922
  %11644 = vmatpush1.bf16.msra.mxu0 %v7921
  %11645 = vmatprep.subr.bf16.mxu0 %v7930
  %11646 = vmatpush1.bf16.msra.mxu0 %v7929
  %11647 = vmatprep.subr.bf16.mxu0 %v7938
  %11648 = vmatpush1.bf16.msra.mxu0 %v7937
  %11649 = vmatprep.subr.bf16.mxu0 %v7946
  %11650 = vmatpush1.bf16.msra.mxu0 %v7945
  %11651 = vmatprep.subr.bf16.mxu0 %v7954
  %11652 = vmatpush1.bf16.msra.mxu0 %v7953
  %11653 = vmatprep.subr.bf16.mxu0 %v7962
  %11654 = vmatpush1.bf16.msra.mxu0 %v7961
  %11655 = vmatprep.subr.bf16.mxu0 %v7970
  %11656 = vmatpush1.bf16.msra.mxu0 %v7969
  %11657 = vmatprep.mubr.bf16.mxu0 %v1705
  %11658 = vmatmul.mubr.bf16.gmra.mrb[0].mxu0 %v1704
  %v11659 = vpop.f32.mrb[0].mxu0
  %v11660 = vadd.f32 %v11619, %v11659
  %v11661 = vpop.f32.mrb[0].mxu0
  %v11662 = vadd.f32 %v11621, %v11661
  %v11663 = vpop.f32.mrb[0].mxu0
  %v11664 = vpop.f32.mrb[0].mxu0
  %11665 = vdwg.mxu0
  %11666 = vmatprep.subr.bf16.mxu0 %v7978
  %11667 = vmatpush1.bf16.msra.mxu0 %v7977
  %11668 = vmatprep.subr.bf16.mxu0 %v7986
  %11669 = vmatpush1.bf16.msra.mxu0 %v7985
  %11670 = vmatprep.subr.bf16.mxu0 %v7994
  %11671 = vmatpush1.bf16.msra.mxu0 %v7993
  %11672 = vmatprep.subr.bf16.mxu0 %v8002
  %11673 = vmatpush1.bf16.msra.mxu0 %v8001
  %11674 = vmatprep.subr.bf16.mxu0 0
  %11675 = vmatpush1.bf16.msra.mxu0 0
  %11676 = vmatprep.subr.bf16.mxu0 0
  %11677 = vmatpush1.bf16.msra.mxu0 0
  %11678 = vmatprep.subr.bf16.mxu0 0
  %11679 = vmatpush1.bf16.msra.mxu0 0
  %11680 = vmatprep.subr.bf16.mxu0 0
  %11681 = vmatpush1.bf16.msra.mxu0 0
  %11682 = vmatprep.subr.bf16.mxu0 0
  %11683 = vmatpush1.bf16.msra.mxu0 0
  %11684 = vmatprep.subr.bf16.mxu0 0
  %11685 = vmatpush1.bf16.msra.mxu0 0
  %11686 = vmatprep.subr.bf16.mxu0 0
  %11687 = vmatpush1.bf16.msra.mxu0 0
  %11688 = vmatprep.subr.bf16.mxu0 0
  %11689 = vmatpush1.bf16.msra.mxu0 0
  %11690 = vmatprep.subr.bf16.mxu0 0
  %11691 = vmatpush1.bf16.msra.mxu0 0
  %11692 = vmatprep.subr.bf16.mxu0 0
  %11693 = vmatpush1.bf16.msra.mxu0 0
  %11694 = vmatprep.subr.bf16.mxu0 0
  %11695 = vmatpush1.bf16.msra.mxu0 0
  %11696 = vmatprep.subr.bf16.mxu0 0
  %11697 = vmatpush1.bf16.msra.mxu0 0
  %11698 = vmatprep.mubr.bf16.mxu0 0
  %11699 = vmatmul.mubr.bf16.gmra.mrb[0].mxu0 %v9573
  %v11700 = vpop.f32.mrb[0].mxu0
  %v11701 = vadd.f32 %v11660, %v11700
  %v11702 = vpop.f32.mrb[0].mxu0
  %v11703 = vadd.f32 %v11662, %v11702
  %v11704 = vpop.f32.mrb[0].mxu0
  %v11705 = vpop.f32.mrb[0].mxu0
  %11706 = vdwg.mxu0
  %v11707 = vmax.f32 %v10102, 0.0
  %v11708 = vmax.f32 %v10104, 0.0
  %v11709 = vmax.f32 %v10635, 0.0
  %v11710 = vmax.f32 %v10637, 0.0
  %v11711 = vmax.f32 %v11168, 0.0
  %v11712 = vmax.f32 %v11170, 0.0
  %v11713 = vmax.f32 %v11701, 0.0
  %v11714 = vmax.f32 %v11703, 0.0
  %v11715 = vpack.c.bf16 %v11707, %v11707
  %v11716 = vpack.c.bf16 %v11708, %v11708
  %v11717 = vpack.c.bf16 %v11709, %v11709
  %v11718 = vpack.c.bf16 %v11710, %v11710
  %v11719 = vpack.c.bf16 %v11711, %v11711
  %v11720 = vpack.c.bf16 %v11712, %v11712
  %v11721 = vpack.c.bf16 %v11713, %v11713
  %v11722 = vpack.c.bf16 %v11714, %v11714
  %v11723 = vld [vmem:[%s3] sm:$0xf]
  %v11724 = vld [vmem:[%s3 + $0x4] sm:$0xf]
  %v11725 = vld [vmem:[%s3 + $0x8] sm:$0xf]
  %v11726 = vld [vmem:[%s3 + $0xc] sm:$0xf]
  %v11727 = vld [vmem:[%s3 + $0x10] sm:$0xf]
  %v11728 = vld [vmem:[%s3 + $0x14] sm:$0xf]
  %v11729 = vld [vmem:[%s3 + $0x18] sm:$0xf]
  %v11730 = vld [vmem:[%s3 + $0x1c] sm:$0xf]
  %v11731 = vld [vmem:[%s3 + $0x20] sm:$0xf]
  %v11732 = vld [vmem:[%s3 + $0x24] sm:$0xf]
  %v11733 = vld [vmem:[%s3 + $0x28] sm:$0xf]
  %v11734 = vld [vmem:[%s3 + $0x2c] sm:$0xf]
  %v11735 = vld [vmem:[%s3 + $0x30] sm:$0xf]
  %v11736 = vld [vmem:[%s3 + $0x34] sm:$0xf]
  %v11737 = vld [vmem:[%s3 + $0x38] sm:$0xf]
  %v11738 = vld [vmem:[%s3 + $0x3c] sm:$0xf]
  %v11739 = vld [vmem:[%s3 + $0x40] sm:$0xf]
  %v11740 = vld [vmem:[%s3 + $0x44] sm:$0xf]
  %v11741 = vld [vmem:[%s3 + $0x48] sm:$0xf]
  %v11742 = vld [vmem:[%s3 + $0x4c] sm:$0xf]
  %v11743 = vld [vmem:[%s3 + $0x50] sm:$0xf]
  %v11744 = vld [vmem:[%s3 + $0x54] sm:$0xf]
  %v11745 = vld [vmem:[%s3 + $0x58] sm:$0xf]
  %v11746 = vld [vmem:[%s3 + $0x5c] sm:$0xf]
  %v11747 = vld [vmem:[%s3 + $0x60] sm:$0xf]
  %v11748 = vld [vmem:[%s3 + $0x64] sm:$0xf]
  %v11749 = vld [vmem:[%s3 + $0x68] sm:$0xf]
  %v11750 = vld [vmem:[%s3 + $0x6c] sm:$0xf]
  %v11751 = vld [vmem:[%s3 + $0x70] sm:$0xf]
  %v11752 = vld [vmem:[%s3 + $0x74] sm:$0xf]
  %v11753 = vld [vmem:[%s3 + $0x78] sm:$0xf]
  %v11754 = vld [vmem:[%s3 + $0x7c] sm:$0xf]
  %v11755 = vld [vmem:[%s3 + $0x80] sm:$0xf]
  %v11756 = vld [vmem:[%s3 + $0x84] sm:$0xf]
  %v11757 = vld [vmem:[%s3 + $0x88] sm:$0xf]
  %v11758 = vld [vmem:[%s3 + $0x8c] sm:$0xf]
  %v11759 = vld [vmem:[%s3 + $0x90] sm:$0xf]
  %v11760 = vld [vmem:[%s3 + $0x94] sm:$0xf]
  %v11761 = vld [vmem:[%s3 + $0x98] sm:$0xf]
  %v11762 = vld [vmem:[%s3 + $0x9c] sm:$0xf]
  %v11763 = vld [vmem:[%s3 + $0xa0] sm:$0xf]
  %v11764 = vld [vmem:[%s3 + $0xa4] sm:$0xf]
  %v11765 = vld [vmem:[%s3 + $0xa8] sm:$0xf]
  %v11766 = vld [vmem:[%s3 + $0xac] sm:$0xf]
  %v11767 = vld [vmem:[%s3 + $0xb0] sm:$0xf]
  %v11768 = vld [vmem:[%s3 + $0xb4] sm:$0xf]
  %v11769 = vld [vmem:[%s3 + $0xb8] sm:$0xf]
  %v11770 = vld [vmem:[%s3 + $0xbc] sm:$0xf]
  %v11771 = vld [vmem:[%s3 + $0xc0] sm:$0xf]
  %v11772 = vld [vmem:[%s3 + $0xc4] sm:$0xf]
  %v11773 = vld [vmem:[%s3 + $0xc8] sm:$0xf]
  %v11774 = vld [vmem:[%s3 + $0xcc] sm:$0xf]
  %v11775 = vld [vmem:[%s3 + $0xd0] sm:$0xf]
  %v11776 = vld [vmem:[%s3 + $0xd4] sm:$0xf]
  %v11777 = vld [vmem:[%s3 + $0xd8] sm:$0xf]
  %v11778 = vld [vmem:[%s3 + $0xdc] sm:$0xf]
  %v11779 = vld [vmem:[%s3 + $0xe0] sm:$0xf]
  %v11780 = vld [vmem:[%s3 + $0xe4] sm:$0xf]
  %v11781 = vld [vmem:[%s3 + $0xe8] sm:$0xf]
  %v11782 = vld [vmem:[%s3 + $0xec] sm:$0xf]
  %v11783 = vld [vmem:[%s3 + $0xf0] sm:$0xf]
  %v11784 = vld [vmem:[%s3 + $0xf4] sm:$0xf]
  %v11785 = vld [vmem:[%s3 + $0xf8] sm:$0xf]
  %v11786 = vld [vmem:[%s3 + $0xfc] sm:$0xf]
  %v11787 = vld [vmem:[%s3 + $0x100] sm:$0xf]
  %v11788 = vld [vmem:[%s3 + $0x104] sm:$0xf]
  %v11789 = vld [vmem:[%s3 + $0x108] sm:$0xf]
  %v11790 = vld [vmem:[%s3 + $0x10c] sm:$0xf]
  %v11791 = vld [vmem:[%s3 + $0x110] sm:$0xf]
  %v11792 = vld [vmem:[%s3 + $0x114] sm:$0xf]
  %v11793 = vld [vmem:[%s3 + $0x118] sm:$0xf]
  %v11794 = vld [vmem:[%s3 + $0x11c] sm:$0xf]
  %v11795 = vld [vmem:[%s3 + $0x120] sm:$0xf]
  %v11796 = vld [vmem:[%s3 + $0x124] sm:$0xf]
  %v11797 = vld [vmem:[%s3 + $0x128] sm:$0xf]
  %v11798 = vld [vmem:[%s3 + $0x12c] sm:$0xf]
  %v11799 = vld [vmem:[%s3 + $0x130] sm:$0xf]
  %v11800 = vld [vmem:[%s3 + $0x134] sm:$0xf]
  %v11801 = vld [vmem:[%s3 + $0x138] sm:$0xf]
  %v11802 = vld [vmem:[%s3 + $0x13c] sm:$0xf]
  %v11803 = vld [vmem:[%s3 + $0x140] sm:$0xf]
  %v11804 = vld [vmem:[%s3 + $0x144] sm:$0xf]
  %v11805 = vld [vmem:[%s3 + $0x148] sm:$0xf]
  %v11806 = vld [vmem:[%s3 + $0x14c] sm:$0xf]
  %v11807 = vld [vmem:[%s3 + $0x150] sm:$0xf]
  %v11808 = vld [vmem:[%s3 + $0x154] sm:$0xf]
  %v11809 = vld [vmem:[%s3 + $0x158] sm:$0xf]
  %v11810 = vld [vmem:[%s3 + $0x15c] sm:$0xf]
  %v11811 = vld [vmem:[%s3 + $0x160] sm:$0xf]
  %v11812 = vld [vmem:[%s3 + $0x164] sm:$0xf]
  %v11813 = vld [vmem:[%s3 + $0x168] sm:$0xf]
  %v11814 = vld [vmem:[%s3 + $0x16c] sm:$0xf]
  %v11815 = vld [vmem:[%s3 + $0x170] sm:$0xf]
  %v11816 = vld [vmem:[%s3 + $0x174] sm:$0xf]
  %v11817 = vld [vmem:[%s3 + $0x178] sm:$0xf]
  %v11818 = vld [vmem:[%s3 + $0x17c] sm:$0xf]
  %v11819 = vld [vmem:[%s3 + $0x180] sm:$0xf]
  %v11820 = vld [vmem:[%s3 + $0x184] sm:$0xf]
  %v11821 = vld [vmem:[%s3 + $0x188] sm:$0xf]
  %v11822 = vld [vmem:[%s3 + $0x18c] sm:$0xf]
  %v11823 = vld [vmem:[%s3 + $0x190] sm:$0xf]
  %v11824 = vld [vmem:[%s3 + $0x194] sm:$0xf]
  %v11825 = vld [vmem:[%s3 + $0x198] sm:$0xf]
  %v11826 = vld [vmem:[%s3 + $0x19c] sm:$0xf]
  %v11827 = vld [vmem:[%s3 + $0x1a0] sm:$0xf]
  %v11828 = vld [vmem:[%s3 + $0x1a4] sm:$0xf]
  %v11829 = vld [vmem:[%s3 + $0x1a8] sm:$0xf]
  %v11830 = vld [vmem:[%s3 + $0x1ac] sm:$0xf]
  %v11831 = vld [vmem:[%s3 + $0x1b0] sm:$0xf]
  %v11832 = vld [vmem:[%s3 + $0x1b4] sm:$0xf]
  %v11833 = vld [vmem:[%s3 + $0x1b8] sm:$0xf]
  %v11834 = vld [vmem:[%s3 + $0x1bc] sm:$0xf]
  %v11835 = vld [vmem:[%s3 + $0x1c0] sm:$0xf]
  %v11836 = vld [vmem:[%s3 + $0x1c4] sm:$0xf]
  %v11837 = vld [vmem:[%s3 + $0x1c8] sm:$0xf]
  %v11838 = vld [vmem:[%s3 + $0x1cc] sm:$0xf]
  %v11839 = vld [vmem:[%s3 + $0x1d0] sm:$0xf]
  %v11840 = vld [vmem:[%s3 + $0x1d4] sm:$0xf]
  %v11841 = vld [vmem:[%s3 + $0x1d8] sm:$0xf]
  %v11842 = vld [vmem:[%s3 + $0x1dc] sm:$0xf]
  %v11843 = vld [vmem:[%s3 + $0x1e0] sm:$0xf]
  %v11844 = vld [vmem:[%s3 + $0x1e4] sm:$0xf]
  %v11845 = vld [vmem:[%s3 + $0x1e8] sm:$0xf]
  %v11846 = vld [vmem:[%s3 + $0x1ec] sm:$0xf]
  %v11847 = vld [vmem:[%s3 + $0x1f0] sm:$0xf]
  %v11848 = vld [vmem:[%s3 + $0x1f4] sm:$0xf]
  %v11849 = vld [vmem:[%s3 + $0x1f8] sm:$0xf]
  %v11850 = vld [vmem:[%s3 + $0x1fc] sm:$0xf]
  %v11851 = vld [vmem:[%s4] sm:$0x1]
  %v11853 = vlaneseq
  %v11854 = vshrl.u32 %v11853, 7
  %v11855 = vsub.s32 0, %v11854
  %v11856 = vrot.slane %v11851, %v11855
  %v11986 = vunpack.c.l.b16 %v11723
  %v11987 = vunpack.c.l.b16 %v11724
  %v11988 = vunpack.c.l.b16 %v11725
  %v11989 = vunpack.c.l.b16 %v11726
  %v11990 = vunpack.c.l.b16 %v11727
  %v11991 = vunpack.c.l.b16 %v11728
  %v11992 = vunpack.c.l.b16 %v11729
  %v11993 = vunpack.c.l.b16 %v11730
  %v11994 = vunpack.c.l.b16 %v11731
  %v11995 = vunpack.c.l.b16 %v11732
  %v11996 = vunpack.c.l.b16 %v11733
  %v11997 = vunpack.c.l.b16 %v11734
  %v11998 = vunpack.c.l.b16 %v11735
  %v11999 = vunpack.c.l.b16 %v11736
  %v12000 = vunpack.c.l.b16 %v11737
  %v12001 = vunpack.c.l.b16 %v11738
  %v12002 = vunpack.c.l.b16 %v11739
  %v12003 = vunpack.c.l.b16 %v11740
  %v12004 = vunpack.c.l.b16 %v11741
  %v12005 = vunpack.c.l.b16 %v11742
  %v12006 = vunpack.c.l.b16 %v11743
  %v12007 = vunpack.c.l.b16 %v11744
  %v12008 = vunpack.c.l.b16 %v11745
  %v12009 = vunpack.c.l.b16 %v11746
  %v12010 = vunpack.c.l.b16 %v11747
  %v12011 = vunpack.c.l.b16 %v11748
  %v12012 = vunpack.c.l.b16 %v11749
  %v12013 = vunpack.c.l.b16 %v11750
  %v12014 = vunpack.c.l.b16 %v11751
  %v12015 = vunpack.c.l.b16 %v11752
  %v12016 = vunpack.c.l.b16 %v11753
  %v12017 = vunpack.c.l.b16 %v11754
  %v12018 = vunpack.c.l.b16 %v11755
  %v12019 = vunpack.c.l.b16 %v11756
  %v12020 = vunpack.c.l.b16 %v11757
  %v12021 = vunpack.c.l.b16 %v11758
  %v12022 = vunpack.c.l.b16 %v11759
  %v12023 = vunpack.c.l.b16 %v11760
  %v12024 = vunpack.c.l.b16 %v11761
  %v12025 = vunpack.c.l.b16 %v11762
  %v12026 = vunpack.c.l.b16 %v11763
  %v12027 = vunpack.c.l.b16 %v11764
  %v12028 = vunpack.c.l.b16 %v11765
  %v12029 = vunpack.c.l.b16 %v11766
  %v12030 = vunpack.c.l.b16 %v11767
  %v12031 = vunpack.c.l.b16 %v11768
  %v12032 = vunpack.c.l.b16 %v11769
  %v12033 = vunpack.c.l.b16 %v11770
  %v12034 = vunpack.c.l.b16 %v11771
  %v12035 = vunpack.c.l.b16 %v11772
  %v12036 = vunpack.c.l.b16 %v11773
  %v12037 = vunpack.c.l.b16 %v11774
  %v12038 = vunpack.c.l.b16 %v11775
  %v12039 = vunpack.c.l.b16 %v11776
  %v12040 = vunpack.c.l.b16 %v11777
  %v12041 = vunpack.c.l.b16 %v11778
  %v12042 = vunpack.c.l.b16 %v11779
  %v12043 = vunpack.c.l.b16 %v11780
  %v12044 = vunpack.c.l.b16 %v11781
  %v12045 = vunpack.c.l.b16 %v11782
  %v12046 = vunpack.c.l.b16 %v11783
  %v12047 = vunpack.c.l.b16 %v11784
  %v12048 = vunpack.c.l.b16 %v11785
  %v12049 = vunpack.c.l.b16 %v11786
  %v12050 = vunpack.c.l.b16 %v11787
  %v12051 = vunpack.c.l.b16 %v11788
  %v12052 = vunpack.c.l.b16 %v11789
  %v12053 = vunpack.c.l.b16 %v11790
  %v12054 = vunpack.c.l.b16 %v11791
  %v12055 = vunpack.c.l.b16 %v11792
  %v12056 = vunpack.c.l.b16 %v11793
  %v12057 = vunpack.c.l.b16 %v11794
  %v12058 = vunpack.c.l.b16 %v11795
  %v12059 = vunpack.c.l.b16 %v11796
  %v12060 = vunpack.c.l.b16 %v11797
  %v12061 = vunpack.c.l.b16 %v11798
  %v12062 = vunpack.c.l.b16 %v11799
  %v12063 = vunpack.c.l.b16 %v11800
  %v12064 = vunpack.c.l.b16 %v11801
  %v12065 = vunpack.c.l.b16 %v11802
  %v12066 = vunpack.c.l.b16 %v11803
  %v12067 = vunpack.c.l.b16 %v11804
  %v12068 = vunpack.c.l.b16 %v11805
  %v12069 = vunpack.c.l.b16 %v11806
  %v12070 = vunpack.c.l.b16 %v11807
  %v12071 = vunpack.c.l.b16 %v11808
  %v12072 = vunpack.c.l.b16 %v11809
  %v12073 = vunpack.c.l.b16 %v11810
  %v12074 = vunpack.c.l.b16 %v11811
  %v12075 = vunpack.c.l.b16 %v11812
  %v12076 = vunpack.c.l.b16 %v11813
  %v12077 = vunpack.c.l.b16 %v11814
  %v12078 = vunpack.c.l.b16 %v11815
  %v12079 = vunpack.c.l.b16 %v11816
  %v12080 = vunpack.c.l.b16 %v11817
  %v12081 = vunpack.c.l.b16 %v11818
  %v12082 = vunpack.c.l.b16 %v11819
  %v12083 = vunpack.c.l.b16 %v11820
  %v12084 = vunpack.c.l.b16 %v11821
  %v12085 = vunpack.c.l.b16 %v11822
  %v12086 = vunpack.c.l.b16 %v11823
  %v12087 = vunpack.c.l.b16 %v11824
  %v12088 = vunpack.c.l.b16 %v11825
  %v12089 = vunpack.c.l.b16 %v11826
  %v12090 = vunpack.c.l.b16 %v11827
  %v12091 = vunpack.c.l.b16 %v11828
  %v12092 = vunpack.c.l.b16 %v11829
  %v12093 = vunpack.c.l.b16 %v11830
  %v12094 = vunpack.c.l.b16 %v11831
  %v12095 = vunpack.c.l.b16 %v11832
  %v12096 = vunpack.c.l.b16 %v11833
  %v12097 = vunpack.c.l.b16 %v11834
  %v12098 = vunpack.c.l.b16 %v11835
  %v12099 = vunpack.c.l.b16 %v11836
  %v12100 = vunpack.c.l.b16 %v11837
  %v12101 = vunpack.c.l.b16 %v11838
  %v12102 = vunpack.c.l.b16 %v11839
  %v12103 = vunpack.c.l.b16 %v11840
  %v12104 = vunpack.c.l.b16 %v11841
  %v12105 = vunpack.c.l.b16 %v11842
  %v12106 = vunpack.c.l.b16 %v11843
  %v12107 = vunpack.c.l.b16 %v11844
  %v12108 = vunpack.c.l.b16 %v11845
  %v12109 = vunpack.c.l.b16 %v11846
  %v12110 = vunpack.c.l.b16 %v11847
  %v12111 = vunpack.c.l.b16 %v11848
  %v12112 = vunpack.c.l.b16 %v11849
  %v12113 = vunpack.c.l.b16 %v11850
  %v12114 = vpack.c.b16 %v11987, %v11986
  %v12115 = vpack.c.b16 %v11989, %v11988
  %v12116 = vpack.c.b16 %v11991, %v11990
  %v12117 = vpack.c.b16 %v11993, %v11992
  %v12118 = vpack.c.b16 %v11995, %v11994
  %v12119 = vpack.c.b16 %v11997, %v11996
  %v12120 = vpack.c.b16 %v11999, %v11998
  %v12121 = vpack.c.b16 %v12001, %v12000
  %v12122 = vpack.c.b16 %v12003, %v12002
  %v12123 = vpack.c.b16 %v12005, %v12004
  %v12124 = vpack.c.b16 %v12007, %v12006
  %v12125 = vpack.c.b16 %v12009, %v12008
  %v12126 = vpack.c.b16 %v12011, %v12010
  %v12127 = vpack.c.b16 %v12013, %v12012
  %v12128 = vpack.c.b16 %v12015, %v12014
  %v12129 = vpack.c.b16 %v12017, %v12016
  %v12130 = vpack.c.b16 %v12019, %v12018
  %v12131 = vpack.c.b16 %v12021, %v12020
  %v12132 = vpack.c.b16 %v12023, %v12022
  %v12133 = vpack.c.b16 %v12025, %v12024
  %v12134 = vpack.c.b16 %v12027, %v12026
  %v12135 = vpack.c.b16 %v12029, %v12028
  %v12136 = vpack.c.b16 %v12031, %v12030
  %v12137 = vpack.c.b16 %v12033, %v12032
  %v12138 = vpack.c.b16 %v12035, %v12034
  %v12139 = vpack.c.b16 %v12037, %v12036
  %v12140 = vpack.c.b16 %v12039, %v12038
  %v12141 = vpack.c.b16 %v12041, %v12040
  %v12142 = vpack.c.b16 %v12043, %v12042
  %v12143 = vpack.c.b16 %v12045, %v12044
  %v12144 = vpack.c.b16 %v12047, %v12046
  %v12145 = vpack.c.b16 %v12049, %v12048
  %v12146 = vpack.c.b16 %v12051, %v12050
  %v12147 = vpack.c.b16 %v12053, %v12052
  %v12148 = vpack.c.b16 %v12055, %v12054
  %v12149 = vpack.c.b16 %v12057, %v12056
  %v12150 = vpack.c.b16 %v12059, %v12058
  %v12151 = vpack.c.b16 %v12061, %v12060
  %v12152 = vpack.c.b16 %v12063, %v12062
  %v12153 = vpack.c.b16 %v12065, %v12064
  %v12154 = vpack.c.b16 %v12067, %v12066
  %v12155 = vpack.c.b16 %v12069, %v12068
  %v12156 = vpack.c.b16 %v12071, %v12070
  %v12157 = vpack.c.b16 %v12073, %v12072
  %v12158 = vpack.c.b16 %v12075, %v12074
  %v12159 = vpack.c.b16 %v12077, %v12076
  %v12160 = vpack.c.b16 %v12079, %v12078
  %v12161 = vpack.c.b16 %v12081, %v12080
  %v12162 = vpack.c.b16 %v12083, %v12082
  %v12163 = vpack.c.b16 %v12085, %v12084
  %v12164 = vpack.c.b16 %v12087, %v12086
  %v12165 = vpack.c.b16 %v12089, %v12088
  %v12166 = vpack.c.b16 %v12091, %v12090
  %v12167 = vpack.c.b16 %v12093, %v12092
  %v12168 = vpack.c.b16 %v12095, %v12094
  %v12169 = vpack.c.b16 %v12097, %v12096
  %v12170 = vpack.c.b16 %v12099, %v12098
  %v12171 = vpack.c.b16 %v12101, %v12100
  %v12172 = vpack.c.b16 %v12103, %v12102
  %v12173 = vpack.c.b16 %v12105, %v12104
  %v12174 = vpack.c.b16 %v12107, %v12106
  %v12175 = vpack.c.b16 %v12109, %v12108
  %v12176 = vpack.c.b16 %v12111, %v12110
  %v12177 = vpack.c.b16 %v12113, %v12112
  %12242 = vmatprep.subr.bf16.mxu0 0
  %12243 = vmatpush1.bf16.msra.mxu0 %v12114
  %12244 = vmatprep.subr.bf16.mxu0 0
  %12245 = vmatpush1.bf16.msra.mxu0 %v12115
  %12246 = vmatprep.subr.bf16.mxu0 0
  %12247 = vmatpush1.bf16.msra.mxu0 %v12116
  %12248 = vmatprep.subr.bf16.mxu0 0
  %12249 = vmatpush1.bf16.msra.mxu0 %v12117
  %12250 = vmatprep.subr.bf16.mxu0 0
  %12251 = vmatpush1.bf16.msra.mxu0 %v12118
  %12252 = vmatprep.subr.bf16.mxu0 0
  %12253 = vmatpush1.bf16.msra.mxu0 %v12119
  %12254 = vmatprep.subr.bf16.mxu0 0
  %12255 = vmatpush1.bf16.msra.mxu0 %v12120
  %12256 = vmatprep.subr.bf16.mxu0 0
  %12257 = vmatpush1.bf16.msra.mxu0 %v12121
  %12258 = vmatprep.subr.bf16.mxu0 0
  %12259 = vmatpush1.bf16.msra.mxu0 %v12122
  %12260 = vmatprep.subr.bf16.mxu0 0
  %12261 = vmatpush1.bf16.msra.mxu0 %v12123
  %12262 = vmatprep.subr.bf16.mxu0 0
  %12263 = vmatpush1.bf16.msra.mxu0 %v12124
  %12264 = vmatprep.subr.bf16.mxu0 0
  %12265 = vmatpush1.bf16.msra.mxu0 %v12125
  %12266 = vmatprep.subr.bf16.mxu0 0
  %12267 = vmatpush1.bf16.msra.mxu0 %v12126
  %12268 = vmatprep.subr.bf16.mxu0 0
  %12269 = vmatpush1.bf16.msra.mxu0 %v12127
  %12270 = vmatprep.subr.bf16.mxu0 0
  %12271 = vmatpush1.bf16.msra.mxu0 %v12128
  %12272 = vmatprep.subr.bf16.mxu0 0
  %12273 = vmatpush1.bf16.msra.mxu0 %v12129
  %12274 = vmatprep.mubr.bf16.mxu0 %v11716
  %12275 = vmatmul.mubr.bf16.gmra.mrb[0].mxu0 %v11715
  %v12276 = vpop.f32.mrb[0].mxu0
  %v12277 = vadd.f32 %v11856, %v12276
  %v12278 = vpop.f32.mrb[0].mxu0
  %v12279 = vpop.f32.mrb[0].mxu0
  %v12280 = vpop.f32.mrb[0].mxu0
  %12281 = vdwg.mxu0
  %12282 = vmatprep.subr.bf16.mxu0 0
  %12283 = vmatpush1.bf16.msra.mxu0 %v12130
  %12284 = vmatprep.subr.bf16.mxu0 0
  %12285 = vmatpush1.bf16.msra.mxu0 %v12131
  %12286 = vmatprep.subr.bf16.mxu0 0
  %12287 = vmatpush1.bf16.msra.mxu0 %v12132
  %12288 = vmatprep.subr.bf16.mxu0 0
  %12289 = vmatpush1.bf16.msra.mxu0 %v12133
  %12290 = vmatprep.subr.bf16.mxu0 0
  %12291 = vmatpush1.bf16.msra.mxu0 %v12134
  %12292 = vmatprep.subr.bf16.mxu0 0
  %12293 = vmatpush1.bf16.msra.mxu0 %v12135
  %12294 = vmatprep.subr.bf16.mxu0 0
  %12295 = vmatpush1.bf16.msra.mxu0 %v12136
  %12296 = vmatprep.subr.bf16.mxu0 0
  %12297 = vmatpush1.bf16.msra.mxu0 %v12137
  %12298 = vmatprep.subr.bf16.mxu0 0
  %12299 = vmatpush1.bf16.msra.mxu0 %v12138
  %12300 = vmatprep.subr.bf16.mxu0 0
  %12301 = vmatpush1.bf16.msra.mxu0 %v12139
  %12302 = vmatprep.subr.bf16.mxu0 0
  %12303 = vmatpush1.bf16.msra.mxu0 %v12140
  %12304 = vmatprep.subr.bf16.mxu0 0
  %12305 = vmatpush1.bf16.msra.mxu0 %v12141
  %12306 = vmatprep.subr.bf16.mxu0 0
  %12307 = vmatpush1.bf16.msra.mxu0 %v12142
  %12308 = vmatprep.subr.bf16.mxu0 0
  %12309 = vmatpush1.bf16.msra.mxu0 %v12143
  %12310 = vmatprep.subr.bf16.mxu0 0
  %12311 = vmatpush1.bf16.msra.mxu0 %v12144
  %12312 = vmatprep.subr.bf16.mxu0 0
  %12313 = vmatpush1.bf16.msra.mxu0 %v12145
  %12314 = vmatprep.mubr.bf16.mxu0 %v11718
  %12315 = vmatmul.mubr.bf16.gmra.mrb[0].mxu0 %v11717
  %v12316 = vpop.f32.mrb[0].mxu0
  %v12317 = vadd.f32 %v12277, %v12316
  %v12318 = vpop.f32.mrb[0].mxu0
  %v12319 = vpop.f32.mrb[0].mxu0
  %v12320 = vpop.f32.mrb[0].mxu0
  %12321 = vdwg.mxu0
  %12322 = vmatprep.subr.bf16.mxu0 0
  %12323 = vmatpush1.bf16.msra.mxu0 %v12146
  %12324 = vmatprep.subr.bf16.mxu0 0
  %12325 = vmatpush1.bf16.msra.mxu0 %v12147
  %12326 = vmatprep.subr.bf16.mxu0 0
  %12327 = vmatpush1.bf16.msra.mxu0 %v12148
  %12328 = vmatprep.subr.bf16.mxu0 0
  %12329 = vmatpush1.bf16.msra.mxu0 %v12149
  %12330 = vmatprep.subr.bf16.mxu0 0
  %12331 = vmatpush1.bf16.msra.mxu0 %v12150
  %12332 = vmatprep.subr.bf16.mxu0 0
  %12333 = vmatpush1.bf16.msra.mxu0 %v12151
  %12334 = vmatprep.subr.bf16.mxu0 0
  %12335 = vmatpush1.bf16.msra.mxu0 %v12152
  %12336 = vmatprep.subr.bf16.mxu0 0
  %12337 = vmatpush1.bf16.msra.mxu0 %v12153
  %12338 = vmatprep.subr.bf16.mxu0 0
  %12339 = vmatpush1.bf16.msra.mxu0 %v12154
  %12340 = vmatprep.subr.bf16.mxu0 0
  %12341 = vmatpush1.bf16.msra.mxu0 %v12155
  %12342 = vmatprep.subr.bf16.mxu0 0
  %12343 = vmatpush1.bf16.msra.mxu0 %v12156
  %12344 = vmatprep.subr.bf16.mxu0 0
  %12345 = vmatpush1.bf16.msra.mxu0 %v12157
  %12346 = vmatprep.subr.bf16.mxu0 0
  %12347 = vmatpush1.bf16.msra.mxu0 %v12158
  %12348 = vmatprep.subr.bf16.mxu0 0
  %12349 = vmatpush1.bf16.msra.mxu0 %v12159
  %12350 = vmatprep.subr.bf16.mxu0 0
  %12351 = vmatpush1.bf16.msra.mxu0 %v12160
  %12352 = vmatprep.subr.bf16.mxu0 0
  %12353 = vmatpush1.bf16.msra.mxu0 %v12161
  %12354 = vmatprep.mubr.bf16.mxu0 %v11720
  %12355 = vmatmul.mubr.bf16.gmra.mrb[0].mxu0 %v11719
  %v12356 = vpop.f32.mrb[0].mxu0
  %v12357 = vadd.f32 %v12317, %v12356
  %v12358 = vpop.f32.mrb[0].mxu0
  %v12359 = vpop.f32.mrb[0].mxu0
  %v12360 = vpop.f32.mrb[0].mxu0
  %12361 = vdwg.mxu0
  %12362 = vmatprep.subr.bf16.mxu0 0
  %12363 = vmatpush1.bf16.msra.mxu0 %v12162
  %12364 = vmatprep.subr.bf16.mxu0 0
  %12365 = vmatpush1.bf16.msra.mxu0 %v12163
  %12366 = vmatprep.subr.bf16.mxu0 0
  %12367 = vmatpush1.bf16.msra.mxu0 %v12164
  %12368 = vmatprep.subr.bf16.mxu0 0
  %12369 = vmatpush1.bf16.msra.mxu0 %v12165
  %12370 = vmatprep.subr.bf16.mxu0 0
  %12371 = vmatpush1.bf16.msra.mxu0 %v12166
  %12372 = vmatprep.subr.bf16.mxu0 0
  %12373 = vmatpush1.bf16.msra.mxu0 %v12167
  %12374 = vmatprep.subr.bf16.mxu0 0
  %12375 = vmatpush1.bf16.msra.mxu0 %v12168
  %12376 = vmatprep.subr.bf16.mxu0 0
  %12377 = vmatpush1.bf16.msra.mxu0 %v12169
  %12378 = vmatprep.subr.bf16.mxu0 0
  %12379 = vmatpush1.bf16.msra.mxu0 %v12170
  %12380 = vmatprep.subr.bf16.mxu0 0
  %12381 = vmatpush1.bf16.msra.mxu0 %v12171
  %12382 = vmatprep.subr.bf16.mxu0 0
  %12383 = vmatpush1.bf16.msra.mxu0 %v12172
  %12384 = vmatprep.subr.bf16.mxu0 0
  %12385 = vmatpush1.bf16.msra.mxu0 %v12173
  %12386 = vmatprep.subr.bf16.mxu0 0
  %12387 = vmatpush1.bf16.msra.mxu0 %v12174
  %12388 = vmatprep.subr.bf16.mxu0 0
  %12389 = vmatpush1.bf16.msra.mxu0 %v12175
  %12390 = vmatprep.subr.bf16.mxu0 0
  %12391 = vmatpush1.bf16.msra.mxu0 %v12176
  %12392 = vmatprep.subr.bf16.mxu0 0
  %12393 = vmatpush1.bf16.msra.mxu0 %v12177
  %12394 = vmatprep.mubr.bf16.mxu0 %v11722
  %12395 = vmatmul.mubr.bf16.gmra.mrb[0].mxu0 %v11721
  %v12396 = vpop.f32.mrb[0].mxu0
  %v12397 = vadd.f32 %v12357, %v12396
  %v12398 = vpop.f32.mrb[0].mxu0
  %v12399 = vpop.f32.mrb[0].mxu0
  %v12400 = vpop.f32.mrb[0].mxu0
  %12401 = vdwg.mxu0
  %12402 = vst [vmem:[%s5] sm:$0xff] %v12397
  // Predicated region
  $region22: #{mnist_classifier_forward.5} parent=0 // pred_check
    _
  $region23: #{mnist_classifier_forward.5} parent=0 // pred_check_branch
    %12404 = sbr.rel (0) target = $region25
  $region24: #{mnist_classifier_forward.5} parent=0 // pred_region
    _
  $region25: #{mnist_classifier_forward.5} parent=0 // pred_fallthru
    _
  // Predicated region
  $region26: #{mnist_classifier_forward.5} parent=0 // pred_check
    _
  $region27: #{mnist_classifier_forward.5} parent=0 // pred_check_branch
    %12406 = sbr.rel (0) target = $region29
  $region28: #{mnist_classifier_forward.5} parent=0 // pred_region
    _
  $region29: #{mnist_classifier_forward.5} parent=0 // pred_fallthru
    _

</llo_original>
